<compile_context>
chip_gen: v7x
topology: tpu7x:2x2x1
jax: 0.10.0
libtpu: 0.0.40
codegen_flags: <defaults>
</compile_context>

<pallas_src>
import functools

import jax
import jax.numpy as jnp
from jax.experimental import pallas as pl
from jax.experimental.pallas import tpu as pltpu

LRELU_SLOPE = 0.2      # nn.LeakyReLU(0.2)
BN_EPS = 1e-5          # nn.BatchNorm2d default eps
KSIZE = 4              # both convs use kernel_size=4


def _unet_innermost_kernel(xq_ref, wd_ref, wu_ref, eye_ref, shift_ref,
                           out_ref, aflat_ref, h1p_ref,
                           *, Bt, H, W, Wq, C_in, C_inner, C_out):
    """Bt images: LeakyReLU -> Conv2d(k4,s1,p2) -> ReLU -> ConvT(k4,s1,p2) -> BN -> concat."""
    H1, W1 = H + 1, W + 1          # k=4, s=1, p=2 conv grows each spatial dim by 1
    M1 = H1 * Wq                   # flattened rows of the down-conv output
    M2 = H * Wq                    # flattened rows of the up-conv output
    HW = H * W
    C_tot = C_in + C_out
    n_stage = h1p_ref.shape[0]     # (H + 5) * Wq

    # Zero only the halo rows of the transposed-conv staging buffer (2*Wq at the top,
    # 2*Wq at the bottom); the M1 centre rows are fully rewritten for every image below.
    h1p_ref[pl.ds(0, 2 * Wq), :] = jnp.zeros((2 * Wq, C_inner), jnp.float32)
    tail = n_stage - (2 * Wq + M1)
    h1p_ref[pl.ds(2 * Wq + M1, tail), :] = jnp.zeros((tail, C_inner), jnp.float32)

    # Wrap-around garbage-column mask, built once per grid step from a width-sized iota.
    col = jax.lax.broadcasted_iota(jnp.int32, (1, Wq, 1), 1)
    keep = col < W1

    for b in range(Bt):
        # -- downrelu: LeakyReLU(0.2).  Padding is zero and lrelu(0) == 0.
        xq = xq_ref[b]                                             # [Hq, Wq, C_in]
        a = jnp.where(xq >= 0.0, xq, LRELU_SLOPE * xq)
        # Wq % 8 == 0 -> pure sublane-tile regrouping.
        aflat_ref[...] = a.reshape(-1, C_in)                       # [Hq*Wq, C_in]

        # -- downconv: Conv2d(C_in, C_inner, k=4, s=1, p=2), bias=False, as ONE im2col
        #    matmul: tap (kh, kw) is the row shift kh*Wq + kw; lane-concat the 16 slices.
        lhs1 = jnp.concatenate(
            [aflat_ref[pl.ds(kh * Wq + kw, M1), :]
             for kh in range(KSIZE) for kw in range(KSIZE)], axis=-1)   # [M1, 16*C_in]
        acc1 = jnp.dot(lhs1.astype(jnp.bfloat16), wd_ref[...],
                       preferred_element_type=jnp.float32)              # [M1, C_inner]

        # -- uprelu + zero the wrap-around garbage columns, stage with a one-row halo.
        h1 = jnp.maximum(acc1, 0.0).reshape(H1, Wq, C_inner)
        h1 = jnp.where(keep, h1, 0.0)
        h1p_ref[pl.ds(2 * Wq, M1), :] = h1.reshape(M1, C_inner)

        # -- upconv: ConvTranspose2d(C_inner, C_out, k=4, s=1, p=2), bias=False
        #    == conv with spatially flipped kernel and padding k-1-p = 1; taps are row
        #    shifts of (kh+1)*Wq + (kw-1) in the staged buffer.  BatchNorm scale is
        #    already folded into wu_ref columns.
        lhs2 = jnp.concatenate(
            [h1p_ref[pl.ds((kh + 1) * Wq + (kw - 1), M2), :]
             for kh in range(KSIZE) for kw in range(KSIZE)], axis=-1)   # [M2, 16*C_inner]
        acc2 = jnp.dot(lhs2.astype(jnp.bfloat16), wu_ref[...],
                       preferred_element_type=jnp.float32)              # [M2, C_out]

        # -- skip-concat in registers, transpose (HW, C_tot) -> (C_tot, HW) with a single
        #    NT matmul against the identity (lane-dense NCHW-flat store), then apply the
        #    folded BatchNorm shift (zeros on the passthrough channels).
        h2v = acc2.reshape(H, Wq, C_out)[:, :W, :].reshape(HW, C_out)   # drop garbage cols
        xc = xq_ref[b, pl.ds(2, H), pl.ds(2, W), :].reshape(HW, C_in)
        both = jnp.concatenate([xc, h2v], axis=-1)                      # [HW, C_tot]
        outT = jax.lax.dot_general(
            eye_ref[...], both,
            dimension_numbers=(((1,), (1,)), ((), ())),
            preferred_element_type=jnp.float32)                         # [C_tot, HW]
        out_ref[b] = (outT + shift_ref[...]).astype(out_ref.dtype)


def _pick_block_batch(B):
    """Images per grid step: amortize per-step overhead but keep >= 2 steps (v7x megacore)."""
    for bt in (8, 4, 2):
        if B % bt == 0 and (B // bt) % 2 == 0:
            return bt
    return 1


def unet_innermost_block(x_nchw, kparams):
    """x_nchw: [B, C_in, H, W] f32 -> [B, C_in + C_out, H, W] f32."""
    B, C_in, H, W = x_nchw.shape
    C_inner = kparams["wd_k"].shape[1]
    C_out = kparams["wu_k"].shape[1]
    C_tot = C_in + C_out
    Wq = ((W + 4) + 7) // 8 * 8        # width + conv halo, rounded up to a multiple of 8
    Hq = H + 5                          # 2 top pad + H + (2 pad + 1 row of flat-shift slack)

    bt = _pick_block_batch(B)
    grid = (B // bt,)

    # NCHW -> NHWC (channels on lanes for the im2col matmuls) and zero pad: 2 rows/cols of
    # conv padding plus the extra right/bottom slack used by the flattened row-shift taps.
    x_nhwc = jnp.transpose(x_nchw, (0, 2, 3, 1)).astype(jnp.float32)
    xq = jnp.pad(x_nhwc, ((0, 0), (2, Hq - H - 2), (2, Wq - W - 2), (0, 0)))

    eye = jnp.eye(C_tot, dtype=jnp.float32)                      # resident transpose matrix
    shift = jnp.concatenate(
        [jnp.zeros((C_in,), jnp.float32), kparams["bn_shift"]]).reshape(C_tot, 1)

    kernel = functools.partial(_unet_innermost_kernel, Bt=bt, H=H, W=W, Wq=Wq,
                               C_in=C_in, C_inner=C_inner, C_out=C_out)
    out_flat = pl.pallas_call(
        kernel,
        out_shape=jax.ShapeDtypeStruct((B, C_tot, H * W), jnp.float32),
        grid_spec=pltpu.PrefetchScalarGridSpec(
            num_scalar_prefetch=0,
            grid=grid,
            in_specs=[
                # per-step image tile: pipelined (double-buffered) across the grid
                pl.BlockSpec((bt, Hq, Wq, C_in), lambda i: (i, 0, 0, 0)),
                # im2col weights / identity / folded BN shift: constant block index ->
                # fetched once, stay resident in VMEM for the whole grid
                pl.BlockSpec((KSIZE * KSIZE * C_in, C_inner), lambda i: (0, 0)),
                pl.BlockSpec((KSIZE * KSIZE * C_inner, C_out), lambda i: (0, 0)),
                pl.BlockSpec((C_tot, C_tot), lambda i: (0, 0)),
                pl.BlockSpec((C_tot, 1), lambda i: (0, 0)),
            ],
            # lane-dense NCHW-flat output block: last dim H*W (multiple of 128)
            out_specs=pl.BlockSpec((bt, C_tot, H * W), lambda i: (i, 0, 0)),
            scratch_shapes=[
                pltpu.VMEM((Hq * Wq, C_in), jnp.float32),        # flattened lrelu(x)
                pltpu.VMEM(((H + 5) * Wq, C_inner), jnp.float32),  # zero-haloed staged h1
            ],
        ),
        compiler_params=pltpu.CompilerParams(
            dimension_semantics=("parallel",),   # grid steps split across TCs (v7x megacore)
            vmem_limit_bytes=32 * 1024 * 1024,
        ),
    )(xq, kparams["wd_k"], kparams["wu_k"], eye, shift)
    # Kernel already emits NCHW-flat; this reshape is free (no transpose / HBM round trip).
    return out_flat.reshape(B, C_tot, H, W)


def init_torch_params(key, input_nc, inner_nc, outer_nc):
    """Deterministic parameters in PyTorch layouts (bias=False because norm is BatchNorm2d)."""
    ks = jax.random.split(key, 6)

    def u(k, shape, fan_in):
        b = 1.0 / (fan_in ** 0.5)
        return jax.random.uniform(k, shape, jnp.float32, -b, b)

    return dict(
        # nn.Conv2d(input_nc, inner_nc, 4, stride=1, padding=2, bias=False): OIHW
        wd=u(ks[0], (inner_nc, input_nc, KSIZE, KSIZE), input_nc * KSIZE * KSIZE),
        # nn.ConvTranspose2d(inner_nc, outer_nc, 4, stride=1, padding=2, bias=False): [in, out, kh, kw]
        wu=u(ks[1], (inner_nc, outer_nc, KSIZE, KSIZE), inner_nc * KSIZE * KSIZE),
        # nn.BatchNorm2d(outer_nc): inference-mode stats (non-trivial to exercise the folding)
        bn_gamma=1.0 + 0.1 * jax.random.normal(ks[2], (outer_nc,), jnp.float32),
        bn_beta=0.1 * jax.random.normal(ks[3], (outer_nc,), jnp.float32),
        bn_mean=0.1 * jax.random.normal(ks[4], (outer_nc,), jnp.float32),
        bn_var=jax.random.uniform(ks[5], (outer_nc,), jnp.float32, 0.5, 1.5),
    )


def pack_kernel_params(p):
    """Torch layouts -> kernel layouts: im2col weight matrices (bf16, BN scale folded) + shift."""
    wd, wu = p["wd"], p["wu"]
    c_inner, c_in = wd.shape[0], wd.shape[1]
    c_out = wu.shape[1]
    # Conv2d: im2col column (t*C_in + ci), t = kh*4 + kw  ->  wd[co, ci, kh, kw]
    wd_k = jnp.transpose(wd, (2, 3, 1, 0)).reshape(KSIZE * KSIZE * c_in, c_inner)
    # BatchNorm2d (inference) folded to per-channel scale/shift; scale folded into wu columns.
    inv = 1.0 / jnp.sqrt(p["bn_var"] + BN_EPS)
    scale = p["bn_gamma"] * inv
    shift = p["bn_beta"] - p["bn_mean"] * scale
    # ConvTranspose2d == conv(flip(W), pad=k-1-p): row (t*C_inner + ci) = wu[ci, co, 3-kh, 3-kw]
    wu_k = jnp.transpose(jnp.flip(wu, axis=(2, 3)), (2, 3, 0, 1)).reshape(
        KSIZE * KSIZE * c_inner, c_out) * scale[None, :]
    return dict(wd_k=wd_k.astype(jnp.bfloat16),
                wu_k=wu_k.astype(jnp.bfloat16),
                bn_shift=shift.astype(jnp.float32))


def reference_forward(x, p):
    """Pure-JAX/XLA reference of the innermost UnetSkipConnectionBlock forward (NCHW)."""
    a = jnp.where(x >= 0.0, x, LRELU_SLOPE * x)
    h = jax.lax.conv_general_dilated(
        a, p["wd"], window_strides=(1, 1), padding=((2, 2), (2, 2)),
        dimension_numbers=("NCHW", "OIHW", "NCHW"),
        precision=jax.lax.Precision.HIGHEST)
    h = jnp.maximum(h, 0.0)
    wu_conv = jnp.transpose(jnp.flip(p["wu"], axis=(2, 3)), (1, 0, 2, 3))   # [out, in, kh, kw]
    h = jax.lax.conv_general_dilated(
        h, wu_conv, window_strides=(1, 1), padding=((1, 1), (1, 1)),
        dimension_numbers=("NCHW", "OIHW", "NCHW"),
        precision=jax.lax.Precision.HIGHEST)
    inv = 1.0 / jnp.sqrt(p["bn_var"] + BN_EPS)
    h = ((h - p["bn_mean"][None, :, None, None]) * inv[None, :, None, None]
         * p["bn_gamma"][None, :, None, None] + p["bn_beta"][None, :, None, None])
    return jnp.concatenate([x, h], axis=1)


if __name__ == "__main__":
    key = jax.random.PRNGKey(0)
    kp, kx = jax.random.split(key)

    B, C, H, W = 2, 4, 16, 16      # outer_nc = input_nc = 4
    INNER = 8                       # inner_nc

    tparams = init_torch_params(kp, input_nc=C, inner_nc=INNER, outer_nc=C)
    kparams = pack_kernel_params(tparams)
    x = jax.random.normal(kx, (B, C, H, W), jnp.float32)

    out = unet_innermost_block(x, kparams)
    jax.block_until_ready(out)

    ref = reference_forward(x, tparams)
    assert out.shape == (B, 2 * C, H, W), out.shape
    # bf16 MXU operands (per perf review) vs XLA's HIGHEST-precision f32 convs -> small slack.
    err = float(jnp.max(jnp.abs(out - ref)))
    assert jnp.allclose(out, ref, atol=1e-2, rtol=1e-2), err
    print("KERNEL_OK")
</pallas_src>

<mosaic_0001>
module attributes {stable_mosaic.version = 11 : i64} {
  func.func @_unet_innermost_kernel(%arg0: i32, %arg1: memref<1x21x24x4xf32, #tpu.memory_space<vmem>>, %arg2: memref<64x8xbf16, #tpu.memory_space<vmem>>, %arg3: memref<128x4xbf16, #tpu.memory_space<vmem>>, %arg4: memref<8x8xf32, #tpu.memory_space<vmem>>, %arg5: memref<8x1xf32, #tpu.memory_space<vmem>>, %arg6: memref<1x8x256xf32, #tpu.memory_space<vmem>>, %arg7: memref<504x4xf32, #tpu.memory_space<vmem>>, %arg8: memref<504x8xf32, #tpu.memory_space<vmem>>) attributes {dimension_semantics = [#tpu.dimension_semantics<parallel>], iteration_bounds = array<i64: 2>, scalar_prefetch = 0 : i64, scratch_operands = 2 : i64, tpu.core_type = #tpu.core_type<tc>, window_params = [{transform_indices = @transform_0, window_bounds = array<i64: 1, 21, 24, 4>}, {pipeline_mode = #tpu.pipeline_mode<synchronous>, transform_indices = @transform_1, window_bounds = array<i64: 64, 8>}, {pipeline_mode = #tpu.pipeline_mode<synchronous>, transform_indices = @transform_2, window_bounds = array<i64: 128, 4>}, {pipeline_mode = #tpu.pipeline_mode<synchronous>, transform_indices = @transform_3, window_bounds = array<i64: 8, 8>}, {pipeline_mode = #tpu.pipeline_mode<synchronous>, transform_indices = @transform_4, window_bounds = array<i64: 8, 1>}, {transform_indices = @transform_5, window_bounds = array<i64: 1, 8, 256>}]} {
    %cst = arith.constant 0.000000e+00 : f32
    %0 = vector.broadcast %cst : f32 to vector<48x8xf32>
    %c0 = arith.constant 0 : index
    %c0_0 = arith.constant 0 : index
    %1 = vector.load %arg8[%c0, %c0_0] : memref<504x8xf32, #tpu.memory_space<vmem>>, vector<48x8xf32>
    tpu.vector_store %arg8[%c0, %c0_0], %0 {strides = array<i32>} : memref<504x8xf32, #tpu.memory_space<vmem>>, vector<48x8xf32>,
    %cst_1 = arith.constant 0.000000e+00 : f32
    %2 = vector.broadcast %cst_1 : f32 to vector<48x8xf32>
    %c456 = arith.constant 456 : index
    %c0_2 = arith.constant 0 : index
    %3 = vector.load %arg8[%c456, %c0_2] : memref<504x8xf32, #tpu.memory_space<vmem>>, vector<48x8xf32>
    tpu.vector_store %arg8[%c456, %c0_2], %2 {strides = array<i32>} : memref<504x8xf32, #tpu.memory_space<vmem>>, vector<48x8xf32>,
    %4 = tpu.iota {dimensions = array<i32: 1>} : vector<1x24x1xi32>
    %c17_i32 = arith.constant 17 : i32
    %5 = vector.broadcast %c17_i32 : i32 to vector<1x24x1xi32>
    %6 = arith.cmpi slt, %4, %5 : vector<1x24x1xi32>
    %c0_3 = arith.constant 0 : index
    %c0_4 = arith.constant 0 : index
    %c0_5 = arith.constant 0 : index
    %c0_6 = arith.constant 0 : index
    %7 = vector.load %arg1[%c0_3, %c0_4, %c0_5, %c0_6] : memref<1x21x24x4xf32, #tpu.memory_space<vmem>>, vector<1x21x24x4xf32>
    %8 = vector.shape_cast %7 : vector<1x21x24x4xf32> to vector<21x24x4xf32>
    %cst_7 = arith.constant 0.000000e+00 : f32
    %9 = vector.broadcast %cst_7 : f32 to vector<21x24x4xf32>
    %10 = arith.cmpf oge, %8, %9 : vector<21x24x4xf32>
    %cst_8 = arith.constant 2.000000e-01 : f32
    %11 = vector.broadcast %cst_8 : f32 to vector<21x24x4xf32>
    %12 = arith.mulf %11, %8 : vector<21x24x4xf32>
    %13 = arith.select %10, %8, %12 : vector<21x24x4xi1>, vector<21x24x4xf32>
    %14 = vector.shape_cast %13 : vector<21x24x4xf32> to vector<504x4xf32>
    %c0_9 = arith.constant 0 : index
    %c0_10 = arith.constant 0 : index
    %15 = vector.load %arg7[%c0_9, %c0_10] : memref<504x4xf32, #tpu.memory_space<vmem>>, vector<504x4xf32>
    tpu.vector_store %arg7[%c0_9, %c0_10], %14 {strides = array<i32>} : memref<504x4xf32, #tpu.memory_space<vmem>>, vector<504x4xf32>,
    %c0_11 = arith.constant 0 : index
    %c0_12 = arith.constant 0 : index
    %16 = vector.load %arg7[%c0_11, %c0_12] : memref<504x4xf32, #tpu.memory_space<vmem>>, vector<408x4xf32>
    %c1 = arith.constant 1 : index
    %c0_13 = arith.constant 0 : index
    %17 = vector.load %arg7[%c1, %c0_13] : memref<504x4xf32, #tpu.memory_space<vmem>>, vector<408x4xf32>
    %c2 = arith.constant 2 : index
    %c0_14 = arith.constant 0 : index
    %18 = vector.load %arg7[%c2, %c0_14] : memref<504x4xf32, #tpu.memory_space<vmem>>, vector<408x4xf32>
    %c3 = arith.constant 3 : index
    %c0_15 = arith.constant 0 : index
    %19 = vector.load %arg7[%c3, %c0_15] : memref<504x4xf32, #tpu.memory_space<vmem>>, vector<408x4xf32>
    %c24 = arith.constant 24 : index
    %c0_16 = arith.constant 0 : index
    %20 = vector.load %arg7[%c24, %c0_16] : memref<504x4xf32, #tpu.memory_space<vmem>>, vector<408x4xf32>
    %c25 = arith.constant 25 : index
    %c0_17 = arith.constant 0 : index
    %21 = vector.load %arg7[%c25, %c0_17] : memref<504x4xf32, #tpu.memory_space<vmem>>, vector<408x4xf32>
    %c26 = arith.constant 26 : index
    %c0_18 = arith.constant 0 : index
    %22 = vector.load %arg7[%c26, %c0_18] : memref<504x4xf32, #tpu.memory_space<vmem>>, vector<408x4xf32>
    %c27 = arith.constant 27 : index
    %c0_19 = arith.constant 0 : index
    %23 = vector.load %arg7[%c27, %c0_19] : memref<504x4xf32, #tpu.memory_space<vmem>>, vector<408x4xf32>
    %c48 = arith.constant 48 : index
    %c0_20 = arith.constant 0 : index
    %24 = vector.load %arg7[%c48, %c0_20] : memref<504x4xf32, #tpu.memory_space<vmem>>, vector<408x4xf32>
    %c49 = arith.constant 49 : index
    %c0_21 = arith.constant 0 : index
    %25 = vector.load %arg7[%c49, %c0_21] : memref<504x4xf32, #tpu.memory_space<vmem>>, vector<408x4xf32>
    %c50 = arith.constant 50 : index
    %c0_22 = arith.constant 0 : index
    %26 = vector.load %arg7[%c50, %c0_22] : memref<504x4xf32, #tpu.memory_space<vmem>>, vector<408x4xf32>
    %c51 = arith.constant 51 : index
    %c0_23 = arith.constant 0 : index
    %27 = vector.load %arg7[%c51, %c0_23] : memref<504x4xf32, #tpu.memory_space<vmem>>, vector<408x4xf32>
    %c72 = arith.constant 72 : index
    %c0_24 = arith.constant 0 : index
    %28 = vector.load %arg7[%c72, %c0_24] : memref<504x4xf32, #tpu.memory_space<vmem>>, vector<408x4xf32>
    %c73 = arith.constant 73 : index
    %c0_25 = arith.constant 0 : index
    %29 = vector.load %arg7[%c73, %c0_25] : memref<504x4xf32, #tpu.memory_space<vmem>>, vector<408x4xf32>
    %c74 = arith.constant 74 : index
    %c0_26 = arith.constant 0 : index
    %30 = vector.load %arg7[%c74, %c0_26] : memref<504x4xf32, #tpu.memory_space<vmem>>, vector<408x4xf32>
    %c75 = arith.constant 75 : index
    %c0_27 = arith.constant 0 : index
    %31 = vector.load %arg7[%c75, %c0_27] : memref<504x4xf32, #tpu.memory_space<vmem>>, vector<408x4xf32>
    %32 = tpu.concatenate %16, %17, %18, %19, %20, %21, %22, %23, %24, %25, %26, %27, %28, %29, %30, %31 in 1 : vector<408x4xf32>, vector<408x4xf32>, vector<408x4xf32>, vector<408x4xf32>, vector<408x4xf32>, vector<408x4xf32>, vector<408x4xf32>, vector<408x4xf32>, vector<408x4xf32>, vector<408x4xf32>, vector<408x4xf32>, vector<408x4xf32>, vector<408x4xf32>, vector<408x4xf32>, vector<408x4xf32>, vector<408x4xf32> -> vector<408x64xf32>
    %33 = arith.truncf %32 : vector<408x64xf32> to vector<408x64xbf16>
    %c0_28 = arith.constant 0 : index
    %c0_29 = arith.constant 0 : index
    %34 = vector.load %arg2[%c0_28, %c0_29] : memref<64x8xbf16, #tpu.memory_space<vmem>>, vector<64x8xbf16>
    %cst_30 = arith.constant dense<0.000000e+00> : vector<408x8xf32>
    %35 = tpu.matmul %33, %34, %cst_30 {dimension_numbers = #tpu.dot_dimension_numbers<[1], [0], [0], [1], [0, 0, 1, 1], [], []>} : vector<408x64xbf16>, vector<64x8xbf16>, vector<408x8xf32> -> vector<408x8xf32>
    %cst_31 = arith.constant 0.000000e+00 : f32
    %36 = vector.broadcast %cst_31 : f32 to vector<408x8xf32>
    %37 = arith.maximumf %35, %36 : vector<408x8xf32>
    %38 = vector.shape_cast %37 : vector<408x8xf32> to vector<17x24x8xf32>
    %cst_32 = arith.constant 0.000000e+00 : f32
    %39 = vector.shape_cast %6 : vector<1x24x1xi1> to vector<1x24x1xi1>
    %40 = vector.broadcast %39 : vector<1x24x1xi1> to vector<17x24x8xi1>
    %41 = vector.broadcast %cst_32 : f32 to vector<17x24x8xf32>
    %42 = arith.select %40, %38, %41 : vector<17x24x8xi1>, vector<17x24x8xf32>
    %43 = vector.shape_cast %42 : vector<17x24x8xf32> to vector<408x8xf32>
    %c48_33 = arith.constant 48 : index
    %c0_34 = arith.constant 0 : index
    %44 = vector.load %arg8[%c48_33, %c0_34] : memref<504x8xf32, #tpu.memory_space<vmem>>, vector<408x8xf32>
    tpu.vector_store %arg8[%c48_33, %c0_34], %43 {strides = array<i32>} : memref<504x8xf32, #tpu.memory_space<vmem>>, vector<408x8xf32>,
    %c23 = arith.constant 23 : index
    %c0_35 = arith.constant 0 : index
    %45 = vector.load %arg8[%c23, %c0_35] : memref<504x8xf32, #tpu.memory_space<vmem>>, vector<384x8xf32>
    %c24_36 = arith.constant 24 : index
    %c0_37 = arith.constant 0 : index
    %46 = vector.load %arg8[%c24_36, %c0_37] : memref<504x8xf32, #tpu.memory_space<vmem>>, vector<384x8xf32>
    %c25_38 = arith.constant 25 : index
    %c0_39 = arith.constant 0 : index
    %47 = vector.load %arg8[%c25_38, %c0_39] : memref<504x8xf32, #tpu.memory_space<vmem>>, vector<384x8xf32>
    %c26_40 = arith.constant 26 : index
    %c0_41 = arith.constant 0 : index
    %48 = vector.load %arg8[%c26_40, %c0_41] : memref<504x8xf32, #tpu.memory_space<vmem>>, vector<384x8xf32>
    %c47 = arith.constant 47 : index
    %c0_42 = arith.constant 0 : index
    %49 = vector.load %arg8[%c47, %c0_42] : memref<504x8xf32, #tpu.memory_space<vmem>>, vector<384x8xf32>
    %c48_43 = arith.constant 48 : index
    %c0_44 = arith.constant 0 : index
    %50 = vector.load %arg8[%c48_43, %c0_44] : memref<504x8xf32, #tpu.memory_space<vmem>>, vector<384x8xf32>
    %c49_45 = arith.constant 49 : index
    %c0_46 = arith.constant 0 : index
    %51 = vector.load %arg8[%c49_45, %c0_46] : memref<504x8xf32, #tpu.memory_space<vmem>>, vector<384x8xf32>
    %c50_47 = arith.constant 50 : index
    %c0_48 = arith.constant 0 : index
    %52 = vector.load %arg8[%c50_47, %c0_48] : memref<504x8xf32, #tpu.memory_space<vmem>>, vector<384x8xf32>
    %c71 = arith.constant 71 : index
    %c0_49 = arith.constant 0 : index
    %53 = vector.load %arg8[%c71, %c0_49] : memref<504x8xf32, #tpu.memory_space<vmem>>, vector<384x8xf32>
    %c72_50 = arith.constant 72 : index
    %c0_51 = arith.constant 0 : index
    %54 = vector.load %arg8[%c72_50, %c0_51] : memref<504x8xf32, #tpu.memory_space<vmem>>, vector<384x8xf32>
    %c73_52 = arith.constant 73 : index
    %c0_53 = arith.constant 0 : index
    %55 = vector.load %arg8[%c73_52, %c0_53] : memref<504x8xf32, #tpu.memory_space<vmem>>, vector<384x8xf32>
    %c74_54 = arith.constant 74 : index
    %c0_55 = arith.constant 0 : index
    %56 = vector.load %arg8[%c74_54, %c0_55] : memref<504x8xf32, #tpu.memory_space<vmem>>, vector<384x8xf32>
    %c95 = arith.constant 95 : index
    %c0_56 = arith.constant 0 : index
    %57 = vector.load %arg8[%c95, %c0_56] : memref<504x8xf32, #tpu.memory_space<vmem>>, vector<384x8xf32>
    %c96 = arith.constant 96 : index
    %c0_57 = arith.constant 0 : index
    %58 = vector.load %arg8[%c96, %c0_57] : memref<504x8xf32, #tpu.memory_space<vmem>>, vector<384x8xf32>
    %c97 = arith.constant 97 : index
    %c0_58 = arith.constant 0 : index
    %59 = vector.load %arg8[%c97, %c0_58] : memref<504x8xf32, #tpu.memory_space<vmem>>, vector<384x8xf32>
    %c98 = arith.constant 98 : index
    %c0_59 = arith.constant 0 : index
    %60 = vector.load %arg8[%c98, %c0_59] : memref<504x8xf32, #tpu.memory_space<vmem>>, vector<384x8xf32>
    %61 = tpu.concatenate %45, %46, %47, %48, %49, %50, %51, %52, %53, %54, %55, %56, %57, %58, %59, %60 in 1 : vector<384x8xf32>, vector<384x8xf32>, vector<384x8xf32>, vector<384x8xf32>, vector<384x8xf32>, vector<384x8xf32>, vector<384x8xf32>, vector<384x8xf32>, vector<384x8xf32>, vector<384x8xf32>, vector<384x8xf32>, vector<384x8xf32>, vector<384x8xf32>, vector<384x8xf32>, vector<384x8xf32>, vector<384x8xf32> -> vector<384x128xf32>
    %62 = arith.truncf %61 : vector<384x128xf32> to vector<384x128xbf16>
    %c0_60 = arith.constant 0 : index
    %c0_61 = arith.constant 0 : index
    %63 = vector.load %arg3[%c0_60, %c0_61] : memref<128x4xbf16, #tpu.memory_space<vmem>>, vector<128x4xbf16>
    %cst_62 = arith.constant dense<0.000000e+00> : vector<384x4xf32>
    %64 = tpu.matmul %62, %63, %cst_62 {dimension_numbers = #tpu.dot_dimension_numbers<[1], [0], [0], [1], [0, 0, 1, 1], [], []>} : vector<384x128xbf16>, vector<128x4xbf16>, vector<384x4xf32> -> vector<384x4xf32>
    %65 = vector.shape_cast %64 : vector<384x4xf32> to vector<16x24x4xf32>
    %66 = vector.extract_strided_slice %65 {offsets = [0, 0, 0], sizes = [16, 16, 4], strides = [1, 1, 1]} : vector<16x24x4xf32> to vector<16x16x4xf32>
    %67 = vector.shape_cast %66 : vector<16x16x4xf32> to vector<256x4xf32>
    %c0_63 = arith.constant 0 : index
    %c2_64 = arith.constant 2 : index
    %c2_65 = arith.constant 2 : index
    %c0_66 = arith.constant 0 : index
    %68 = vector.load %arg1[%c0_63, %c2_64, %c2_65, %c0_66] : memref<1x21x24x4xf32, #tpu.memory_space<vmem>>, vector<1x16x16x4xf32>
    %69 = vector.shape_cast %68 : vector<1x16x16x4xf32> to vector<16x16x4xf32>
    %70 = vector.shape_cast %69 : vector<16x16x4xf32> to vector<256x4xf32>
    %71 = tpu.concatenate %70, %67 in 1 : vector<256x4xf32>, vector<256x4xf32> -> vector<256x8xf32>
    %c0_67 = arith.constant 0 : index
    %c0_68 = arith.constant 0 : index
    %72 = vector.load %arg4[%c0_67, %c0_68] : memref<8x8xf32, #tpu.memory_space<vmem>>, vector<8x8xf32>
    %cst_69 = arith.constant dense<0.000000e+00> : vector<8x256xf32>
    %73 = tpu.matmul %72, %71, %cst_69 {dimension_numbers = #tpu.dot_dimension_numbers<[1], [1], [0], [0], [0, 0, 1, 0], [], []>} : vector<8x8xf32>, vector<256x8xf32>, vector<8x256xf32> -> vector<8x256xf32>
    %c0_70 = arith.constant 0 : index
    %c0_71 = arith.constant 0 : index
    %74 = vector.load %arg5[%c0_70, %c0_71] : memref<8x1xf32, #tpu.memory_space<vmem>>, vector<8x1xf32>
    %75 = vector.broadcast %74 : vector<8x1xf32> to vector<8x256xf32>
    %76 = arith.addf %73, %75 : vector<8x256xf32>
    %c0_72 = arith.constant 0 : index
    %c0_73 = arith.constant 0 : index
    %c0_74 = arith.constant 0 : index
    %77 = vector.load %arg6[%c0_72, %c0_73, %c0_74] : memref<1x8x256xf32, #tpu.memory_space<vmem>>, vector<1x8x256xf32>
    %78 = vector.shape_cast %77 : vector<1x8x256xf32> to vector<8x256xf32>
    %79 = vector.shape_cast %76 : vector<8x256xf32> to vector<1x8x256xf32>
    tpu.vector_store %arg6[%c0_72, %c0_73, %c0_74], %79 {strides = array<i32>} : memref<1x8x256xf32, #tpu.memory_space<vmem>>, vector<1x8x256xf32>,
    return
  }
  func.func @transform_0(%arg0: i32) -> (i32, i32, i32, i32) {
    %c0_i32 = arith.constant 0 : i32
    %c0_i32_0 = arith.constant 0 : i32
    %c0_i32_1 = arith.constant 0 : i32
    %c0_i32_2 = arith.constant 0 : i32
    return %arg0, %c0_i32, %c0_i32_0, %c0_i32_1 : i32, i32, i32, i32
  }
  func.func @transform_1(%arg0: i32) -> (i32, i32) {
    %c0_i32 = arith.constant 0 : i32
    %c0_i32_0 = arith.constant 0 : i32
    %c0_i32_1 = arith.constant 0 : i32
    return %c0_i32, %c0_i32_0 : i32, i32
  }
  func.func @transform_2(%arg0: i32) -> (i32, i32) {
    %c0_i32 = arith.constant 0 : i32
    %c0_i32_0 = arith.constant 0 : i32
    %c0_i32_1 = arith.constant 0 : i32
    return %c0_i32, %c0_i32_0 : i32, i32
  }
  func.func @transform_3(%arg0: i32) -> (i32, i32) {
    %c0_i32 = arith.constant 0 : i32
    %c0_i32_0 = arith.constant 0 : i32
    %c0_i32_1 = arith.constant 0 : i32
    return %c0_i32, %c0_i32_0 : i32, i32
  }
  func.func @transform_4(%arg0: i32) -> (i32, i32) {
    %c0_i32 = arith.constant 0 : i32
    %c0_i32_0 = arith.constant 0 : i32
    %c0_i32_1 = arith.constant 0 : i32
    return %c0_i32, %c0_i32_0 : i32, i32
  }
  func.func @transform_5(%arg0: i32) -> (i32, i32, i32) {
    %c0_i32 = arith.constant 0 : i32
    %c0_i32_0 = arith.constant 0 : i32
    %c0_i32_1 = arith.constant 0 : i32
    return %arg0, %c0_i32, %c0_i32_0 : i32, i32, i32
  }
}

</mosaic_0001>

<llo_original>
// kernel: tpu_custom_call.1
$region0: #{tpu_custom_call.1}
  #allocation0 [shape = 'u32[]', space=smem, size = 0x4, offset = 0x4, fixed_abs, tag = 'smem constant byte address 0x4 - core index']
  #allocation1 [shape = 'u32[144,128]{1,0:T(1,128)}', space=vmem, size = 0x12000, scoped, tag = 'internal scratch']
  #allocation2 [shape = 'f32[504,4]{1,0:T(8,128)}', space=vmem, size = 0x3f000, scoped, tag = 'scratch operand']
  #allocation3 [shape = 'f32[504,8]{1,0:T(8,128)}', space=vmem, size = 0x3f000, scoped, tag = 'scratch operand']
  %s0 = inlined_call_operand.vmem [shape: f32[2,21,24,4], index: 0, kind: input, shape index: {}]
  %s1 = inlined_call_operand.vmem [shape: bf16[64,8], index: 1, kind: input, shape index: {}]
  %s2 = inlined_call_operand.vmem [shape: bf16[128,4], index: 2, kind: input, shape index: {}]
  %s3 = inlined_call_operand.vmem [shape: f32[8,8], index: 3, kind: input, shape index: {}]
  %s4 = inlined_call_operand.vmem [shape: f32[8,1], index: 4, kind: input, shape index: {}]
  %s5 = inlined_call_operand.hbm [shape: f32[2,8,256], index: 5, kind: output, shape index: {}]
  %s6 = sld [smem:[#allocation0]]
  $region53: #{tpu_custom_call.1} parent=0
    _
  %s8 = ssub.s32 1, %s6
  %s9 = scalar_select 0, %s8, %s6
  $region1: #{tpu_custom_call.1} parent=0
    #allocation4 [shape = 'u8[16384]{0}', space=vmem, size = 0x4000, scoped, tag = 'output window, operand 0']
    #allocation5 [shape = 's32[2]{0}', space=sflag, size = 0x8, scoped, tag = 'scoped memory for tpu_custom_call.1']
    %10 = vsyncpa [#allocation5], 0
    %s11 = scalar_lea.sflag [#allocation5], 1
    %12 = vsyncpa %s11, 0
    loop: start=0, step=1, limit=4
    $region2: #{tpu_custom_call.1} parent=1 // loop_pre_header
      _
    $region3: #{tpu_custom_call.1} parent=1 // loop_header
      %s14 = sphi 0, %s18
      %p15 = scmp.ge.s32.totalorder %s14, 4
      %s24 = sphi 0, %s26
      %s27 = sphi 0, %s24
      %s28 = sphi 0, %s27
      %s44 = sphi 0, %s28
      %s48 = sphi 0, %s48
      %s50 = sphi 0, %s48
      %s51 = sphi 0, %s50
      %s65 = sphi 0, %s51
      %s69 = sphi 0, %s69
      %s71 = sphi 0, %s69
      %s72 = sphi 0, %s71
      %s86 = sphi 0, %s72
      %s90 = sphi 0, %s90
      %s92 = sphi 0, %s90
      %s93 = sphi 0, %s92
      %s107 = sphi 0, %s93
      %s111 = sphi 0, %s111
      %s113 = sphi 0, %s111
      %s114 = sphi 0, %s113
      %s128 = sphi 0, %s114
      %s134 = sphi 0, %s136
      %s137 = sphi 0, %s134
      %s138 = sphi 0, %s137
      %s154 = sphi 0, %s138
    $region4: #{tpu_custom_call.1} parent=1 // loop_header_branch
      %17 = sbr.rel (%p15) target = $region8
    $region5: #{tpu_custom_call.1} parent=1 // loop_body
      %s19 = ssub.s32 %s14, 1
      %s20 = ssub.s32 %s14, 2
      %s21 = sadd.s32 %s14, 1
      %s22 = ssub.s32 %s14, %s21
      %p23 = scmp.eq.s32.totalorder %s22, 0
      %s25 = sadd.s32 %s24, 1
      %s26 = scalar_select %p23, %s24, %s25
      %p29 = pneg %p23
      %p30 = scmp.eq.s32.totalorder %s14, 1
      %p31 = por %p29, %p30
      %p32 = scmp.ne.s32.totalorder %s24, %s27
      %p33 = scmp.eq.s32.totalorder %s14, 0
      %p34 = por %p32, %p33
      %p35 = scmp.ne.s32.totalorder %s24, %s27
      %p36 = scmp.eq.s32.totalorder %s19, 1
      %p37 = por %p35, %p36
      %p38 = scmp.ne.s32.totalorder %s27, %s28
      %p39 = scmp.eq.s32.totalorder %s19, 0
      %p40 = por %p38, %p39
      %p41 = scmp.ne.s32.totalorder %s27, %s28
      %p42 = scmp.eq.s32.totalorder %s20, 1
      %p43 = por %p41, %p42
      %p45 = scmp.ne.s32.totalorder %s28, %s44
      %p46 = scmp.eq.s32.totalorder %s20, 0
      %p47 = por %p45, %p46
      %s49 = sadd.s32 %s48, 1
      %p52 = scmp.eq.s32.totalorder %s14, 1
      %p53 = scmp.ne.s32.totalorder %s48, %s50
      %p54 = scmp.eq.s32.totalorder %s14, 0
      %p55 = por %p53, %p54
      %p56 = scmp.ne.s32.totalorder %s48, %s50
      %p57 = scmp.eq.s32.totalorder %s19, 1
      %p58 = por %p56, %p57
      %p59 = scmp.ne.s32.totalorder %s50, %s51
      %p60 = scmp.eq.s32.totalorder %s19, 0
      %p61 = por %p59, %p60
      %p62 = scmp.ne.s32.totalorder %s50, %s51
      %p63 = scmp.eq.s32.totalorder %s20, 1
      %p64 = por %p62, %p63
      %p66 = scmp.ne.s32.totalorder %s51, %s65
      %p67 = scmp.eq.s32.totalorder %s20, 0
      %p68 = por %p66, %p67
      %s70 = sadd.s32 %s69, 1
      %p73 = scmp.eq.s32.totalorder %s14, 1
      %p74 = scmp.ne.s32.totalorder %s69, %s71
      %p75 = scmp.eq.s32.totalorder %s14, 0
      %p76 = por %p74, %p75
      %p77 = scmp.ne.s32.totalorder %s69, %s71
      %p78 = scmp.eq.s32.totalorder %s19, 1
      %p79 = por %p77, %p78
      %p80 = scmp.ne.s32.totalorder %s71, %s72
      %p81 = scmp.eq.s32.totalorder %s19, 0
      %p82 = por %p80, %p81
      %p83 = scmp.ne.s32.totalorder %s71, %s72
      %p84 = scmp.eq.s32.totalorder %s20, 1
      %p85 = por %p83, %p84
      %p87 = scmp.ne.s32.totalorder %s72, %s86
      %p88 = scmp.eq.s32.totalorder %s20, 0
      %p89 = por %p87, %p88
      %s91 = sadd.s32 %s90, 1
      %p94 = scmp.eq.s32.totalorder %s14, 1
      %p95 = scmp.ne.s32.totalorder %s90, %s92
      %p96 = scmp.eq.s32.totalorder %s14, 0
      %p97 = por %p95, %p96
      %p98 = scmp.ne.s32.totalorder %s90, %s92
      %p99 = scmp.eq.s32.totalorder %s19, 1
      %p100 = por %p98, %p99
      %p101 = scmp.ne.s32.totalorder %s92, %s93
      %p102 = scmp.eq.s32.totalorder %s19, 0
      %p103 = por %p101, %p102
      %p104 = scmp.ne.s32.totalorder %s92, %s93
      %p105 = scmp.eq.s32.totalorder %s20, 1
      %p106 = por %p104, %p105
      %p108 = scmp.ne.s32.totalorder %s93, %s107
      %p109 = scmp.eq.s32.totalorder %s20, 0
      %p110 = por %p108, %p109
      %s112 = sadd.s32 %s111, 1
      %p115 = scmp.eq.s32.totalorder %s14, 1
      %p116 = scmp.ne.s32.totalorder %s111, %s113
      %p117 = scmp.eq.s32.totalorder %s14, 0
      %p118 = por %p116, %p117
      %p119 = scmp.ne.s32.totalorder %s111, %s113
      %p120 = scmp.eq.s32.totalorder %s19, 1
      %p121 = por %p119, %p120
      %p122 = scmp.ne.s32.totalorder %s113, %s114
      %p123 = scmp.eq.s32.totalorder %s19, 0
      %p124 = por %p122, %p123
      %p125 = scmp.ne.s32.totalorder %s113, %s114
      %p126 = scmp.eq.s32.totalorder %s20, 1
      %p127 = por %p125, %p126
      %p129 = scmp.ne.s32.totalorder %s114, %s128
      %p130 = scmp.eq.s32.totalorder %s20, 0
      %p131 = por %p129, %p130
      %s132 = ssub.s32 %s14, %s21
      %p133 = scmp.eq.s32.totalorder %s132, 0
      %s135 = sadd.s32 %s134, 1
      %s136 = scalar_select %p133, %s134, %s135
      %p139 = pneg %p133
      %p140 = scmp.eq.s32.totalorder %s14, 1
      %p141 = por %p139, %p140
      %p142 = scmp.ne.s32.totalorder %s134, %s137
      %p143 = scmp.eq.s32.totalorder %s14, 0
      %p144 = por %p142, %p143
      %p145 = scmp.ne.s32.totalorder %s134, %s137
      %p146 = scmp.eq.s32.totalorder %s19, 1
      %p147 = por %p145, %p146
      %p148 = scmp.ne.s32.totalorder %s137, %s138
      %p149 = scmp.eq.s32.totalorder %s19, 0
      %p150 = por %p148, %p149
      %p151 = scmp.ne.s32.totalorder %s137, %s138
      %p152 = scmp.eq.s32.totalorder %s20, 1
      %p153 = por %p151, %p152
      %p155 = scmp.ne.s32.totalorder %s138, %s154
      %p156 = scmp.eq.s32.totalorder %s20, 0
      %p157 = por %p155, %p156
      %p158 = scmp.le.s32.totalorder 1, %s14
      %p159 = scmp.lt.s32.totalorder %s14, 3
      %p160 = pnand %p158, %p159
      %p161 = pneg %p160
      // Predicated region
      $region9: #{tpu_custom_call.1} parent=5 // pred_check
        _
      $region10: #{tpu_custom_call.1} parent=5 // pred_check_branch
        %163 = sbr.rel (%p160) target = $region12
      $region11: #{tpu_custom_call.1} parent=5 // pred_region
        %s164 = ssub.s32 %s14, 1
        // Predicated region
        $region13: #{tpu_custom_call.1} parent=11 // pred_check
          %p165 = pneg %p61
        $region14: #{tpu_custom_call.1} parent=11 // pred_check_branch
          %167 = sbr.rel (%p165) target = $region16
        $region15: #{tpu_custom_call.1} parent=11 // pred_region
          _
        $region16: #{tpu_custom_call.1} parent=11 // pred_fallthru
          _
        // Predicated region
        $region17: #{tpu_custom_call.1} parent=11 // pred_check
          %p168 = pneg %p82
        $region18: #{tpu_custom_call.1} parent=11 // pred_check_branch
          %170 = sbr.rel (%p168) target = $region20
        $region19: #{tpu_custom_call.1} parent=11 // pred_region
          _
        $region20: #{tpu_custom_call.1} parent=11 // pred_fallthru
          _
        // Predicated region
        $region21: #{tpu_custom_call.1} parent=11 // pred_check
          %p171 = pneg %p103
        $region22: #{tpu_custom_call.1} parent=11 // pred_check_branch
          %173 = sbr.rel (%p171) target = $region24
        $region23: #{tpu_custom_call.1} parent=11 // pred_region
          _
        $region24: #{tpu_custom_call.1} parent=11 // pred_fallthru
          _
        // Predicated region
        $region25: #{tpu_custom_call.1} parent=11 // pred_check
          %p174 = pneg %p124
        $region26: #{tpu_custom_call.1} parent=11 // pred_check_branch
          %176 = sbr.rel (%p174) target = $region28
        $region27: #{tpu_custom_call.1} parent=11 // pred_region
          _
        $region28: #{tpu_custom_call.1} parent=11 // pred_fallthru
          _
      $region12: #{tpu_custom_call.1} parent=5 // pred_fallthru
        _
      %p177 = scmp.lt.s32.totalorder %s14, 2
      // Predicated region
      $region29: #{tpu_custom_call.1} parent=5 // pred_check
        %p178 = pneg %p177
      $region30: #{tpu_custom_call.1} parent=5 // pred_check_branch
        %180 = sbr.rel (%p178) target = $region32
      $region31: #{tpu_custom_call.1} parent=5 // pred_region
        // Predicated region
        $region33: #{tpu_custom_call.1} parent=31 // pred_check
          %p181 = pneg %p34
        $region34: #{tpu_custom_call.1} parent=31 // pred_check_branch
          %183 = sbr.rel (%p181) target = $region36
        $region35: #{tpu_custom_call.1} parent=31 // pred_region
          %p184 = scmp.lt.s32.totalorder %s14, 1
          %s185 = scalar_select %p184, %s14, 1
          %s186 = smul.addr %s185, 63
          %s187 = smul.addr %s186, 8
          %s188 = scalar_lea.vmem %s0, %s187
        $region36: #{tpu_custom_call.1} parent=31 // pred_fallthru
          _
      $region32: #{tpu_custom_call.1} parent=5 // pred_fallthru
        _
      %p189 = scmp.le.s32.totalorder 1, %s14
      %p190 = scmp.lt.s32.totalorder %s14, 3
      %p191 = pnand %p189, %p190
      %p192 = pneg %p191
      // Predicated region
      $region37: #{tpu_custom_call.1} parent=5 // pred_check
        _
      $region38: #{tpu_custom_call.1} parent=5 // pred_check_branch
        %194 = sbr.rel (%p191) target = $region40
      $region39: #{tpu_custom_call.1} parent=5 // pred_region
        %s195 = ssub.s32 %s14, 1
        %p196 = scmp.lt.s32.totalorder %s19, 1
        %s197 = scalar_select %p196, %s19, 1
        %s198 = smul.addr %s197, 63
        %s199 = smul.addr %s198, 8
        %s200 = scalar_lea.vmem %s0, %s199
        %p201 = pneg %p40
        %p202 = pneg %p37
        %p203 = pneg %p61
        %p204 = pneg %p58
        %p205 = pneg %p82
        %p206 = pneg %p79
        %p207 = pneg %p103
        %p208 = pneg %p100
        %p209 = pneg %p124
        %p210 = pneg %p121
        %p211 = pneg %p150
        %p212 = pneg %p147
        %s213 = sand.u32 %s137, 1
        %s214 = scalar_lea.sflag [#allocation5], %s213
        %s215 = sand.u32 %s137, 1
        %s216 = smul.addr %s215, 16
        %s217 = scalar_lea.vmem [#allocation4], %s216
        %p218 = scmp.lt.s32.totalorder %s19, 1
        %s219 = scalar_select %p218, %s19, 1
        %s220 = smul.addr %s219, 63
        %s221 = smul.addr %s220, 8
        %s222 = scalar_lea.vmem %s0, %s221
        %vm224 = vcmask 64512
        %225 = vst.msk [vmem:[#allocation3] sm:$0xff] %vm224, 0.0
        %226 = vst.msk [vmem:[#allocation3 + $0x8] sm:$0xff] %vm224, 0.0
        %227 = vst.msk [vmem:[#allocation3 + $0x10] sm:$0xff] %vm224, 0.0
        %228 = vst.msk [vmem:[#allocation3 + $0x18] sm:$0xff] %vm224, 0.0
        %229 = vst.msk [vmem:[#allocation3 + $0x20] sm:$0xff] %vm224, 0.0
        %230 = vst.msk [vmem:[#allocation3 + $0x28] sm:$0xff] %vm224, 0.0
        %231 = vst.msk [vmem:[#allocation3 + $0x1c8] sm:$0xff] %vm224, 0.0
        %232 = vst.msk [vmem:[#allocation3 + $0x1d0] sm:$0xff] %vm224, 0.0
        %233 = vst.msk [vmem:[#allocation3 + $0x1d8] sm:$0xff] %vm224, 0.0
        %234 = vst.msk [vmem:[#allocation3 + $0x1e0] sm:$0xff] %vm224, 0.0
        %235 = vst.msk [vmem:[#allocation3 + $0x1e8] sm:$0xff] %vm224, 0.0
        %236 = vst.msk [vmem:[#allocation3 + $0x1f0] sm:$0xff] %vm224, 0.0
        %v237 = vlaneseq
        %v238 = vshrl.u32 %v237, 7
        %v239 = vadd.s32 %v238, 8
        %v240 = vadd.s32 %v238, 16
        %vm241 = vcmp.lt.s32.totalorder %v238, 17
        %vm242 = vcmp.lt.s32.totalorder %v239, 17
        %vm243 = vcmp.lt.s32.totalorder %v240, 17
        %v244 = vld [vmem:[%s222] sm:$0xff]
        %v245 = vld [vmem:[%s222 + $0x8] sm:$0xff]
        %v246 = vld [vmem:[%s222 + $0x10] sm:$0xff]
        %v247 = vld [vmem:[%s222 + $0x18] sm:$0xff]
        %v248 = vld [vmem:[%s222 + $0x20] sm:$0xff]
        %v249 = vld [vmem:[%s222 + $0x28] sm:$0xff]
        %v250 = vld [vmem:[%s222 + $0x30] sm:$0xff]
        %v251 = vld [vmem:[%s222 + $0x38] sm:$0xff]
        %v252 = vld [vmem:[%s222 + $0x40] sm:$0xff]
        %v253 = vld [vmem:[%s222 + $0x48] sm:$0xff]
        %v254 = vld [vmem:[%s222 + $0x50] sm:$0xff]
        %v255 = vld [vmem:[%s222 + $0x58] sm:$0xff]
        %v256 = vld [vmem:[%s222 + $0x60] sm:$0xff]
        %v257 = vld [vmem:[%s222 + $0x68] sm:$0xff]
        %v258 = vld [vmem:[%s222 + $0x70] sm:$0xff]
        %v259 = vld [vmem:[%s222 + $0x78] sm:$0xff]
        %v260 = vld [vmem:[%s222 + $0x80] sm:$0xff]
        %v261 = vld [vmem:[%s222 + $0x88] sm:$0xff]
        %v262 = vld [vmem:[%s222 + $0x90] sm:$0xff]
        %v263 = vld [vmem:[%s222 + $0x98] sm:$0xff]
        %v264 = vld [vmem:[%s222 + $0xa0] sm:$0xff]
        %v265 = vld [vmem:[%s222 + $0xa8] sm:$0xff]
        %v266 = vld [vmem:[%s222 + $0xb0] sm:$0xff]
        %v267 = vld [vmem:[%s222 + $0xb8] sm:$0xff]
        %v268 = vld [vmem:[%s222 + $0xc0] sm:$0xff]
        %v269 = vld [vmem:[%s222 + $0xc8] sm:$0xff]
        %v270 = vld [vmem:[%s222 + $0xd0] sm:$0xff]
        %v271 = vld [vmem:[%s222 + $0xd8] sm:$0xff]
        %v272 = vld [vmem:[%s222 + $0xe0] sm:$0xff]
        %v273 = vld [vmem:[%s222 + $0xe8] sm:$0xff]
        %v274 = vld [vmem:[%s222 + $0xf0] sm:$0xff]
        %v275 = vld [vmem:[%s222 + $0xf8] sm:$0xff]
        %v276 = vld [vmem:[%s222 + $0x100] sm:$0xff]
        %v277 = vld [vmem:[%s222 + $0x108] sm:$0xff]
        %v278 = vld [vmem:[%s222 + $0x110] sm:$0xff]
        %v279 = vld [vmem:[%s222 + $0x118] sm:$0xff]
        %v280 = vld [vmem:[%s222 + $0x120] sm:$0xff]
        %v281 = vld [vmem:[%s222 + $0x128] sm:$0xff]
        %v282 = vld [vmem:[%s222 + $0x130] sm:$0xff]
        %v283 = vld [vmem:[%s222 + $0x138] sm:$0xff]
        %v284 = vld [vmem:[%s222 + $0x140] sm:$0xff]
        %v285 = vld [vmem:[%s222 + $0x148] sm:$0xff]
        %v286 = vld [vmem:[%s222 + $0x150] sm:$0xff]
        %v287 = vld [vmem:[%s222 + $0x158] sm:$0xff]
        %v288 = vld [vmem:[%s222 + $0x160] sm:$0xff]
        %v289 = vld [vmem:[%s222 + $0x168] sm:$0xff]
        %v290 = vld [vmem:[%s222 + $0x170] sm:$0xff]
        %v291 = vld [vmem:[%s222 + $0x178] sm:$0xff]
        %v292 = vld [vmem:[%s222 + $0x180] sm:$0xff]
        %v293 = vld [vmem:[%s222 + $0x188] sm:$0xff]
        %v294 = vld [vmem:[%s222 + $0x190] sm:$0xff]
        %v295 = vld [vmem:[%s222 + $0x198] sm:$0xff]
        %v296 = vld [vmem:[%s222 + $0x1a0] sm:$0xff]
        %v297 = vld [vmem:[%s222 + $0x1a8] sm:$0xff]
        %v298 = vld [vmem:[%s222 + $0x1b0] sm:$0xff]
        %v299 = vld [vmem:[%s222 + $0x1b8] sm:$0xff]
        %v300 = vld [vmem:[%s222 + $0x1c0] sm:$0xff]
        %v301 = vld [vmem:[%s222 + $0x1c8] sm:$0xff]
        %v302 = vld [vmem:[%s222 + $0x1d0] sm:$0xff]
        %v303 = vld [vmem:[%s222 + $0x1d8] sm:$0xff]
        %v304 = vld [vmem:[%s222 + $0x1e0] sm:$0xff]
        %v305 = vld [vmem:[%s222 + $0x1e8] sm:$0xff]
        %v306 = vld [vmem:[%s222 + $0x1f0] sm:$0xff]
        %vm307 = vcmp.ge.f32.partialorder %v244, 0.0
        %vm308 = vcmp.ge.f32.partialorder %v245, 0.0
        %vm309 = vcmp.ge.f32.partialorder %v246, 0.0
        %vm310 = vcmp.ge.f32.partialorder %v247, 0.0
        %vm311 = vcmp.ge.f32.partialorder %v248, 0.0
        %vm312 = vcmp.ge.f32.partialorder %v249, 0.0
        %vm313 = vcmp.ge.f32.partialorder %v250, 0.0
        %vm314 = vcmp.ge.f32.partialorder %v251, 0.0
        %vm315 = vcmp.ge.f32.partialorder %v252, 0.0
        %vm316 = vcmp.ge.f32.partialorder %v253, 0.0
        %vm317 = vcmp.ge.f32.partialorder %v254, 0.0
        %vm318 = vcmp.ge.f32.partialorder %v255, 0.0
        %vm319 = vcmp.ge.f32.partialorder %v256, 0.0
        %vm320 = vcmp.ge.f32.partialorder %v257, 0.0
        %vm321 = vcmp.ge.f32.partialorder %v258, 0.0
        %vm322 = vcmp.ge.f32.partialorder %v259, 0.0
        %vm323 = vcmp.ge.f32.partialorder %v260, 0.0
        %vm324 = vcmp.ge.f32.partialorder %v261, 0.0
        %vm325 = vcmp.ge.f32.partialorder %v262, 0.0
        %vm326 = vcmp.ge.f32.partialorder %v263, 0.0
        %vm327 = vcmp.ge.f32.partialorder %v264, 0.0
        %vm328 = vcmp.ge.f32.partialorder %v265, 0.0
        %vm329 = vcmp.ge.f32.partialorder %v266, 0.0
        %vm330 = vcmp.ge.f32.partialorder %v267, 0.0
        %vm331 = vcmp.ge.f32.partialorder %v268, 0.0
        %vm332 = vcmp.ge.f32.partialorder %v269, 0.0
        %vm333 = vcmp.ge.f32.partialorder %v270, 0.0
        %vm334 = vcmp.ge.f32.partialorder %v271, 0.0
        %vm335 = vcmp.ge.f32.partialorder %v272, 0.0
        %vm336 = vcmp.ge.f32.partialorder %v273, 0.0
        %vm337 = vcmp.ge.f32.partialorder %v274, 0.0
        %vm338 = vcmp.ge.f32.partialorder %v275, 0.0
        %vm339 = vcmp.ge.f32.partialorder %v276, 0.0
        %vm340 = vcmp.ge.f32.partialorder %v277, 0.0
        %vm341 = vcmp.ge.f32.partialorder %v278, 0.0
        %vm342 = vcmp.ge.f32.partialorder %v279, 0.0
        %vm343 = vcmp.ge.f32.partialorder %v280, 0.0
        %vm344 = vcmp.ge.f32.partialorder %v281, 0.0
        %vm345 = vcmp.ge.f32.partialorder %v282, 0.0
        %vm346 = vcmp.ge.f32.partialorder %v283, 0.0
        %vm347 = vcmp.ge.f32.partialorder %v284, 0.0
        %vm348 = vcmp.ge.f32.partialorder %v285, 0.0
        %vm349 = vcmp.ge.f32.partialorder %v286, 0.0
        %vm350 = vcmp.ge.f32.partialorder %v287, 0.0
        %vm351 = vcmp.ge.f32.partialorder %v288, 0.0
        %vm352 = vcmp.ge.f32.partialorder %v289, 0.0
        %vm353 = vcmp.ge.f32.partialorder %v290, 0.0
        %vm354 = vcmp.ge.f32.partialorder %v291, 0.0
        %vm355 = vcmp.ge.f32.partialorder %v292, 0.0
        %vm356 = vcmp.ge.f32.partialorder %v293, 0.0
        %vm357 = vcmp.ge.f32.partialorder %v294, 0.0
        %vm358 = vcmp.ge.f32.partialorder %v295, 0.0
        %vm359 = vcmp.ge.f32.partialorder %v296, 0.0
        %vm360 = vcmp.ge.f32.partialorder %v297, 0.0
        %vm361 = vcmp.ge.f32.partialorder %v298, 0.0
        %vm362 = vcmp.ge.f32.partialorder %v299, 0.0
        %vm363 = vcmp.ge.f32.partialorder %v300, 0.0
        %vm364 = vcmp.ge.f32.partialorder %v301, 0.0
        %vm365 = vcmp.ge.f32.partialorder %v302, 0.0
        %vm366 = vcmp.ge.f32.partialorder %v303, 0.0
        %vm367 = vcmp.ge.f32.partialorder %v304, 0.0
        %vm368 = vcmp.ge.f32.partialorder %v305, 0.0
        %vm369 = vcmp.ge.f32.partialorder %v306, 0.0
        %v370 = vmul.f32 %v244, 0.2
        %v371 = vmul.f32 %v245, 0.2
        %v372 = vmul.f32 %v246, 0.2
        %v373 = vmul.f32 %v247, 0.2
        %v374 = vmul.f32 %v248, 0.2
        %v375 = vmul.f32 %v249, 0.2
        %v376 = vmul.f32 %v250, 0.2
        %v377 = vmul.f32 %v251, 0.2
        %v378 = vmul.f32 %v252, 0.2
        %v379 = vmul.f32 %v253, 0.2
        %v380 = vmul.f32 %v254, 0.2
        %v381 = vmul.f32 %v255, 0.2
        %v382 = vmul.f32 %v256, 0.2
        %v383 = vmul.f32 %v257, 0.2
        %v384 = vmul.f32 %v258, 0.2
        %v385 = vmul.f32 %v259, 0.2
        %v386 = vmul.f32 %v260, 0.2
        %v387 = vmul.f32 %v261, 0.2
        %v388 = vmul.f32 %v262, 0.2
        %v389 = vmul.f32 %v263, 0.2
        %v390 = vmul.f32 %v264, 0.2
        %v391 = vmul.f32 %v265, 0.2
        %v392 = vmul.f32 %v266, 0.2
        %v393 = vmul.f32 %v267, 0.2
        %v394 = vmul.f32 %v268, 0.2
        %v395 = vmul.f32 %v269, 0.2
        %v396 = vmul.f32 %v270, 0.2
        %v397 = vmul.f32 %v271, 0.2
        %v398 = vmul.f32 %v272, 0.2
        %v399 = vmul.f32 %v273, 0.2
        %v400 = vmul.f32 %v274, 0.2
        %v401 = vmul.f32 %v275, 0.2
        %v402 = vmul.f32 %v276, 0.2
        %v403 = vmul.f32 %v277, 0.2
        %v404 = vmul.f32 %v278, 0.2
        %v405 = vmul.f32 %v279, 0.2
        %v406 = vmul.f32 %v280, 0.2
        %v407 = vmul.f32 %v281, 0.2
        %v408 = vmul.f32 %v282, 0.2
        %v409 = vmul.f32 %v283, 0.2
        %v410 = vmul.f32 %v284, 0.2
        %v411 = vmul.f32 %v285, 0.2
        %v412 = vmul.f32 %v286, 0.2
        %v413 = vmul.f32 %v287, 0.2
        %v414 = vmul.f32 %v288, 0.2
        %v415 = vmul.f32 %v289, 0.2
        %v416 = vmul.f32 %v290, 0.2
        %v417 = vmul.f32 %v291, 0.2
        %v418 = vmul.f32 %v292, 0.2
        %v419 = vmul.f32 %v293, 0.2
        %v420 = vmul.f32 %v294, 0.2
        %v421 = vmul.f32 %v295, 0.2
        %v422 = vmul.f32 %v296, 0.2
        %v423 = vmul.f32 %v297, 0.2
        %v424 = vmul.f32 %v298, 0.2
        %v425 = vmul.f32 %v299, 0.2
        %v426 = vmul.f32 %v300, 0.2
        %v427 = vmul.f32 %v301, 0.2
        %v428 = vmul.f32 %v302, 0.2
        %v429 = vmul.f32 %v303, 0.2
        %v430 = vmul.f32 %v304, 0.2
        %v431 = vmul.f32 %v305, 0.2
        %v432 = vmul.f32 %v306, 0.2
        %v433 = vsel %vm307, %v244, %v370
        %v434 = vsel %vm308, %v245, %v371
        %v435 = vsel %vm309, %v246, %v372
        %v436 = vsel %vm310, %v247, %v373
        %v437 = vsel %vm311, %v248, %v374
        %v438 = vsel %vm312, %v249, %v375
        %v439 = vsel %vm313, %v250, %v376
        %v440 = vsel %vm314, %v251, %v377
        %v441 = vsel %vm315, %v252, %v378
        %v442 = vsel %vm316, %v253, %v379
        %v443 = vsel %vm317, %v254, %v380
        %v444 = vsel %vm318, %v255, %v381
        %v445 = vsel %vm319, %v256, %v382
        %v446 = vsel %vm320, %v257, %v383
        %v447 = vsel %vm321, %v258, %v384
        %v448 = vsel %vm322, %v259, %v385
        %v449 = vsel %vm323, %v260, %v386
        %v450 = vsel %vm324, %v261, %v387
        %v451 = vsel %vm325, %v262, %v388
        %v452 = vsel %vm326, %v263, %v389
        %v453 = vsel %vm327, %v264, %v390
        %v454 = vsel %vm328, %v265, %v391
        %v455 = vsel %vm329, %v266, %v392
        %v456 = vsel %vm330, %v267, %v393
        %v457 = vsel %vm331, %v268, %v394
        %v458 = vsel %vm332, %v269, %v395
        %v459 = vsel %vm333, %v270, %v396
        %v460 = vsel %vm334, %v271, %v397
        %v461 = vsel %vm335, %v272, %v398
        %v462 = vsel %vm336, %v273, %v399
        %v463 = vsel %vm337, %v274, %v400
        %v464 = vsel %vm338, %v275, %v401
        %v465 = vsel %vm339, %v276, %v402
        %v466 = vsel %vm340, %v277, %v403
        %v467 = vsel %vm341, %v278, %v404
        %v468 = vsel %vm342, %v279, %v405
        %v469 = vsel %vm343, %v280, %v406
        %v470 = vsel %vm344, %v281, %v407
        %v471 = vsel %vm345, %v282, %v408
        %v472 = vsel %vm346, %v283, %v409
        %v473 = vsel %vm347, %v284, %v410
        %v474 = vsel %vm348, %v285, %v411
        %v475 = vsel %vm349, %v286, %v412
        %v476 = vsel %vm350, %v287, %v413
        %v477 = vsel %vm351, %v288, %v414
        %v478 = vsel %vm352, %v289, %v415
        %v479 = vsel %vm353, %v290, %v416
        %v480 = vsel %vm354, %v291, %v417
        %v481 = vsel %vm355, %v292, %v418
        %v482 = vsel %vm356, %v293, %v419
        %v483 = vsel %vm357, %v294, %v420
        %v484 = vsel %vm358, %v295, %v421
        %v485 = vsel %vm359, %v296, %v422
        %v486 = vsel %vm360, %v297, %v423
        %v487 = vsel %vm361, %v298, %v424
        %v488 = vsel %vm362, %v299, %v425
        %v489 = vsel %vm363, %v300, %v426
        %v490 = vsel %vm364, %v301, %v427
        %v491 = vsel %vm365, %v302, %v428
        %v492 = vsel %vm366, %v303, %v429
        %v493 = vsel %vm367, %v304, %v430
        %v494 = vsel %vm368, %v305, %v431
        %v495 = vsel %vm369, %v306, %v432
        %vm496 = vcmask 31744
        %497 = vst.msk [vmem:[#allocation2] sm:$0xff] %vm496, %v433
        %498 = vst.msk [vmem:[#allocation2 + $0x8] sm:$0xff] %vm496, %v434
        %499 = vst.msk [vmem:[#allocation2 + $0x10] sm:$0xff] %vm496, %v435
        %500 = vst.msk [vmem:[#allocation2 + $0x18] sm:$0xff] %vm496, %v436
        %501 = vst.msk [vmem:[#allocation2 + $0x20] sm:$0xff] %vm496, %v437
        %502 = vst.msk [vmem:[#allocation2 + $0x28] sm:$0xff] %vm496, %v438
        %503 = vst.msk [vmem:[#allocation2 + $0x30] sm:$0xff] %vm496, %v439
        %504 = vst.msk [vmem:[#allocation2 + $0x38] sm:$0xff] %vm496, %v440
        %505 = vst.msk [vmem:[#allocation2 + $0x40] sm:$0xff] %vm496, %v441
        %506 = vst.msk [vmem:[#allocation2 + $0x48] sm:$0xff] %vm496, %v442
        %507 = vst.msk [vmem:[#allocation2 + $0x50] sm:$0xff] %vm496, %v443
        %508 = vst.msk [vmem:[#allocation2 + $0x58] sm:$0xff] %vm496, %v444
        %509 = vst.msk [vmem:[#allocation2 + $0x60] sm:$0xff] %vm496, %v445
        %510 = vst.msk [vmem:[#allocation2 + $0x68] sm:$0xff] %vm496, %v446
        %511 = vst.msk [vmem:[#allocation2 + $0x70] sm:$0xff] %vm496, %v447
        %512 = vst.msk [vmem:[#allocation2 + $0x78] sm:$0xff] %vm496, %v448
        %513 = vst.msk [vmem:[#allocation2 + $0x80] sm:$0xff] %vm496, %v449
        %514 = vst.msk [vmem:[#allocation2 + $0x88] sm:$0xff] %vm496, %v450
        %515 = vst.msk [vmem:[#allocation2 + $0x90] sm:$0xff] %vm496, %v451
        %516 = vst.msk [vmem:[#allocation2 + $0x98] sm:$0xff] %vm496, %v452
        %517 = vst.msk [vmem:[#allocation2 + $0xa0] sm:$0xff] %vm496, %v453
        %518 = vst.msk [vmem:[#allocation2 + $0xa8] sm:$0xff] %vm496, %v454
        %519 = vst.msk [vmem:[#allocation2 + $0xb0] sm:$0xff] %vm496, %v455
        %520 = vst.msk [vmem:[#allocation2 + $0xb8] sm:$0xff] %vm496, %v456
        %521 = vst.msk [vmem:[#allocation2 + $0xc0] sm:$0xff] %vm496, %v457
        %522 = vst.msk [vmem:[#allocation2 + $0xc8] sm:$0xff] %vm496, %v458
        %523 = vst.msk [vmem:[#allocation2 + $0xd0] sm:$0xff] %vm496, %v459
        %524 = vst.msk [vmem:[#allocation2 + $0xd8] sm:$0xff] %vm496, %v460
        %525 = vst.msk [vmem:[#allocation2 + $0xe0] sm:$0xff] %vm496, %v461
        %526 = vst.msk [vmem:[#allocation2 + $0xe8] sm:$0xff] %vm496, %v462
        %527 = vst.msk [vmem:[#allocation2 + $0xf0] sm:$0xff] %vm496, %v463
        %528 = vst.msk [vmem:[#allocation2 + $0xf8] sm:$0xff] %vm496, %v464
        %529 = vst.msk [vmem:[#allocation2 + $0x100] sm:$0xff] %vm496, %v465
        %530 = vst.msk [vmem:[#allocation2 + $0x108] sm:$0xff] %vm496, %v466
        %531 = vst.msk [vmem:[#allocation2 + $0x110] sm:$0xff] %vm496, %v467
        %532 = vst.msk [vmem:[#allocation2 + $0x118] sm:$0xff] %vm496, %v468
        %533 = vst.msk [vmem:[#allocation2 + $0x120] sm:$0xff] %vm496, %v469
        %534 = vst.msk [vmem:[#allocation2 + $0x128] sm:$0xff] %vm496, %v470
        %535 = vst.msk [vmem:[#allocation2 + $0x130] sm:$0xff] %vm496, %v471
        %536 = vst.msk [vmem:[#allocation2 + $0x138] sm:$0xff] %vm496, %v472
        %537 = vst.msk [vmem:[#allocation2 + $0x140] sm:$0xff] %vm496, %v473
        %538 = vst.msk [vmem:[#allocation2 + $0x148] sm:$0xff] %vm496, %v474
        %539 = vst.msk [vmem:[#allocation2 + $0x150] sm:$0xff] %vm496, %v475
        %540 = vst.msk [vmem:[#allocation2 + $0x158] sm:$0xff] %vm496, %v476
        %541 = vst.msk [vmem:[#allocation2 + $0x160] sm:$0xff] %vm496, %v477
        %542 = vst.msk [vmem:[#allocation2 + $0x168] sm:$0xff] %vm496, %v478
        %543 = vst.msk [vmem:[#allocation2 + $0x170] sm:$0xff] %vm496, %v479
        %544 = vst.msk [vmem:[#allocation2 + $0x178] sm:$0xff] %vm496, %v480
        %545 = vst.msk [vmem:[#allocation2 + $0x180] sm:$0xff] %vm496, %v481
        %546 = vst.msk [vmem:[#allocation2 + $0x188] sm:$0xff] %vm496, %v482
        %547 = vst.msk [vmem:[#allocation2 + $0x190] sm:$0xff] %vm496, %v483
        %548 = vst.msk [vmem:[#allocation2 + $0x198] sm:$0xff] %vm496, %v484
        %549 = vst.msk [vmem:[#allocation2 + $0x1a0] sm:$0xff] %vm496, %v485
        %550 = vst.msk [vmem:[#allocation2 + $0x1a8] sm:$0xff] %vm496, %v486
        %551 = vst.msk [vmem:[#allocation2 + $0x1b0] sm:$0xff] %vm496, %v487
        %552 = vst.msk [vmem:[#allocation2 + $0x1b8] sm:$0xff] %vm496, %v488
        %553 = vst.msk [vmem:[#allocation2 + $0x1c0] sm:$0xff] %vm496, %v489
        %554 = vst.msk [vmem:[#allocation2 + $0x1c8] sm:$0xff] %vm496, %v490
        %555 = vst.msk [vmem:[#allocation2 + $0x1d0] sm:$0xff] %vm496, %v491
        %556 = vst.msk [vmem:[#allocation2 + $0x1d8] sm:$0xff] %vm496, %v492
        %557 = vst.msk [vmem:[#allocation2 + $0x1e0] sm:$0xff] %vm496, %v493
        %558 = vst.msk [vmem:[#allocation2 + $0x1e8] sm:$0xff] %vm496, %v494
        %559 = vst.msk [vmem:[#allocation2 + $0x1f0] sm:$0xff] %vm496, %v495
        %v560 = vld [vmem:[#allocation2] sm:$0xff]
        %v561 = vld [vmem:[#allocation2 + $0x8] sm:$0xff]
        %v562 = vld [vmem:[#allocation2 + $0x10] sm:$0xff]
        %v563 = vld [vmem:[#allocation2 + $0x18] sm:$0xff]
        %v564 = vld [vmem:[#allocation2 + $0x20] sm:$0xff]
        %v565 = vld [vmem:[#allocation2 + $0x28] sm:$0xff]
        %v566 = vld [vmem:[#allocation2 + $0x30] sm:$0xff]
        %v567 = vld [vmem:[#allocation2 + $0x38] sm:$0xff]
        %v568 = vld [vmem:[#allocation2 + $0x40] sm:$0xff]
        %v569 = vld [vmem:[#allocation2 + $0x48] sm:$0xff]
        %v570 = vld [vmem:[#allocation2 + $0x50] sm:$0xff]
        %v571 = vld [vmem:[#allocation2 + $0x58] sm:$0xff]
        %v572 = vld [vmem:[#allocation2 + $0x60] sm:$0xff]
        %v573 = vld [vmem:[#allocation2 + $0x68] sm:$0xff]
        %v574 = vld [vmem:[#allocation2 + $0x70] sm:$0xff]
        %v575 = vld [vmem:[#allocation2 + $0x78] sm:$0xff]
        %v576 = vld [vmem:[#allocation2 + $0x80] sm:$0xff]
        %v577 = vld [vmem:[#allocation2 + $0x88] sm:$0xff]
        %v578 = vld [vmem:[#allocation2 + $0x90] sm:$0xff]
        %v579 = vld [vmem:[#allocation2 + $0x98] sm:$0xff]
        %v580 = vld [vmem:[#allocation2 + $0xa0] sm:$0xff]
        %v581 = vld [vmem:[#allocation2 + $0xa8] sm:$0xff]
        %v582 = vld [vmem:[#allocation2 + $0xb0] sm:$0xff]
        %v583 = vld [vmem:[#allocation2 + $0xb8] sm:$0xff]
        %v584 = vld [vmem:[#allocation2 + $0xc0] sm:$0xff]
        %v585 = vld [vmem:[#allocation2 + $0xc8] sm:$0xff]
        %v586 = vld [vmem:[#allocation2 + $0xd0] sm:$0xff]
        %v587 = vld [vmem:[#allocation2 + $0xd8] sm:$0xff]
        %v588 = vld [vmem:[#allocation2 + $0xe0] sm:$0xff]
        %v589 = vld [vmem:[#allocation2 + $0xe8] sm:$0xff]
        %v590 = vld [vmem:[#allocation2 + $0xf0] sm:$0xff]
        %v591 = vld [vmem:[#allocation2 + $0xf8] sm:$0xff]
        %v592 = vld [vmem:[#allocation2 + $0x100] sm:$0xff]
        %v593 = vld [vmem:[#allocation2 + $0x108] sm:$0xff]
        %v594 = vld [vmem:[#allocation2 + $0x110] sm:$0xff]
        %v595 = vld [vmem:[#allocation2 + $0x118] sm:$0xff]
        %v596 = vld [vmem:[#allocation2 + $0x120] sm:$0xff]
        %v597 = vld [vmem:[#allocation2 + $0x128] sm:$0xff]
        %v598 = vld [vmem:[#allocation2 + $0x130] sm:$0xff]
        %v599 = vld [vmem:[#allocation2 + $0x138] sm:$0xff]
        %v600 = vld [vmem:[#allocation2 + $0x140] sm:$0xff]
        %v601 = vld [vmem:[#allocation2 + $0x148] sm:$0xff]
        %v602 = vld [vmem:[#allocation2 + $0x150] sm:$0xff]
        %v603 = vld [vmem:[#allocation2 + $0x158] sm:$0xff]
        %v604 = vld [vmem:[#allocation2 + $0x160] sm:$0xff]
        %v605 = vld [vmem:[#allocation2 + $0x168] sm:$0xff]
        %v606 = vld [vmem:[#allocation2 + $0x170] sm:$0xff]
        %v607 = vld [vmem:[#allocation2 + $0x178] sm:$0xff]
        %v608 = vld [vmem:[#allocation2 + $0x180] sm:$0xff]
        %v609 = vld [vmem:[#allocation2 + $0x188] sm:$0xff]
        %v610 = vld [vmem:[#allocation2 + $0x190] sm:$0xff]
        %v611 = vld [vmem:[#allocation2 + $0x1] sm:$0xff]
        %v612 = vld [vmem:[#allocation2 + $0x9] sm:$0xff]
        %v613 = vld [vmem:[#allocation2 + $0x11] sm:$0xff]
        %v614 = vld [vmem:[#allocation2 + $0x19] sm:$0xff]
        %v615 = vld [vmem:[#allocation2 + $0x21] sm:$0xff]
        %v616 = vld [vmem:[#allocation2 + $0x29] sm:$0xff]
        %v617 = vld [vmem:[#allocation2 + $0x31] sm:$0xff]
        %v618 = vld [vmem:[#allocation2 + $0x39] sm:$0xff]
        %v619 = vld [vmem:[#allocation2 + $0x41] sm:$0xff]
        %v620 = vld [vmem:[#allocation2 + $0x49] sm:$0xff]
        %v621 = vld [vmem:[#allocation2 + $0x51] sm:$0xff]
        %v622 = vld [vmem:[#allocation2 + $0x59] sm:$0xff]
        %v623 = vld [vmem:[#allocation2 + $0x61] sm:$0xff]
        %v624 = vld [vmem:[#allocation2 + $0x69] sm:$0xff]
        %v625 = vld [vmem:[#allocation2 + $0x71] sm:$0xff]
        %v626 = vld [vmem:[#allocation2 + $0x79] sm:$0xff]
        %v627 = vld [vmem:[#allocation2 + $0x81] sm:$0xff]
        %v628 = vld [vmem:[#allocation2 + $0x89] sm:$0xff]
        %v629 = vld [vmem:[#allocation2 + $0x91] sm:$0xff]
        %v630 = vld [vmem:[#allocation2 + $0x99] sm:$0xff]
        %v631 = vld [vmem:[#allocation2 + $0xa1] sm:$0xff]
        %v632 = vld [vmem:[#allocation2 + $0xa9] sm:$0xff]
        %v633 = vld [vmem:[#allocation2 + $0xb1] sm:$0xff]
        %v634 = vld [vmem:[#allocation2 + $0xb9] sm:$0xff]
        %v635 = vld [vmem:[#allocation2 + $0xc1] sm:$0xff]
        %v636 = vld [vmem:[#allocation2 + $0xc9] sm:$0xff]
        %v637 = vld [vmem:[#allocation2 + $0xd1] sm:$0xff]
        %v638 = vld [vmem:[#allocation2 + $0xd9] sm:$0xff]
        %v639 = vld [vmem:[#allocation2 + $0xe1] sm:$0xff]
        %v640 = vld [vmem:[#allocation2 + $0xe9] sm:$0xff]
        %v641 = vld [vmem:[#allocation2 + $0xf1] sm:$0xff]
        %v642 = vld [vmem:[#allocation2 + $0xf9] sm:$0xff]
        %v643 = vld [vmem:[#allocation2 + $0x101] sm:$0xff]
        %v644 = vld [vmem:[#allocation2 + $0x109] sm:$0xff]
        %v645 = vld [vmem:[#allocation2 + $0x111] sm:$0xff]
        %v646 = vld [vmem:[#allocation2 + $0x119] sm:$0xff]
        %v647 = vld [vmem:[#allocation2 + $0x121] sm:$0xff]
        %v648 = vld [vmem:[#allocation2 + $0x129] sm:$0xff]
        %v649 = vld [vmem:[#allocation2 + $0x131] sm:$0xff]
        %v650 = vld [vmem:[#allocation2 + $0x139] sm:$0xff]
        %v651 = vld [vmem:[#allocation2 + $0x141] sm:$0xff]
        %v652 = vld [vmem:[#allocation2 + $0x149] sm:$0xff]
        %v653 = vld [vmem:[#allocation2 + $0x151] sm:$0xff]
        %v654 = vld [vmem:[#allocation2 + $0x159] sm:$0xff]
        %v655 = vld [vmem:[#allocation2 + $0x161] sm:$0xff]
        %v656 = vld [vmem:[#allocation2 + $0x169] sm:$0xff]
        %v657 = vld [vmem:[#allocation2 + $0x171] sm:$0xff]
        %v658 = vld [vmem:[#allocation2 + $0x179] sm:$0xff]
        %v659 = vld [vmem:[#allocation2 + $0x181] sm:$0xff]
        %v660 = vld [vmem:[#allocation2 + $0x189] sm:$0xff]
        %v661 = vld [vmem:[#allocation2 + $0x191] sm:$0xff]
        %v662 = vld [vmem:[#allocation2 + $0x2] sm:$0xff]
        %v663 = vld [vmem:[#allocation2 + $0xa] sm:$0xff]
        %v664 = vld [vmem:[#allocation2 + $0x12] sm:$0xff]
        %v665 = vld [vmem:[#allocation2 + $0x1a] sm:$0xff]
        %v666 = vld [vmem:[#allocation2 + $0x22] sm:$0xff]
        %v667 = vld [vmem:[#allocation2 + $0x2a] sm:$0xff]
        %v668 = vld [vmem:[#allocation2 + $0x32] sm:$0xff]
        %v669 = vld [vmem:[#allocation2 + $0x3a] sm:$0xff]
        %v670 = vld [vmem:[#allocation2 + $0x42] sm:$0xff]
        %v671 = vld [vmem:[#allocation2 + $0x4a] sm:$0xff]
        %v672 = vld [vmem:[#allocation2 + $0x52] sm:$0xff]
        %v673 = vld [vmem:[#allocation2 + $0x5a] sm:$0xff]
        %v674 = vld [vmem:[#allocation2 + $0x62] sm:$0xff]
        %v675 = vld [vmem:[#allocation2 + $0x6a] sm:$0xff]
        %v676 = vld [vmem:[#allocation2 + $0x72] sm:$0xff]
        %v677 = vld [vmem:[#allocation2 + $0x7a] sm:$0xff]
        %v678 = vld [vmem:[#allocation2 + $0x82] sm:$0xff]
        %v679 = vld [vmem:[#allocation2 + $0x8a] sm:$0xff]
        %v680 = vld [vmem:[#allocation2 + $0x92] sm:$0xff]
        %v681 = vld [vmem:[#allocation2 + $0x9a] sm:$0xff]
        %v682 = vld [vmem:[#allocation2 + $0xa2] sm:$0xff]
        %v683 = vld [vmem:[#allocation2 + $0xaa] sm:$0xff]
        %v684 = vld [vmem:[#allocation2 + $0xb2] sm:$0xff]
        %v685 = vld [vmem:[#allocation2 + $0xba] sm:$0xff]
        %v686 = vld [vmem:[#allocation2 + $0xc2] sm:$0xff]
        %v687 = vld [vmem:[#allocation2 + $0xca] sm:$0xff]
        %v688 = vld [vmem:[#allocation2 + $0xd2] sm:$0xff]
        %v689 = vld [vmem:[#allocation2 + $0xda] sm:$0xff]
        %v690 = vld [vmem:[#allocation2 + $0xe2] sm:$0xff]
        %v691 = vld [vmem:[#allocation2 + $0xea] sm:$0xff]
        %v692 = vld [vmem:[#allocation2 + $0xf2] sm:$0xff]
        %v693 = vld [vmem:[#allocation2 + $0xfa] sm:$0xff]
        %v694 = vld [vmem:[#allocation2 + $0x102] sm:$0xff]
        %v695 = vld [vmem:[#allocation2 + $0x10a] sm:$0xff]
        %v696 = vld [vmem:[#allocation2 + $0x112] sm:$0xff]
        %v697 = vld [vmem:[#allocation2 + $0x11a] sm:$0xff]
        %v698 = vld [vmem:[#allocation2 + $0x122] sm:$0xff]
        %v699 = vld [vmem:[#allocation2 + $0x12a] sm:$0xff]
        %v700 = vld [vmem:[#allocation2 + $0x132] sm:$0xff]
        %v701 = vld [vmem:[#allocation2 + $0x13a] sm:$0xff]
        %v702 = vld [vmem:[#allocation2 + $0x142] sm:$0xff]
        %v703 = vld [vmem:[#allocation2 + $0x14a] sm:$0xff]
        %v704 = vld [vmem:[#allocation2 + $0x152] sm:$0xff]
        %v705 = vld [vmem:[#allocation2 + $0x15a] sm:$0xff]
        %v706 = vld [vmem:[#allocation2 + $0x162] sm:$0xff]
        %v707 = vld [vmem:[#allocation2 + $0x16a] sm:$0xff]
        %v708 = vld [vmem:[#allocation2 + $0x172] sm:$0xff]
        %v709 = vld [vmem:[#allocation2 + $0x17a] sm:$0xff]
        %v710 = vld [vmem:[#allocation2 + $0x182] sm:$0xff]
        %v711 = vld [vmem:[#allocation2 + $0x18a] sm:$0xff]
        %v712 = vld [vmem:[#allocation2 + $0x192] sm:$0xff]
        %v713 = vld [vmem:[#allocation2 + $0x3] sm:$0xff]
        %v714 = vld [vmem:[#allocation2 + $0xb] sm:$0xff]
        %v715 = vld [vmem:[#allocation2 + $0x13] sm:$0xff]
        %v716 = vld [vmem:[#allocation2 + $0x1b] sm:$0xff]
        %v717 = vld [vmem:[#allocation2 + $0x23] sm:$0xff]
        %v718 = vld [vmem:[#allocation2 + $0x2b] sm:$0xff]
        %v719 = vld [vmem:[#allocation2 + $0x33] sm:$0xff]
        %v720 = vld [vmem:[#allocation2 + $0x3b] sm:$0xff]
        %v721 = vld [vmem:[#allocation2 + $0x43] sm:$0xff]
        %v722 = vld [vmem:[#allocation2 + $0x4b] sm:$0xff]
        %v723 = vld [vmem:[#allocation2 + $0x53] sm:$0xff]
        %v724 = vld [vmem:[#allocation2 + $0x5b] sm:$0xff]
        %v725 = vld [vmem:[#allocation2 + $0x63] sm:$0xff]
        %v726 = vld [vmem:[#allocation2 + $0x6b] sm:$0xff]
        %v727 = vld [vmem:[#allocation2 + $0x73] sm:$0xff]
        %v728 = vld [vmem:[#allocation2 + $0x7b] sm:$0xff]
        %v729 = vld [vmem:[#allocation2 + $0x83] sm:$0xff]
        %v730 = vld [vmem:[#allocation2 + $0x8b] sm:$0xff]
        %v731 = vld [vmem:[#allocation2 + $0x93] sm:$0xff]
        %v732 = vld [vmem:[#allocation2 + $0x9b] sm:$0xff]
        %v733 = vld [vmem:[#allocation2 + $0xa3] sm:$0xff]
        %v734 = vld [vmem:[#allocation2 + $0xab] sm:$0xff]
        %v735 = vld [vmem:[#allocation2 + $0xb3] sm:$0xff]
        %v736 = vld [vmem:[#allocation2 + $0xbb] sm:$0xff]
        %v737 = vld [vmem:[#allocation2 + $0xc3] sm:$0xff]
        %v738 = vld [vmem:[#allocation2 + $0xcb] sm:$0xff]
        %v739 = vld [vmem:[#allocation2 + $0xd3] sm:$0xff]
        %v740 = vld [vmem:[#allocation2 + $0xdb] sm:$0xff]
        %v741 = vld [vmem:[#allocation2 + $0xe3] sm:$0xff]
        %v742 = vld [vmem:[#allocation2 + $0xeb] sm:$0xff]
        %v743 = vld [vmem:[#allocation2 + $0xf3] sm:$0xff]
        %v744 = vld [vmem:[#allocation2 + $0xfb] sm:$0xff]
        %v745 = vld [vmem:[#allocation2 + $0x103] sm:$0xff]
        %v746 = vld [vmem:[#allocation2 + $0x10b] sm:$0xff]
        %v747 = vld [vmem:[#allocation2 + $0x113] sm:$0xff]
        %v748 = vld [vmem:[#allocation2 + $0x11b] sm:$0xff]
        %v749 = vld [vmem:[#allocation2 + $0x123] sm:$0xff]
        %v750 = vld [vmem:[#allocation2 + $0x12b] sm:$0xff]
        %v751 = vld [vmem:[#allocation2 + $0x133] sm:$0xff]
        %v752 = vld [vmem:[#allocation2 + $0x13b] sm:$0xff]
        %v753 = vld [vmem:[#allocation2 + $0x143] sm:$0xff]
        %v754 = vld [vmem:[#allocation2 + $0x14b] sm:$0xff]
        %v755 = vld [vmem:[#allocation2 + $0x153] sm:$0xff]
        %v756 = vld [vmem:[#allocation2 + $0x15b] sm:$0xff]
        %v757 = vld [vmem:[#allocation2 + $0x163] sm:$0xff]
        %v758 = vld [vmem:[#allocation2 + $0x16b] sm:$0xff]
        %v759 = vld [vmem:[#allocation2 + $0x173] sm:$0xff]
        %v760 = vld [vmem:[#allocation2 + $0x17b] sm:$0xff]
        %v761 = vld [vmem:[#allocation2 + $0x183] sm:$0xff]
        %v762 = vld [vmem:[#allocation2 + $0x18b] sm:$0xff]
        %v763 = vld [vmem:[#allocation2 + $0x193] sm:$0xff]
        %v764 = vld [vmem:[#allocation2 + $0x198] sm:$0xff]
        %v765 = vld [vmem:[#allocation2 + $0x1a0] sm:$0xff]
        %v766 = vld [vmem:[#allocation2 + $0x1a8] sm:$0xff]
        %v767 = vld [vmem:[#allocation2 + $0x199] sm:$0xff]
        %v768 = vld [vmem:[#allocation2 + $0x1a1] sm:$0xff]
        %v769 = vld [vmem:[#allocation2 + $0x1a9] sm:$0xff]
        %v770 = vld [vmem:[#allocation2 + $0x19a] sm:$0xff]
        %v771 = vld [vmem:[#allocation2 + $0x1a2] sm:$0xff]
        %v772 = vld [vmem:[#allocation2 + $0x1aa] sm:$0xff]
        %v773 = vld [vmem:[#allocation2 + $0x19b] sm:$0xff]
        %v774 = vld [vmem:[#allocation2 + $0x1a3] sm:$0xff]
        %v775 = vld [vmem:[#allocation2 + $0x1ab] sm:$0xff]
        %v776 = vld [vmem:[#allocation2 + $0x1b0] sm:$0xff]
        %v777 = vld [vmem:[#allocation2 + $0x1b8] sm:$0xff]
        %v778 = vld [vmem:[#allocation2 + $0x1c0] sm:$0xff]
        %v779 = vld [vmem:[#allocation2 + $0x1b1] sm:$0xff]
        %v780 = vld [vmem:[#allocation2 + $0x1b9] sm:$0xff]
        %v781 = vld [vmem:[#allocation2 + $0x1c1] sm:$0xff]
        %v782 = vld [vmem:[#allocation2 + $0x1b2] sm:$0xff]
        %v783 = vld [vmem:[#allocation2 + $0x1ba] sm:$0xff]
        %v784 = vld [vmem:[#allocation2 + $0x1c2] sm:$0xff]
        %v785 = vld [vmem:[#allocation2 + $0x1b3] sm:$0xff]
        %v786 = vld [vmem:[#allocation2 + $0x1bb] sm:$0xff]
        %v787 = vld [vmem:[#allocation2 + $0x1c3] sm:$0xff]
        %v788 = vld [vmem:[#allocation2 + $0x1c8] sm:$0xff]
        %v789 = vld [vmem:[#allocation2 + $0x1d0] sm:$0xff]
        %v790 = vld [vmem:[#allocation2 + $0x1d8] sm:$0xff]
        %v791 = vld [vmem:[#allocation2 + $0x1c9] sm:$0xff]
        %v792 = vld [vmem:[#allocation2 + $0x1d1] sm:$0xff]
        %v793 = vld [vmem:[#allocation2 + $0x1d9] sm:$0xff]
        %v794 = vld [vmem:[#allocation2 + $0x1ca] sm:$0xff]
        %v795 = vld [vmem:[#allocation2 + $0x1d2] sm:$0xff]
        %v796 = vld [vmem:[#allocation2 + $0x1da] sm:$0xff]
        %v797 = vld [vmem:[#allocation2 + $0x1cb] sm:$0xff]
        %v798 = vld [vmem:[#allocation2 + $0x1d3] sm:$0xff]
        %v799 = vld [vmem:[#allocation2 + $0x1db] sm:$0xff]
        %851 = vrot.lane.b32.xlu0 %v611, 4
        %v852 = vpop.permute.xlu0 %851
        %853 = vrot.lane.b32.xlu0 %v612, 4
        %v854 = vpop.permute.xlu0 %853
        %855 = vrot.lane.b32.xlu0 %v613, 4
        %v856 = vpop.permute.xlu0 %855
        %857 = vrot.lane.b32.xlu0 %v614, 4
        %v858 = vpop.permute.xlu0 %857
        %859 = vrot.lane.b32.xlu0 %v615, 4
        %v860 = vpop.permute.xlu0 %859
        %861 = vrot.lane.b32.xlu0 %v616, 4
        %v862 = vpop.permute.xlu0 %861
        %863 = vrot.lane.b32.xlu0 %v617, 4
        %v864 = vpop.permute.xlu0 %863
        %865 = vrot.lane.b32.xlu0 %v618, 4
        %v866 = vpop.permute.xlu0 %865
        %867 = vrot.lane.b32.xlu0 %v619, 4
        %v868 = vpop.permute.xlu0 %867
        %869 = vrot.lane.b32.xlu0 %v620, 4
        %v870 = vpop.permute.xlu0 %869
        %871 = vrot.lane.b32.xlu0 %v621, 4
        %v872 = vpop.permute.xlu0 %871
        %873 = vrot.lane.b32.xlu0 %v622, 4
        %v874 = vpop.permute.xlu0 %873
        %875 = vrot.lane.b32.xlu0 %v623, 4
        %v876 = vpop.permute.xlu0 %875
        %877 = vrot.lane.b32.xlu0 %v624, 4
        %v878 = vpop.permute.xlu0 %877
        %879 = vrot.lane.b32.xlu0 %v625, 4
        %v880 = vpop.permute.xlu0 %879
        %881 = vrot.lane.b32.xlu0 %v626, 4
        %v882 = vpop.permute.xlu0 %881
        %883 = vrot.lane.b32.xlu0 %v627, 4
        %v884 = vpop.permute.xlu0 %883
        %885 = vrot.lane.b32.xlu0 %v628, 4
        %v886 = vpop.permute.xlu0 %885
        %887 = vrot.lane.b32.xlu0 %v629, 4
        %v888 = vpop.permute.xlu0 %887
        %889 = vrot.lane.b32.xlu0 %v630, 4
        %v890 = vpop.permute.xlu0 %889
        %891 = vrot.lane.b32.xlu0 %v631, 4
        %v892 = vpop.permute.xlu0 %891
        %893 = vrot.lane.b32.xlu0 %v632, 4
        %v894 = vpop.permute.xlu0 %893
        %895 = vrot.lane.b32.xlu0 %v633, 4
        %v896 = vpop.permute.xlu0 %895
        %897 = vrot.lane.b32.xlu0 %v634, 4
        %v898 = vpop.permute.xlu0 %897
        %899 = vrot.lane.b32.xlu0 %v635, 4
        %v900 = vpop.permute.xlu0 %899
        %901 = vrot.lane.b32.xlu0 %v636, 4
        %v902 = vpop.permute.xlu0 %901
        %903 = vrot.lane.b32.xlu0 %v637, 4
        %v904 = vpop.permute.xlu0 %903
        %905 = vrot.lane.b32.xlu0 %v638, 4
        %v906 = vpop.permute.xlu0 %905
        %907 = vrot.lane.b32.xlu0 %v639, 4
        %v908 = vpop.permute.xlu0 %907
        %909 = vrot.lane.b32.xlu0 %v640, 4
        %v910 = vpop.permute.xlu0 %909
        %911 = vrot.lane.b32.xlu0 %v641, 4
        %v912 = vpop.permute.xlu0 %911
        %913 = vrot.lane.b32.xlu0 %v642, 4
        %v914 = vpop.permute.xlu0 %913
        %915 = vrot.lane.b32.xlu0 %v643, 4
        %v916 = vpop.permute.xlu0 %915
        %917 = vrot.lane.b32.xlu0 %v644, 4
        %v918 = vpop.permute.xlu0 %917
        %919 = vrot.lane.b32.xlu0 %v645, 4
        %v920 = vpop.permute.xlu0 %919
        %921 = vrot.lane.b32.xlu0 %v646, 4
        %v922 = vpop.permute.xlu0 %921
        %923 = vrot.lane.b32.xlu0 %v647, 4
        %v924 = vpop.permute.xlu0 %923
        %925 = vrot.lane.b32.xlu0 %v648, 4
        %v926 = vpop.permute.xlu0 %925
        %927 = vrot.lane.b32.xlu0 %v649, 4
        %v928 = vpop.permute.xlu0 %927
        %929 = vrot.lane.b32.xlu0 %v650, 4
        %v930 = vpop.permute.xlu0 %929
        %931 = vrot.lane.b32.xlu0 %v651, 4
        %v932 = vpop.permute.xlu0 %931
        %933 = vrot.lane.b32.xlu0 %v652, 4
        %v934 = vpop.permute.xlu0 %933
        %935 = vrot.lane.b32.xlu0 %v653, 4
        %v936 = vpop.permute.xlu0 %935
        %937 = vrot.lane.b32.xlu0 %v654, 4
        %v938 = vpop.permute.xlu0 %937
        %939 = vrot.lane.b32.xlu0 %v655, 4
        %v940 = vpop.permute.xlu0 %939
        %941 = vrot.lane.b32.xlu0 %v656, 4
        %v942 = vpop.permute.xlu0 %941
        %943 = vrot.lane.b32.xlu0 %v657, 4
        %v944 = vpop.permute.xlu0 %943
        %945 = vrot.lane.b32.xlu0 %v658, 4
        %v946 = vpop.permute.xlu0 %945
        %947 = vrot.lane.b32.xlu0 %v659, 4
        %v948 = vpop.permute.xlu0 %947
        %949 = vrot.lane.b32.xlu0 %v660, 4
        %v950 = vpop.permute.xlu0 %949
        %951 = vrot.lane.b32.xlu0 %v661, 4
        %v952 = vpop.permute.xlu0 %951
        %1055 = vrot.lane.b32.xlu0 %v662, 8
        %v1056 = vpop.permute.xlu0 %1055
        %1057 = vrot.lane.b32.xlu0 %v663, 8
        %v1058 = vpop.permute.xlu0 %1057
        %1059 = vrot.lane.b32.xlu0 %v664, 8
        %v1060 = vpop.permute.xlu0 %1059
        %1061 = vrot.lane.b32.xlu0 %v665, 8
        %v1062 = vpop.permute.xlu0 %1061
        %1063 = vrot.lane.b32.xlu0 %v666, 8
        %v1064 = vpop.permute.xlu0 %1063
        %1065 = vrot.lane.b32.xlu0 %v667, 8
        %v1066 = vpop.permute.xlu0 %1065
        %1067 = vrot.lane.b32.xlu0 %v668, 8
        %v1068 = vpop.permute.xlu0 %1067
        %1069 = vrot.lane.b32.xlu0 %v669, 8
        %v1070 = vpop.permute.xlu0 %1069
        %1071 = vrot.lane.b32.xlu0 %v670, 8
        %v1072 = vpop.permute.xlu0 %1071
        %1073 = vrot.lane.b32.xlu0 %v671, 8
        %v1074 = vpop.permute.xlu0 %1073
        %1075 = vrot.lane.b32.xlu0 %v672, 8
        %v1076 = vpop.permute.xlu0 %1075
        %1077 = vrot.lane.b32.xlu0 %v673, 8
        %v1078 = vpop.permute.xlu0 %1077
        %1079 = vrot.lane.b32.xlu0 %v674, 8
        %v1080 = vpop.permute.xlu0 %1079
        %1081 = vrot.lane.b32.xlu0 %v675, 8
        %v1082 = vpop.permute.xlu0 %1081
        %1083 = vrot.lane.b32.xlu0 %v676, 8
        %v1084 = vpop.permute.xlu0 %1083
        %1085 = vrot.lane.b32.xlu0 %v677, 8
        %v1086 = vpop.permute.xlu0 %1085
        %1087 = vrot.lane.b32.xlu0 %v678, 8
        %v1088 = vpop.permute.xlu0 %1087
        %1089 = vrot.lane.b32.xlu0 %v679, 8
        %v1090 = vpop.permute.xlu0 %1089
        %1091 = vrot.lane.b32.xlu0 %v680, 8
        %v1092 = vpop.permute.xlu0 %1091
        %1093 = vrot.lane.b32.xlu0 %v681, 8
        %v1094 = vpop.permute.xlu0 %1093
        %1095 = vrot.lane.b32.xlu0 %v682, 8
        %v1096 = vpop.permute.xlu0 %1095
        %1097 = vrot.lane.b32.xlu0 %v683, 8
        %v1098 = vpop.permute.xlu0 %1097
        %1099 = vrot.lane.b32.xlu0 %v684, 8
        %v1100 = vpop.permute.xlu0 %1099
        %1101 = vrot.lane.b32.xlu0 %v685, 8
        %v1102 = vpop.permute.xlu0 %1101
        %1103 = vrot.lane.b32.xlu0 %v686, 8
        %v1104 = vpop.permute.xlu0 %1103
        %1105 = vrot.lane.b32.xlu0 %v687, 8
        %v1106 = vpop.permute.xlu0 %1105
        %1107 = vrot.lane.b32.xlu0 %v688, 8
        %v1108 = vpop.permute.xlu0 %1107
        %1109 = vrot.lane.b32.xlu0 %v689, 8
        %v1110 = vpop.permute.xlu0 %1109
        %1111 = vrot.lane.b32.xlu0 %v690, 8
        %v1112 = vpop.permute.xlu0 %1111
        %1113 = vrot.lane.b32.xlu0 %v691, 8
        %v1114 = vpop.permute.xlu0 %1113
        %1115 = vrot.lane.b32.xlu0 %v692, 8
        %v1116 = vpop.permute.xlu0 %1115
        %1117 = vrot.lane.b32.xlu0 %v693, 8
        %v1118 = vpop.permute.xlu0 %1117
        %1119 = vrot.lane.b32.xlu0 %v694, 8
        %v1120 = vpop.permute.xlu0 %1119
        %1121 = vrot.lane.b32.xlu0 %v695, 8
        %v1122 = vpop.permute.xlu0 %1121
        %1123 = vrot.lane.b32.xlu0 %v696, 8
        %v1124 = vpop.permute.xlu0 %1123
        %1125 = vrot.lane.b32.xlu0 %v697, 8
        %v1126 = vpop.permute.xlu0 %1125
        %1127 = vrot.lane.b32.xlu0 %v698, 8
        %v1128 = vpop.permute.xlu0 %1127
        %1129 = vrot.lane.b32.xlu0 %v699, 8
        %v1130 = vpop.permute.xlu0 %1129
        %1131 = vrot.lane.b32.xlu0 %v700, 8
        %v1132 = vpop.permute.xlu0 %1131
        %1133 = vrot.lane.b32.xlu0 %v701, 8
        %v1134 = vpop.permute.xlu0 %1133
        %1135 = vrot.lane.b32.xlu0 %v702, 8
        %v1136 = vpop.permute.xlu0 %1135
        %1137 = vrot.lane.b32.xlu0 %v703, 8
        %v1138 = vpop.permute.xlu0 %1137
        %1139 = vrot.lane.b32.xlu0 %v704, 8
        %v1140 = vpop.permute.xlu0 %1139
        %1141 = vrot.lane.b32.xlu0 %v705, 8
        %v1142 = vpop.permute.xlu0 %1141
        %1143 = vrot.lane.b32.xlu0 %v706, 8
        %v1144 = vpop.permute.xlu0 %1143
        %1145 = vrot.lane.b32.xlu0 %v707, 8
        %v1146 = vpop.permute.xlu0 %1145
        %1147 = vrot.lane.b32.xlu0 %v708, 8
        %v1148 = vpop.permute.xlu0 %1147
        %1149 = vrot.lane.b32.xlu0 %v709, 8
        %v1150 = vpop.permute.xlu0 %1149
        %1151 = vrot.lane.b32.xlu0 %v710, 8
        %v1152 = vpop.permute.xlu0 %1151
        %1153 = vrot.lane.b32.xlu0 %v711, 8
        %v1154 = vpop.permute.xlu0 %1153
        %1155 = vrot.lane.b32.xlu0 %v712, 8
        %v1156 = vpop.permute.xlu0 %1155
        %1259 = vrot.lane.b32.xlu0 %v713, 12
        %v1260 = vpop.permute.xlu0 %1259
        %1261 = vrot.lane.b32.xlu0 %v714, 12
        %v1262 = vpop.permute.xlu0 %1261
        %1263 = vrot.lane.b32.xlu0 %v715, 12
        %v1264 = vpop.permute.xlu0 %1263
        %1265 = vrot.lane.b32.xlu0 %v716, 12
        %v1266 = vpop.permute.xlu0 %1265
        %1267 = vrot.lane.b32.xlu0 %v717, 12
        %v1268 = vpop.permute.xlu0 %1267
        %1269 = vrot.lane.b32.xlu0 %v718, 12
        %v1270 = vpop.permute.xlu0 %1269
        %1271 = vrot.lane.b32.xlu0 %v719, 12
        %v1272 = vpop.permute.xlu0 %1271
        %1273 = vrot.lane.b32.xlu0 %v720, 12
        %v1274 = vpop.permute.xlu0 %1273
        %1275 = vrot.lane.b32.xlu0 %v721, 12
        %v1276 = vpop.permute.xlu0 %1275
        %1277 = vrot.lane.b32.xlu0 %v722, 12
        %v1278 = vpop.permute.xlu0 %1277
        %1279 = vrot.lane.b32.xlu0 %v723, 12
        %v1280 = vpop.permute.xlu0 %1279
        %1281 = vrot.lane.b32.xlu0 %v724, 12
        %v1282 = vpop.permute.xlu0 %1281
        %1283 = vrot.lane.b32.xlu0 %v725, 12
        %v1284 = vpop.permute.xlu0 %1283
        %1285 = vrot.lane.b32.xlu0 %v726, 12
        %v1286 = vpop.permute.xlu0 %1285
        %1287 = vrot.lane.b32.xlu0 %v727, 12
        %v1288 = vpop.permute.xlu0 %1287
        %1289 = vrot.lane.b32.xlu0 %v728, 12
        %v1290 = vpop.permute.xlu0 %1289
        %1291 = vrot.lane.b32.xlu0 %v729, 12
        %v1292 = vpop.permute.xlu0 %1291
        %1293 = vrot.lane.b32.xlu0 %v730, 12
        %v1294 = vpop.permute.xlu0 %1293
        %1295 = vrot.lane.b32.xlu0 %v731, 12
        %v1296 = vpop.permute.xlu0 %1295
        %1297 = vrot.lane.b32.xlu0 %v732, 12
        %v1298 = vpop.permute.xlu0 %1297
        %1299 = vrot.lane.b32.xlu0 %v733, 12
        %v1300 = vpop.permute.xlu0 %1299
        %1301 = vrot.lane.b32.xlu0 %v734, 12
        %v1302 = vpop.permute.xlu0 %1301
        %1303 = vrot.lane.b32.xlu0 %v735, 12
        %v1304 = vpop.permute.xlu0 %1303
        %1305 = vrot.lane.b32.xlu0 %v736, 12
        %v1306 = vpop.permute.xlu0 %1305
        %1307 = vrot.lane.b32.xlu0 %v737, 12
        %v1308 = vpop.permute.xlu0 %1307
        %1309 = vrot.lane.b32.xlu0 %v738, 12
        %v1310 = vpop.permute.xlu0 %1309
        %1311 = vrot.lane.b32.xlu0 %v739, 12
        %v1312 = vpop.permute.xlu0 %1311
        %1313 = vrot.lane.b32.xlu0 %v740, 12
        %v1314 = vpop.permute.xlu0 %1313
        %1315 = vrot.lane.b32.xlu0 %v741, 12
        %v1316 = vpop.permute.xlu0 %1315
        %1317 = vrot.lane.b32.xlu0 %v742, 12
        %v1318 = vpop.permute.xlu0 %1317
        %1319 = vrot.lane.b32.xlu0 %v743, 12
        %v1320 = vpop.permute.xlu0 %1319
        %1321 = vrot.lane.b32.xlu0 %v744, 12
        %v1322 = vpop.permute.xlu0 %1321
        %1323 = vrot.lane.b32.xlu0 %v745, 12
        %v1324 = vpop.permute.xlu0 %1323
        %1325 = vrot.lane.b32.xlu0 %v746, 12
        %v1326 = vpop.permute.xlu0 %1325
        %1327 = vrot.lane.b32.xlu0 %v747, 12
        %v1328 = vpop.permute.xlu0 %1327
        %1329 = vrot.lane.b32.xlu0 %v748, 12
        %v1330 = vpop.permute.xlu0 %1329
        %1331 = vrot.lane.b32.xlu0 %v749, 12
        %v1332 = vpop.permute.xlu0 %1331
        %1333 = vrot.lane.b32.xlu0 %v750, 12
        %v1334 = vpop.permute.xlu0 %1333
        %1335 = vrot.lane.b32.xlu0 %v751, 12
        %v1336 = vpop.permute.xlu0 %1335
        %1337 = vrot.lane.b32.xlu0 %v752, 12
        %v1338 = vpop.permute.xlu0 %1337
        %1339 = vrot.lane.b32.xlu0 %v753, 12
        %v1340 = vpop.permute.xlu0 %1339
        %1341 = vrot.lane.b32.xlu0 %v754, 12
        %v1342 = vpop.permute.xlu0 %1341
        %1343 = vrot.lane.b32.xlu0 %v755, 12
        %v1344 = vpop.permute.xlu0 %1343
        %1345 = vrot.lane.b32.xlu0 %v756, 12
        %v1346 = vpop.permute.xlu0 %1345
        %1347 = vrot.lane.b32.xlu0 %v757, 12
        %v1348 = vpop.permute.xlu0 %1347
        %1349 = vrot.lane.b32.xlu0 %v758, 12
        %v1350 = vpop.permute.xlu0 %1349
        %1351 = vrot.lane.b32.xlu0 %v759, 12
        %v1352 = vpop.permute.xlu0 %1351
        %1353 = vrot.lane.b32.xlu0 %v760, 12
        %v1354 = vpop.permute.xlu0 %1353
        %1355 = vrot.lane.b32.xlu0 %v761, 12
        %v1356 = vpop.permute.xlu0 %1355
        %1357 = vrot.lane.b32.xlu0 %v762, 12
        %v1358 = vpop.permute.xlu0 %1357
        %1359 = vrot.lane.b32.xlu0 %v763, 12
        %v1360 = vpop.permute.xlu0 %1359
        %1463 = vrot.lane.b32.xlu0 %v563, 16
        %v1464 = vpop.permute.xlu0 %1463
        %1465 = vrot.lane.b32.xlu0 %v564, 16
        %v1466 = vpop.permute.xlu0 %1465
        %1467 = vrot.lane.b32.xlu0 %v565, 16
        %v1468 = vpop.permute.xlu0 %1467
        %1469 = vrot.lane.b32.xlu0 %v566, 16
        %v1470 = vpop.permute.xlu0 %1469
        %1471 = vrot.lane.b32.xlu0 %v567, 16
        %v1472 = vpop.permute.xlu0 %1471
        %1473 = vrot.lane.b32.xlu0 %v568, 16
        %v1474 = vpop.permute.xlu0 %1473
        %1475 = vrot.lane.b32.xlu0 %v569, 16
        %v1476 = vpop.permute.xlu0 %1475
        %1477 = vrot.lane.b32.xlu0 %v570, 16
        %v1478 = vpop.permute.xlu0 %1477
        %1479 = vrot.lane.b32.xlu0 %v571, 16
        %v1480 = vpop.permute.xlu0 %1479
        %1481 = vrot.lane.b32.xlu0 %v572, 16
        %v1482 = vpop.permute.xlu0 %1481
        %1483 = vrot.lane.b32.xlu0 %v573, 16
        %v1484 = vpop.permute.xlu0 %1483
        %1485 = vrot.lane.b32.xlu0 %v574, 16
        %v1486 = vpop.permute.xlu0 %1485
        %1487 = vrot.lane.b32.xlu0 %v575, 16
        %v1488 = vpop.permute.xlu0 %1487
        %1489 = vrot.lane.b32.xlu0 %v576, 16
        %v1490 = vpop.permute.xlu0 %1489
        %1491 = vrot.lane.b32.xlu0 %v577, 16
        %v1492 = vpop.permute.xlu0 %1491
        %1493 = vrot.lane.b32.xlu0 %v578, 16
        %v1494 = vpop.permute.xlu0 %1493
        %1495 = vrot.lane.b32.xlu0 %v579, 16
        %v1496 = vpop.permute.xlu0 %1495
        %1497 = vrot.lane.b32.xlu0 %v580, 16
        %v1498 = vpop.permute.xlu0 %1497
        %1499 = vrot.lane.b32.xlu0 %v581, 16
        %v1500 = vpop.permute.xlu0 %1499
        %1501 = vrot.lane.b32.xlu0 %v582, 16
        %v1502 = vpop.permute.xlu0 %1501
        %1503 = vrot.lane.b32.xlu0 %v583, 16
        %v1504 = vpop.permute.xlu0 %1503
        %1505 = vrot.lane.b32.xlu0 %v584, 16
        %v1506 = vpop.permute.xlu0 %1505
        %1507 = vrot.lane.b32.xlu0 %v585, 16
        %v1508 = vpop.permute.xlu0 %1507
        %1509 = vrot.lane.b32.xlu0 %v586, 16
        %v1510 = vpop.permute.xlu0 %1509
        %1511 = vrot.lane.b32.xlu0 %v587, 16
        %v1512 = vpop.permute.xlu0 %1511
        %1513 = vrot.lane.b32.xlu0 %v588, 16
        %v1514 = vpop.permute.xlu0 %1513
        %1515 = vrot.lane.b32.xlu0 %v589, 16
        %v1516 = vpop.permute.xlu0 %1515
        %1517 = vrot.lane.b32.xlu0 %v590, 16
        %v1518 = vpop.permute.xlu0 %1517
        %1519 = vrot.lane.b32.xlu0 %v591, 16
        %v1520 = vpop.permute.xlu0 %1519
        %1521 = vrot.lane.b32.xlu0 %v592, 16
        %v1522 = vpop.permute.xlu0 %1521
        %1523 = vrot.lane.b32.xlu0 %v593, 16
        %v1524 = vpop.permute.xlu0 %1523
        %1525 = vrot.lane.b32.xlu0 %v594, 16
        %v1526 = vpop.permute.xlu0 %1525
        %1527 = vrot.lane.b32.xlu0 %v595, 16
        %v1528 = vpop.permute.xlu0 %1527
        %1529 = vrot.lane.b32.xlu0 %v596, 16
        %v1530 = vpop.permute.xlu0 %1529
        %1531 = vrot.lane.b32.xlu0 %v597, 16
        %v1532 = vpop.permute.xlu0 %1531
        %1533 = vrot.lane.b32.xlu0 %v598, 16
        %v1534 = vpop.permute.xlu0 %1533
        %1535 = vrot.lane.b32.xlu0 %v599, 16
        %v1536 = vpop.permute.xlu0 %1535
        %1537 = vrot.lane.b32.xlu0 %v600, 16
        %v1538 = vpop.permute.xlu0 %1537
        %1539 = vrot.lane.b32.xlu0 %v601, 16
        %v1540 = vpop.permute.xlu0 %1539
        %1541 = vrot.lane.b32.xlu0 %v602, 16
        %v1542 = vpop.permute.xlu0 %1541
        %1543 = vrot.lane.b32.xlu0 %v603, 16
        %v1544 = vpop.permute.xlu0 %1543
        %1545 = vrot.lane.b32.xlu0 %v604, 16
        %v1546 = vpop.permute.xlu0 %1545
        %1547 = vrot.lane.b32.xlu0 %v605, 16
        %v1548 = vpop.permute.xlu0 %1547
        %1549 = vrot.lane.b32.xlu0 %v606, 16
        %v1550 = vpop.permute.xlu0 %1549
        %1551 = vrot.lane.b32.xlu0 %v607, 16
        %v1552 = vpop.permute.xlu0 %1551
        %1553 = vrot.lane.b32.xlu0 %v608, 16
        %v1554 = vpop.permute.xlu0 %1553
        %1555 = vrot.lane.b32.xlu0 %v609, 16
        %v1556 = vpop.permute.xlu0 %1555
        %1557 = vrot.lane.b32.xlu0 %v610, 16
        %v1558 = vpop.permute.xlu0 %1557
        %1559 = vrot.lane.b32.xlu0 %v764, 16
        %v1560 = vpop.permute.xlu0 %1559
        %1561 = vrot.lane.b32.xlu0 %v765, 16
        %v1562 = vpop.permute.xlu0 %1561
        %1563 = vrot.lane.b32.xlu0 %v766, 16
        %v1564 = vpop.permute.xlu0 %1563
        %1619 = vrot.lane.b32.xlu0 %v614, 20
        %v1620 = vpop.permute.xlu0 %1619
        %1621 = vrot.lane.b32.xlu0 %v615, 20
        %v1622 = vpop.permute.xlu0 %1621
        %1623 = vrot.lane.b32.xlu0 %v616, 20
        %v1624 = vpop.permute.xlu0 %1623
        %1625 = vrot.lane.b32.xlu0 %v617, 20
        %v1626 = vpop.permute.xlu0 %1625
        %1627 = vrot.lane.b32.xlu0 %v618, 20
        %v1628 = vpop.permute.xlu0 %1627
        %1629 = vrot.lane.b32.xlu0 %v619, 20
        %v1630 = vpop.permute.xlu0 %1629
        %1631 = vrot.lane.b32.xlu0 %v620, 20
        %v1632 = vpop.permute.xlu0 %1631
        %1633 = vrot.lane.b32.xlu0 %v621, 20
        %v1634 = vpop.permute.xlu0 %1633
        %1635 = vrot.lane.b32.xlu0 %v622, 20
        %v1636 = vpop.permute.xlu0 %1635
        %1637 = vrot.lane.b32.xlu0 %v623, 20
        %v1638 = vpop.permute.xlu0 %1637
        %1639 = vrot.lane.b32.xlu0 %v624, 20
        %v1640 = vpop.permute.xlu0 %1639
        %1641 = vrot.lane.b32.xlu0 %v625, 20
        %v1642 = vpop.permute.xlu0 %1641
        %1643 = vrot.lane.b32.xlu0 %v626, 20
        %v1644 = vpop.permute.xlu0 %1643
        %1645 = vrot.lane.b32.xlu0 %v627, 20
        %v1646 = vpop.permute.xlu0 %1645
        %1647 = vrot.lane.b32.xlu0 %v628, 20
        %v1648 = vpop.permute.xlu0 %1647
        %1649 = vrot.lane.b32.xlu0 %v629, 20
        %v1650 = vpop.permute.xlu0 %1649
        %1651 = vrot.lane.b32.xlu0 %v630, 20
        %v1652 = vpop.permute.xlu0 %1651
        %1653 = vrot.lane.b32.xlu0 %v631, 20
        %v1654 = vpop.permute.xlu0 %1653
        %1655 = vrot.lane.b32.xlu0 %v632, 20
        %v1656 = vpop.permute.xlu0 %1655
        %1657 = vrot.lane.b32.xlu0 %v633, 20
        %v1658 = vpop.permute.xlu0 %1657
        %1659 = vrot.lane.b32.xlu0 %v634, 20
        %v1660 = vpop.permute.xlu0 %1659
        %1661 = vrot.lane.b32.xlu0 %v635, 20
        %v1662 = vpop.permute.xlu0 %1661
        %1663 = vrot.lane.b32.xlu0 %v636, 20
        %v1664 = vpop.permute.xlu0 %1663
        %1665 = vrot.lane.b32.xlu0 %v637, 20
        %v1666 = vpop.permute.xlu0 %1665
        %1667 = vrot.lane.b32.xlu0 %v638, 20
        %v1668 = vpop.permute.xlu0 %1667
        %1669 = vrot.lane.b32.xlu0 %v639, 20
        %v1670 = vpop.permute.xlu0 %1669
        %1671 = vrot.lane.b32.xlu0 %v640, 20
        %v1672 = vpop.permute.xlu0 %1671
        %1673 = vrot.lane.b32.xlu0 %v641, 20
        %v1674 = vpop.permute.xlu0 %1673
        %1675 = vrot.lane.b32.xlu0 %v642, 20
        %v1676 = vpop.permute.xlu0 %1675
        %1677 = vrot.lane.b32.xlu0 %v643, 20
        %v1678 = vpop.permute.xlu0 %1677
        %1679 = vrot.lane.b32.xlu0 %v644, 20
        %v1680 = vpop.permute.xlu0 %1679
        %1681 = vrot.lane.b32.xlu0 %v645, 20
        %v1682 = vpop.permute.xlu0 %1681
        %1683 = vrot.lane.b32.xlu0 %v646, 20
        %v1684 = vpop.permute.xlu0 %1683
        %1685 = vrot.lane.b32.xlu0 %v647, 20
        %v1686 = vpop.permute.xlu0 %1685
        %1687 = vrot.lane.b32.xlu0 %v648, 20
        %v1688 = vpop.permute.xlu0 %1687
        %1689 = vrot.lane.b32.xlu0 %v649, 20
        %v1690 = vpop.permute.xlu0 %1689
        %1691 = vrot.lane.b32.xlu0 %v650, 20
        %v1692 = vpop.permute.xlu0 %1691
        %1693 = vrot.lane.b32.xlu0 %v651, 20
        %v1694 = vpop.permute.xlu0 %1693
        %1695 = vrot.lane.b32.xlu0 %v652, 20
        %v1696 = vpop.permute.xlu0 %1695
        %1697 = vrot.lane.b32.xlu0 %v653, 20
        %v1698 = vpop.permute.xlu0 %1697
        %1699 = vrot.lane.b32.xlu0 %v654, 20
        %v1700 = vpop.permute.xlu0 %1699
        %1701 = vrot.lane.b32.xlu0 %v655, 20
        %v1702 = vpop.permute.xlu0 %1701
        %1703 = vrot.lane.b32.xlu0 %v656, 20
        %v1704 = vpop.permute.xlu0 %1703
        %1705 = vrot.lane.b32.xlu0 %v657, 20
        %v1706 = vpop.permute.xlu0 %1705
        %1707 = vrot.lane.b32.xlu0 %v658, 20
        %v1708 = vpop.permute.xlu0 %1707
        %1709 = vrot.lane.b32.xlu0 %v659, 20
        %v1710 = vpop.permute.xlu0 %1709
        %1711 = vrot.lane.b32.xlu0 %v660, 20
        %v1712 = vpop.permute.xlu0 %1711
        %1713 = vrot.lane.b32.xlu0 %v661, 20
        %v1714 = vpop.permute.xlu0 %1713
        %1715 = vrot.lane.b32.xlu0 %v767, 20
        %v1716 = vpop.permute.xlu0 %1715
        %1717 = vrot.lane.b32.xlu0 %v768, 20
        %v1718 = vpop.permute.xlu0 %1717
        %1719 = vrot.lane.b32.xlu0 %v769, 20
        %v1720 = vpop.permute.xlu0 %1719
        %1775 = vrot.lane.b32.xlu0 %v665, 24
        %v1776 = vpop.permute.xlu0 %1775
        %1777 = vrot.lane.b32.xlu0 %v666, 24
        %v1778 = vpop.permute.xlu0 %1777
        %1779 = vrot.lane.b32.xlu0 %v667, 24
        %v1780 = vpop.permute.xlu0 %1779
        %1781 = vrot.lane.b32.xlu0 %v668, 24
        %v1782 = vpop.permute.xlu0 %1781
        %1783 = vrot.lane.b32.xlu0 %v669, 24
        %v1784 = vpop.permute.xlu0 %1783
        %1785 = vrot.lane.b32.xlu0 %v670, 24
        %v1786 = vpop.permute.xlu0 %1785
        %1787 = vrot.lane.b32.xlu0 %v671, 24
        %v1788 = vpop.permute.xlu0 %1787
        %1789 = vrot.lane.b32.xlu0 %v672, 24
        %v1790 = vpop.permute.xlu0 %1789
        %1791 = vrot.lane.b32.xlu0 %v673, 24
        %v1792 = vpop.permute.xlu0 %1791
        %1793 = vrot.lane.b32.xlu0 %v674, 24
        %v1794 = vpop.permute.xlu0 %1793
        %1795 = vrot.lane.b32.xlu0 %v675, 24
        %v1796 = vpop.permute.xlu0 %1795
        %1797 = vrot.lane.b32.xlu0 %v676, 24
        %v1798 = vpop.permute.xlu0 %1797
        %1799 = vrot.lane.b32.xlu0 %v677, 24
        %v1800 = vpop.permute.xlu0 %1799
        %1801 = vrot.lane.b32.xlu0 %v678, 24
        %v1802 = vpop.permute.xlu0 %1801
        %1803 = vrot.lane.b32.xlu0 %v679, 24
        %v1804 = vpop.permute.xlu0 %1803
        %1805 = vrot.lane.b32.xlu0 %v680, 24
        %v1806 = vpop.permute.xlu0 %1805
        %1807 = vrot.lane.b32.xlu0 %v681, 24
        %v1808 = vpop.permute.xlu0 %1807
        %1809 = vrot.lane.b32.xlu0 %v682, 24
        %v1810 = vpop.permute.xlu0 %1809
        %1811 = vrot.lane.b32.xlu0 %v683, 24
        %v1812 = vpop.permute.xlu0 %1811
        %1813 = vrot.lane.b32.xlu0 %v684, 24
        %v1814 = vpop.permute.xlu0 %1813
        %1815 = vrot.lane.b32.xlu0 %v685, 24
        %v1816 = vpop.permute.xlu0 %1815
        %1817 = vrot.lane.b32.xlu0 %v686, 24
        %v1818 = vpop.permute.xlu0 %1817
        %1819 = vrot.lane.b32.xlu0 %v687, 24
        %v1820 = vpop.permute.xlu0 %1819
        %1821 = vrot.lane.b32.xlu0 %v688, 24
        %v1822 = vpop.permute.xlu0 %1821
        %1823 = vrot.lane.b32.xlu0 %v689, 24
        %v1824 = vpop.permute.xlu0 %1823
        %1825 = vrot.lane.b32.xlu0 %v690, 24
        %v1826 = vpop.permute.xlu0 %1825
        %1827 = vrot.lane.b32.xlu0 %v691, 24
        %v1828 = vpop.permute.xlu0 %1827
        %1829 = vrot.lane.b32.xlu0 %v692, 24
        %v1830 = vpop.permute.xlu0 %1829
        %1831 = vrot.lane.b32.xlu0 %v693, 24
        %v1832 = vpop.permute.xlu0 %1831
        %1833 = vrot.lane.b32.xlu0 %v694, 24
        %v1834 = vpop.permute.xlu0 %1833
        %1835 = vrot.lane.b32.xlu0 %v695, 24
        %v1836 = vpop.permute.xlu0 %1835
        %1837 = vrot.lane.b32.xlu0 %v696, 24
        %v1838 = vpop.permute.xlu0 %1837
        %1839 = vrot.lane.b32.xlu0 %v697, 24
        %v1840 = vpop.permute.xlu0 %1839
        %1841 = vrot.lane.b32.xlu0 %v698, 24
        %v1842 = vpop.permute.xlu0 %1841
        %1843 = vrot.lane.b32.xlu0 %v699, 24
        %v1844 = vpop.permute.xlu0 %1843
        %1845 = vrot.lane.b32.xlu0 %v700, 24
        %v1846 = vpop.permute.xlu0 %1845
        %1847 = vrot.lane.b32.xlu0 %v701, 24
        %v1848 = vpop.permute.xlu0 %1847
        %1849 = vrot.lane.b32.xlu0 %v702, 24
        %v1850 = vpop.permute.xlu0 %1849
        %1851 = vrot.lane.b32.xlu0 %v703, 24
        %v1852 = vpop.permute.xlu0 %1851
        %1853 = vrot.lane.b32.xlu0 %v704, 24
        %v1854 = vpop.permute.xlu0 %1853
        %1855 = vrot.lane.b32.xlu0 %v705, 24
        %v1856 = vpop.permute.xlu0 %1855
        %1857 = vrot.lane.b32.xlu0 %v706, 24
        %v1858 = vpop.permute.xlu0 %1857
        %1859 = vrot.lane.b32.xlu0 %v707, 24
        %v1860 = vpop.permute.xlu0 %1859
        %1861 = vrot.lane.b32.xlu0 %v708, 24
        %v1862 = vpop.permute.xlu0 %1861
        %1863 = vrot.lane.b32.xlu0 %v709, 24
        %v1864 = vpop.permute.xlu0 %1863
        %1865 = vrot.lane.b32.xlu0 %v710, 24
        %v1866 = vpop.permute.xlu0 %1865
        %1867 = vrot.lane.b32.xlu0 %v711, 24
        %v1868 = vpop.permute.xlu0 %1867
        %1869 = vrot.lane.b32.xlu0 %v712, 24
        %v1870 = vpop.permute.xlu0 %1869
        %1871 = vrot.lane.b32.xlu0 %v770, 24
        %v1872 = vpop.permute.xlu0 %1871
        %1873 = vrot.lane.b32.xlu0 %v771, 24
        %v1874 = vpop.permute.xlu0 %1873
        %1875 = vrot.lane.b32.xlu0 %v772, 24
        %v1876 = vpop.permute.xlu0 %1875
        %1931 = vrot.lane.b32.xlu0 %v716, 28
        %v1932 = vpop.permute.xlu0 %1931
        %1933 = vrot.lane.b32.xlu0 %v717, 28
        %v1934 = vpop.permute.xlu0 %1933
        %1935 = vrot.lane.b32.xlu0 %v718, 28
        %v1936 = vpop.permute.xlu0 %1935
        %1937 = vrot.lane.b32.xlu0 %v719, 28
        %v1938 = vpop.permute.xlu0 %1937
        %1939 = vrot.lane.b32.xlu0 %v720, 28
        %v1940 = vpop.permute.xlu0 %1939
        %1941 = vrot.lane.b32.xlu0 %v721, 28
        %v1942 = vpop.permute.xlu0 %1941
        %1943 = vrot.lane.b32.xlu0 %v722, 28
        %v1944 = vpop.permute.xlu0 %1943
        %1945 = vrot.lane.b32.xlu0 %v723, 28
        %v1946 = vpop.permute.xlu0 %1945
        %1947 = vrot.lane.b32.xlu0 %v724, 28
        %v1948 = vpop.permute.xlu0 %1947
        %1949 = vrot.lane.b32.xlu0 %v725, 28
        %v1950 = vpop.permute.xlu0 %1949
        %1951 = vrot.lane.b32.xlu0 %v726, 28
        %v1952 = vpop.permute.xlu0 %1951
        %1953 = vrot.lane.b32.xlu0 %v727, 28
        %v1954 = vpop.permute.xlu0 %1953
        %1955 = vrot.lane.b32.xlu0 %v728, 28
        %v1956 = vpop.permute.xlu0 %1955
        %1957 = vrot.lane.b32.xlu0 %v729, 28
        %v1958 = vpop.permute.xlu0 %1957
        %1959 = vrot.lane.b32.xlu0 %v730, 28
        %v1960 = vpop.permute.xlu0 %1959
        %1961 = vrot.lane.b32.xlu0 %v731, 28
        %v1962 = vpop.permute.xlu0 %1961
        %1963 = vrot.lane.b32.xlu0 %v732, 28
        %v1964 = vpop.permute.xlu0 %1963
        %1965 = vrot.lane.b32.xlu0 %v733, 28
        %v1966 = vpop.permute.xlu0 %1965
        %1967 = vrot.lane.b32.xlu0 %v734, 28
        %v1968 = vpop.permute.xlu0 %1967
        %1969 = vrot.lane.b32.xlu0 %v735, 28
        %v1970 = vpop.permute.xlu0 %1969
        %1971 = vrot.lane.b32.xlu0 %v736, 28
        %v1972 = vpop.permute.xlu0 %1971
        %1973 = vrot.lane.b32.xlu0 %v737, 28
        %v1974 = vpop.permute.xlu0 %1973
        %1975 = vrot.lane.b32.xlu0 %v738, 28
        %v1976 = vpop.permute.xlu0 %1975
        %1977 = vrot.lane.b32.xlu0 %v739, 28
        %v1978 = vpop.permute.xlu0 %1977
        %1979 = vrot.lane.b32.xlu0 %v740, 28
        %v1980 = vpop.permute.xlu0 %1979
        %1981 = vrot.lane.b32.xlu0 %v741, 28
        %v1982 = vpop.permute.xlu0 %1981
        %1983 = vrot.lane.b32.xlu0 %v742, 28
        %v1984 = vpop.permute.xlu0 %1983
        %1985 = vrot.lane.b32.xlu0 %v743, 28
        %v1986 = vpop.permute.xlu0 %1985
        %1987 = vrot.lane.b32.xlu0 %v744, 28
        %v1988 = vpop.permute.xlu0 %1987
        %1989 = vrot.lane.b32.xlu0 %v745, 28
        %v1990 = vpop.permute.xlu0 %1989
        %1991 = vrot.lane.b32.xlu0 %v746, 28
        %v1992 = vpop.permute.xlu0 %1991
        %1993 = vrot.lane.b32.xlu0 %v747, 28
        %v1994 = vpop.permute.xlu0 %1993
        %1995 = vrot.lane.b32.xlu0 %v748, 28
        %v1996 = vpop.permute.xlu0 %1995
        %1997 = vrot.lane.b32.xlu0 %v749, 28
        %v1998 = vpop.permute.xlu0 %1997
        %1999 = vrot.lane.b32.xlu0 %v750, 28
        %v2000 = vpop.permute.xlu0 %1999
        %2001 = vrot.lane.b32.xlu0 %v751, 28
        %v2002 = vpop.permute.xlu0 %2001
        %2003 = vrot.lane.b32.xlu0 %v752, 28
        %v2004 = vpop.permute.xlu0 %2003
        %2005 = vrot.lane.b32.xlu0 %v753, 28
        %v2006 = vpop.permute.xlu0 %2005
        %2007 = vrot.lane.b32.xlu0 %v754, 28
        %v2008 = vpop.permute.xlu0 %2007
        %2009 = vrot.lane.b32.xlu0 %v755, 28
        %v2010 = vpop.permute.xlu0 %2009
        %2011 = vrot.lane.b32.xlu0 %v756, 28
        %v2012 = vpop.permute.xlu0 %2011
        %2013 = vrot.lane.b32.xlu0 %v757, 28
        %v2014 = vpop.permute.xlu0 %2013
        %2015 = vrot.lane.b32.xlu0 %v758, 28
        %v2016 = vpop.permute.xlu0 %2015
        %2017 = vrot.lane.b32.xlu0 %v759, 28
        %v2018 = vpop.permute.xlu0 %2017
        %2019 = vrot.lane.b32.xlu0 %v760, 28
        %v2020 = vpop.permute.xlu0 %2019
        %2021 = vrot.lane.b32.xlu0 %v761, 28
        %v2022 = vpop.permute.xlu0 %2021
        %2023 = vrot.lane.b32.xlu0 %v762, 28
        %v2024 = vpop.permute.xlu0 %2023
        %2025 = vrot.lane.b32.xlu0 %v763, 28
        %v2026 = vpop.permute.xlu0 %2025
        %2027 = vrot.lane.b32.xlu0 %v773, 28
        %v2028 = vpop.permute.xlu0 %2027
        %2029 = vrot.lane.b32.xlu0 %v774, 28
        %v2030 = vpop.permute.xlu0 %2029
        %2031 = vrot.lane.b32.xlu0 %v775, 28
        %v2032 = vpop.permute.xlu0 %2031
        %2087 = vrot.lane.b32.xlu0 %v566, 32
        %v2088 = vpop.permute.xlu0 %2087
        %2089 = vrot.lane.b32.xlu0 %v567, 32
        %v2090 = vpop.permute.xlu0 %2089
        %2091 = vrot.lane.b32.xlu0 %v568, 32
        %v2092 = vpop.permute.xlu0 %2091
        %2093 = vrot.lane.b32.xlu0 %v569, 32
        %v2094 = vpop.permute.xlu0 %2093
        %2095 = vrot.lane.b32.xlu0 %v570, 32
        %v2096 = vpop.permute.xlu0 %2095
        %2097 = vrot.lane.b32.xlu0 %v571, 32
        %v2098 = vpop.permute.xlu0 %2097
        %2099 = vrot.lane.b32.xlu0 %v572, 32
        %v2100 = vpop.permute.xlu0 %2099
        %2101 = vrot.lane.b32.xlu0 %v573, 32
        %v2102 = vpop.permute.xlu0 %2101
        %2103 = vrot.lane.b32.xlu0 %v574, 32
        %v2104 = vpop.permute.xlu0 %2103
        %2105 = vrot.lane.b32.xlu0 %v575, 32
        %v2106 = vpop.permute.xlu0 %2105
        %2107 = vrot.lane.b32.xlu0 %v576, 32
        %v2108 = vpop.permute.xlu0 %2107
        %2109 = vrot.lane.b32.xlu0 %v577, 32
        %v2110 = vpop.permute.xlu0 %2109
        %2111 = vrot.lane.b32.xlu0 %v578, 32
        %v2112 = vpop.permute.xlu0 %2111
        %2113 = vrot.lane.b32.xlu0 %v579, 32
        %v2114 = vpop.permute.xlu0 %2113
        %2115 = vrot.lane.b32.xlu0 %v580, 32
        %v2116 = vpop.permute.xlu0 %2115
        %2117 = vrot.lane.b32.xlu0 %v581, 32
        %v2118 = vpop.permute.xlu0 %2117
        %2119 = vrot.lane.b32.xlu0 %v582, 32
        %v2120 = vpop.permute.xlu0 %2119
        %2121 = vrot.lane.b32.xlu0 %v583, 32
        %v2122 = vpop.permute.xlu0 %2121
        %2123 = vrot.lane.b32.xlu0 %v584, 32
        %v2124 = vpop.permute.xlu0 %2123
        %2125 = vrot.lane.b32.xlu0 %v585, 32
        %v2126 = vpop.permute.xlu0 %2125
        %2127 = vrot.lane.b32.xlu0 %v586, 32
        %v2128 = vpop.permute.xlu0 %2127
        %2129 = vrot.lane.b32.xlu0 %v587, 32
        %v2130 = vpop.permute.xlu0 %2129
        %2131 = vrot.lane.b32.xlu0 %v588, 32
        %v2132 = vpop.permute.xlu0 %2131
        %2133 = vrot.lane.b32.xlu0 %v589, 32
        %v2134 = vpop.permute.xlu0 %2133
        %2135 = vrot.lane.b32.xlu0 %v590, 32
        %v2136 = vpop.permute.xlu0 %2135
        %2137 = vrot.lane.b32.xlu0 %v591, 32
        %v2138 = vpop.permute.xlu0 %2137
        %2139 = vrot.lane.b32.xlu0 %v592, 32
        %v2140 = vpop.permute.xlu0 %2139
        %2141 = vrot.lane.b32.xlu0 %v593, 32
        %v2142 = vpop.permute.xlu0 %2141
        %2143 = vrot.lane.b32.xlu0 %v594, 32
        %v2144 = vpop.permute.xlu0 %2143
        %2145 = vrot.lane.b32.xlu0 %v595, 32
        %v2146 = vpop.permute.xlu0 %2145
        %2147 = vrot.lane.b32.xlu0 %v596, 32
        %v2148 = vpop.permute.xlu0 %2147
        %2149 = vrot.lane.b32.xlu0 %v597, 32
        %v2150 = vpop.permute.xlu0 %2149
        %2151 = vrot.lane.b32.xlu0 %v598, 32
        %v2152 = vpop.permute.xlu0 %2151
        %2153 = vrot.lane.b32.xlu0 %v599, 32
        %v2154 = vpop.permute.xlu0 %2153
        %2155 = vrot.lane.b32.xlu0 %v600, 32
        %v2156 = vpop.permute.xlu0 %2155
        %2157 = vrot.lane.b32.xlu0 %v601, 32
        %v2158 = vpop.permute.xlu0 %2157
        %2159 = vrot.lane.b32.xlu0 %v602, 32
        %v2160 = vpop.permute.xlu0 %2159
        %2161 = vrot.lane.b32.xlu0 %v603, 32
        %v2162 = vpop.permute.xlu0 %2161
        %2163 = vrot.lane.b32.xlu0 %v604, 32
        %v2164 = vpop.permute.xlu0 %2163
        %2165 = vrot.lane.b32.xlu0 %v605, 32
        %v2166 = vpop.permute.xlu0 %2165
        %2167 = vrot.lane.b32.xlu0 %v606, 32
        %v2168 = vpop.permute.xlu0 %2167
        %2169 = vrot.lane.b32.xlu0 %v607, 32
        %v2170 = vpop.permute.xlu0 %2169
        %2171 = vrot.lane.b32.xlu0 %v608, 32
        %v2172 = vpop.permute.xlu0 %2171
        %2173 = vrot.lane.b32.xlu0 %v609, 32
        %v2174 = vpop.permute.xlu0 %2173
        %2175 = vrot.lane.b32.xlu0 %v610, 32
        %v2176 = vpop.permute.xlu0 %2175
        %2177 = vrot.lane.b32.xlu0 %v764, 32
        %v2178 = vpop.permute.xlu0 %2177
        %2179 = vrot.lane.b32.xlu0 %v765, 32
        %v2180 = vpop.permute.xlu0 %2179
        %2181 = vrot.lane.b32.xlu0 %v766, 32
        %v2182 = vpop.permute.xlu0 %2181
        %2183 = vrot.lane.b32.xlu0 %v776, 32
        %v2184 = vpop.permute.xlu0 %2183
        %2185 = vrot.lane.b32.xlu0 %v777, 32
        %v2186 = vpop.permute.xlu0 %2185
        %2187 = vrot.lane.b32.xlu0 %v778, 32
        %v2188 = vpop.permute.xlu0 %2187
        %2243 = vrot.lane.b32.xlu0 %v617, 36
        %v2244 = vpop.permute.xlu0 %2243
        %2245 = vrot.lane.b32.xlu0 %v618, 36
        %v2246 = vpop.permute.xlu0 %2245
        %2247 = vrot.lane.b32.xlu0 %v619, 36
        %v2248 = vpop.permute.xlu0 %2247
        %2249 = vrot.lane.b32.xlu0 %v620, 36
        %v2250 = vpop.permute.xlu0 %2249
        %2251 = vrot.lane.b32.xlu0 %v621, 36
        %v2252 = vpop.permute.xlu0 %2251
        %2253 = vrot.lane.b32.xlu0 %v622, 36
        %v2254 = vpop.permute.xlu0 %2253
        %2255 = vrot.lane.b32.xlu0 %v623, 36
        %v2256 = vpop.permute.xlu0 %2255
        %2257 = vrot.lane.b32.xlu0 %v624, 36
        %v2258 = vpop.permute.xlu0 %2257
        %2259 = vrot.lane.b32.xlu0 %v625, 36
        %v2260 = vpop.permute.xlu0 %2259
        %2261 = vrot.lane.b32.xlu0 %v626, 36
        %v2262 = vpop.permute.xlu0 %2261
        %2263 = vrot.lane.b32.xlu0 %v627, 36
        %v2264 = vpop.permute.xlu0 %2263
        %2265 = vrot.lane.b32.xlu0 %v628, 36
        %v2266 = vpop.permute.xlu0 %2265
        %2267 = vrot.lane.b32.xlu0 %v629, 36
        %v2268 = vpop.permute.xlu0 %2267
        %2269 = vrot.lane.b32.xlu0 %v630, 36
        %v2270 = vpop.permute.xlu0 %2269
        %2271 = vrot.lane.b32.xlu0 %v631, 36
        %v2272 = vpop.permute.xlu0 %2271
        %2273 = vrot.lane.b32.xlu0 %v632, 36
        %v2274 = vpop.permute.xlu0 %2273
        %2275 = vrot.lane.b32.xlu0 %v633, 36
        %v2276 = vpop.permute.xlu0 %2275
        %2277 = vrot.lane.b32.xlu0 %v634, 36
        %v2278 = vpop.permute.xlu0 %2277
        %2279 = vrot.lane.b32.xlu0 %v635, 36
        %v2280 = vpop.permute.xlu0 %2279
        %2281 = vrot.lane.b32.xlu0 %v636, 36
        %v2282 = vpop.permute.xlu0 %2281
        %2283 = vrot.lane.b32.xlu0 %v637, 36
        %v2284 = vpop.permute.xlu0 %2283
        %2285 = vrot.lane.b32.xlu0 %v638, 36
        %v2286 = vpop.permute.xlu0 %2285
        %2287 = vrot.lane.b32.xlu0 %v639, 36
        %v2288 = vpop.permute.xlu0 %2287
        %2289 = vrot.lane.b32.xlu0 %v640, 36
        %v2290 = vpop.permute.xlu0 %2289
        %2291 = vrot.lane.b32.xlu0 %v641, 36
        %v2292 = vpop.permute.xlu0 %2291
        %2293 = vrot.lane.b32.xlu0 %v642, 36
        %v2294 = vpop.permute.xlu0 %2293
        %2295 = vrot.lane.b32.xlu0 %v643, 36
        %v2296 = vpop.permute.xlu0 %2295
        %2297 = vrot.lane.b32.xlu0 %v644, 36
        %v2298 = vpop.permute.xlu0 %2297
        %2299 = vrot.lane.b32.xlu0 %v645, 36
        %v2300 = vpop.permute.xlu0 %2299
        %2301 = vrot.lane.b32.xlu0 %v646, 36
        %v2302 = vpop.permute.xlu0 %2301
        %2303 = vrot.lane.b32.xlu0 %v647, 36
        %v2304 = vpop.permute.xlu0 %2303
        %2305 = vrot.lane.b32.xlu0 %v648, 36
        %v2306 = vpop.permute.xlu0 %2305
        %2307 = vrot.lane.b32.xlu0 %v649, 36
        %v2308 = vpop.permute.xlu0 %2307
        %2309 = vrot.lane.b32.xlu0 %v650, 36
        %v2310 = vpop.permute.xlu0 %2309
        %2311 = vrot.lane.b32.xlu0 %v651, 36
        %v2312 = vpop.permute.xlu0 %2311
        %2313 = vrot.lane.b32.xlu0 %v652, 36
        %v2314 = vpop.permute.xlu0 %2313
        %2315 = vrot.lane.b32.xlu0 %v653, 36
        %v2316 = vpop.permute.xlu0 %2315
        %2317 = vrot.lane.b32.xlu0 %v654, 36
        %v2318 = vpop.permute.xlu0 %2317
        %2319 = vrot.lane.b32.xlu0 %v655, 36
        %v2320 = vpop.permute.xlu0 %2319
        %2321 = vrot.lane.b32.xlu0 %v656, 36
        %v2322 = vpop.permute.xlu0 %2321
        %2323 = vrot.lane.b32.xlu0 %v657, 36
        %v2324 = vpop.permute.xlu0 %2323
        %2325 = vrot.lane.b32.xlu0 %v658, 36
        %v2326 = vpop.permute.xlu0 %2325
        %2327 = vrot.lane.b32.xlu0 %v659, 36
        %v2328 = vpop.permute.xlu0 %2327
        %2329 = vrot.lane.b32.xlu0 %v660, 36
        %v2330 = vpop.permute.xlu0 %2329
        %2331 = vrot.lane.b32.xlu0 %v661, 36
        %v2332 = vpop.permute.xlu0 %2331
        %2333 = vrot.lane.b32.xlu0 %v767, 36
        %v2334 = vpop.permute.xlu0 %2333
        %2335 = vrot.lane.b32.xlu0 %v768, 36
        %v2336 = vpop.permute.xlu0 %2335
        %2337 = vrot.lane.b32.xlu0 %v769, 36
        %v2338 = vpop.permute.xlu0 %2337
        %2339 = vrot.lane.b32.xlu0 %v779, 36
        %v2340 = vpop.permute.xlu0 %2339
        %2341 = vrot.lane.b32.xlu0 %v780, 36
        %v2342 = vpop.permute.xlu0 %2341
        %2343 = vrot.lane.b32.xlu0 %v781, 36
        %v2344 = vpop.permute.xlu0 %2343
        %2399 = vrot.lane.b32.xlu0 %v668, 40
        %v2400 = vpop.permute.xlu0 %2399
        %2401 = vrot.lane.b32.xlu0 %v669, 40
        %v2402 = vpop.permute.xlu0 %2401
        %2403 = vrot.lane.b32.xlu0 %v670, 40
        %v2404 = vpop.permute.xlu0 %2403
        %2405 = vrot.lane.b32.xlu0 %v671, 40
        %v2406 = vpop.permute.xlu0 %2405
        %2407 = vrot.lane.b32.xlu0 %v672, 40
        %v2408 = vpop.permute.xlu0 %2407
        %2409 = vrot.lane.b32.xlu0 %v673, 40
        %v2410 = vpop.permute.xlu0 %2409
        %2411 = vrot.lane.b32.xlu0 %v674, 40
        %v2412 = vpop.permute.xlu0 %2411
        %2413 = vrot.lane.b32.xlu0 %v675, 40
        %v2414 = vpop.permute.xlu0 %2413
        %2415 = vrot.lane.b32.xlu0 %v676, 40
        %v2416 = vpop.permute.xlu0 %2415
        %2417 = vrot.lane.b32.xlu0 %v677, 40
        %v2418 = vpop.permute.xlu0 %2417
        %2419 = vrot.lane.b32.xlu0 %v678, 40
        %v2420 = vpop.permute.xlu0 %2419
        %2421 = vrot.lane.b32.xlu0 %v679, 40
        %v2422 = vpop.permute.xlu0 %2421
        %2423 = vrot.lane.b32.xlu0 %v680, 40
        %v2424 = vpop.permute.xlu0 %2423
        %2425 = vrot.lane.b32.xlu0 %v681, 40
        %v2426 = vpop.permute.xlu0 %2425
        %2427 = vrot.lane.b32.xlu0 %v682, 40
        %v2428 = vpop.permute.xlu0 %2427
        %2429 = vrot.lane.b32.xlu0 %v683, 40
        %v2430 = vpop.permute.xlu0 %2429
        %2431 = vrot.lane.b32.xlu0 %v684, 40
        %v2432 = vpop.permute.xlu0 %2431
        %2433 = vrot.lane.b32.xlu0 %v685, 40
        %v2434 = vpop.permute.xlu0 %2433
        %2435 = vrot.lane.b32.xlu0 %v686, 40
        %v2436 = vpop.permute.xlu0 %2435
        %2437 = vrot.lane.b32.xlu0 %v687, 40
        %v2438 = vpop.permute.xlu0 %2437
        %2439 = vrot.lane.b32.xlu0 %v688, 40
        %v2440 = vpop.permute.xlu0 %2439
        %2441 = vrot.lane.b32.xlu0 %v689, 40
        %v2442 = vpop.permute.xlu0 %2441
        %2443 = vrot.lane.b32.xlu0 %v690, 40
        %v2444 = vpop.permute.xlu0 %2443
        %2445 = vrot.lane.b32.xlu0 %v691, 40
        %v2446 = vpop.permute.xlu0 %2445
        %2447 = vrot.lane.b32.xlu0 %v692, 40
        %v2448 = vpop.permute.xlu0 %2447
        %2449 = vrot.lane.b32.xlu0 %v693, 40
        %v2450 = vpop.permute.xlu0 %2449
        %2451 = vrot.lane.b32.xlu0 %v694, 40
        %v2452 = vpop.permute.xlu0 %2451
        %2453 = vrot.lane.b32.xlu0 %v695, 40
        %v2454 = vpop.permute.xlu0 %2453
        %2455 = vrot.lane.b32.xlu0 %v696, 40
        %v2456 = vpop.permute.xlu0 %2455
        %2457 = vrot.lane.b32.xlu0 %v697, 40
        %v2458 = vpop.permute.xlu0 %2457
        %2459 = vrot.lane.b32.xlu0 %v698, 40
        %v2460 = vpop.permute.xlu0 %2459
        %2461 = vrot.lane.b32.xlu0 %v699, 40
        %v2462 = vpop.permute.xlu0 %2461
        %2463 = vrot.lane.b32.xlu0 %v700, 40
        %v2464 = vpop.permute.xlu0 %2463
        %2465 = vrot.lane.b32.xlu0 %v701, 40
        %v2466 = vpop.permute.xlu0 %2465
        %2467 = vrot.lane.b32.xlu0 %v702, 40
        %v2468 = vpop.permute.xlu0 %2467
        %2469 = vrot.lane.b32.xlu0 %v703, 40
        %v2470 = vpop.permute.xlu0 %2469
        %2471 = vrot.lane.b32.xlu0 %v704, 40
        %v2472 = vpop.permute.xlu0 %2471
        %2473 = vrot.lane.b32.xlu0 %v705, 40
        %v2474 = vpop.permute.xlu0 %2473
        %2475 = vrot.lane.b32.xlu0 %v706, 40
        %v2476 = vpop.permute.xlu0 %2475
        %2477 = vrot.lane.b32.xlu0 %v707, 40
        %v2478 = vpop.permute.xlu0 %2477
        %2479 = vrot.lane.b32.xlu0 %v708, 40
        %v2480 = vpop.permute.xlu0 %2479
        %2481 = vrot.lane.b32.xlu0 %v709, 40
        %v2482 = vpop.permute.xlu0 %2481
        %2483 = vrot.lane.b32.xlu0 %v710, 40
        %v2484 = vpop.permute.xlu0 %2483
        %2485 = vrot.lane.b32.xlu0 %v711, 40
        %v2486 = vpop.permute.xlu0 %2485
        %2487 = vrot.lane.b32.xlu0 %v712, 40
        %v2488 = vpop.permute.xlu0 %2487
        %2489 = vrot.lane.b32.xlu0 %v770, 40
        %v2490 = vpop.permute.xlu0 %2489
        %2491 = vrot.lane.b32.xlu0 %v771, 40
        %v2492 = vpop.permute.xlu0 %2491
        %2493 = vrot.lane.b32.xlu0 %v772, 40
        %v2494 = vpop.permute.xlu0 %2493
        %2495 = vrot.lane.b32.xlu0 %v782, 40
        %v2496 = vpop.permute.xlu0 %2495
        %2497 = vrot.lane.b32.xlu0 %v783, 40
        %v2498 = vpop.permute.xlu0 %2497
        %2499 = vrot.lane.b32.xlu0 %v784, 40
        %v2500 = vpop.permute.xlu0 %2499
        %2555 = vrot.lane.b32.xlu0 %v719, 44
        %v2556 = vpop.permute.xlu0 %2555
        %2557 = vrot.lane.b32.xlu0 %v720, 44
        %v2558 = vpop.permute.xlu0 %2557
        %2559 = vrot.lane.b32.xlu0 %v721, 44
        %v2560 = vpop.permute.xlu0 %2559
        %2561 = vrot.lane.b32.xlu0 %v722, 44
        %v2562 = vpop.permute.xlu0 %2561
        %2563 = vrot.lane.b32.xlu0 %v723, 44
        %v2564 = vpop.permute.xlu0 %2563
        %2565 = vrot.lane.b32.xlu0 %v724, 44
        %v2566 = vpop.permute.xlu0 %2565
        %2567 = vrot.lane.b32.xlu0 %v725, 44
        %v2568 = vpop.permute.xlu0 %2567
        %2569 = vrot.lane.b32.xlu0 %v726, 44
        %v2570 = vpop.permute.xlu0 %2569
        %2571 = vrot.lane.b32.xlu0 %v727, 44
        %v2572 = vpop.permute.xlu0 %2571
        %2573 = vrot.lane.b32.xlu0 %v728, 44
        %v2574 = vpop.permute.xlu0 %2573
        %2575 = vrot.lane.b32.xlu0 %v729, 44
        %v2576 = vpop.permute.xlu0 %2575
        %2577 = vrot.lane.b32.xlu0 %v730, 44
        %v2578 = vpop.permute.xlu0 %2577
        %2579 = vrot.lane.b32.xlu0 %v731, 44
        %v2580 = vpop.permute.xlu0 %2579
        %2581 = vrot.lane.b32.xlu0 %v732, 44
        %v2582 = vpop.permute.xlu0 %2581
        %2583 = vrot.lane.b32.xlu0 %v733, 44
        %v2584 = vpop.permute.xlu0 %2583
        %2585 = vrot.lane.b32.xlu0 %v734, 44
        %v2586 = vpop.permute.xlu0 %2585
        %2587 = vrot.lane.b32.xlu0 %v735, 44
        %v2588 = vpop.permute.xlu0 %2587
        %2589 = vrot.lane.b32.xlu0 %v736, 44
        %v2590 = vpop.permute.xlu0 %2589
        %2591 = vrot.lane.b32.xlu0 %v737, 44
        %v2592 = vpop.permute.xlu0 %2591
        %2593 = vrot.lane.b32.xlu0 %v738, 44
        %v2594 = vpop.permute.xlu0 %2593
        %2595 = vrot.lane.b32.xlu0 %v739, 44
        %v2596 = vpop.permute.xlu0 %2595
        %2597 = vrot.lane.b32.xlu0 %v740, 44
        %v2598 = vpop.permute.xlu0 %2597
        %2599 = vrot.lane.b32.xlu0 %v741, 44
        %v2600 = vpop.permute.xlu0 %2599
        %2601 = vrot.lane.b32.xlu0 %v742, 44
        %v2602 = vpop.permute.xlu0 %2601
        %2603 = vrot.lane.b32.xlu0 %v743, 44
        %v2604 = vpop.permute.xlu0 %2603
        %2605 = vrot.lane.b32.xlu0 %v744, 44
        %v2606 = vpop.permute.xlu0 %2605
        %2607 = vrot.lane.b32.xlu0 %v745, 44
        %v2608 = vpop.permute.xlu0 %2607
        %2609 = vrot.lane.b32.xlu0 %v746, 44
        %v2610 = vpop.permute.xlu0 %2609
        %2611 = vrot.lane.b32.xlu0 %v747, 44
        %v2612 = vpop.permute.xlu0 %2611
        %2613 = vrot.lane.b32.xlu0 %v748, 44
        %v2614 = vpop.permute.xlu0 %2613
        %2615 = vrot.lane.b32.xlu0 %v749, 44
        %v2616 = vpop.permute.xlu0 %2615
        %2617 = vrot.lane.b32.xlu0 %v750, 44
        %v2618 = vpop.permute.xlu0 %2617
        %2619 = vrot.lane.b32.xlu0 %v751, 44
        %v2620 = vpop.permute.xlu0 %2619
        %2621 = vrot.lane.b32.xlu0 %v752, 44
        %v2622 = vpop.permute.xlu0 %2621
        %2623 = vrot.lane.b32.xlu0 %v753, 44
        %v2624 = vpop.permute.xlu0 %2623
        %2625 = vrot.lane.b32.xlu0 %v754, 44
        %v2626 = vpop.permute.xlu0 %2625
        %2627 = vrot.lane.b32.xlu0 %v755, 44
        %v2628 = vpop.permute.xlu0 %2627
        %2629 = vrot.lane.b32.xlu0 %v756, 44
        %v2630 = vpop.permute.xlu0 %2629
        %2631 = vrot.lane.b32.xlu0 %v757, 44
        %v2632 = vpop.permute.xlu0 %2631
        %2633 = vrot.lane.b32.xlu0 %v758, 44
        %v2634 = vpop.permute.xlu0 %2633
        %2635 = vrot.lane.b32.xlu0 %v759, 44
        %v2636 = vpop.permute.xlu0 %2635
        %2637 = vrot.lane.b32.xlu0 %v760, 44
        %v2638 = vpop.permute.xlu0 %2637
        %2639 = vrot.lane.b32.xlu0 %v761, 44
        %v2640 = vpop.permute.xlu0 %2639
        %2641 = vrot.lane.b32.xlu0 %v762, 44
        %v2642 = vpop.permute.xlu0 %2641
        %2643 = vrot.lane.b32.xlu0 %v763, 44
        %v2644 = vpop.permute.xlu0 %2643
        %2645 = vrot.lane.b32.xlu0 %v773, 44
        %v2646 = vpop.permute.xlu0 %2645
        %2647 = vrot.lane.b32.xlu0 %v774, 44
        %v2648 = vpop.permute.xlu0 %2647
        %2649 = vrot.lane.b32.xlu0 %v775, 44
        %v2650 = vpop.permute.xlu0 %2649
        %2651 = vrot.lane.b32.xlu0 %v785, 44
        %v2652 = vpop.permute.xlu0 %2651
        %2653 = vrot.lane.b32.xlu0 %v786, 44
        %v2654 = vpop.permute.xlu0 %2653
        %2655 = vrot.lane.b32.xlu0 %v787, 44
        %v2656 = vpop.permute.xlu0 %2655
        %2711 = vrot.lane.b32.xlu0 %v569, 48
        %v2712 = vpop.permute.xlu0 %2711
        %2713 = vrot.lane.b32.xlu0 %v570, 48
        %v2714 = vpop.permute.xlu0 %2713
        %2715 = vrot.lane.b32.xlu0 %v571, 48
        %v2716 = vpop.permute.xlu0 %2715
        %2717 = vrot.lane.b32.xlu0 %v572, 48
        %v2718 = vpop.permute.xlu0 %2717
        %2719 = vrot.lane.b32.xlu0 %v573, 48
        %v2720 = vpop.permute.xlu0 %2719
        %2721 = vrot.lane.b32.xlu0 %v574, 48
        %v2722 = vpop.permute.xlu0 %2721
        %2723 = vrot.lane.b32.xlu0 %v575, 48
        %v2724 = vpop.permute.xlu0 %2723
        %2725 = vrot.lane.b32.xlu0 %v576, 48
        %v2726 = vpop.permute.xlu0 %2725
        %2727 = vrot.lane.b32.xlu0 %v577, 48
        %v2728 = vpop.permute.xlu0 %2727
        %2729 = vrot.lane.b32.xlu0 %v578, 48
        %v2730 = vpop.permute.xlu0 %2729
        %2731 = vrot.lane.b32.xlu0 %v579, 48
        %v2732 = vpop.permute.xlu0 %2731
        %2733 = vrot.lane.b32.xlu0 %v580, 48
        %v2734 = vpop.permute.xlu0 %2733
        %2735 = vrot.lane.b32.xlu0 %v581, 48
        %v2736 = vpop.permute.xlu0 %2735
        %2737 = vrot.lane.b32.xlu0 %v582, 48
        %v2738 = vpop.permute.xlu0 %2737
        %2739 = vrot.lane.b32.xlu0 %v583, 48
        %v2740 = vpop.permute.xlu0 %2739
        %2741 = vrot.lane.b32.xlu0 %v584, 48
        %v2742 = vpop.permute.xlu0 %2741
        %2743 = vrot.lane.b32.xlu0 %v585, 48
        %v2744 = vpop.permute.xlu0 %2743
        %2745 = vrot.lane.b32.xlu0 %v586, 48
        %v2746 = vpop.permute.xlu0 %2745
        %2747 = vrot.lane.b32.xlu0 %v587, 48
        %v2748 = vpop.permute.xlu0 %2747
        %2749 = vrot.lane.b32.xlu0 %v588, 48
        %v2750 = vpop.permute.xlu0 %2749
        %2751 = vrot.lane.b32.xlu0 %v589, 48
        %v2752 = vpop.permute.xlu0 %2751
        %2753 = vrot.lane.b32.xlu0 %v590, 48
        %v2754 = vpop.permute.xlu0 %2753
        %2755 = vrot.lane.b32.xlu0 %v591, 48
        %v2756 = vpop.permute.xlu0 %2755
        %2757 = vrot.lane.b32.xlu0 %v592, 48
        %v2758 = vpop.permute.xlu0 %2757
        %2759 = vrot.lane.b32.xlu0 %v593, 48
        %v2760 = vpop.permute.xlu0 %2759
        %2761 = vrot.lane.b32.xlu0 %v594, 48
        %v2762 = vpop.permute.xlu0 %2761
        %2763 = vrot.lane.b32.xlu0 %v595, 48
        %v2764 = vpop.permute.xlu0 %2763
        %2765 = vrot.lane.b32.xlu0 %v596, 48
        %v2766 = vpop.permute.xlu0 %2765
        %2767 = vrot.lane.b32.xlu0 %v597, 48
        %v2768 = vpop.permute.xlu0 %2767
        %2769 = vrot.lane.b32.xlu0 %v598, 48
        %v2770 = vpop.permute.xlu0 %2769
        %2771 = vrot.lane.b32.xlu0 %v599, 48
        %v2772 = vpop.permute.xlu0 %2771
        %2773 = vrot.lane.b32.xlu0 %v600, 48
        %v2774 = vpop.permute.xlu0 %2773
        %2775 = vrot.lane.b32.xlu0 %v601, 48
        %v2776 = vpop.permute.xlu0 %2775
        %2777 = vrot.lane.b32.xlu0 %v602, 48
        %v2778 = vpop.permute.xlu0 %2777
        %2779 = vrot.lane.b32.xlu0 %v603, 48
        %v2780 = vpop.permute.xlu0 %2779
        %2781 = vrot.lane.b32.xlu0 %v604, 48
        %v2782 = vpop.permute.xlu0 %2781
        %2783 = vrot.lane.b32.xlu0 %v605, 48
        %v2784 = vpop.permute.xlu0 %2783
        %2785 = vrot.lane.b32.xlu0 %v606, 48
        %v2786 = vpop.permute.xlu0 %2785
        %2787 = vrot.lane.b32.xlu0 %v607, 48
        %v2788 = vpop.permute.xlu0 %2787
        %2789 = vrot.lane.b32.xlu0 %v608, 48
        %v2790 = vpop.permute.xlu0 %2789
        %2791 = vrot.lane.b32.xlu0 %v609, 48
        %v2792 = vpop.permute.xlu0 %2791
        %2793 = vrot.lane.b32.xlu0 %v610, 48
        %v2794 = vpop.permute.xlu0 %2793
        %2795 = vrot.lane.b32.xlu0 %v764, 48
        %v2796 = vpop.permute.xlu0 %2795
        %2797 = vrot.lane.b32.xlu0 %v765, 48
        %v2798 = vpop.permute.xlu0 %2797
        %2799 = vrot.lane.b32.xlu0 %v766, 48
        %v2800 = vpop.permute.xlu0 %2799
        %2801 = vrot.lane.b32.xlu0 %v776, 48
        %v2802 = vpop.permute.xlu0 %2801
        %2803 = vrot.lane.b32.xlu0 %v777, 48
        %v2804 = vpop.permute.xlu0 %2803
        %2805 = vrot.lane.b32.xlu0 %v778, 48
        %v2806 = vpop.permute.xlu0 %2805
        %2807 = vrot.lane.b32.xlu0 %v788, 48
        %v2808 = vpop.permute.xlu0 %2807
        %2809 = vrot.lane.b32.xlu0 %v789, 48
        %v2810 = vpop.permute.xlu0 %2809
        %2811 = vrot.lane.b32.xlu0 %v790, 48
        %v2812 = vpop.permute.xlu0 %2811
        %2867 = vrot.lane.b32.xlu0 %v620, 52
        %v2868 = vpop.permute.xlu0 %2867
        %2869 = vrot.lane.b32.xlu0 %v621, 52
        %v2870 = vpop.permute.xlu0 %2869
        %2871 = vrot.lane.b32.xlu0 %v622, 52
        %v2872 = vpop.permute.xlu0 %2871
        %2873 = vrot.lane.b32.xlu0 %v623, 52
        %v2874 = vpop.permute.xlu0 %2873
        %2875 = vrot.lane.b32.xlu0 %v624, 52
        %v2876 = vpop.permute.xlu0 %2875
        %2877 = vrot.lane.b32.xlu0 %v625, 52
        %v2878 = vpop.permute.xlu0 %2877
        %2879 = vrot.lane.b32.xlu0 %v626, 52
        %v2880 = vpop.permute.xlu0 %2879
        %2881 = vrot.lane.b32.xlu0 %v627, 52
        %v2882 = vpop.permute.xlu0 %2881
        %2883 = vrot.lane.b32.xlu0 %v628, 52
        %v2884 = vpop.permute.xlu0 %2883
        %2885 = vrot.lane.b32.xlu0 %v629, 52
        %v2886 = vpop.permute.xlu0 %2885
        %2887 = vrot.lane.b32.xlu0 %v630, 52
        %v2888 = vpop.permute.xlu0 %2887
        %2889 = vrot.lane.b32.xlu0 %v631, 52
        %v2890 = vpop.permute.xlu0 %2889
        %2891 = vrot.lane.b32.xlu0 %v632, 52
        %v2892 = vpop.permute.xlu0 %2891
        %2893 = vrot.lane.b32.xlu0 %v633, 52
        %v2894 = vpop.permute.xlu0 %2893
        %2895 = vrot.lane.b32.xlu0 %v634, 52
        %v2896 = vpop.permute.xlu0 %2895
        %2897 = vrot.lane.b32.xlu0 %v635, 52
        %v2898 = vpop.permute.xlu0 %2897
        %2899 = vrot.lane.b32.xlu0 %v636, 52
        %v2900 = vpop.permute.xlu0 %2899
        %2901 = vrot.lane.b32.xlu0 %v637, 52
        %v2902 = vpop.permute.xlu0 %2901
        %2903 = vrot.lane.b32.xlu0 %v638, 52
        %v2904 = vpop.permute.xlu0 %2903
        %2905 = vrot.lane.b32.xlu0 %v639, 52
        %v2906 = vpop.permute.xlu0 %2905
        %2907 = vrot.lane.b32.xlu0 %v640, 52
        %v2908 = vpop.permute.xlu0 %2907
        %2909 = vrot.lane.b32.xlu0 %v641, 52
        %v2910 = vpop.permute.xlu0 %2909
        %2911 = vrot.lane.b32.xlu0 %v642, 52
        %v2912 = vpop.permute.xlu0 %2911
        %2913 = vrot.lane.b32.xlu0 %v643, 52
        %v2914 = vpop.permute.xlu0 %2913
        %2915 = vrot.lane.b32.xlu0 %v644, 52
        %v2916 = vpop.permute.xlu0 %2915
        %2917 = vrot.lane.b32.xlu0 %v645, 52
        %v2918 = vpop.permute.xlu0 %2917
        %2919 = vrot.lane.b32.xlu0 %v646, 52
        %v2920 = vpop.permute.xlu0 %2919
        %2921 = vrot.lane.b32.xlu0 %v647, 52
        %v2922 = vpop.permute.xlu0 %2921
        %2923 = vrot.lane.b32.xlu0 %v648, 52
        %v2924 = vpop.permute.xlu0 %2923
        %2925 = vrot.lane.b32.xlu0 %v649, 52
        %v2926 = vpop.permute.xlu0 %2925
        %2927 = vrot.lane.b32.xlu0 %v650, 52
        %v2928 = vpop.permute.xlu0 %2927
        %2929 = vrot.lane.b32.xlu0 %v651, 52
        %v2930 = vpop.permute.xlu0 %2929
        %2931 = vrot.lane.b32.xlu0 %v652, 52
        %v2932 = vpop.permute.xlu0 %2931
        %2933 = vrot.lane.b32.xlu0 %v653, 52
        %v2934 = vpop.permute.xlu0 %2933
        %2935 = vrot.lane.b32.xlu0 %v654, 52
        %v2936 = vpop.permute.xlu0 %2935
        %2937 = vrot.lane.b32.xlu0 %v655, 52
        %v2938 = vpop.permute.xlu0 %2937
        %2939 = vrot.lane.b32.xlu0 %v656, 52
        %v2940 = vpop.permute.xlu0 %2939
        %2941 = vrot.lane.b32.xlu0 %v657, 52
        %v2942 = vpop.permute.xlu0 %2941
        %2943 = vrot.lane.b32.xlu0 %v658, 52
        %v2944 = vpop.permute.xlu0 %2943
        %2945 = vrot.lane.b32.xlu0 %v659, 52
        %v2946 = vpop.permute.xlu0 %2945
        %2947 = vrot.lane.b32.xlu0 %v660, 52
        %v2948 = vpop.permute.xlu0 %2947
        %2949 = vrot.lane.b32.xlu0 %v661, 52
        %v2950 = vpop.permute.xlu0 %2949
        %2951 = vrot.lane.b32.xlu0 %v767, 52
        %v2952 = vpop.permute.xlu0 %2951
        %2953 = vrot.lane.b32.xlu0 %v768, 52
        %v2954 = vpop.permute.xlu0 %2953
        %2955 = vrot.lane.b32.xlu0 %v769, 52
        %v2956 = vpop.permute.xlu0 %2955
        %2957 = vrot.lane.b32.xlu0 %v779, 52
        %v2958 = vpop.permute.xlu0 %2957
        %2959 = vrot.lane.b32.xlu0 %v780, 52
        %v2960 = vpop.permute.xlu0 %2959
        %2961 = vrot.lane.b32.xlu0 %v781, 52
        %v2962 = vpop.permute.xlu0 %2961
        %2963 = vrot.lane.b32.xlu0 %v791, 52
        %v2964 = vpop.permute.xlu0 %2963
        %2965 = vrot.lane.b32.xlu0 %v792, 52
        %v2966 = vpop.permute.xlu0 %2965
        %2967 = vrot.lane.b32.xlu0 %v793, 52
        %v2968 = vpop.permute.xlu0 %2967
        %3023 = vrot.lane.b32.xlu0 %v671, 56
        %v3024 = vpop.permute.xlu0 %3023
        %3025 = vrot.lane.b32.xlu0 %v672, 56
        %v3026 = vpop.permute.xlu0 %3025
        %3027 = vrot.lane.b32.xlu0 %v673, 56
        %v3028 = vpop.permute.xlu0 %3027
        %3029 = vrot.lane.b32.xlu0 %v674, 56
        %v3030 = vpop.permute.xlu0 %3029
        %3031 = vrot.lane.b32.xlu0 %v675, 56
        %v3032 = vpop.permute.xlu0 %3031
        %3033 = vrot.lane.b32.xlu0 %v676, 56
        %v3034 = vpop.permute.xlu0 %3033
        %3035 = vrot.lane.b32.xlu0 %v677, 56
        %v3036 = vpop.permute.xlu0 %3035
        %3037 = vrot.lane.b32.xlu0 %v678, 56
        %v3038 = vpop.permute.xlu0 %3037
        %3039 = vrot.lane.b32.xlu0 %v679, 56
        %v3040 = vpop.permute.xlu0 %3039
        %3041 = vrot.lane.b32.xlu0 %v680, 56
        %v3042 = vpop.permute.xlu0 %3041
        %3043 = vrot.lane.b32.xlu0 %v681, 56
        %v3044 = vpop.permute.xlu0 %3043
        %3045 = vrot.lane.b32.xlu0 %v682, 56
        %v3046 = vpop.permute.xlu0 %3045
        %3047 = vrot.lane.b32.xlu0 %v683, 56
        %v3048 = vpop.permute.xlu0 %3047
        %3049 = vrot.lane.b32.xlu0 %v684, 56
        %v3050 = vpop.permute.xlu0 %3049
        %3051 = vrot.lane.b32.xlu0 %v685, 56
        %v3052 = vpop.permute.xlu0 %3051
        %3053 = vrot.lane.b32.xlu0 %v686, 56
        %v3054 = vpop.permute.xlu0 %3053
        %3055 = vrot.lane.b32.xlu0 %v687, 56
        %v3056 = vpop.permute.xlu0 %3055
        %3057 = vrot.lane.b32.xlu0 %v688, 56
        %v3058 = vpop.permute.xlu0 %3057
        %3059 = vrot.lane.b32.xlu0 %v689, 56
        %v3060 = vpop.permute.xlu0 %3059
        %3061 = vrot.lane.b32.xlu0 %v690, 56
        %v3062 = vpop.permute.xlu0 %3061
        %3063 = vrot.lane.b32.xlu0 %v691, 56
        %v3064 = vpop.permute.xlu0 %3063
        %3065 = vrot.lane.b32.xlu0 %v692, 56
        %v3066 = vpop.permute.xlu0 %3065
        %3067 = vrot.lane.b32.xlu0 %v693, 56
        %v3068 = vpop.permute.xlu0 %3067
        %3069 = vrot.lane.b32.xlu0 %v694, 56
        %v3070 = vpop.permute.xlu0 %3069
        %3071 = vrot.lane.b32.xlu0 %v695, 56
        %v3072 = vpop.permute.xlu0 %3071
        %3073 = vrot.lane.b32.xlu0 %v696, 56
        %v3074 = vpop.permute.xlu0 %3073
        %3075 = vrot.lane.b32.xlu0 %v697, 56
        %v3076 = vpop.permute.xlu0 %3075
        %3077 = vrot.lane.b32.xlu0 %v698, 56
        %v3078 = vpop.permute.xlu0 %3077
        %3079 = vrot.lane.b32.xlu0 %v699, 56
        %v3080 = vpop.permute.xlu0 %3079
        %3081 = vrot.lane.b32.xlu0 %v700, 56
        %v3082 = vpop.permute.xlu0 %3081
        %3083 = vrot.lane.b32.xlu0 %v701, 56
        %v3084 = vpop.permute.xlu0 %3083
        %3085 = vrot.lane.b32.xlu0 %v702, 56
        %v3086 = vpop.permute.xlu0 %3085
        %3087 = vrot.lane.b32.xlu0 %v703, 56
        %v3088 = vpop.permute.xlu0 %3087
        %3089 = vrot.lane.b32.xlu0 %v704, 56
        %v3090 = vpop.permute.xlu0 %3089
        %3091 = vrot.lane.b32.xlu0 %v705, 56
        %v3092 = vpop.permute.xlu0 %3091
        %3093 = vrot.lane.b32.xlu0 %v706, 56
        %v3094 = vpop.permute.xlu0 %3093
        %3095 = vrot.lane.b32.xlu0 %v707, 56
        %v3096 = vpop.permute.xlu0 %3095
        %3097 = vrot.lane.b32.xlu0 %v708, 56
        %v3098 = vpop.permute.xlu0 %3097
        %3099 = vrot.lane.b32.xlu0 %v709, 56
        %v3100 = vpop.permute.xlu0 %3099
        %3101 = vrot.lane.b32.xlu0 %v710, 56
        %v3102 = vpop.permute.xlu0 %3101
        %3103 = vrot.lane.b32.xlu0 %v711, 56
        %v3104 = vpop.permute.xlu0 %3103
        %3105 = vrot.lane.b32.xlu0 %v712, 56
        %v3106 = vpop.permute.xlu0 %3105
        %3107 = vrot.lane.b32.xlu0 %v770, 56
        %v3108 = vpop.permute.xlu0 %3107
        %3109 = vrot.lane.b32.xlu0 %v771, 56
        %v3110 = vpop.permute.xlu0 %3109
        %3111 = vrot.lane.b32.xlu0 %v772, 56
        %v3112 = vpop.permute.xlu0 %3111
        %3113 = vrot.lane.b32.xlu0 %v782, 56
        %v3114 = vpop.permute.xlu0 %3113
        %3115 = vrot.lane.b32.xlu0 %v783, 56
        %v3116 = vpop.permute.xlu0 %3115
        %3117 = vrot.lane.b32.xlu0 %v784, 56
        %v3118 = vpop.permute.xlu0 %3117
        %3119 = vrot.lane.b32.xlu0 %v794, 56
        %v3120 = vpop.permute.xlu0 %3119
        %3121 = vrot.lane.b32.xlu0 %v795, 56
        %v3122 = vpop.permute.xlu0 %3121
        %3123 = vrot.lane.b32.xlu0 %v796, 56
        %v3124 = vpop.permute.xlu0 %3123
        %3179 = vrot.lane.b32.xlu0 %v722, 60
        %v3180 = vpop.permute.xlu0 %3179
        %3181 = vrot.lane.b32.xlu0 %v723, 60
        %v3182 = vpop.permute.xlu0 %3181
        %3183 = vrot.lane.b32.xlu0 %v724, 60
        %v3184 = vpop.permute.xlu0 %3183
        %3185 = vrot.lane.b32.xlu0 %v725, 60
        %v3186 = vpop.permute.xlu0 %3185
        %3187 = vrot.lane.b32.xlu0 %v726, 60
        %v3188 = vpop.permute.xlu0 %3187
        %3189 = vrot.lane.b32.xlu0 %v727, 60
        %v3190 = vpop.permute.xlu0 %3189
        %3191 = vrot.lane.b32.xlu0 %v728, 60
        %v3192 = vpop.permute.xlu0 %3191
        %3193 = vrot.lane.b32.xlu0 %v729, 60
        %v3194 = vpop.permute.xlu0 %3193
        %3195 = vrot.lane.b32.xlu0 %v730, 60
        %v3196 = vpop.permute.xlu0 %3195
        %3197 = vrot.lane.b32.xlu0 %v731, 60
        %v3198 = vpop.permute.xlu0 %3197
        %3199 = vrot.lane.b32.xlu0 %v732, 60
        %v3200 = vpop.permute.xlu0 %3199
        %3201 = vrot.lane.b32.xlu0 %v733, 60
        %v3202 = vpop.permute.xlu0 %3201
        %3203 = vrot.lane.b32.xlu0 %v734, 60
        %v3204 = vpop.permute.xlu0 %3203
        %3205 = vrot.lane.b32.xlu0 %v735, 60
        %v3206 = vpop.permute.xlu0 %3205
        %3207 = vrot.lane.b32.xlu0 %v736, 60
        %v3208 = vpop.permute.xlu0 %3207
        %3209 = vrot.lane.b32.xlu0 %v737, 60
        %v3210 = vpop.permute.xlu0 %3209
        %3211 = vrot.lane.b32.xlu0 %v738, 60
        %v3212 = vpop.permute.xlu0 %3211
        %3213 = vrot.lane.b32.xlu0 %v739, 60
        %v3214 = vpop.permute.xlu0 %3213
        %3215 = vrot.lane.b32.xlu0 %v740, 60
        %v3216 = vpop.permute.xlu0 %3215
        %3217 = vrot.lane.b32.xlu0 %v741, 60
        %v3218 = vpop.permute.xlu0 %3217
        %3219 = vrot.lane.b32.xlu0 %v742, 60
        %v3220 = vpop.permute.xlu0 %3219
        %3221 = vrot.lane.b32.xlu0 %v743, 60
        %v3222 = vpop.permute.xlu0 %3221
        %3223 = vrot.lane.b32.xlu0 %v744, 60
        %v3224 = vpop.permute.xlu0 %3223
        %3225 = vrot.lane.b32.xlu0 %v745, 60
        %v3226 = vpop.permute.xlu0 %3225
        %3227 = vrot.lane.b32.xlu0 %v746, 60
        %v3228 = vpop.permute.xlu0 %3227
        %3229 = vrot.lane.b32.xlu0 %v747, 60
        %v3230 = vpop.permute.xlu0 %3229
        %3231 = vrot.lane.b32.xlu0 %v748, 60
        %v3232 = vpop.permute.xlu0 %3231
        %3233 = vrot.lane.b32.xlu0 %v749, 60
        %v3234 = vpop.permute.xlu0 %3233
        %3235 = vrot.lane.b32.xlu0 %v750, 60
        %v3236 = vpop.permute.xlu0 %3235
        %3237 = vrot.lane.b32.xlu0 %v751, 60
        %v3238 = vpop.permute.xlu0 %3237
        %3239 = vrot.lane.b32.xlu0 %v752, 60
        %v3240 = vpop.permute.xlu0 %3239
        %3241 = vrot.lane.b32.xlu0 %v753, 60
        %v3242 = vpop.permute.xlu0 %3241
        %3243 = vrot.lane.b32.xlu0 %v754, 60
        %v3244 = vpop.permute.xlu0 %3243
        %3245 = vrot.lane.b32.xlu0 %v755, 60
        %v3246 = vpop.permute.xlu0 %3245
        %3247 = vrot.lane.b32.xlu0 %v756, 60
        %v3248 = vpop.permute.xlu0 %3247
        %3249 = vrot.lane.b32.xlu0 %v757, 60
        %v3250 = vpop.permute.xlu0 %3249
        %3251 = vrot.lane.b32.xlu0 %v758, 60
        %v3252 = vpop.permute.xlu0 %3251
        %3253 = vrot.lane.b32.xlu0 %v759, 60
        %v3254 = vpop.permute.xlu0 %3253
        %3255 = vrot.lane.b32.xlu0 %v760, 60
        %v3256 = vpop.permute.xlu0 %3255
        %3257 = vrot.lane.b32.xlu0 %v761, 60
        %v3258 = vpop.permute.xlu0 %3257
        %3259 = vrot.lane.b32.xlu0 %v762, 60
        %v3260 = vpop.permute.xlu0 %3259
        %3261 = vrot.lane.b32.xlu0 %v763, 60
        %v3262 = vpop.permute.xlu0 %3261
        %3263 = vrot.lane.b32.xlu0 %v773, 60
        %v3264 = vpop.permute.xlu0 %3263
        %3265 = vrot.lane.b32.xlu0 %v774, 60
        %v3266 = vpop.permute.xlu0 %3265
        %3267 = vrot.lane.b32.xlu0 %v775, 60
        %v3268 = vpop.permute.xlu0 %3267
        %3269 = vrot.lane.b32.xlu0 %v785, 60
        %v3270 = vpop.permute.xlu0 %3269
        %3271 = vrot.lane.b32.xlu0 %v786, 60
        %v3272 = vpop.permute.xlu0 %3271
        %3273 = vrot.lane.b32.xlu0 %v787, 60
        %v3274 = vpop.permute.xlu0 %3273
        %3275 = vrot.lane.b32.xlu0 %v797, 60
        %v3276 = vpop.permute.xlu0 %3275
        %3277 = vrot.lane.b32.xlu0 %v798, 60
        %v3278 = vpop.permute.xlu0 %3277
        %3279 = vrot.lane.b32.xlu0 %v799, 60
        %v3280 = vpop.permute.xlu0 %3279
        %v3332 = vsel %vm496, %v560, %v852
        %v3333 = vsel %vm496, %v561, %v854
        %v3334 = vsel %vm496, %v562, %v856
        %v3335 = vsel %vm496, %v563, %v858
        %v3336 = vsel %vm496, %v564, %v860
        %v3337 = vsel %vm496, %v565, %v862
        %v3338 = vsel %vm496, %v566, %v864
        %v3339 = vsel %vm496, %v567, %v866
        %v3340 = vsel %vm496, %v568, %v868
        %v3341 = vsel %vm496, %v569, %v870
        %v3342 = vsel %vm496, %v570, %v872
        %v3343 = vsel %vm496, %v571, %v874
        %v3344 = vsel %vm496, %v572, %v876
        %v3345 = vsel %vm496, %v573, %v878
        %v3346 = vsel %vm496, %v574, %v880
        %v3347 = vsel %vm496, %v575, %v882
        %v3348 = vsel %vm496, %v576, %v884
        %v3349 = vsel %vm496, %v577, %v886
        %v3350 = vsel %vm496, %v578, %v888
        %v3351 = vsel %vm496, %v579, %v890
        %v3352 = vsel %vm496, %v580, %v892
        %v3353 = vsel %vm496, %v581, %v894
        %v3354 = vsel %vm496, %v582, %v896
        %v3355 = vsel %vm496, %v583, %v898
        %v3356 = vsel %vm496, %v584, %v900
        %v3357 = vsel %vm496, %v585, %v902
        %v3358 = vsel %vm496, %v586, %v904
        %v3359 = vsel %vm496, %v587, %v906
        %v3360 = vsel %vm496, %v588, %v908
        %v3361 = vsel %vm496, %v589, %v910
        %v3362 = vsel %vm496, %v590, %v912
        %v3363 = vsel %vm496, %v591, %v914
        %v3364 = vsel %vm496, %v592, %v916
        %v3365 = vsel %vm496, %v593, %v918
        %v3366 = vsel %vm496, %v594, %v920
        %v3367 = vsel %vm496, %v595, %v922
        %v3368 = vsel %vm496, %v596, %v924
        %v3369 = vsel %vm496, %v597, %v926
        %v3370 = vsel %vm496, %v598, %v928
        %v3371 = vsel %vm496, %v599, %v930
        %v3372 = vsel %vm496, %v600, %v932
        %v3373 = vsel %vm496, %v601, %v934
        %v3374 = vsel %vm496, %v602, %v936
        %v3375 = vsel %vm496, %v603, %v938
        %v3376 = vsel %vm496, %v604, %v940
        %v3377 = vsel %vm496, %v605, %v942
        %v3378 = vsel %vm496, %v606, %v944
        %v3379 = vsel %vm496, %v607, %v946
        %v3380 = vsel %vm496, %v608, %v948
        %v3381 = vsel %vm496, %v609, %v950
        %v3382 = vsel %vm496, %v610, %v952
        %v3383 = vsel %vm224, %v3332, %v1056
        %v3384 = vsel %vm224, %v3333, %v1058
        %v3385 = vsel %vm224, %v3334, %v1060
        %v3386 = vsel %vm224, %v3335, %v1062
        %v3387 = vsel %vm224, %v3336, %v1064
        %v3388 = vsel %vm224, %v3337, %v1066
        %v3389 = vsel %vm224, %v3338, %v1068
        %v3390 = vsel %vm224, %v3339, %v1070
        %v3391 = vsel %vm224, %v3340, %v1072
        %v3392 = vsel %vm224, %v3341, %v1074
        %v3393 = vsel %vm224, %v3342, %v1076
        %v3394 = vsel %vm224, %v3343, %v1078
        %v3395 = vsel %vm224, %v3344, %v1080
        %v3396 = vsel %vm224, %v3345, %v1082
        %v3397 = vsel %vm224, %v3346, %v1084
        %v3398 = vsel %vm224, %v3347, %v1086
        %v3399 = vsel %vm224, %v3348, %v1088
        %v3400 = vsel %vm224, %v3349, %v1090
        %v3401 = vsel %vm224, %v3350, %v1092
        %v3402 = vsel %vm224, %v3351, %v1094
        %v3403 = vsel %vm224, %v3352, %v1096
        %v3404 = vsel %vm224, %v3353, %v1098
        %v3405 = vsel %vm224, %v3354, %v1100
        %v3406 = vsel %vm224, %v3355, %v1102
        %v3407 = vsel %vm224, %v3356, %v1104
        %v3408 = vsel %vm224, %v3357, %v1106
        %v3409 = vsel %vm224, %v3358, %v1108
        %v3410 = vsel %vm224, %v3359, %v1110
        %v3411 = vsel %vm224, %v3360, %v1112
        %v3412 = vsel %vm224, %v3361, %v1114
        %v3413 = vsel %vm224, %v3362, %v1116
        %v3414 = vsel %vm224, %v3363, %v1118
        %v3415 = vsel %vm224, %v3364, %v1120
        %v3416 = vsel %vm224, %v3365, %v1122
        %v3417 = vsel %vm224, %v3366, %v1124
        %v3418 = vsel %vm224, %v3367, %v1126
        %v3419 = vsel %vm224, %v3368, %v1128
        %v3420 = vsel %vm224, %v3369, %v1130
        %v3421 = vsel %vm224, %v3370, %v1132
        %v3422 = vsel %vm224, %v3371, %v1134
        %v3423 = vsel %vm224, %v3372, %v1136
        %v3424 = vsel %vm224, %v3373, %v1138
        %v3425 = vsel %vm224, %v3374, %v1140
        %v3426 = vsel %vm224, %v3375, %v1142
        %v3427 = vsel %vm224, %v3376, %v1144
        %v3428 = vsel %vm224, %v3377, %v1146
        %v3429 = vsel %vm224, %v3378, %v1148
        %v3430 = vsel %vm224, %v3379, %v1150
        %v3431 = vsel %vm224, %v3380, %v1152
        %v3432 = vsel %vm224, %v3381, %v1154
        %v3433 = vsel %vm224, %v3382, %v1156
        %vm3434 = vcmask 97280
        %v3435 = vsel %vm3434, %v3383, %v1260
        %v3436 = vsel %vm3434, %v3384, %v1262
        %v3437 = vsel %vm3434, %v3385, %v1264
        %v3438 = vsel %vm3434, %v3386, %v1266
        %v3439 = vsel %vm3434, %v3387, %v1268
        %v3440 = vsel %vm3434, %v3388, %v1270
        %v3441 = vsel %vm3434, %v3389, %v1272
        %v3442 = vsel %vm3434, %v3390, %v1274
        %v3443 = vsel %vm3434, %v3391, %v1276
        %v3444 = vsel %vm3434, %v3392, %v1278
        %v3445 = vsel %vm3434, %v3393, %v1280
        %v3446 = vsel %vm3434, %v3394, %v1282
        %v3447 = vsel %vm3434, %v3395, %v1284
        %v3448 = vsel %vm3434, %v3396, %v1286
        %v3449 = vsel %vm3434, %v3397, %v1288
        %v3450 = vsel %vm3434, %v3398, %v1290
        %v3451 = vsel %vm3434, %v3399, %v1292
        %v3452 = vsel %vm3434, %v3400, %v1294
        %v3453 = vsel %vm3434, %v3401, %v1296
        %v3454 = vsel %vm3434, %v3402, %v1298
        %v3455 = vsel %vm3434, %v3403, %v1300
        %v3456 = vsel %vm3434, %v3404, %v1302
        %v3457 = vsel %vm3434, %v3405, %v1304
        %v3458 = vsel %vm3434, %v3406, %v1306
        %v3459 = vsel %vm3434, %v3407, %v1308
        %v3460 = vsel %vm3434, %v3408, %v1310
        %v3461 = vsel %vm3434, %v3409, %v1312
        %v3462 = vsel %vm3434, %v3410, %v1314
        %v3463 = vsel %vm3434, %v3411, %v1316
        %v3464 = vsel %vm3434, %v3412, %v1318
        %v3465 = vsel %vm3434, %v3413, %v1320
        %v3466 = vsel %vm3434, %v3414, %v1322
        %v3467 = vsel %vm3434, %v3415, %v1324
        %v3468 = vsel %vm3434, %v3416, %v1326
        %v3469 = vsel %vm3434, %v3417, %v1328
        %v3470 = vsel %vm3434, %v3418, %v1330
        %v3471 = vsel %vm3434, %v3419, %v1332
        %v3472 = vsel %vm3434, %v3420, %v1334
        %v3473 = vsel %vm3434, %v3421, %v1336
        %v3474 = vsel %vm3434, %v3422, %v1338
        %v3475 = vsel %vm3434, %v3423, %v1340
        %v3476 = vsel %vm3434, %v3424, %v1342
        %v3477 = vsel %vm3434, %v3425, %v1344
        %v3478 = vsel %vm3434, %v3426, %v1346
        %v3479 = vsel %vm3434, %v3427, %v1348
        %v3480 = vsel %vm3434, %v3428, %v1350
        %v3481 = vsel %vm3434, %v3429, %v1352
        %v3482 = vsel %vm3434, %v3430, %v1354
        %v3483 = vsel %vm3434, %v3431, %v1356
        %v3484 = vsel %vm3434, %v3432, %v1358
        %v3485 = vsel %vm3434, %v3433, %v1360
        %vm3486 = vcmask 130048
        %v3487 = vsel %vm3486, %v3435, %v1464
        %v3488 = vsel %vm3486, %v3436, %v1466
        %v3489 = vsel %vm3486, %v3437, %v1468
        %v3490 = vsel %vm3486, %v3438, %v1470
        %v3491 = vsel %vm3486, %v3439, %v1472
        %v3492 = vsel %vm3486, %v3440, %v1474
        %v3493 = vsel %vm3486, %v3441, %v1476
        %v3494 = vsel %vm3486, %v3442, %v1478
        %v3495 = vsel %vm3486, %v3443, %v1480
        %v3496 = vsel %vm3486, %v3444, %v1482
        %v3497 = vsel %vm3486, %v3445, %v1484
        %v3498 = vsel %vm3486, %v3446, %v1486
        %v3499 = vsel %vm3486, %v3447, %v1488
        %v3500 = vsel %vm3486, %v3448, %v1490
        %v3501 = vsel %vm3486, %v3449, %v1492
        %v3502 = vsel %vm3486, %v3450, %v1494
        %v3503 = vsel %vm3486, %v3451, %v1496
        %v3504 = vsel %vm3486, %v3452, %v1498
        %v3505 = vsel %vm3486, %v3453, %v1500
        %v3506 = vsel %vm3486, %v3454, %v1502
        %v3507 = vsel %vm3486, %v3455, %v1504
        %v3508 = vsel %vm3486, %v3456, %v1506
        %v3509 = vsel %vm3486, %v3457, %v1508
        %v3510 = vsel %vm3486, %v3458, %v1510
        %v3511 = vsel %vm3486, %v3459, %v1512
        %v3512 = vsel %vm3486, %v3460, %v1514
        %v3513 = vsel %vm3486, %v3461, %v1516
        %v3514 = vsel %vm3486, %v3462, %v1518
        %v3515 = vsel %vm3486, %v3463, %v1520
        %v3516 = vsel %vm3486, %v3464, %v1522
        %v3517 = vsel %vm3486, %v3465, %v1524
        %v3518 = vsel %vm3486, %v3466, %v1526
        %v3519 = vsel %vm3486, %v3467, %v1528
        %v3520 = vsel %vm3486, %v3468, %v1530
        %v3521 = vsel %vm3486, %v3469, %v1532
        %v3522 = vsel %vm3486, %v3470, %v1534
        %v3523 = vsel %vm3486, %v3471, %v1536
        %v3524 = vsel %vm3486, %v3472, %v1538
        %v3525 = vsel %vm3486, %v3473, %v1540
        %v3526 = vsel %vm3486, %v3474, %v1542
        %v3527 = vsel %vm3486, %v3475, %v1544
        %v3528 = vsel %vm3486, %v3476, %v1546
        %v3529 = vsel %vm3486, %v3477, %v1548
        %v3530 = vsel %vm3486, %v3478, %v1550
        %v3531 = vsel %vm3486, %v3479, %v1552
        %v3532 = vsel %vm3486, %v3480, %v1554
        %v3533 = vsel %vm3486, %v3481, %v1556
        %v3534 = vsel %vm3486, %v3482, %v1558
        %v3535 = vsel %vm3486, %v3483, %v1560
        %v3536 = vsel %vm3486, %v3484, %v1562
        %v3537 = vsel %vm3486, %v3485, %v1564
        %vm3538 = vcmask 162816
        %v3539 = vsel %vm3538, %v3487, %v1620
        %v3540 = vsel %vm3538, %v3488, %v1622
        %v3541 = vsel %vm3538, %v3489, %v1624
        %v3542 = vsel %vm3538, %v3490, %v1626
        %v3543 = vsel %vm3538, %v3491, %v1628
        %v3544 = vsel %vm3538, %v3492, %v1630
        %v3545 = vsel %vm3538, %v3493, %v1632
        %v3546 = vsel %vm3538, %v3494, %v1634
        %v3547 = vsel %vm3538, %v3495, %v1636
        %v3548 = vsel %vm3538, %v3496, %v1638
        %v3549 = vsel %vm3538, %v3497, %v1640
        %v3550 = vsel %vm3538, %v3498, %v1642
        %v3551 = vsel %vm3538, %v3499, %v1644
        %v3552 = vsel %vm3538, %v3500, %v1646
        %v3553 = vsel %vm3538, %v3501, %v1648
        %v3554 = vsel %vm3538, %v3502, %v1650
        %v3555 = vsel %vm3538, %v3503, %v1652
        %v3556 = vsel %vm3538, %v3504, %v1654
        %v3557 = vsel %vm3538, %v3505, %v1656
        %v3558 = vsel %vm3538, %v3506, %v1658
        %v3559 = vsel %vm3538, %v3507, %v1660
        %v3560 = vsel %vm3538, %v3508, %v1662
        %v3561 = vsel %vm3538, %v3509, %v1664
        %v3562 = vsel %vm3538, %v3510, %v1666
        %v3563 = vsel %vm3538, %v3511, %v1668
        %v3564 = vsel %vm3538, %v3512, %v1670
        %v3565 = vsel %vm3538, %v3513, %v1672
        %v3566 = vsel %vm3538, %v3514, %v1674
        %v3567 = vsel %vm3538, %v3515, %v1676
        %v3568 = vsel %vm3538, %v3516, %v1678
        %v3569 = vsel %vm3538, %v3517, %v1680
        %v3570 = vsel %vm3538, %v3518, %v1682
        %v3571 = vsel %vm3538, %v3519, %v1684
        %v3572 = vsel %vm3538, %v3520, %v1686
        %v3573 = vsel %vm3538, %v3521, %v1688
        %v3574 = vsel %vm3538, %v3522, %v1690
        %v3575 = vsel %vm3538, %v3523, %v1692
        %v3576 = vsel %vm3538, %v3524, %v1694
        %v3577 = vsel %vm3538, %v3525, %v1696
        %v3578 = vsel %vm3538, %v3526, %v1698
        %v3579 = vsel %vm3538, %v3527, %v1700
        %v3580 = vsel %vm3538, %v3528, %v1702
        %v3581 = vsel %vm3538, %v3529, %v1704
        %v3582 = vsel %vm3538, %v3530, %v1706
        %v3583 = vsel %vm3538, %v3531, %v1708
        %v3584 = vsel %vm3538, %v3532, %v1710
        %v3585 = vsel %vm3538, %v3533, %v1712
        %v3586 = vsel %vm3538, %v3534, %v1714
        %v3587 = vsel %vm3538, %v3535, %v1716
        %v3588 = vsel %vm3538, %v3536, %v1718
        %v3589 = vsel %vm3538, %v3537, %v1720
        %vm3590 = vcmask 195584
        %v3591 = vsel %vm3590, %v3539, %v1776
        %v3592 = vsel %vm3590, %v3540, %v1778
        %v3593 = vsel %vm3590, %v3541, %v1780
        %v3594 = vsel %vm3590, %v3542, %v1782
        %v3595 = vsel %vm3590, %v3543, %v1784
        %v3596 = vsel %vm3590, %v3544, %v1786
        %v3597 = vsel %vm3590, %v3545, %v1788
        %v3598 = vsel %vm3590, %v3546, %v1790
        %v3599 = vsel %vm3590, %v3547, %v1792
        %v3600 = vsel %vm3590, %v3548, %v1794
        %v3601 = vsel %vm3590, %v3549, %v1796
        %v3602 = vsel %vm3590, %v3550, %v1798
        %v3603 = vsel %vm3590, %v3551, %v1800
        %v3604 = vsel %vm3590, %v3552, %v1802
        %v3605 = vsel %vm3590, %v3553, %v1804
        %v3606 = vsel %vm3590, %v3554, %v1806
        %v3607 = vsel %vm3590, %v3555, %v1808
        %v3608 = vsel %vm3590, %v3556, %v1810
        %v3609 = vsel %vm3590, %v3557, %v1812
        %v3610 = vsel %vm3590, %v3558, %v1814
        %v3611 = vsel %vm3590, %v3559, %v1816
        %v3612 = vsel %vm3590, %v3560, %v1818
        %v3613 = vsel %vm3590, %v3561, %v1820
        %v3614 = vsel %vm3590, %v3562, %v1822
        %v3615 = vsel %vm3590, %v3563, %v1824
        %v3616 = vsel %vm3590, %v3564, %v1826
        %v3617 = vsel %vm3590, %v3565, %v1828
        %v3618 = vsel %vm3590, %v3566, %v1830
        %v3619 = vsel %vm3590, %v3567, %v1832
        %v3620 = vsel %vm3590, %v3568, %v1834
        %v3621 = vsel %vm3590, %v3569, %v1836
        %v3622 = vsel %vm3590, %v3570, %v1838
        %v3623 = vsel %vm3590, %v3571, %v1840
        %v3624 = vsel %vm3590, %v3572, %v1842
        %v3625 = vsel %vm3590, %v3573, %v1844
        %v3626 = vsel %vm3590, %v3574, %v1846
        %v3627 = vsel %vm3590, %v3575, %v1848
        %v3628 = vsel %vm3590, %v3576, %v1850
        %v3629 = vsel %vm3590, %v3577, %v1852
        %v3630 = vsel %vm3590, %v3578, %v1854
        %v3631 = vsel %vm3590, %v3579, %v1856
        %v3632 = vsel %vm3590, %v3580, %v1858
        %v3633 = vsel %vm3590, %v3581, %v1860
        %v3634 = vsel %vm3590, %v3582, %v1862
        %v3635 = vsel %vm3590, %v3583, %v1864
        %v3636 = vsel %vm3590, %v3584, %v1866
        %v3637 = vsel %vm3590, %v3585, %v1868
        %v3638 = vsel %vm3590, %v3586, %v1870
        %v3639 = vsel %vm3590, %v3587, %v1872
        %v3640 = vsel %vm3590, %v3588, %v1874
        %v3641 = vsel %vm3590, %v3589, %v1876
        %vm3642 = vcmask 228352
        %v3643 = vsel %vm3642, %v3591, %v1932
        %v3644 = vsel %vm3642, %v3592, %v1934
        %v3645 = vsel %vm3642, %v3593, %v1936
        %v3646 = vsel %vm3642, %v3594, %v1938
        %v3647 = vsel %vm3642, %v3595, %v1940
        %v3648 = vsel %vm3642, %v3596, %v1942
        %v3649 = vsel %vm3642, %v3597, %v1944
        %v3650 = vsel %vm3642, %v3598, %v1946
        %v3651 = vsel %vm3642, %v3599, %v1948
        %v3652 = vsel %vm3642, %v3600, %v1950
        %v3653 = vsel %vm3642, %v3601, %v1952
        %v3654 = vsel %vm3642, %v3602, %v1954
        %v3655 = vsel %vm3642, %v3603, %v1956
        %v3656 = vsel %vm3642, %v3604, %v1958
        %v3657 = vsel %vm3642, %v3605, %v1960
        %v3658 = vsel %vm3642, %v3606, %v1962
        %v3659 = vsel %vm3642, %v3607, %v1964
        %v3660 = vsel %vm3642, %v3608, %v1966
        %v3661 = vsel %vm3642, %v3609, %v1968
        %v3662 = vsel %vm3642, %v3610, %v1970
        %v3663 = vsel %vm3642, %v3611, %v1972
        %v3664 = vsel %vm3642, %v3612, %v1974
        %v3665 = vsel %vm3642, %v3613, %v1976
        %v3666 = vsel %vm3642, %v3614, %v1978
        %v3667 = vsel %vm3642, %v3615, %v1980
        %v3668 = vsel %vm3642, %v3616, %v1982
        %v3669 = vsel %vm3642, %v3617, %v1984
        %v3670 = vsel %vm3642, %v3618, %v1986
        %v3671 = vsel %vm3642, %v3619, %v1988
        %v3672 = vsel %vm3642, %v3620, %v1990
        %v3673 = vsel %vm3642, %v3621, %v1992
        %v3674 = vsel %vm3642, %v3622, %v1994
        %v3675 = vsel %vm3642, %v3623, %v1996
        %v3676 = vsel %vm3642, %v3624, %v1998
        %v3677 = vsel %vm3642, %v3625, %v2000
        %v3678 = vsel %vm3642, %v3626, %v2002
        %v3679 = vsel %vm3642, %v3627, %v2004
        %v3680 = vsel %vm3642, %v3628, %v2006
        %v3681 = vsel %vm3642, %v3629, %v2008
        %v3682 = vsel %vm3642, %v3630, %v2010
        %v3683 = vsel %vm3642, %v3631, %v2012
        %v3684 = vsel %vm3642, %v3632, %v2014
        %v3685 = vsel %vm3642, %v3633, %v2016
        %v3686 = vsel %vm3642, %v3634, %v2018
        %v3687 = vsel %vm3642, %v3635, %v2020
        %v3688 = vsel %vm3642, %v3636, %v2022
        %v3689 = vsel %vm3642, %v3637, %v2024
        %v3690 = vsel %vm3642, %v3638, %v2026
        %v3691 = vsel %vm3642, %v3639, %v2028
        %v3692 = vsel %vm3642, %v3640, %v2030
        %v3693 = vsel %vm3642, %v3641, %v2032
        %vm3694 = vcmask 261120
        %v3695 = vsel %vm3694, %v3643, %v2088
        %v3696 = vsel %vm3694, %v3644, %v2090
        %v3697 = vsel %vm3694, %v3645, %v2092
        %v3698 = vsel %vm3694, %v3646, %v2094
        %v3699 = vsel %vm3694, %v3647, %v2096
        %v3700 = vsel %vm3694, %v3648, %v2098
        %v3701 = vsel %vm3694, %v3649, %v2100
        %v3702 = vsel %vm3694, %v3650, %v2102
        %v3703 = vsel %vm3694, %v3651, %v2104
        %v3704 = vsel %vm3694, %v3652, %v2106
        %v3705 = vsel %vm3694, %v3653, %v2108
        %v3706 = vsel %vm3694, %v3654, %v2110
        %v3707 = vsel %vm3694, %v3655, %v2112
        %v3708 = vsel %vm3694, %v3656, %v2114
        %v3709 = vsel %vm3694, %v3657, %v2116
        %v3710 = vsel %vm3694, %v3658, %v2118
        %v3711 = vsel %vm3694, %v3659, %v2120
        %v3712 = vsel %vm3694, %v3660, %v2122
        %v3713 = vsel %vm3694, %v3661, %v2124
        %v3714 = vsel %vm3694, %v3662, %v2126
        %v3715 = vsel %vm3694, %v3663, %v2128
        %v3716 = vsel %vm3694, %v3664, %v2130
        %v3717 = vsel %vm3694, %v3665, %v2132
        %v3718 = vsel %vm3694, %v3666, %v2134
        %v3719 = vsel %vm3694, %v3667, %v2136
        %v3720 = vsel %vm3694, %v3668, %v2138
        %v3721 = vsel %vm3694, %v3669, %v2140
        %v3722 = vsel %vm3694, %v3670, %v2142
        %v3723 = vsel %vm3694, %v3671, %v2144
        %v3724 = vsel %vm3694, %v3672, %v2146
        %v3725 = vsel %vm3694, %v3673, %v2148
        %v3726 = vsel %vm3694, %v3674, %v2150
        %v3727 = vsel %vm3694, %v3675, %v2152
        %v3728 = vsel %vm3694, %v3676, %v2154
        %v3729 = vsel %vm3694, %v3677, %v2156
        %v3730 = vsel %vm3694, %v3678, %v2158
        %v3731 = vsel %vm3694, %v3679, %v2160
        %v3732 = vsel %vm3694, %v3680, %v2162
        %v3733 = vsel %vm3694, %v3681, %v2164
        %v3734 = vsel %vm3694, %v3682, %v2166
        %v3735 = vsel %vm3694, %v3683, %v2168
        %v3736 = vsel %vm3694, %v3684, %v2170
        %v3737 = vsel %vm3694, %v3685, %v2172
        %v3738 = vsel %vm3694, %v3686, %v2174
        %v3739 = vsel %vm3694, %v3687, %v2176
        %v3740 = vsel %vm3694, %v3688, %v2178
        %v3741 = vsel %vm3694, %v3689, %v2180
        %v3742 = vsel %vm3694, %v3690, %v2182
        %v3743 = vsel %vm3694, %v3691, %v2184
        %v3744 = vsel %vm3694, %v3692, %v2186
        %v3745 = vsel %vm3694, %v3693, %v2188
        %vm3746 = vcmask 293888
        %v3747 = vsel %vm3746, %v3695, %v2244
        %v3748 = vsel %vm3746, %v3696, %v2246
        %v3749 = vsel %vm3746, %v3697, %v2248
        %v3750 = vsel %vm3746, %v3698, %v2250
        %v3751 = vsel %vm3746, %v3699, %v2252
        %v3752 = vsel %vm3746, %v3700, %v2254
        %v3753 = vsel %vm3746, %v3701, %v2256
        %v3754 = vsel %vm3746, %v3702, %v2258
        %v3755 = vsel %vm3746, %v3703, %v2260
        %v3756 = vsel %vm3746, %v3704, %v2262
        %v3757 = vsel %vm3746, %v3705, %v2264
        %v3758 = vsel %vm3746, %v3706, %v2266
        %v3759 = vsel %vm3746, %v3707, %v2268
        %v3760 = vsel %vm3746, %v3708, %v2270
        %v3761 = vsel %vm3746, %v3709, %v2272
        %v3762 = vsel %vm3746, %v3710, %v2274
        %v3763 = vsel %vm3746, %v3711, %v2276
        %v3764 = vsel %vm3746, %v3712, %v2278
        %v3765 = vsel %vm3746, %v3713, %v2280
        %v3766 = vsel %vm3746, %v3714, %v2282
        %v3767 = vsel %vm3746, %v3715, %v2284
        %v3768 = vsel %vm3746, %v3716, %v2286
        %v3769 = vsel %vm3746, %v3717, %v2288
        %v3770 = vsel %vm3746, %v3718, %v2290
        %v3771 = vsel %vm3746, %v3719, %v2292
        %v3772 = vsel %vm3746, %v3720, %v2294
        %v3773 = vsel %vm3746, %v3721, %v2296
        %v3774 = vsel %vm3746, %v3722, %v2298
        %v3775 = vsel %vm3746, %v3723, %v2300
        %v3776 = vsel %vm3746, %v3724, %v2302
        %v3777 = vsel %vm3746, %v3725, %v2304
        %v3778 = vsel %vm3746, %v3726, %v2306
        %v3779 = vsel %vm3746, %v3727, %v2308
        %v3780 = vsel %vm3746, %v3728, %v2310
        %v3781 = vsel %vm3746, %v3729, %v2312
        %v3782 = vsel %vm3746, %v3730, %v2314
        %v3783 = vsel %vm3746, %v3731, %v2316
        %v3784 = vsel %vm3746, %v3732, %v2318
        %v3785 = vsel %vm3746, %v3733, %v2320
        %v3786 = vsel %vm3746, %v3734, %v2322
        %v3787 = vsel %vm3746, %v3735, %v2324
        %v3788 = vsel %vm3746, %v3736, %v2326
        %v3789 = vsel %vm3746, %v3737, %v2328
        %v3790 = vsel %vm3746, %v3738, %v2330
        %v3791 = vsel %vm3746, %v3739, %v2332
        %v3792 = vsel %vm3746, %v3740, %v2334
        %v3793 = vsel %vm3746, %v3741, %v2336
        %v3794 = vsel %vm3746, %v3742, %v2338
        %v3795 = vsel %vm3746, %v3743, %v2340
        %v3796 = vsel %vm3746, %v3744, %v2342
        %v3797 = vsel %vm3746, %v3745, %v2344
        %vm3798 = vcmask 326656
        %v3799 = vsel %vm3798, %v3747, %v2400
        %v3800 = vsel %vm3798, %v3748, %v2402
        %v3801 = vsel %vm3798, %v3749, %v2404
        %v3802 = vsel %vm3798, %v3750, %v2406
        %v3803 = vsel %vm3798, %v3751, %v2408
        %v3804 = vsel %vm3798, %v3752, %v2410
        %v3805 = vsel %vm3798, %v3753, %v2412
        %v3806 = vsel %vm3798, %v3754, %v2414
        %v3807 = vsel %vm3798, %v3755, %v2416
        %v3808 = vsel %vm3798, %v3756, %v2418
        %v3809 = vsel %vm3798, %v3757, %v2420
        %v3810 = vsel %vm3798, %v3758, %v2422
        %v3811 = vsel %vm3798, %v3759, %v2424
        %v3812 = vsel %vm3798, %v3760, %v2426
        %v3813 = vsel %vm3798, %v3761, %v2428
        %v3814 = vsel %vm3798, %v3762, %v2430
        %v3815 = vsel %vm3798, %v3763, %v2432
        %v3816 = vsel %vm3798, %v3764, %v2434
        %v3817 = vsel %vm3798, %v3765, %v2436
        %v3818 = vsel %vm3798, %v3766, %v2438
        %v3819 = vsel %vm3798, %v3767, %v2440
        %v3820 = vsel %vm3798, %v3768, %v2442
        %v3821 = vsel %vm3798, %v3769, %v2444
        %v3822 = vsel %vm3798, %v3770, %v2446
        %v3823 = vsel %vm3798, %v3771, %v2448
        %v3824 = vsel %vm3798, %v3772, %v2450
        %v3825 = vsel %vm3798, %v3773, %v2452
        %v3826 = vsel %vm3798, %v3774, %v2454
        %v3827 = vsel %vm3798, %v3775, %v2456
        %v3828 = vsel %vm3798, %v3776, %v2458
        %v3829 = vsel %vm3798, %v3777, %v2460
        %v3830 = vsel %vm3798, %v3778, %v2462
        %v3831 = vsel %vm3798, %v3779, %v2464
        %v3832 = vsel %vm3798, %v3780, %v2466
        %v3833 = vsel %vm3798, %v3781, %v2468
        %v3834 = vsel %vm3798, %v3782, %v2470
        %v3835 = vsel %vm3798, %v3783, %v2472
        %v3836 = vsel %vm3798, %v3784, %v2474
        %v3837 = vsel %vm3798, %v3785, %v2476
        %v3838 = vsel %vm3798, %v3786, %v2478
        %v3839 = vsel %vm3798, %v3787, %v2480
        %v3840 = vsel %vm3798, %v3788, %v2482
        %v3841 = vsel %vm3798, %v3789, %v2484
        %v3842 = vsel %vm3798, %v3790, %v2486
        %v3843 = vsel %vm3798, %v3791, %v2488
        %v3844 = vsel %vm3798, %v3792, %v2490
        %v3845 = vsel %vm3798, %v3793, %v2492
        %v3846 = vsel %vm3798, %v3794, %v2494
        %v3847 = vsel %vm3798, %v3795, %v2496
        %v3848 = vsel %vm3798, %v3796, %v2498
        %v3849 = vsel %vm3798, %v3797, %v2500
        %vm3850 = vcmask 359424
        %v3851 = vsel %vm3850, %v3799, %v2556
        %v3852 = vsel %vm3850, %v3800, %v2558
        %v3853 = vsel %vm3850, %v3801, %v2560
        %v3854 = vsel %vm3850, %v3802, %v2562
        %v3855 = vsel %vm3850, %v3803, %v2564
        %v3856 = vsel %vm3850, %v3804, %v2566
        %v3857 = vsel %vm3850, %v3805, %v2568
        %v3858 = vsel %vm3850, %v3806, %v2570
        %v3859 = vsel %vm3850, %v3807, %v2572
        %v3860 = vsel %vm3850, %v3808, %v2574
        %v3861 = vsel %vm3850, %v3809, %v2576
        %v3862 = vsel %vm3850, %v3810, %v2578
        %v3863 = vsel %vm3850, %v3811, %v2580
        %v3864 = vsel %vm3850, %v3812, %v2582
        %v3865 = vsel %vm3850, %v3813, %v2584
        %v3866 = vsel %vm3850, %v3814, %v2586
        %v3867 = vsel %vm3850, %v3815, %v2588
        %v3868 = vsel %vm3850, %v3816, %v2590
        %v3869 = vsel %vm3850, %v3817, %v2592
        %v3870 = vsel %vm3850, %v3818, %v2594
        %v3871 = vsel %vm3850, %v3819, %v2596
        %v3872 = vsel %vm3850, %v3820, %v2598
        %v3873 = vsel %vm3850, %v3821, %v2600
        %v3874 = vsel %vm3850, %v3822, %v2602
        %v3875 = vsel %vm3850, %v3823, %v2604
        %v3876 = vsel %vm3850, %v3824, %v2606
        %v3877 = vsel %vm3850, %v3825, %v2608
        %v3878 = vsel %vm3850, %v3826, %v2610
        %v3879 = vsel %vm3850, %v3827, %v2612
        %v3880 = vsel %vm3850, %v3828, %v2614
        %v3881 = vsel %vm3850, %v3829, %v2616
        %v3882 = vsel %vm3850, %v3830, %v2618
        %v3883 = vsel %vm3850, %v3831, %v2620
        %v3884 = vsel %vm3850, %v3832, %v2622
        %v3885 = vsel %vm3850, %v3833, %v2624
        %v3886 = vsel %vm3850, %v3834, %v2626
        %v3887 = vsel %vm3850, %v3835, %v2628
        %v3888 = vsel %vm3850, %v3836, %v2630
        %v3889 = vsel %vm3850, %v3837, %v2632
        %v3890 = vsel %vm3850, %v3838, %v2634
        %v3891 = vsel %vm3850, %v3839, %v2636
        %v3892 = vsel %vm3850, %v3840, %v2638
        %v3893 = vsel %vm3850, %v3841, %v2640
        %v3894 = vsel %vm3850, %v3842, %v2642
        %v3895 = vsel %vm3850, %v3843, %v2644
        %v3896 = vsel %vm3850, %v3844, %v2646
        %v3897 = vsel %vm3850, %v3845, %v2648
        %v3898 = vsel %vm3850, %v3846, %v2650
        %v3899 = vsel %vm3850, %v3847, %v2652
        %v3900 = vsel %vm3850, %v3848, %v2654
        %v3901 = vsel %vm3850, %v3849, %v2656
        %vm3902 = vcmask 392192
        %v3903 = vsel %vm3902, %v3851, %v2712
        %v3904 = vsel %vm3902, %v3852, %v2714
        %v3905 = vsel %vm3902, %v3853, %v2716
        %v3906 = vsel %vm3902, %v3854, %v2718
        %v3907 = vsel %vm3902, %v3855, %v2720
        %v3908 = vsel %vm3902, %v3856, %v2722
        %v3909 = vsel %vm3902, %v3857, %v2724
        %v3910 = vsel %vm3902, %v3858, %v2726
        %v3911 = vsel %vm3902, %v3859, %v2728
        %v3912 = vsel %vm3902, %v3860, %v2730
        %v3913 = vsel %vm3902, %v3861, %v2732
        %v3914 = vsel %vm3902, %v3862, %v2734
        %v3915 = vsel %vm3902, %v3863, %v2736
        %v3916 = vsel %vm3902, %v3864, %v2738
        %v3917 = vsel %vm3902, %v3865, %v2740
        %v3918 = vsel %vm3902, %v3866, %v2742
        %v3919 = vsel %vm3902, %v3867, %v2744
        %v3920 = vsel %vm3902, %v3868, %v2746
        %v3921 = vsel %vm3902, %v3869, %v2748
        %v3922 = vsel %vm3902, %v3870, %v2750
        %v3923 = vsel %vm3902, %v3871, %v2752
        %v3924 = vsel %vm3902, %v3872, %v2754
        %v3925 = vsel %vm3902, %v3873, %v2756
        %v3926 = vsel %vm3902, %v3874, %v2758
        %v3927 = vsel %vm3902, %v3875, %v2760
        %v3928 = vsel %vm3902, %v3876, %v2762
        %v3929 = vsel %vm3902, %v3877, %v2764
        %v3930 = vsel %vm3902, %v3878, %v2766
        %v3931 = vsel %vm3902, %v3879, %v2768
        %v3932 = vsel %vm3902, %v3880, %v2770
        %v3933 = vsel %vm3902, %v3881, %v2772
        %v3934 = vsel %vm3902, %v3882, %v2774
        %v3935 = vsel %vm3902, %v3883, %v2776
        %v3936 = vsel %vm3902, %v3884, %v2778
        %v3937 = vsel %vm3902, %v3885, %v2780
        %v3938 = vsel %vm3902, %v3886, %v2782
        %v3939 = vsel %vm3902, %v3887, %v2784
        %v3940 = vsel %vm3902, %v3888, %v2786
        %v3941 = vsel %vm3902, %v3889, %v2788
        %v3942 = vsel %vm3902, %v3890, %v2790
        %v3943 = vsel %vm3902, %v3891, %v2792
        %v3944 = vsel %vm3902, %v3892, %v2794
        %v3945 = vsel %vm3902, %v3893, %v2796
        %v3946 = vsel %vm3902, %v3894, %v2798
        %v3947 = vsel %vm3902, %v3895, %v2800
        %v3948 = vsel %vm3902, %v3896, %v2802
        %v3949 = vsel %vm3902, %v3897, %v2804
        %v3950 = vsel %vm3902, %v3898, %v2806
        %v3951 = vsel %vm3902, %v3899, %v2808
        %v3952 = vsel %vm3902, %v3900, %v2810
        %v3953 = vsel %vm3902, %v3901, %v2812
        %vm3954 = vcmask 424960
        %v3955 = vsel %vm3954, %v3903, %v2868
        %v3956 = vsel %vm3954, %v3904, %v2870
        %v3957 = vsel %vm3954, %v3905, %v2872
        %v3958 = vsel %vm3954, %v3906, %v2874
        %v3959 = vsel %vm3954, %v3907, %v2876
        %v3960 = vsel %vm3954, %v3908, %v2878
        %v3961 = vsel %vm3954, %v3909, %v2880
        %v3962 = vsel %vm3954, %v3910, %v2882
        %v3963 = vsel %vm3954, %v3911, %v2884
        %v3964 = vsel %vm3954, %v3912, %v2886
        %v3965 = vsel %vm3954, %v3913, %v2888
        %v3966 = vsel %vm3954, %v3914, %v2890
        %v3967 = vsel %vm3954, %v3915, %v2892
        %v3968 = vsel %vm3954, %v3916, %v2894
        %v3969 = vsel %vm3954, %v3917, %v2896
        %v3970 = vsel %vm3954, %v3918, %v2898
        %v3971 = vsel %vm3954, %v3919, %v2900
        %v3972 = vsel %vm3954, %v3920, %v2902
        %v3973 = vsel %vm3954, %v3921, %v2904
        %v3974 = vsel %vm3954, %v3922, %v2906
        %v3975 = vsel %vm3954, %v3923, %v2908
        %v3976 = vsel %vm3954, %v3924, %v2910
        %v3977 = vsel %vm3954, %v3925, %v2912
        %v3978 = vsel %vm3954, %v3926, %v2914
        %v3979 = vsel %vm3954, %v3927, %v2916
        %v3980 = vsel %vm3954, %v3928, %v2918
        %v3981 = vsel %vm3954, %v3929, %v2920
        %v3982 = vsel %vm3954, %v3930, %v2922
        %v3983 = vsel %vm3954, %v3931, %v2924
        %v3984 = vsel %vm3954, %v3932, %v2926
        %v3985 = vsel %vm3954, %v3933, %v2928
        %v3986 = vsel %vm3954, %v3934, %v2930
        %v3987 = vsel %vm3954, %v3935, %v2932
        %v3988 = vsel %vm3954, %v3936, %v2934
        %v3989 = vsel %vm3954, %v3937, %v2936
        %v3990 = vsel %vm3954, %v3938, %v2938
        %v3991 = vsel %vm3954, %v3939, %v2940
        %v3992 = vsel %vm3954, %v3940, %v2942
        %v3993 = vsel %vm3954, %v3941, %v2944
        %v3994 = vsel %vm3954, %v3942, %v2946
        %v3995 = vsel %vm3954, %v3943, %v2948
        %v3996 = vsel %vm3954, %v3944, %v2950
        %v3997 = vsel %vm3954, %v3945, %v2952
        %v3998 = vsel %vm3954, %v3946, %v2954
        %v3999 = vsel %vm3954, %v3947, %v2956
        %v4000 = vsel %vm3954, %v3948, %v2958
        %v4001 = vsel %vm3954, %v3949, %v2960
        %v4002 = vsel %vm3954, %v3950, %v2962
        %v4003 = vsel %vm3954, %v3951, %v2964
        %v4004 = vsel %vm3954, %v3952, %v2966
        %v4005 = vsel %vm3954, %v3953, %v2968
        %vm4006 = vcmask 457728
        %v4007 = vsel %vm4006, %v3955, %v3024
        %v4008 = vsel %vm4006, %v3956, %v3026
        %v4009 = vsel %vm4006, %v3957, %v3028
        %v4010 = vsel %vm4006, %v3958, %v3030
        %v4011 = vsel %vm4006, %v3959, %v3032
        %v4012 = vsel %vm4006, %v3960, %v3034
        %v4013 = vsel %vm4006, %v3961, %v3036
        %v4014 = vsel %vm4006, %v3962, %v3038
        %v4015 = vsel %vm4006, %v3963, %v3040
        %v4016 = vsel %vm4006, %v3964, %v3042
        %v4017 = vsel %vm4006, %v3965, %v3044
        %v4018 = vsel %vm4006, %v3966, %v3046
        %v4019 = vsel %vm4006, %v3967, %v3048
        %v4020 = vsel %vm4006, %v3968, %v3050
        %v4021 = vsel %vm4006, %v3969, %v3052
        %v4022 = vsel %vm4006, %v3970, %v3054
        %v4023 = vsel %vm4006, %v3971, %v3056
        %v4024 = vsel %vm4006, %v3972, %v3058
        %v4025 = vsel %vm4006, %v3973, %v3060
        %v4026 = vsel %vm4006, %v3974, %v3062
        %v4027 = vsel %vm4006, %v3975, %v3064
        %v4028 = vsel %vm4006, %v3976, %v3066
        %v4029 = vsel %vm4006, %v3977, %v3068
        %v4030 = vsel %vm4006, %v3978, %v3070
        %v4031 = vsel %vm4006, %v3979, %v3072
        %v4032 = vsel %vm4006, %v3980, %v3074
        %v4033 = vsel %vm4006, %v3981, %v3076
        %v4034 = vsel %vm4006, %v3982, %v3078
        %v4035 = vsel %vm4006, %v3983, %v3080
        %v4036 = vsel %vm4006, %v3984, %v3082
        %v4037 = vsel %vm4006, %v3985, %v3084
        %v4038 = vsel %vm4006, %v3986, %v3086
        %v4039 = vsel %vm4006, %v3987, %v3088
        %v4040 = vsel %vm4006, %v3988, %v3090
        %v4041 = vsel %vm4006, %v3989, %v3092
        %v4042 = vsel %vm4006, %v3990, %v3094
        %v4043 = vsel %vm4006, %v3991, %v3096
        %v4044 = vsel %vm4006, %v3992, %v3098
        %v4045 = vsel %vm4006, %v3993, %v3100
        %v4046 = vsel %vm4006, %v3994, %v3102
        %v4047 = vsel %vm4006, %v3995, %v3104
        %v4048 = vsel %vm4006, %v3996, %v3106
        %v4049 = vsel %vm4006, %v3997, %v3108
        %v4050 = vsel %vm4006, %v3998, %v3110
        %v4051 = vsel %vm4006, %v3999, %v3112
        %v4052 = vsel %vm4006, %v4000, %v3114
        %v4053 = vsel %vm4006, %v4001, %v3116
        %v4054 = vsel %vm4006, %v4002, %v3118
        %v4055 = vsel %vm4006, %v4003, %v3120
        %v4056 = vsel %vm4006, %v4004, %v3122
        %v4057 = vsel %vm4006, %v4005, %v3124
        %vm4058 = vcmask 490496
        %v4059 = vsel %vm4058, %v4007, %v3180
        %v4060 = vsel %vm4058, %v4008, %v3182
        %v4061 = vsel %vm4058, %v4009, %v3184
        %v4062 = vsel %vm4058, %v4010, %v3186
        %v4063 = vsel %vm4058, %v4011, %v3188
        %v4064 = vsel %vm4058, %v4012, %v3190
        %v4065 = vsel %vm4058, %v4013, %v3192
        %v4066 = vsel %vm4058, %v4014, %v3194
        %v4067 = vsel %vm4058, %v4015, %v3196
        %v4068 = vsel %vm4058, %v4016, %v3198
        %v4069 = vsel %vm4058, %v4017, %v3200
        %v4070 = vsel %vm4058, %v4018, %v3202
        %v4071 = vsel %vm4058, %v4019, %v3204
        %v4072 = vsel %vm4058, %v4020, %v3206
        %v4073 = vsel %vm4058, %v4021, %v3208
        %v4074 = vsel %vm4058, %v4022, %v3210
        %v4075 = vsel %vm4058, %v4023, %v3212
        %v4076 = vsel %vm4058, %v4024, %v3214
        %v4077 = vsel %vm4058, %v4025, %v3216
        %v4078 = vsel %vm4058, %v4026, %v3218
        %v4079 = vsel %vm4058, %v4027, %v3220
        %v4080 = vsel %vm4058, %v4028, %v3222
        %v4081 = vsel %vm4058, %v4029, %v3224
        %v4082 = vsel %vm4058, %v4030, %v3226
        %v4083 = vsel %vm4058, %v4031, %v3228
        %v4084 = vsel %vm4058, %v4032, %v3230
        %v4085 = vsel %vm4058, %v4033, %v3232
        %v4086 = vsel %vm4058, %v4034, %v3234
        %v4087 = vsel %vm4058, %v4035, %v3236
        %v4088 = vsel %vm4058, %v4036, %v3238
        %v4089 = vsel %vm4058, %v4037, %v3240
        %v4090 = vsel %vm4058, %v4038, %v3242
        %v4091 = vsel %vm4058, %v4039, %v3244
        %v4092 = vsel %vm4058, %v4040, %v3246
        %v4093 = vsel %vm4058, %v4041, %v3248
        %v4094 = vsel %vm4058, %v4042, %v3250
        %v4095 = vsel %vm4058, %v4043, %v3252
        %v4096 = vsel %vm4058, %v4044, %v3254
        %v4097 = vsel %vm4058, %v4045, %v3256
        %v4098 = vsel %vm4058, %v4046, %v3258
        %v4099 = vsel %vm4058, %v4047, %v3260
        %v4100 = vsel %vm4058, %v4048, %v3262
        %v4101 = vsel %vm4058, %v4049, %v3264
        %v4102 = vsel %vm4058, %v4050, %v3266
        %v4103 = vsel %vm4058, %v4051, %v3268
        %v4104 = vsel %vm4058, %v4052, %v3270
        %v4105 = vsel %vm4058, %v4053, %v3272
        %v4106 = vsel %vm4058, %v4054, %v3274
        %v4107 = vsel %vm4058, %v4055, %v3276
        %v4108 = vsel %vm4058, %v4056, %v3278
        %v4109 = vsel %vm4058, %v4057, %v3280
        %v4110 = vpack.c.bf16 %v4060, %v4059
        %v4111 = vpack.c.bf16 %v4062, %v4061
        %v4112 = vpack.c.bf16 %v4064, %v4063
        %v4113 = vpack.c.bf16 %v4066, %v4065
        %v4114 = vpack.c.bf16 %v4068, %v4067
        %v4115 = vpack.c.bf16 %v4070, %v4069
        %v4116 = vpack.c.bf16 %v4072, %v4071
        %v4117 = vpack.c.bf16 %v4074, %v4073
        %v4118 = vpack.c.bf16 %v4076, %v4075
        %v4119 = vpack.c.bf16 %v4078, %v4077
        %v4120 = vpack.c.bf16 %v4080, %v4079
        %v4121 = vpack.c.bf16 %v4082, %v4081
        %v4122 = vpack.c.bf16 %v4084, %v4083
        %v4123 = vpack.c.bf16 %v4086, %v4085
        %v4124 = vpack.c.bf16 %v4088, %v4087
        %v4125 = vpack.c.bf16 %v4090, %v4089
        %v4126 = vpack.c.bf16 %v4092, %v4091
        %v4127 = vpack.c.bf16 %v4094, %v4093
        %v4128 = vpack.c.bf16 %v4096, %v4095
        %v4129 = vpack.c.bf16 %v4098, %v4097
        %v4130 = vpack.c.bf16 %v4100, %v4099
        %v4131 = vpack.c.bf16 %v4102, %v4101
        %v4132 = vpack.c.bf16 %v4104, %v4103
        %v4133 = vpack.c.bf16 %v4106, %v4105
        %v4134 = vpack.c.bf16 %v4108, %v4107
        %v4135 = vpack.c.bf16 %v4109, %v4109
        %v4136 = vld [vmem:[%s1] sm:$0xf]
        %v4137 = vld [vmem:[%s1 + $0x4] sm:$0xf]
        %v4138 = vld [vmem:[%s1 + $0x8] sm:$0xf]
        %v4139 = vld [vmem:[%s1 + $0xc] sm:$0xf]
        %v4140 = vld [vmem:[%s1 + $0x10] sm:$0xf]
        %v4141 = vld [vmem:[%s1 + $0x14] sm:$0xf]
        %v4142 = vld [vmem:[%s1 + $0x18] sm:$0xf]
        %v4143 = vld [vmem:[%s1 + $0x1c] sm:$0xf]
        %v4152 = vunpack.c.l.b16 %v4136
        %v4153 = vunpack.c.l.b16 %v4137
        %v4154 = vunpack.c.l.b16 %v4138
        %v4155 = vunpack.c.l.b16 %v4139
        %v4156 = vunpack.c.l.b16 %v4140
        %v4157 = vunpack.c.l.b16 %v4141
        %v4158 = vunpack.c.l.b16 %v4142
        %v4159 = vunpack.c.l.b16 %v4143
        %v4160 = vpack.c.b16 %v4153, %v4152
        %v4161 = vpack.c.b16 %v4155, %v4154
        %v4162 = vpack.c.b16 %v4157, %v4156
        %v4163 = vpack.c.b16 %v4159, %v4158
        %vm4168 = vcmask 523264
        %v4170 = vsel %vm4168, %v4110, 0
        %v4173 = vsel %vm4168, %v4111, 0
        %v4176 = vsel %vm4168, %v4112, 0
        %v4179 = vsel %vm4168, %v4113, 0
        %v4182 = vsel %vm4168, %v4114, 0
        %v4185 = vsel %vm4168, %v4115, 0
        %v4188 = vsel %vm4168, %v4116, 0
        %v4191 = vsel %vm4168, %v4117, 0
        %v4194 = vsel %vm4168, %v4118, 0
        %v4197 = vsel %vm4168, %v4119, 0
        %v4200 = vsel %vm4168, %v4120, 0
        %v4203 = vsel %vm4168, %v4121, 0
        %v4206 = vsel %vm4168, %v4122, 0
        %v4209 = vsel %vm4168, %v4123, 0
        %v4212 = vsel %vm4168, %v4124, 0
        %v4215 = vsel %vm4168, %v4125, 0
        %v4218 = vsel %vm4168, %v4126, 0
        %v4221 = vsel %vm4168, %v4127, 0
        %v4224 = vsel %vm4168, %v4128, 0
        %v4227 = vsel %vm4168, %v4129, 0
        %v4230 = vsel %vm4168, %v4130, 0
        %v4233 = vsel %vm4168, %v4131, 0
        %v4236 = vsel %vm4168, %v4132, 0
        %v4239 = vsel %vm4168, %v4133, 0
        %v4242 = vsel %vm4168, %v4134, 0
        %v4245 = vsel %vm4168, %v4135, 0
        %4247 = vmatprep.subr.bf16.mxu0 0
        %4248 = vmatpush1.bf16.msra.mxu0 %v4160
        %4249 = vmatprep.subr.bf16.mxu0 0
        %4250 = vmatpush1.bf16.msra.mxu0 %v4161
        %4251 = vmatprep.subr.bf16.mxu0 0
        %4252 = vmatpush1.bf16.msra.mxu0 %v4162
        %4253 = vmatprep.subr.bf16.mxu0 0
        %4254 = vmatpush1.bf16.msra.mxu0 %v4163
        %4255 = vmatprep.subr.bf16.mxu0 0
        %4256 = vmatpush1.bf16.msra.mxu0 0
        %4257 = vmatprep.subr.bf16.mxu0 0
        %4258 = vmatpush1.bf16.msra.mxu0 0
        %4259 = vmatprep.subr.bf16.mxu0 0
        %4260 = vmatpush1.bf16.msra.mxu0 0
        %4261 = vmatprep.subr.bf16.mxu0 0
        %4262 = vmatpush1.bf16.msra.mxu0 0
        %4263 = vmatprep.subr.bf16.mxu0 0
        %4264 = vmatpush1.bf16.msra.mxu0 0
        %4265 = vmatprep.subr.bf16.mxu0 0
        %4266 = vmatpush1.bf16.msra.mxu0 0
        %4267 = vmatprep.subr.bf16.mxu0 0
        %4268 = vmatpush1.bf16.msra.mxu0 0
        %4269 = vmatprep.subr.bf16.mxu0 0
        %4270 = vmatpush1.bf16.msra.mxu0 0
        %4271 = vmatprep.subr.bf16.mxu0 0
        %4272 = vmatpush1.bf16.msra.mxu0 0
        %4273 = vmatprep.subr.bf16.mxu0 0
        %4274 = vmatpush1.bf16.msra.mxu0 0
        %4275 = vmatprep.subr.bf16.mxu0 0
        %4276 = vmatpush1.bf16.msra.mxu0 0
        %4277 = vmatprep.subr.bf16.mxu0 0
        %4278 = vmatpush1.bf16.msra.mxu0 0
        %4279 = vmatprep.mubr.bf16.mxu0 0
        %4280 = vmatmul.mubr.bf16.gmra.mrb[0].mxu0 %v4170
        %v4281 = vpop.f32.mrb[0].mxu0
        %v4282 = vadd.f32 0.0, %v4281
        %v4283 = vpop.f32.mrb[0].mxu0
        %v4284 = vpop.f32.mrb[0].mxu0
        %v4285 = vadd.f32 0.0, %v4284
        %v4286 = vpop.f32.mrb[0].mxu0
        %4287 = vmatprep.mubr.bf16.mxu0 0
        %4288 = vmatmul.mubr.bf16.gmra.mrb[0].mxu0 %v4173
        %v4289 = vpop.f32.mrb[0].mxu0
        %v4290 = vadd.f32 0.0, %v4289
        %v4291 = vpop.f32.mrb[0].mxu0
        %v4292 = vpop.f32.mrb[0].mxu0
        %v4293 = vadd.f32 0.0, %v4292
        %v4294 = vpop.f32.mrb[0].mxu0
        %4295 = vmatprep.mubr.bf16.mxu0 0
        %4296 = vmatmul.mubr.bf16.gmra.mrb[0].mxu0 %v4176
        %v4297 = vpop.f32.mrb[0].mxu0
        %v4298 = vadd.f32 0.0, %v4297
        %v4299 = vpop.f32.mrb[0].mxu0
        %v4300 = vpop.f32.mrb[0].mxu0
        %v4301 = vadd.f32 0.0, %v4300
        %v4302 = vpop.f32.mrb[0].mxu0
        %4303 = vmatprep.mubr.bf16.mxu0 0
        %4304 = vmatmul.mubr.bf16.gmra.mrb[0].mxu0 %v4179
        %v4305 = vpop.f32.mrb[0].mxu0
        %v4306 = vadd.f32 0.0, %v4305
        %v4307 = vpop.f32.mrb[0].mxu0
        %v4308 = vpop.f32.mrb[0].mxu0
        %v4309 = vadd.f32 0.0, %v4308
        %v4310 = vpop.f32.mrb[0].mxu0
        %4311 = vmatprep.mubr.bf16.mxu0 0
        %4312 = vmatmul.mubr.bf16.gmra.mrb[0].mxu0 %v4182
        %v4313 = vpop.f32.mrb[0].mxu0
        %v4314 = vadd.f32 0.0, %v4313
        %v4315 = vpop.f32.mrb[0].mxu0
        %v4316 = vpop.f32.mrb[0].mxu0
        %v4317 = vadd.f32 0.0, %v4316
        %v4318 = vpop.f32.mrb[0].mxu0
        %4319 = vmatprep.mubr.bf16.mxu0 0
        %4320 = vmatmul.mubr.bf16.gmra.mrb[0].mxu0 %v4185
        %v4321 = vpop.f32.mrb[0].mxu0
        %v4322 = vadd.f32 0.0, %v4321
        %v4323 = vpop.f32.mrb[0].mxu0
        %v4324 = vpop.f32.mrb[0].mxu0
        %v4325 = vadd.f32 0.0, %v4324
        %v4326 = vpop.f32.mrb[0].mxu0
        %4327 = vmatprep.mubr.bf16.mxu0 0
        %4328 = vmatmul.mubr.bf16.gmra.mrb[0].mxu0 %v4188
        %v4329 = vpop.f32.mrb[0].mxu0
        %v4330 = vadd.f32 0.0, %v4329
        %v4331 = vpop.f32.mrb[0].mxu0
        %v4332 = vpop.f32.mrb[0].mxu0
        %v4333 = vadd.f32 0.0, %v4332
        %v4334 = vpop.f32.mrb[0].mxu0
        %4335 = vmatprep.mubr.bf16.mxu0 0
        %4336 = vmatmul.mubr.bf16.gmra.mrb[0].mxu0 %v4191
        %v4337 = vpop.f32.mrb[0].mxu0
        %v4338 = vadd.f32 0.0, %v4337
        %v4339 = vpop.f32.mrb[0].mxu0
        %v4340 = vpop.f32.mrb[0].mxu0
        %v4341 = vadd.f32 0.0, %v4340
        %v4342 = vpop.f32.mrb[0].mxu0
        %4343 = vmatprep.mubr.bf16.mxu0 0
        %4344 = vmatmul.mubr.bf16.gmra.mrb[0].mxu0 %v4194
        %v4345 = vpop.f32.mrb[0].mxu0
        %v4346 = vadd.f32 0.0, %v4345
        %v4347 = vpop.f32.mrb[0].mxu0
        %v4348 = vpop.f32.mrb[0].mxu0
        %v4349 = vadd.f32 0.0, %v4348
        %v4350 = vpop.f32.mrb[0].mxu0
        %4351 = vmatprep.mubr.bf16.mxu0 0
        %4352 = vmatmul.mubr.bf16.gmra.mrb[0].mxu0 %v4197
        %v4353 = vpop.f32.mrb[0].mxu0
        %v4354 = vadd.f32 0.0, %v4353
        %v4355 = vpop.f32.mrb[0].mxu0
        %v4356 = vpop.f32.mrb[0].mxu0
        %v4357 = vadd.f32 0.0, %v4356
        %v4358 = vpop.f32.mrb[0].mxu0
        %4359 = vmatprep.mubr.bf16.mxu0 0
        %4360 = vmatmul.mubr.bf16.gmra.mrb[0].mxu0 %v4200
        %v4361 = vpop.f32.mrb[0].mxu0
        %v4362 = vadd.f32 0.0, %v4361
        %v4363 = vpop.f32.mrb[0].mxu0
        %v4364 = vpop.f32.mrb[0].mxu0
        %v4365 = vadd.f32 0.0, %v4364
        %v4366 = vpop.f32.mrb[0].mxu0
        %4367 = vmatprep.mubr.bf16.mxu0 0
        %4368 = vmatmul.mubr.bf16.gmra.mrb[0].mxu0 %v4203
        %v4369 = vpop.f32.mrb[0].mxu0
        %v4370 = vadd.f32 0.0, %v4369
        %v4371 = vpop.f32.mrb[0].mxu0
        %v4372 = vpop.f32.mrb[0].mxu0
        %v4373 = vadd.f32 0.0, %v4372
        %v4374 = vpop.f32.mrb[0].mxu0
        %4375 = vmatprep.mubr.bf16.mxu0 0
        %4376 = vmatmul.mubr.bf16.gmra.mrb[0].mxu0 %v4206
        %v4377 = vpop.f32.mrb[0].mxu0
        %v4378 = vadd.f32 0.0, %v4377
        %v4379 = vpop.f32.mrb[0].mxu0
        %v4380 = vpop.f32.mrb[0].mxu0
        %v4381 = vadd.f32 0.0, %v4380
        %v4382 = vpop.f32.mrb[0].mxu0
        %4383 = vmatprep.mubr.bf16.mxu0 0
        %4384 = vmatmul.mubr.bf16.gmra.mrb[0].mxu0 %v4209
        %v4385 = vpop.f32.mrb[0].mxu0
        %v4386 = vadd.f32 0.0, %v4385
        %v4387 = vpop.f32.mrb[0].mxu0
        %v4388 = vpop.f32.mrb[0].mxu0
        %v4389 = vadd.f32 0.0, %v4388
        %v4390 = vpop.f32.mrb[0].mxu0
        %4391 = vmatprep.mubr.bf16.mxu0 0
        %4392 = vmatmul.mubr.bf16.gmra.mrb[0].mxu0 %v4212
        %v4393 = vpop.f32.mrb[0].mxu0
        %v4394 = vadd.f32 0.0, %v4393
        %v4395 = vpop.f32.mrb[0].mxu0
        %v4396 = vpop.f32.mrb[0].mxu0
        %v4397 = vadd.f32 0.0, %v4396
        %v4398 = vpop.f32.mrb[0].mxu0
        %4399 = vmatprep.mubr.bf16.mxu0 0
        %4400 = vmatmul.mubr.bf16.gmra.mrb[0].mxu0 %v4215
        %v4401 = vpop.f32.mrb[0].mxu0
        %v4402 = vadd.f32 0.0, %v4401
        %v4403 = vpop.f32.mrb[0].mxu0
        %v4404 = vpop.f32.mrb[0].mxu0
        %v4405 = vadd.f32 0.0, %v4404
        %v4406 = vpop.f32.mrb[0].mxu0
        %4407 = vmatprep.mubr.bf16.mxu0 0
        %4408 = vmatmul.mubr.bf16.gmra.mrb[0].mxu0 %v4218
        %v4409 = vpop.f32.mrb[0].mxu0
        %v4410 = vadd.f32 0.0, %v4409
        %v4411 = vpop.f32.mrb[0].mxu0
        %v4412 = vpop.f32.mrb[0].mxu0
        %v4413 = vadd.f32 0.0, %v4412
        %v4414 = vpop.f32.mrb[0].mxu0
        %4415 = vmatprep.mubr.bf16.mxu0 0
        %4416 = vmatmul.mubr.bf16.gmra.mrb[0].mxu0 %v4221
        %v4417 = vpop.f32.mrb[0].mxu0
        %v4418 = vadd.f32 0.0, %v4417
        %v4419 = vpop.f32.mrb[0].mxu0
        %v4420 = vpop.f32.mrb[0].mxu0
        %v4421 = vadd.f32 0.0, %v4420
        %v4422 = vpop.f32.mrb[0].mxu0
        %4423 = vmatprep.mubr.bf16.mxu0 0
        %4424 = vmatmul.mubr.bf16.gmra.mrb[0].mxu0 %v4224
        %v4425 = vpop.f32.mrb[0].mxu0
        %v4426 = vadd.f32 0.0, %v4425
        %v4427 = vpop.f32.mrb[0].mxu0
        %v4428 = vpop.f32.mrb[0].mxu0
        %v4429 = vadd.f32 0.0, %v4428
        %v4430 = vpop.f32.mrb[0].mxu0
        %4431 = vmatprep.mubr.bf16.mxu0 0
        %4432 = vmatmul.mubr.bf16.gmra.mrb[0].mxu0 %v4227
        %v4433 = vpop.f32.mrb[0].mxu0
        %v4434 = vadd.f32 0.0, %v4433
        %v4435 = vpop.f32.mrb[0].mxu0
        %v4436 = vpop.f32.mrb[0].mxu0
        %v4437 = vadd.f32 0.0, %v4436
        %v4438 = vpop.f32.mrb[0].mxu0
        %4439 = vmatprep.mubr.bf16.mxu0 0
        %4440 = vmatmul.mubr.bf16.gmra.mrb[0].mxu0 %v4230
        %v4441 = vpop.f32.mrb[0].mxu0
        %v4442 = vadd.f32 0.0, %v4441
        %v4443 = vpop.f32.mrb[0].mxu0
        %v4444 = vpop.f32.mrb[0].mxu0
        %v4445 = vadd.f32 0.0, %v4444
        %v4446 = vpop.f32.mrb[0].mxu0
        %4447 = vmatprep.mubr.bf16.mxu0 0
        %4448 = vmatmul.mubr.bf16.gmra.mrb[0].mxu0 %v4233
        %v4449 = vpop.f32.mrb[0].mxu0
        %v4450 = vadd.f32 0.0, %v4449
        %v4451 = vpop.f32.mrb[0].mxu0
        %v4452 = vpop.f32.mrb[0].mxu0
        %v4453 = vadd.f32 0.0, %v4452
        %v4454 = vpop.f32.mrb[0].mxu0
        %4455 = vmatprep.mubr.bf16.mxu0 0
        %4456 = vmatmul.mubr.bf16.gmra.mrb[0].mxu0 %v4236
        %v4457 = vpop.f32.mrb[0].mxu0
        %v4458 = vadd.f32 0.0, %v4457
        %v4459 = vpop.f32.mrb[0].mxu0
        %v4460 = vpop.f32.mrb[0].mxu0
        %v4461 = vadd.f32 0.0, %v4460
        %v4462 = vpop.f32.mrb[0].mxu0
        %4463 = vmatprep.mubr.bf16.mxu0 0
        %4464 = vmatmul.mubr.bf16.gmra.mrb[0].mxu0 %v4239
        %v4465 = vpop.f32.mrb[0].mxu0
        %v4466 = vadd.f32 0.0, %v4465
        %v4467 = vpop.f32.mrb[0].mxu0
        %v4468 = vpop.f32.mrb[0].mxu0
        %v4469 = vadd.f32 0.0, %v4468
        %v4470 = vpop.f32.mrb[0].mxu0
        %4471 = vmatprep.mubr.bf16.mxu0 0
        %4472 = vmatmul.mubr.bf16.gmra.mrb[0].mxu0 %v4242
        %v4473 = vpop.f32.mrb[0].mxu0
        %v4474 = vadd.f32 0.0, %v4473
        %v4475 = vpop.f32.mrb[0].mxu0
        %v4476 = vpop.f32.mrb[0].mxu0
        %v4477 = vadd.f32 0.0, %v4476
        %v4478 = vpop.f32.mrb[0].mxu0
        %4479 = vmatprep.mubr.bf16.mxu0 0
        %4480 = vmatmul.mubr.bf16.gmra.mrb[0].mxu0 %v4245
        %v4481 = vpop.f32.mrb[0].mxu0
        %v4482 = vadd.f32 0.0, %v4481
        %v4483 = vpop.f32.mrb[0].mxu0
        %v4484 = vpop.f32.mrb[0].mxu0
        %v4485 = vpop.f32.mrb[0].mxu0
        %4486 = vdwg.mxu0
        %v4487 = vmax.f32 %v4282, 0.0
        %v4488 = vmax.f32 %v4285, 0.0
        %v4489 = vmax.f32 %v4290, 0.0
        %v4490 = vmax.f32 %v4293, 0.0
        %v4491 = vmax.f32 %v4298, 0.0
        %v4492 = vmax.f32 %v4301, 0.0
        %v4493 = vmax.f32 %v4306, 0.0
        %v4494 = vmax.f32 %v4309, 0.0
        %v4495 = vmax.f32 %v4314, 0.0
        %v4496 = vmax.f32 %v4317, 0.0
        %v4497 = vmax.f32 %v4322, 0.0
        %v4498 = vmax.f32 %v4325, 0.0
        %v4499 = vmax.f32 %v4330, 0.0
        %v4500 = vmax.f32 %v4333, 0.0
        %v4501 = vmax.f32 %v4338, 0.0
        %v4502 = vmax.f32 %v4341, 0.0
        %v4503 = vmax.f32 %v4346, 0.0
        %v4504 = vmax.f32 %v4349, 0.0
        %v4505 = vmax.f32 %v4354, 0.0
        %v4506 = vmax.f32 %v4357, 0.0
        %v4507 = vmax.f32 %v4362, 0.0
        %v4508 = vmax.f32 %v4365, 0.0
        %v4509 = vmax.f32 %v4370, 0.0
        %v4510 = vmax.f32 %v4373, 0.0
        %v4511 = vmax.f32 %v4378, 0.0
        %v4512 = vmax.f32 %v4381, 0.0
        %v4513 = vmax.f32 %v4386, 0.0
        %v4514 = vmax.f32 %v4389, 0.0
        %v4515 = vmax.f32 %v4394, 0.0
        %v4516 = vmax.f32 %v4397, 0.0
        %v4517 = vmax.f32 %v4402, 0.0
        %v4518 = vmax.f32 %v4405, 0.0
        %v4519 = vmax.f32 %v4410, 0.0
        %v4520 = vmax.f32 %v4413, 0.0
        %v4521 = vmax.f32 %v4418, 0.0
        %v4522 = vmax.f32 %v4421, 0.0
        %v4523 = vmax.f32 %v4426, 0.0
        %v4524 = vmax.f32 %v4429, 0.0
        %v4525 = vmax.f32 %v4434, 0.0
        %v4526 = vmax.f32 %v4437, 0.0
        %v4527 = vmax.f32 %v4442, 0.0
        %v4528 = vmax.f32 %v4445, 0.0
        %v4529 = vmax.f32 %v4450, 0.0
        %v4530 = vmax.f32 %v4453, 0.0
        %v4531 = vmax.f32 %v4458, 0.0
        %v4532 = vmax.f32 %v4461, 0.0
        %v4533 = vmax.f32 %v4466, 0.0
        %v4534 = vmax.f32 %v4469, 0.0
        %v4535 = vmax.f32 %v4474, 0.0
        %v4536 = vmax.f32 %v4477, 0.0
        %v4537 = vmax.f32 %v4482, 0.0
        %v4538 = vsel %vm241, 1, 0
        %v4539 = vsel %vm242, 1, 0
        %v4540 = vsel %vm243, 1, 0
        %vm4541 = vcmp.eq.s32.totalorder %v4538, 1
        %vm4542 = vcmp.eq.s32.totalorder %v4539, 1
        %vm4543 = vcmp.eq.s32.totalorder %v4540, 1
        %v4544 = vsel %vm4541, %v4487, 0.0
        %v4545 = vsel %vm4542, %v4488, 0.0
        %v4546 = vsel %vm4543, %v4489, 0.0
        %v4547 = vsel %vm4541, %v4490, 0.0
        %v4548 = vsel %vm4542, %v4491, 0.0
        %v4549 = vsel %vm4543, %v4492, 0.0
        %v4550 = vsel %vm4541, %v4493, 0.0
        %v4551 = vsel %vm4542, %v4494, 0.0
        %v4552 = vsel %vm4543, %v4495, 0.0
        %v4553 = vsel %vm4541, %v4496, 0.0
        %v4554 = vsel %vm4542, %v4497, 0.0
        %v4555 = vsel %vm4543, %v4498, 0.0
        %v4556 = vsel %vm4541, %v4499, 0.0
        %v4557 = vsel %vm4542, %v4500, 0.0
        %v4558 = vsel %vm4543, %v4501, 0.0
        %v4559 = vsel %vm4541, %v4502, 0.0
        %v4560 = vsel %vm4542, %v4503, 0.0
        %v4561 = vsel %vm4543, %v4504, 0.0
        %v4562 = vsel %vm4541, %v4505, 0.0
        %v4563 = vsel %vm4542, %v4506, 0.0
        %v4564 = vsel %vm4543, %v4507, 0.0
        %v4565 = vsel %vm4541, %v4508, 0.0
        %v4566 = vsel %vm4542, %v4509, 0.0
        %v4567 = vsel %vm4543, %v4510, 0.0
        %v4568 = vsel %vm4541, %v4511, 0.0
        %v4569 = vsel %vm4542, %v4512, 0.0
        %v4570 = vsel %vm4543, %v4513, 0.0
        %v4571 = vsel %vm4541, %v4514, 0.0
        %v4572 = vsel %vm4542, %v4515, 0.0
        %v4573 = vsel %vm4543, %v4516, 0.0
        %v4574 = vsel %vm4541, %v4517, 0.0
        %v4575 = vsel %vm4542, %v4518, 0.0
        %v4576 = vsel %vm4543, %v4519, 0.0
        %v4577 = vsel %vm4541, %v4520, 0.0
        %v4578 = vsel %vm4542, %v4521, 0.0
        %v4579 = vsel %vm4543, %v4522, 0.0
        %v4580 = vsel %vm4541, %v4523, 0.0
        %v4581 = vsel %vm4542, %v4524, 0.0
        %v4582 = vsel %vm4543, %v4525, 0.0
        %v4583 = vsel %vm4541, %v4526, 0.0
        %v4584 = vsel %vm4542, %v4527, 0.0
        %v4585 = vsel %vm4543, %v4528, 0.0
        %v4586 = vsel %vm4541, %v4529, 0.0
        %v4587 = vsel %vm4542, %v4530, 0.0
        %v4588 = vsel %vm4543, %v4531, 0.0
        %v4589 = vsel %vm4541, %v4532, 0.0
        %v4590 = vsel %vm4542, %v4533, 0.0
        %v4591 = vsel %vm4543, %v4534, 0.0
        %v4592 = vsel %vm4541, %v4535, 0.0
        %v4593 = vsel %vm4542, %v4536, 0.0
        %v4594 = vsel %vm4543, %v4537, 0.0
        %4595 = vst.msk [vmem:[#allocation3 + $0x30] sm:$0xff] %vm224, %v4544
        %4596 = vst.msk [vmem:[#allocation3 + $0x38] sm:$0xff] %vm224, %v4545
        %4597 = vst.msk [vmem:[#allocation3 + $0x40] sm:$0xff] %vm224, %v4546
        %4598 = vst.msk [vmem:[#allocation3 + $0x48] sm:$0xff] %vm224, %v4547
        %4599 = vst.msk [vmem:[#allocation3 + $0x50] sm:$0xff] %vm224, %v4548
        %4600 = vst.msk [vmem:[#allocation3 + $0x58] sm:$0xff] %vm224, %v4549
        %4601 = vst.msk [vmem:[#allocation3 + $0x60] sm:$0xff] %vm224, %v4550
        %4602 = vst.msk [vmem:[#allocation3 + $0x68] sm:$0xff] %vm224, %v4551
        %4603 = vst.msk [vmem:[#allocation3 + $0x70] sm:$0xff] %vm224, %v4552
        %4604 = vst.msk [vmem:[#allocation3 + $0x78] sm:$0xff] %vm224, %v4553
        %4605 = vst.msk [vmem:[#allocation3 + $0x80] sm:$0xff] %vm224, %v4554
        %4606 = vst.msk [vmem:[#allocation3 + $0x88] sm:$0xff] %vm224, %v4555
        %4607 = vst.msk [vmem:[#allocation3 + $0x90] sm:$0xff] %vm224, %v4556
        %4608 = vst.msk [vmem:[#allocation3 + $0x98] sm:$0xff] %vm224, %v4557
        %4609 = vst.msk [vmem:[#allocation3 + $0xa0] sm:$0xff] %vm224, %v4558
        %4610 = vst.msk [vmem:[#allocation3 + $0xa8] sm:$0xff] %vm224, %v4559
        %4611 = vst.msk [vmem:[#allocation3 + $0xb0] sm:$0xff] %vm224, %v4560
        %4612 = vst.msk [vmem:[#allocation3 + $0xb8] sm:$0xff] %vm224, %v4561
        %4613 = vst.msk [vmem:[#allocation3 + $0xc0] sm:$0xff] %vm224, %v4562
        %4614 = vst.msk [vmem:[#allocation3 + $0xc8] sm:$0xff] %vm224, %v4563
        %4615 = vst.msk [vmem:[#allocation3 + $0xd0] sm:$0xff] %vm224, %v4564
        %4616 = vst.msk [vmem:[#allocation3 + $0xd8] sm:$0xff] %vm224, %v4565
        %4617 = vst.msk [vmem:[#allocation3 + $0xe0] sm:$0xff] %vm224, %v4566
        %4618 = vst.msk [vmem:[#allocation3 + $0xe8] sm:$0xff] %vm224, %v4567
        %4619 = vst.msk [vmem:[#allocation3 + $0xf0] sm:$0xff] %vm224, %v4568
        %4620 = vst.msk [vmem:[#allocation3 + $0xf8] sm:$0xff] %vm224, %v4569
        %4621 = vst.msk [vmem:[#allocation3 + $0x100] sm:$0xff] %vm224, %v4570
        %4622 = vst.msk [vmem:[#allocation3 + $0x108] sm:$0xff] %vm224, %v4571
        %4623 = vst.msk [vmem:[#allocation3 + $0x110] sm:$0xff] %vm224, %v4572
        %4624 = vst.msk [vmem:[#allocation3 + $0x118] sm:$0xff] %vm224, %v4573
        %4625 = vst.msk [vmem:[#allocation3 + $0x120] sm:$0xff] %vm224, %v4574
        %4626 = vst.msk [vmem:[#allocation3 + $0x128] sm:$0xff] %vm224, %v4575
        %4627 = vst.msk [vmem:[#allocation3 + $0x130] sm:$0xff] %vm224, %v4576
        %4628 = vst.msk [vmem:[#allocation3 + $0x138] sm:$0xff] %vm224, %v4577
        %4629 = vst.msk [vmem:[#allocation3 + $0x140] sm:$0xff] %vm224, %v4578
        %4630 = vst.msk [vmem:[#allocation3 + $0x148] sm:$0xff] %vm224, %v4579
        %4631 = vst.msk [vmem:[#allocation3 + $0x150] sm:$0xff] %vm224, %v4580
        %4632 = vst.msk [vmem:[#allocation3 + $0x158] sm:$0xff] %vm224, %v4581
        %4633 = vst.msk [vmem:[#allocation3 + $0x160] sm:$0xff] %vm224, %v4582
        %4634 = vst.msk [vmem:[#allocation3 + $0x168] sm:$0xff] %vm224, %v4583
        %4635 = vst.msk [vmem:[#allocation3 + $0x170] sm:$0xff] %vm224, %v4584
        %4636 = vst.msk [vmem:[#allocation3 + $0x178] sm:$0xff] %vm224, %v4585
        %4637 = vst.msk [vmem:[#allocation3 + $0x180] sm:$0xff] %vm224, %v4586
        %4638 = vst.msk [vmem:[#allocation3 + $0x188] sm:$0xff] %vm224, %v4587
        %4639 = vst.msk [vmem:[#allocation3 + $0x190] sm:$0xff] %vm224, %v4588
        %4640 = vst.msk [vmem:[#allocation3 + $0x198] sm:$0xff] %vm224, %v4589
        %4641 = vst.msk [vmem:[#allocation3 + $0x1a0] sm:$0xff] %vm224, %v4590
        %4642 = vst.msk [vmem:[#allocation3 + $0x1a8] sm:$0xff] %vm224, %v4591
        %4643 = vst.msk [vmem:[#allocation3 + $0x1b0] sm:$0xff] %vm224, %v4592
        %4644 = vst.msk [vmem:[#allocation3 + $0x1b8] sm:$0xff] %vm224, %v4593
        %4645 = vst.msk [vmem:[#allocation3 + $0x1c0] sm:$0xff] %vm224, %v4594
        %v4646 = vld [vmem:[#allocation3 + $0x17] sm:$0xff]
        %v4647 = vld [vmem:[#allocation3 + $0x1f] sm:$0xff]
        %v4648 = vld [vmem:[#allocation3 + $0x27] sm:$0xff]
        %v4649 = vld [vmem:[#allocation3 + $0x2f] sm:$0xff]
        %v4650 = vld [vmem:[#allocation3 + $0x37] sm:$0xff]
        %v4651 = vld [vmem:[#allocation3 + $0x3f] sm:$0xff]
        %v4652 = vld [vmem:[#allocation3 + $0x47] sm:$0xff]
        %v4653 = vld [vmem:[#allocation3 + $0x4f] sm:$0xff]
        %v4654 = vld [vmem:[#allocation3 + $0x57] sm:$0xff]
        %v4655 = vld [vmem:[#allocation3 + $0x5f] sm:$0xff]
        %v4656 = vld [vmem:[#allocation3 + $0x67] sm:$0xff]
        %v4657 = vld [vmem:[#allocation3 + $0x6f] sm:$0xff]
        %v4658 = vld [vmem:[#allocation3 + $0x77] sm:$0xff]
        %v4659 = vld [vmem:[#allocation3 + $0x7f] sm:$0xff]
        %v4660 = vld [vmem:[#allocation3 + $0x87] sm:$0xff]
        %v4661 = vld [vmem:[#allocation3 + $0x8f] sm:$0xff]
        %v4662 = vld [vmem:[#allocation3 + $0x97] sm:$0xff]
        %v4663 = vld [vmem:[#allocation3 + $0x9f] sm:$0xff]
        %v4664 = vld [vmem:[#allocation3 + $0xa7] sm:$0xff]
        %v4665 = vld [vmem:[#allocation3 + $0xaf] sm:$0xff]
        %v4666 = vld [vmem:[#allocation3 + $0xb7] sm:$0xff]
        %v4667 = vld [vmem:[#allocation3 + $0xbf] sm:$0xff]
        %v4668 = vld [vmem:[#allocation3 + $0xc7] sm:$0xff]
        %v4669 = vld [vmem:[#allocation3 + $0xcf] sm:$0xff]
        %v4670 = vld [vmem:[#allocation3 + $0xd7] sm:$0xff]
        %v4671 = vld [vmem:[#allocation3 + $0xdf] sm:$0xff]
        %v4672 = vld [vmem:[#allocation3 + $0xe7] sm:$0xff]
        %v4673 = vld [vmem:[#allocation3 + $0xef] sm:$0xff]
        %v4674 = vld [vmem:[#allocation3 + $0xf7] sm:$0xff]
        %v4675 = vld [vmem:[#allocation3 + $0xff] sm:$0xff]
        %v4676 = vld [vmem:[#allocation3 + $0x107] sm:$0xff]
        %v4677 = vld [vmem:[#allocation3 + $0x10f] sm:$0xff]
        %v4678 = vld [vmem:[#allocation3 + $0x117] sm:$0xff]
        %v4679 = vld [vmem:[#allocation3 + $0x11f] sm:$0xff]
        %v4680 = vld [vmem:[#allocation3 + $0x127] sm:$0xff]
        %v4681 = vld [vmem:[#allocation3 + $0x12f] sm:$0xff]
        %v4682 = vld [vmem:[#allocation3 + $0x137] sm:$0xff]
        %v4683 = vld [vmem:[#allocation3 + $0x13f] sm:$0xff]
        %v4684 = vld [vmem:[#allocation3 + $0x147] sm:$0xff]
        %v4685 = vld [vmem:[#allocation3 + $0x14f] sm:$0xff]
        %v4686 = vld [vmem:[#allocation3 + $0x157] sm:$0xff]
        %v4687 = vld [vmem:[#allocation3 + $0x15f] sm:$0xff]
        %v4688 = vld [vmem:[#allocation3 + $0x167] sm:$0xff]
        %v4689 = vld [vmem:[#allocation3 + $0x16f] sm:$0xff]
        %v4690 = vld [vmem:[#allocation3 + $0x177] sm:$0xff]
        %v4691 = vld [vmem:[#allocation3 + $0x17f] sm:$0xff]
        %v4692 = vld [vmem:[#allocation3 + $0x187] sm:$0xff]
        %v4693 = vld [vmem:[#allocation3 + $0x18f] sm:$0xff]
        %v4694 = vld [vmem:[#allocation3 + $0x18] sm:$0xff]
        %v4695 = vld [vmem:[#allocation3 + $0x20] sm:$0xff]
        %v4696 = vld [vmem:[#allocation3 + $0x28] sm:$0xff]
        %v4697 = vld [vmem:[#allocation3 + $0x30] sm:$0xff]
        %v4698 = vld [vmem:[#allocation3 + $0x38] sm:$0xff]
        %v4699 = vld [vmem:[#allocation3 + $0x40] sm:$0xff]
        %v4700 = vld [vmem:[#allocation3 + $0x48] sm:$0xff]
        %v4701 = vld [vmem:[#allocation3 + $0x50] sm:$0xff]
        %v4702 = vld [vmem:[#allocation3 + $0x58] sm:$0xff]
        %v4703 = vld [vmem:[#allocation3 + $0x60] sm:$0xff]
        %v4704 = vld [vmem:[#allocation3 + $0x68] sm:$0xff]
        %v4705 = vld [vmem:[#allocation3 + $0x70] sm:$0xff]
        %v4706 = vld [vmem:[#allocation3 + $0x78] sm:$0xff]
        %v4707 = vld [vmem:[#allocation3 + $0x80] sm:$0xff]
        %v4708 = vld [vmem:[#allocation3 + $0x88] sm:$0xff]
        %v4709 = vld [vmem:[#allocation3 + $0x90] sm:$0xff]
        %v4710 = vld [vmem:[#allocation3 + $0x98] sm:$0xff]
        %v4711 = vld [vmem:[#allocation3 + $0xa0] sm:$0xff]
        %v4712 = vld [vmem:[#allocation3 + $0xa8] sm:$0xff]
        %v4713 = vld [vmem:[#allocation3 + $0xb0] sm:$0xff]
        %v4714 = vld [vmem:[#allocation3 + $0xb8] sm:$0xff]
        %v4715 = vld [vmem:[#allocation3 + $0xc0] sm:$0xff]
        %v4716 = vld [vmem:[#allocation3 + $0xc8] sm:$0xff]
        %v4717 = vld [vmem:[#allocation3 + $0xd0] sm:$0xff]
        %v4718 = vld [vmem:[#allocation3 + $0xd8] sm:$0xff]
        %v4719 = vld [vmem:[#allocation3 + $0xe0] sm:$0xff]
        %v4720 = vld [vmem:[#allocation3 + $0xe8] sm:$0xff]
        %v4721 = vld [vmem:[#allocation3 + $0xf0] sm:$0xff]
        %v4722 = vld [vmem:[#allocation3 + $0xf8] sm:$0xff]
        %v4723 = vld [vmem:[#allocation3 + $0x100] sm:$0xff]
        %v4724 = vld [vmem:[#allocation3 + $0x108] sm:$0xff]
        %v4725 = vld [vmem:[#allocation3 + $0x110] sm:$0xff]
        %v4726 = vld [vmem:[#allocation3 + $0x118] sm:$0xff]
        %v4727 = vld [vmem:[#allocation3 + $0x120] sm:$0xff]
        %v4728 = vld [vmem:[#allocation3 + $0x128] sm:$0xff]
        %v4729 = vld [vmem:[#allocation3 + $0x130] sm:$0xff]
        %v4730 = vld [vmem:[#allocation3 + $0x138] sm:$0xff]
        %v4731 = vld [vmem:[#allocation3 + $0x140] sm:$0xff]
        %v4732 = vld [vmem:[#allocation3 + $0x148] sm:$0xff]
        %v4733 = vld [vmem:[#allocation3 + $0x150] sm:$0xff]
        %v4734 = vld [vmem:[#allocation3 + $0x158] sm:$0xff]
        %v4735 = vld [vmem:[#allocation3 + $0x160] sm:$0xff]
        %v4736 = vld [vmem:[#allocation3 + $0x168] sm:$0xff]
        %v4737 = vld [vmem:[#allocation3 + $0x170] sm:$0xff]
        %v4738 = vld [vmem:[#allocation3 + $0x178] sm:$0xff]
        %v4739 = vld [vmem:[#allocation3 + $0x180] sm:$0xff]
        %v4740 = vld [vmem:[#allocation3 + $0x188] sm:$0xff]
        %v4741 = vld [vmem:[#allocation3 + $0x190] sm:$0xff]
        %v4742 = vld [vmem:[#allocation3 + $0x19] sm:$0xff]
        %v4743 = vld [vmem:[#allocation3 + $0x21] sm:$0xff]
        %v4744 = vld [vmem:[#allocation3 + $0x29] sm:$0xff]
        %v4745 = vld [vmem:[#allocation3 + $0x31] sm:$0xff]
        %v4746 = vld [vmem:[#allocation3 + $0x39] sm:$0xff]
        %v4747 = vld [vmem:[#allocation3 + $0x41] sm:$0xff]
        %v4748 = vld [vmem:[#allocation3 + $0x49] sm:$0xff]
        %v4749 = vld [vmem:[#allocation3 + $0x51] sm:$0xff]
        %v4750 = vld [vmem:[#allocation3 + $0x59] sm:$0xff]
        %v4751 = vld [vmem:[#allocation3 + $0x61] sm:$0xff]
        %v4752 = vld [vmem:[#allocation3 + $0x69] sm:$0xff]
        %v4753 = vld [vmem:[#allocation3 + $0x71] sm:$0xff]
        %v4754 = vld [vmem:[#allocation3 + $0x79] sm:$0xff]
        %v4755 = vld [vmem:[#allocation3 + $0x81] sm:$0xff]
        %v4756 = vld [vmem:[#allocation3 + $0x89] sm:$0xff]
        %v4757 = vld [vmem:[#allocation3 + $0x91] sm:$0xff]
        %v4758 = vld [vmem:[#allocation3 + $0x99] sm:$0xff]
        %v4759 = vld [vmem:[#allocation3 + $0xa1] sm:$0xff]
        %v4760 = vld [vmem:[#allocation3 + $0xa9] sm:$0xff]
        %v4761 = vld [vmem:[#allocation3 + $0xb1] sm:$0xff]
        %v4762 = vld [vmem:[#allocation3 + $0xb9] sm:$0xff]
        %v4763 = vld [vmem:[#allocation3 + $0xc1] sm:$0xff]
        %v4764 = vld [vmem:[#allocation3 + $0xc9] sm:$0xff]
        %v4765 = vld [vmem:[#allocation3 + $0xd1] sm:$0xff]
        %v4766 = vld [vmem:[#allocation3 + $0xd9] sm:$0xff]
        %v4767 = vld [vmem:[#allocation3 + $0xe1] sm:$0xff]
        %v4768 = vld [vmem:[#allocation3 + $0xe9] sm:$0xff]
        %v4769 = vld [vmem:[#allocation3 + $0xf1] sm:$0xff]
        %v4770 = vld [vmem:[#allocation3 + $0xf9] sm:$0xff]
        %v4771 = vld [vmem:[#allocation3 + $0x101] sm:$0xff]
        %v4772 = vld [vmem:[#allocation3 + $0x109] sm:$0xff]
        %v4773 = vld [vmem:[#allocation3 + $0x111] sm:$0xff]
        %v4774 = vld [vmem:[#allocation3 + $0x119] sm:$0xff]
        %v4775 = vld [vmem:[#allocation3 + $0x121] sm:$0xff]
        %v4776 = vld [vmem:[#allocation3 + $0x129] sm:$0xff]
        %v4777 = vld [vmem:[#allocation3 + $0x131] sm:$0xff]
        %v4778 = vld [vmem:[#allocation3 + $0x139] sm:$0xff]
        %v4779 = vld [vmem:[#allocation3 + $0x141] sm:$0xff]
        %v4780 = vld [vmem:[#allocation3 + $0x149] sm:$0xff]
        %v4781 = vld [vmem:[#allocation3 + $0x151] sm:$0xff]
        %v4782 = vld [vmem:[#allocation3 + $0x159] sm:$0xff]
        %v4783 = vld [vmem:[#allocation3 + $0x161] sm:$0xff]
        %v4784 = vld [vmem:[#allocation3 + $0x169] sm:$0xff]
        %v4785 = vld [vmem:[#allocation3 + $0x171] sm:$0xff]
        %v4786 = vld [vmem:[#allocation3 + $0x179] sm:$0xff]
        %v4787 = vld [vmem:[#allocation3 + $0x181] sm:$0xff]
        %v4788 = vld [vmem:[#allocation3 + $0x189] sm:$0xff]
        %v4789 = vld [vmem:[#allocation3 + $0x191] sm:$0xff]
        %v4790 = vld [vmem:[#allocation3 + $0x1a] sm:$0xff]
        %v4791 = vld [vmem:[#allocation3 + $0x22] sm:$0xff]
        %v4792 = vld [vmem:[#allocation3 + $0x2a] sm:$0xff]
        %v4793 = vld [vmem:[#allocation3 + $0x32] sm:$0xff]
        %v4794 = vld [vmem:[#allocation3 + $0x3a] sm:$0xff]
        %v4795 = vld [vmem:[#allocation3 + $0x42] sm:$0xff]
        %v4796 = vld [vmem:[#allocation3 + $0x4a] sm:$0xff]
        %v4797 = vld [vmem:[#allocation3 + $0x52] sm:$0xff]
        %v4798 = vld [vmem:[#allocation3 + $0x5a] sm:$0xff]
        %v4799 = vld [vmem:[#allocation3 + $0x62] sm:$0xff]
        %v4800 = vld [vmem:[#allocation3 + $0x6a] sm:$0xff]
        %v4801 = vld [vmem:[#allocation3 + $0x72] sm:$0xff]
        %v4802 = vld [vmem:[#allocation3 + $0x7a] sm:$0xff]
        %v4803 = vld [vmem:[#allocation3 + $0x82] sm:$0xff]
        %v4804 = vld [vmem:[#allocation3 + $0x8a] sm:$0xff]
        %v4805 = vld [vmem:[#allocation3 + $0x92] sm:$0xff]
        %v4806 = vld [vmem:[#allocation3 + $0x9a] sm:$0xff]
        %v4807 = vld [vmem:[#allocation3 + $0xa2] sm:$0xff]
        %v4808 = vld [vmem:[#allocation3 + $0xaa] sm:$0xff]
        %v4809 = vld [vmem:[#allocation3 + $0xb2] sm:$0xff]
        %v4810 = vld [vmem:[#allocation3 + $0xba] sm:$0xff]
        %v4811 = vld [vmem:[#allocation3 + $0xc2] sm:$0xff]
        %v4812 = vld [vmem:[#allocation3 + $0xca] sm:$0xff]
        %v4813 = vld [vmem:[#allocation3 + $0xd2] sm:$0xff]
        %v4814 = vld [vmem:[#allocation3 + $0xda] sm:$0xff]
        %v4815 = vld [vmem:[#allocation3 + $0xe2] sm:$0xff]
        %v4816 = vld [vmem:[#allocation3 + $0xea] sm:$0xff]
        %v4817 = vld [vmem:[#allocation3 + $0xf2] sm:$0xff]
        %v4818 = vld [vmem:[#allocation3 + $0xfa] sm:$0xff]
        %v4819 = vld [vmem:[#allocation3 + $0x102] sm:$0xff]
        %v4820 = vld [vmem:[#allocation3 + $0x10a] sm:$0xff]
        %v4821 = vld [vmem:[#allocation3 + $0x112] sm:$0xff]
        %v4822 = vld [vmem:[#allocation3 + $0x11a] sm:$0xff]
        %v4823 = vld [vmem:[#allocation3 + $0x122] sm:$0xff]
        %v4824 = vld [vmem:[#allocation3 + $0x12a] sm:$0xff]
        %v4825 = vld [vmem:[#allocation3 + $0x132] sm:$0xff]
        %v4826 = vld [vmem:[#allocation3 + $0x13a] sm:$0xff]
        %v4827 = vld [vmem:[#allocation3 + $0x142] sm:$0xff]
        %v4828 = vld [vmem:[#allocation3 + $0x14a] sm:$0xff]
        %v4829 = vld [vmem:[#allocation3 + $0x152] sm:$0xff]
        %v4830 = vld [vmem:[#allocation3 + $0x15a] sm:$0xff]
        %v4831 = vld [vmem:[#allocation3 + $0x162] sm:$0xff]
        %v4832 = vld [vmem:[#allocation3 + $0x16a] sm:$0xff]
        %v4833 = vld [vmem:[#allocation3 + $0x172] sm:$0xff]
        %v4834 = vld [vmem:[#allocation3 + $0x17a] sm:$0xff]
        %v4835 = vld [vmem:[#allocation3 + $0x182] sm:$0xff]
        %v4836 = vld [vmem:[#allocation3 + $0x18a] sm:$0xff]
        %v4837 = vld [vmem:[#allocation3 + $0x192] sm:$0xff]
        %v4838 = vld [vmem:[#allocation3 + $0x197] sm:$0xff]
        %v4839 = vld [vmem:[#allocation3 + $0x19f] sm:$0xff]
        %v4840 = vld [vmem:[#allocation3 + $0x1a7] sm:$0xff]
        %v4841 = vld [vmem:[#allocation3 + $0x198] sm:$0xff]
        %v4842 = vld [vmem:[#allocation3 + $0x1a0] sm:$0xff]
        %v4843 = vld [vmem:[#allocation3 + $0x1a8] sm:$0xff]
        %v4844 = vld [vmem:[#allocation3 + $0x199] sm:$0xff]
        %v4845 = vld [vmem:[#allocation3 + $0x1a1] sm:$0xff]
        %v4846 = vld [vmem:[#allocation3 + $0x1a9] sm:$0xff]
        %v4847 = vld [vmem:[#allocation3 + $0x19a] sm:$0xff]
        %v4848 = vld [vmem:[#allocation3 + $0x1a2] sm:$0xff]
        %v4849 = vld [vmem:[#allocation3 + $0x1aa] sm:$0xff]
        %v4850 = vld [vmem:[#allocation3 + $0x1af] sm:$0xff]
        %v4851 = vld [vmem:[#allocation3 + $0x1b7] sm:$0xff]
        %v4852 = vld [vmem:[#allocation3 + $0x1bf] sm:$0xff]
        %v4853 = vld [vmem:[#allocation3 + $0x1b0] sm:$0xff]
        %v4854 = vld [vmem:[#allocation3 + $0x1b8] sm:$0xff]
        %v4855 = vld [vmem:[#allocation3 + $0x1c0] sm:$0xff]
        %v4856 = vld [vmem:[#allocation3 + $0x1b1] sm:$0xff]
        %v4857 = vld [vmem:[#allocation3 + $0x1b9] sm:$0xff]
        %v4858 = vld [vmem:[#allocation3 + $0x1c1] sm:$0xff]
        %v4859 = vld [vmem:[#allocation3 + $0x1b2] sm:$0xff]
        %v4860 = vld [vmem:[#allocation3 + $0x1ba] sm:$0xff]
        %v4861 = vld [vmem:[#allocation3 + $0x1c2] sm:$0xff]
        %v4862 = vld [vmem:[#allocation3 + $0x1c7] sm:$0xff]
        %v4863 = vld [vmem:[#allocation3 + $0x1cf] sm:$0xff]
        %v4864 = vld [vmem:[#allocation3 + $0x1d7] sm:$0xff]
        %v4865 = vld [vmem:[#allocation3 + $0x1c8] sm:$0xff]
        %v4866 = vld [vmem:[#allocation3 + $0x1d0] sm:$0xff]
        %v4867 = vld [vmem:[#allocation3 + $0x1d8] sm:$0xff]
        %v4868 = vld [vmem:[#allocation3 + $0x1c9] sm:$0xff]
        %v4869 = vld [vmem:[#allocation3 + $0x1d1] sm:$0xff]
        %v4870 = vld [vmem:[#allocation3 + $0x1d9] sm:$0xff]
        %v4871 = vld [vmem:[#allocation3 + $0x1ca] sm:$0xff]
        %v4872 = vld [vmem:[#allocation3 + $0x1d2] sm:$0xff]
        %v4873 = vld [vmem:[#allocation3 + $0x1da] sm:$0xff]
        %4922 = vrot.lane.b32.xlu0 %v4694, 8
        %v4923 = vpop.permute.xlu0 %4922
        %4924 = vrot.lane.b32.xlu0 %v4695, 8
        %v4925 = vpop.permute.xlu0 %4924
        %4926 = vrot.lane.b32.xlu0 %v4696, 8
        %v4927 = vpop.permute.xlu0 %4926
        %4928 = vrot.lane.b32.xlu0 %v4697, 8
        %v4929 = vpop.permute.xlu0 %4928
        %4930 = vrot.lane.b32.xlu0 %v4698, 8
        %v4931 = vpop.permute.xlu0 %4930
        %4932 = vrot.lane.b32.xlu0 %v4699, 8
        %v4933 = vpop.permute.xlu0 %4932
        %4934 = vrot.lane.b32.xlu0 %v4700, 8
        %v4935 = vpop.permute.xlu0 %4934
        %4936 = vrot.lane.b32.xlu0 %v4701, 8
        %v4937 = vpop.permute.xlu0 %4936
        %4938 = vrot.lane.b32.xlu0 %v4702, 8
        %v4939 = vpop.permute.xlu0 %4938
        %4940 = vrot.lane.b32.xlu0 %v4703, 8
        %v4941 = vpop.permute.xlu0 %4940
        %4942 = vrot.lane.b32.xlu0 %v4704, 8
        %v4943 = vpop.permute.xlu0 %4942
        %4944 = vrot.lane.b32.xlu0 %v4705, 8
        %v4945 = vpop.permute.xlu0 %4944
        %4946 = vrot.lane.b32.xlu0 %v4706, 8
        %v4947 = vpop.permute.xlu0 %4946
        %4948 = vrot.lane.b32.xlu0 %v4707, 8
        %v4949 = vpop.permute.xlu0 %4948
        %4950 = vrot.lane.b32.xlu0 %v4708, 8
        %v4951 = vpop.permute.xlu0 %4950
        %4952 = vrot.lane.b32.xlu0 %v4709, 8
        %v4953 = vpop.permute.xlu0 %4952
        %4954 = vrot.lane.b32.xlu0 %v4710, 8
        %v4955 = vpop.permute.xlu0 %4954
        %4956 = vrot.lane.b32.xlu0 %v4711, 8
        %v4957 = vpop.permute.xlu0 %4956
        %4958 = vrot.lane.b32.xlu0 %v4712, 8
        %v4959 = vpop.permute.xlu0 %4958
        %4960 = vrot.lane.b32.xlu0 %v4713, 8
        %v4961 = vpop.permute.xlu0 %4960
        %4962 = vrot.lane.b32.xlu0 %v4714, 8
        %v4963 = vpop.permute.xlu0 %4962
        %4964 = vrot.lane.b32.xlu0 %v4715, 8
        %v4965 = vpop.permute.xlu0 %4964
        %4966 = vrot.lane.b32.xlu0 %v4716, 8
        %v4967 = vpop.permute.xlu0 %4966
        %4968 = vrot.lane.b32.xlu0 %v4717, 8
        %v4969 = vpop.permute.xlu0 %4968
        %4970 = vrot.lane.b32.xlu0 %v4718, 8
        %v4971 = vpop.permute.xlu0 %4970
        %4972 = vrot.lane.b32.xlu0 %v4719, 8
        %v4973 = vpop.permute.xlu0 %4972
        %4974 = vrot.lane.b32.xlu0 %v4720, 8
        %v4975 = vpop.permute.xlu0 %4974
        %4976 = vrot.lane.b32.xlu0 %v4721, 8
        %v4977 = vpop.permute.xlu0 %4976
        %4978 = vrot.lane.b32.xlu0 %v4722, 8
        %v4979 = vpop.permute.xlu0 %4978
        %4980 = vrot.lane.b32.xlu0 %v4723, 8
        %v4981 = vpop.permute.xlu0 %4980
        %4982 = vrot.lane.b32.xlu0 %v4724, 8
        %v4983 = vpop.permute.xlu0 %4982
        %4984 = vrot.lane.b32.xlu0 %v4725, 8
        %v4985 = vpop.permute.xlu0 %4984
        %4986 = vrot.lane.b32.xlu0 %v4726, 8
        %v4987 = vpop.permute.xlu0 %4986
        %4988 = vrot.lane.b32.xlu0 %v4727, 8
        %v4989 = vpop.permute.xlu0 %4988
        %4990 = vrot.lane.b32.xlu0 %v4728, 8
        %v4991 = vpop.permute.xlu0 %4990
        %4992 = vrot.lane.b32.xlu0 %v4729, 8
        %v4993 = vpop.permute.xlu0 %4992
        %4994 = vrot.lane.b32.xlu0 %v4730, 8
        %v4995 = vpop.permute.xlu0 %4994
        %4996 = vrot.lane.b32.xlu0 %v4731, 8
        %v4997 = vpop.permute.xlu0 %4996
        %4998 = vrot.lane.b32.xlu0 %v4732, 8
        %v4999 = vpop.permute.xlu0 %4998
        %5000 = vrot.lane.b32.xlu0 %v4733, 8
        %v5001 = vpop.permute.xlu0 %5000
        %5002 = vrot.lane.b32.xlu0 %v4734, 8
        %v5003 = vpop.permute.xlu0 %5002
        %5004 = vrot.lane.b32.xlu0 %v4735, 8
        %v5005 = vpop.permute.xlu0 %5004
        %5006 = vrot.lane.b32.xlu0 %v4736, 8
        %v5007 = vpop.permute.xlu0 %5006
        %5008 = vrot.lane.b32.xlu0 %v4737, 8
        %v5009 = vpop.permute.xlu0 %5008
        %5010 = vrot.lane.b32.xlu0 %v4738, 8
        %v5011 = vpop.permute.xlu0 %5010
        %5012 = vrot.lane.b32.xlu0 %v4739, 8
        %v5013 = vpop.permute.xlu0 %5012
        %5014 = vrot.lane.b32.xlu0 %v4740, 8
        %v5015 = vpop.permute.xlu0 %5014
        %5016 = vrot.lane.b32.xlu0 %v4741, 8
        %v5017 = vpop.permute.xlu0 %5016
        %5114 = vrot.lane.b32.xlu0 %v4742, 16
        %v5115 = vpop.permute.xlu0 %5114
        %5116 = vrot.lane.b32.xlu0 %v4743, 16
        %v5117 = vpop.permute.xlu0 %5116
        %5118 = vrot.lane.b32.xlu0 %v4744, 16
        %v5119 = vpop.permute.xlu0 %5118
        %5120 = vrot.lane.b32.xlu0 %v4745, 16
        %v5121 = vpop.permute.xlu0 %5120
        %5122 = vrot.lane.b32.xlu0 %v4746, 16
        %v5123 = vpop.permute.xlu0 %5122
        %5124 = vrot.lane.b32.xlu0 %v4747, 16
        %v5125 = vpop.permute.xlu0 %5124
        %5126 = vrot.lane.b32.xlu0 %v4748, 16
        %v5127 = vpop.permute.xlu0 %5126
        %5128 = vrot.lane.b32.xlu0 %v4749, 16
        %v5129 = vpop.permute.xlu0 %5128
        %5130 = vrot.lane.b32.xlu0 %v4750, 16
        %v5131 = vpop.permute.xlu0 %5130
        %5132 = vrot.lane.b32.xlu0 %v4751, 16
        %v5133 = vpop.permute.xlu0 %5132
        %5134 = vrot.lane.b32.xlu0 %v4752, 16
        %v5135 = vpop.permute.xlu0 %5134
        %5136 = vrot.lane.b32.xlu0 %v4753, 16
        %v5137 = vpop.permute.xlu0 %5136
        %5138 = vrot.lane.b32.xlu0 %v4754, 16
        %v5139 = vpop.permute.xlu0 %5138
        %5140 = vrot.lane.b32.xlu0 %v4755, 16
        %v5141 = vpop.permute.xlu0 %5140
        %5142 = vrot.lane.b32.xlu0 %v4756, 16
        %v5143 = vpop.permute.xlu0 %5142
        %5144 = vrot.lane.b32.xlu0 %v4757, 16
        %v5145 = vpop.permute.xlu0 %5144
        %5146 = vrot.lane.b32.xlu0 %v4758, 16
        %v5147 = vpop.permute.xlu0 %5146
        %5148 = vrot.lane.b32.xlu0 %v4759, 16
        %v5149 = vpop.permute.xlu0 %5148
        %5150 = vrot.lane.b32.xlu0 %v4760, 16
        %v5151 = vpop.permute.xlu0 %5150
        %5152 = vrot.lane.b32.xlu0 %v4761, 16
        %v5153 = vpop.permute.xlu0 %5152
        %5154 = vrot.lane.b32.xlu0 %v4762, 16
        %v5155 = vpop.permute.xlu0 %5154
        %5156 = vrot.lane.b32.xlu0 %v4763, 16
        %v5157 = vpop.permute.xlu0 %5156
        %5158 = vrot.lane.b32.xlu0 %v4764, 16
        %v5159 = vpop.permute.xlu0 %5158
        %5160 = vrot.lane.b32.xlu0 %v4765, 16
        %v5161 = vpop.permute.xlu0 %5160
        %5162 = vrot.lane.b32.xlu0 %v4766, 16
        %v5163 = vpop.permute.xlu0 %5162
        %5164 = vrot.lane.b32.xlu0 %v4767, 16
        %v5165 = vpop.permute.xlu0 %5164
        %5166 = vrot.lane.b32.xlu0 %v4768, 16
        %v5167 = vpop.permute.xlu0 %5166
        %5168 = vrot.lane.b32.xlu0 %v4769, 16
        %v5169 = vpop.permute.xlu0 %5168
        %5170 = vrot.lane.b32.xlu0 %v4770, 16
        %v5171 = vpop.permute.xlu0 %5170
        %5172 = vrot.lane.b32.xlu0 %v4771, 16
        %v5173 = vpop.permute.xlu0 %5172
        %5174 = vrot.lane.b32.xlu0 %v4772, 16
        %v5175 = vpop.permute.xlu0 %5174
        %5176 = vrot.lane.b32.xlu0 %v4773, 16
        %v5177 = vpop.permute.xlu0 %5176
        %5178 = vrot.lane.b32.xlu0 %v4774, 16
        %v5179 = vpop.permute.xlu0 %5178
        %5180 = vrot.lane.b32.xlu0 %v4775, 16
        %v5181 = vpop.permute.xlu0 %5180
        %5182 = vrot.lane.b32.xlu0 %v4776, 16
        %v5183 = vpop.permute.xlu0 %5182
        %5184 = vrot.lane.b32.xlu0 %v4777, 16
        %v5185 = vpop.permute.xlu0 %5184
        %5186 = vrot.lane.b32.xlu0 %v4778, 16
        %v5187 = vpop.permute.xlu0 %5186
        %5188 = vrot.lane.b32.xlu0 %v4779, 16
        %v5189 = vpop.permute.xlu0 %5188
        %5190 = vrot.lane.b32.xlu0 %v4780, 16
        %v5191 = vpop.permute.xlu0 %5190
        %5192 = vrot.lane.b32.xlu0 %v4781, 16
        %v5193 = vpop.permute.xlu0 %5192
        %5194 = vrot.lane.b32.xlu0 %v4782, 16
        %v5195 = vpop.permute.xlu0 %5194
        %5196 = vrot.lane.b32.xlu0 %v4783, 16
        %v5197 = vpop.permute.xlu0 %5196
        %5198 = vrot.lane.b32.xlu0 %v4784, 16
        %v5199 = vpop.permute.xlu0 %5198
        %5200 = vrot.lane.b32.xlu0 %v4785, 16
        %v5201 = vpop.permute.xlu0 %5200
        %5202 = vrot.lane.b32.xlu0 %v4786, 16
        %v5203 = vpop.permute.xlu0 %5202
        %5204 = vrot.lane.b32.xlu0 %v4787, 16
        %v5205 = vpop.permute.xlu0 %5204
        %5206 = vrot.lane.b32.xlu0 %v4788, 16
        %v5207 = vpop.permute.xlu0 %5206
        %5208 = vrot.lane.b32.xlu0 %v4789, 16
        %v5209 = vpop.permute.xlu0 %5208
        %5306 = vrot.lane.b32.xlu0 %v4790, 24
        %v5307 = vpop.permute.xlu0 %5306
        %5308 = vrot.lane.b32.xlu0 %v4791, 24
        %v5309 = vpop.permute.xlu0 %5308
        %5310 = vrot.lane.b32.xlu0 %v4792, 24
        %v5311 = vpop.permute.xlu0 %5310
        %5312 = vrot.lane.b32.xlu0 %v4793, 24
        %v5313 = vpop.permute.xlu0 %5312
        %5314 = vrot.lane.b32.xlu0 %v4794, 24
        %v5315 = vpop.permute.xlu0 %5314
        %5316 = vrot.lane.b32.xlu0 %v4795, 24
        %v5317 = vpop.permute.xlu0 %5316
        %5318 = vrot.lane.b32.xlu0 %v4796, 24
        %v5319 = vpop.permute.xlu0 %5318
        %5320 = vrot.lane.b32.xlu0 %v4797, 24
        %v5321 = vpop.permute.xlu0 %5320
        %5322 = vrot.lane.b32.xlu0 %v4798, 24
        %v5323 = vpop.permute.xlu0 %5322
        %5324 = vrot.lane.b32.xlu0 %v4799, 24
        %v5325 = vpop.permute.xlu0 %5324
        %5326 = vrot.lane.b32.xlu0 %v4800, 24
        %v5327 = vpop.permute.xlu0 %5326
        %5328 = vrot.lane.b32.xlu0 %v4801, 24
        %v5329 = vpop.permute.xlu0 %5328
        %5330 = vrot.lane.b32.xlu0 %v4802, 24
        %v5331 = vpop.permute.xlu0 %5330
        %5332 = vrot.lane.b32.xlu0 %v4803, 24
        %v5333 = vpop.permute.xlu0 %5332
        %5334 = vrot.lane.b32.xlu0 %v4804, 24
        %v5335 = vpop.permute.xlu0 %5334
        %5336 = vrot.lane.b32.xlu0 %v4805, 24
        %v5337 = vpop.permute.xlu0 %5336
        %5338 = vrot.lane.b32.xlu0 %v4806, 24
        %v5339 = vpop.permute.xlu0 %5338
        %5340 = vrot.lane.b32.xlu0 %v4807, 24
        %v5341 = vpop.permute.xlu0 %5340
        %5342 = vrot.lane.b32.xlu0 %v4808, 24
        %v5343 = vpop.permute.xlu0 %5342
        %5344 = vrot.lane.b32.xlu0 %v4809, 24
        %v5345 = vpop.permute.xlu0 %5344
        %5346 = vrot.lane.b32.xlu0 %v4810, 24
        %v5347 = vpop.permute.xlu0 %5346
        %5348 = vrot.lane.b32.xlu0 %v4811, 24
        %v5349 = vpop.permute.xlu0 %5348
        %5350 = vrot.lane.b32.xlu0 %v4812, 24
        %v5351 = vpop.permute.xlu0 %5350
        %5352 = vrot.lane.b32.xlu0 %v4813, 24
        %v5353 = vpop.permute.xlu0 %5352
        %5354 = vrot.lane.b32.xlu0 %v4814, 24
        %v5355 = vpop.permute.xlu0 %5354
        %5356 = vrot.lane.b32.xlu0 %v4815, 24
        %v5357 = vpop.permute.xlu0 %5356
        %5358 = vrot.lane.b32.xlu0 %v4816, 24
        %v5359 = vpop.permute.xlu0 %5358
        %5360 = vrot.lane.b32.xlu0 %v4817, 24
        %v5361 = vpop.permute.xlu0 %5360
        %5362 = vrot.lane.b32.xlu0 %v4818, 24
        %v5363 = vpop.permute.xlu0 %5362
        %5364 = vrot.lane.b32.xlu0 %v4819, 24
        %v5365 = vpop.permute.xlu0 %5364
        %5366 = vrot.lane.b32.xlu0 %v4820, 24
        %v5367 = vpop.permute.xlu0 %5366
        %5368 = vrot.lane.b32.xlu0 %v4821, 24
        %v5369 = vpop.permute.xlu0 %5368
        %5370 = vrot.lane.b32.xlu0 %v4822, 24
        %v5371 = vpop.permute.xlu0 %5370
        %5372 = vrot.lane.b32.xlu0 %v4823, 24
        %v5373 = vpop.permute.xlu0 %5372
        %5374 = vrot.lane.b32.xlu0 %v4824, 24
        %v5375 = vpop.permute.xlu0 %5374
        %5376 = vrot.lane.b32.xlu0 %v4825, 24
        %v5377 = vpop.permute.xlu0 %5376
        %5378 = vrot.lane.b32.xlu0 %v4826, 24
        %v5379 = vpop.permute.xlu0 %5378
        %5380 = vrot.lane.b32.xlu0 %v4827, 24
        %v5381 = vpop.permute.xlu0 %5380
        %5382 = vrot.lane.b32.xlu0 %v4828, 24
        %v5383 = vpop.permute.xlu0 %5382
        %5384 = vrot.lane.b32.xlu0 %v4829, 24
        %v5385 = vpop.permute.xlu0 %5384
        %5386 = vrot.lane.b32.xlu0 %v4830, 24
        %v5387 = vpop.permute.xlu0 %5386
        %5388 = vrot.lane.b32.xlu0 %v4831, 24
        %v5389 = vpop.permute.xlu0 %5388
        %5390 = vrot.lane.b32.xlu0 %v4832, 24
        %v5391 = vpop.permute.xlu0 %5390
        %5392 = vrot.lane.b32.xlu0 %v4833, 24
        %v5393 = vpop.permute.xlu0 %5392
        %5394 = vrot.lane.b32.xlu0 %v4834, 24
        %v5395 = vpop.permute.xlu0 %5394
        %5396 = vrot.lane.b32.xlu0 %v4835, 24
        %v5397 = vpop.permute.xlu0 %5396
        %5398 = vrot.lane.b32.xlu0 %v4836, 24
        %v5399 = vpop.permute.xlu0 %5398
        %5400 = vrot.lane.b32.xlu0 %v4837, 24
        %v5401 = vpop.permute.xlu0 %5400
        %5498 = vrot.lane.b32.xlu0 %v4649, 32
        %v5499 = vpop.permute.xlu0 %5498
        %5500 = vrot.lane.b32.xlu0 %v4650, 32
        %v5501 = vpop.permute.xlu0 %5500
        %5502 = vrot.lane.b32.xlu0 %v4651, 32
        %v5503 = vpop.permute.xlu0 %5502
        %5504 = vrot.lane.b32.xlu0 %v4652, 32
        %v5505 = vpop.permute.xlu0 %5504
        %5506 = vrot.lane.b32.xlu0 %v4653, 32
        %v5507 = vpop.permute.xlu0 %5506
        %5508 = vrot.lane.b32.xlu0 %v4654, 32
        %v5509 = vpop.permute.xlu0 %5508
        %5510 = vrot.lane.b32.xlu0 %v4655, 32
        %v5511 = vpop.permute.xlu0 %5510
        %5512 = vrot.lane.b32.xlu0 %v4656, 32
        %v5513 = vpop.permute.xlu0 %5512
        %5514 = vrot.lane.b32.xlu0 %v4657, 32
        %v5515 = vpop.permute.xlu0 %5514
        %5516 = vrot.lane.b32.xlu0 %v4658, 32
        %v5517 = vpop.permute.xlu0 %5516
        %5518 = vrot.lane.b32.xlu0 %v4659, 32
        %v5519 = vpop.permute.xlu0 %5518
        %5520 = vrot.lane.b32.xlu0 %v4660, 32
        %v5521 = vpop.permute.xlu0 %5520
        %5522 = vrot.lane.b32.xlu0 %v4661, 32
        %v5523 = vpop.permute.xlu0 %5522
        %5524 = vrot.lane.b32.xlu0 %v4662, 32
        %v5525 = vpop.permute.xlu0 %5524
        %5526 = vrot.lane.b32.xlu0 %v4663, 32
        %v5527 = vpop.permute.xlu0 %5526
        %5528 = vrot.lane.b32.xlu0 %v4664, 32
        %v5529 = vpop.permute.xlu0 %5528
        %5530 = vrot.lane.b32.xlu0 %v4665, 32
        %v5531 = vpop.permute.xlu0 %5530
        %5532 = vrot.lane.b32.xlu0 %v4666, 32
        %v5533 = vpop.permute.xlu0 %5532
        %5534 = vrot.lane.b32.xlu0 %v4667, 32
        %v5535 = vpop.permute.xlu0 %5534
        %5536 = vrot.lane.b32.xlu0 %v4668, 32
        %v5537 = vpop.permute.xlu0 %5536
        %5538 = vrot.lane.b32.xlu0 %v4669, 32
        %v5539 = vpop.permute.xlu0 %5538
        %5540 = vrot.lane.b32.xlu0 %v4670, 32
        %v5541 = vpop.permute.xlu0 %5540
        %5542 = vrot.lane.b32.xlu0 %v4671, 32
        %v5543 = vpop.permute.xlu0 %5542
        %5544 = vrot.lane.b32.xlu0 %v4672, 32
        %v5545 = vpop.permute.xlu0 %5544
        %5546 = vrot.lane.b32.xlu0 %v4673, 32
        %v5547 = vpop.permute.xlu0 %5546
        %5548 = vrot.lane.b32.xlu0 %v4674, 32
        %v5549 = vpop.permute.xlu0 %5548
        %5550 = vrot.lane.b32.xlu0 %v4675, 32
        %v5551 = vpop.permute.xlu0 %5550
        %5552 = vrot.lane.b32.xlu0 %v4676, 32
        %v5553 = vpop.permute.xlu0 %5552
        %5554 = vrot.lane.b32.xlu0 %v4677, 32
        %v5555 = vpop.permute.xlu0 %5554
        %5556 = vrot.lane.b32.xlu0 %v4678, 32
        %v5557 = vpop.permute.xlu0 %5556
        %5558 = vrot.lane.b32.xlu0 %v4679, 32
        %v5559 = vpop.permute.xlu0 %5558
        %5560 = vrot.lane.b32.xlu0 %v4680, 32
        %v5561 = vpop.permute.xlu0 %5560
        %5562 = vrot.lane.b32.xlu0 %v4681, 32
        %v5563 = vpop.permute.xlu0 %5562
        %5564 = vrot.lane.b32.xlu0 %v4682, 32
        %v5565 = vpop.permute.xlu0 %5564
        %5566 = vrot.lane.b32.xlu0 %v4683, 32
        %v5567 = vpop.permute.xlu0 %5566
        %5568 = vrot.lane.b32.xlu0 %v4684, 32
        %v5569 = vpop.permute.xlu0 %5568
        %5570 = vrot.lane.b32.xlu0 %v4685, 32
        %v5571 = vpop.permute.xlu0 %5570
        %5572 = vrot.lane.b32.xlu0 %v4686, 32
        %v5573 = vpop.permute.xlu0 %5572
        %5574 = vrot.lane.b32.xlu0 %v4687, 32
        %v5575 = vpop.permute.xlu0 %5574
        %5576 = vrot.lane.b32.xlu0 %v4688, 32
        %v5577 = vpop.permute.xlu0 %5576
        %5578 = vrot.lane.b32.xlu0 %v4689, 32
        %v5579 = vpop.permute.xlu0 %5578
        %5580 = vrot.lane.b32.xlu0 %v4690, 32
        %v5581 = vpop.permute.xlu0 %5580
        %5582 = vrot.lane.b32.xlu0 %v4691, 32
        %v5583 = vpop.permute.xlu0 %5582
        %5584 = vrot.lane.b32.xlu0 %v4692, 32
        %v5585 = vpop.permute.xlu0 %5584
        %5586 = vrot.lane.b32.xlu0 %v4693, 32
        %v5587 = vpop.permute.xlu0 %5586
        %5588 = vrot.lane.b32.xlu0 %v4838, 32
        %v5589 = vpop.permute.xlu0 %5588
        %5590 = vrot.lane.b32.xlu0 %v4839, 32
        %v5591 = vpop.permute.xlu0 %5590
        %5592 = vrot.lane.b32.xlu0 %v4840, 32
        %v5593 = vpop.permute.xlu0 %5592
        %5645 = vrot.lane.b32.xlu0 %v4697, 40
        %v5646 = vpop.permute.xlu0 %5645
        %5647 = vrot.lane.b32.xlu0 %v4698, 40
        %v5648 = vpop.permute.xlu0 %5647
        %5649 = vrot.lane.b32.xlu0 %v4699, 40
        %v5650 = vpop.permute.xlu0 %5649
        %5651 = vrot.lane.b32.xlu0 %v4700, 40
        %v5652 = vpop.permute.xlu0 %5651
        %5653 = vrot.lane.b32.xlu0 %v4701, 40
        %v5654 = vpop.permute.xlu0 %5653
        %5655 = vrot.lane.b32.xlu0 %v4702, 40
        %v5656 = vpop.permute.xlu0 %5655
        %5657 = vrot.lane.b32.xlu0 %v4703, 40
        %v5658 = vpop.permute.xlu0 %5657
        %5659 = vrot.lane.b32.xlu0 %v4704, 40
        %v5660 = vpop.permute.xlu0 %5659
        %5661 = vrot.lane.b32.xlu0 %v4705, 40
        %v5662 = vpop.permute.xlu0 %5661
        %5663 = vrot.lane.b32.xlu0 %v4706, 40
        %v5664 = vpop.permute.xlu0 %5663
        %5665 = vrot.lane.b32.xlu0 %v4707, 40
        %v5666 = vpop.permute.xlu0 %5665
        %5667 = vrot.lane.b32.xlu0 %v4708, 40
        %v5668 = vpop.permute.xlu0 %5667
        %5669 = vrot.lane.b32.xlu0 %v4709, 40
        %v5670 = vpop.permute.xlu0 %5669
        %5671 = vrot.lane.b32.xlu0 %v4710, 40
        %v5672 = vpop.permute.xlu0 %5671
        %5673 = vrot.lane.b32.xlu0 %v4711, 40
        %v5674 = vpop.permute.xlu0 %5673
        %5675 = vrot.lane.b32.xlu0 %v4712, 40
        %v5676 = vpop.permute.xlu0 %5675
        %5677 = vrot.lane.b32.xlu0 %v4713, 40
        %v5678 = vpop.permute.xlu0 %5677
        %5679 = vrot.lane.b32.xlu0 %v4714, 40
        %v5680 = vpop.permute.xlu0 %5679
        %5681 = vrot.lane.b32.xlu0 %v4715, 40
        %v5682 = vpop.permute.xlu0 %5681
        %5683 = vrot.lane.b32.xlu0 %v4716, 40
        %v5684 = vpop.permute.xlu0 %5683
        %5685 = vrot.lane.b32.xlu0 %v4717, 40
        %v5686 = vpop.permute.xlu0 %5685
        %5687 = vrot.lane.b32.xlu0 %v4718, 40
        %v5688 = vpop.permute.xlu0 %5687
        %5689 = vrot.lane.b32.xlu0 %v4719, 40
        %v5690 = vpop.permute.xlu0 %5689
        %5691 = vrot.lane.b32.xlu0 %v4720, 40
        %v5692 = vpop.permute.xlu0 %5691
        %5693 = vrot.lane.b32.xlu0 %v4721, 40
        %v5694 = vpop.permute.xlu0 %5693
        %5695 = vrot.lane.b32.xlu0 %v4722, 40
        %v5696 = vpop.permute.xlu0 %5695
        %5697 = vrot.lane.b32.xlu0 %v4723, 40
        %v5698 = vpop.permute.xlu0 %5697
        %5699 = vrot.lane.b32.xlu0 %v4724, 40
        %v5700 = vpop.permute.xlu0 %5699
        %5701 = vrot.lane.b32.xlu0 %v4725, 40
        %v5702 = vpop.permute.xlu0 %5701
        %5703 = vrot.lane.b32.xlu0 %v4726, 40
        %v5704 = vpop.permute.xlu0 %5703
        %5705 = vrot.lane.b32.xlu0 %v4727, 40
        %v5706 = vpop.permute.xlu0 %5705
        %5707 = vrot.lane.b32.xlu0 %v4728, 40
        %v5708 = vpop.permute.xlu0 %5707
        %5709 = vrot.lane.b32.xlu0 %v4729, 40
        %v5710 = vpop.permute.xlu0 %5709
        %5711 = vrot.lane.b32.xlu0 %v4730, 40
        %v5712 = vpop.permute.xlu0 %5711
        %5713 = vrot.lane.b32.xlu0 %v4731, 40
        %v5714 = vpop.permute.xlu0 %5713
        %5715 = vrot.lane.b32.xlu0 %v4732, 40
        %v5716 = vpop.permute.xlu0 %5715
        %5717 = vrot.lane.b32.xlu0 %v4733, 40
        %v5718 = vpop.permute.xlu0 %5717
        %5719 = vrot.lane.b32.xlu0 %v4734, 40
        %v5720 = vpop.permute.xlu0 %5719
        %5721 = vrot.lane.b32.xlu0 %v4735, 40
        %v5722 = vpop.permute.xlu0 %5721
        %5723 = vrot.lane.b32.xlu0 %v4736, 40
        %v5724 = vpop.permute.xlu0 %5723
        %5725 = vrot.lane.b32.xlu0 %v4737, 40
        %v5726 = vpop.permute.xlu0 %5725
        %5727 = vrot.lane.b32.xlu0 %v4738, 40
        %v5728 = vpop.permute.xlu0 %5727
        %5729 = vrot.lane.b32.xlu0 %v4739, 40
        %v5730 = vpop.permute.xlu0 %5729
        %5731 = vrot.lane.b32.xlu0 %v4740, 40
        %v5732 = vpop.permute.xlu0 %5731
        %5733 = vrot.lane.b32.xlu0 %v4741, 40
        %v5734 = vpop.permute.xlu0 %5733
        %5735 = vrot.lane.b32.xlu0 %v4841, 40
        %v5736 = vpop.permute.xlu0 %5735
        %5737 = vrot.lane.b32.xlu0 %v4842, 40
        %v5738 = vpop.permute.xlu0 %5737
        %5739 = vrot.lane.b32.xlu0 %v4843, 40
        %v5740 = vpop.permute.xlu0 %5739
        %5792 = vrot.lane.b32.xlu0 %v4745, 48
        %v5793 = vpop.permute.xlu0 %5792
        %5794 = vrot.lane.b32.xlu0 %v4746, 48
        %v5795 = vpop.permute.xlu0 %5794
        %5796 = vrot.lane.b32.xlu0 %v4747, 48
        %v5797 = vpop.permute.xlu0 %5796
        %5798 = vrot.lane.b32.xlu0 %v4748, 48
        %v5799 = vpop.permute.xlu0 %5798
        %5800 = vrot.lane.b32.xlu0 %v4749, 48
        %v5801 = vpop.permute.xlu0 %5800
        %5802 = vrot.lane.b32.xlu0 %v4750, 48
        %v5803 = vpop.permute.xlu0 %5802
        %5804 = vrot.lane.b32.xlu0 %v4751, 48
        %v5805 = vpop.permute.xlu0 %5804
        %5806 = vrot.lane.b32.xlu0 %v4752, 48
        %v5807 = vpop.permute.xlu0 %5806
        %5808 = vrot.lane.b32.xlu0 %v4753, 48
        %v5809 = vpop.permute.xlu0 %5808
        %5810 = vrot.lane.b32.xlu0 %v4754, 48
        %v5811 = vpop.permute.xlu0 %5810
        %5812 = vrot.lane.b32.xlu0 %v4755, 48
        %v5813 = vpop.permute.xlu0 %5812
        %5814 = vrot.lane.b32.xlu0 %v4756, 48
        %v5815 = vpop.permute.xlu0 %5814
        %5816 = vrot.lane.b32.xlu0 %v4757, 48
        %v5817 = vpop.permute.xlu0 %5816
        %5818 = vrot.lane.b32.xlu0 %v4758, 48
        %v5819 = vpop.permute.xlu0 %5818
        %5820 = vrot.lane.b32.xlu0 %v4759, 48
        %v5821 = vpop.permute.xlu0 %5820
        %5822 = vrot.lane.b32.xlu0 %v4760, 48
        %v5823 = vpop.permute.xlu0 %5822
        %5824 = vrot.lane.b32.xlu0 %v4761, 48
        %v5825 = vpop.permute.xlu0 %5824
        %5826 = vrot.lane.b32.xlu0 %v4762, 48
        %v5827 = vpop.permute.xlu0 %5826
        %5828 = vrot.lane.b32.xlu0 %v4763, 48
        %v5829 = vpop.permute.xlu0 %5828
        %5830 = vrot.lane.b32.xlu0 %v4764, 48
        %v5831 = vpop.permute.xlu0 %5830
        %5832 = vrot.lane.b32.xlu0 %v4765, 48
        %v5833 = vpop.permute.xlu0 %5832
        %5834 = vrot.lane.b32.xlu0 %v4766, 48
        %v5835 = vpop.permute.xlu0 %5834
        %5836 = vrot.lane.b32.xlu0 %v4767, 48
        %v5837 = vpop.permute.xlu0 %5836
        %5838 = vrot.lane.b32.xlu0 %v4768, 48
        %v5839 = vpop.permute.xlu0 %5838
        %5840 = vrot.lane.b32.xlu0 %v4769, 48
        %v5841 = vpop.permute.xlu0 %5840
        %5842 = vrot.lane.b32.xlu0 %v4770, 48
        %v5843 = vpop.permute.xlu0 %5842
        %5844 = vrot.lane.b32.xlu0 %v4771, 48
        %v5845 = vpop.permute.xlu0 %5844
        %5846 = vrot.lane.b32.xlu0 %v4772, 48
        %v5847 = vpop.permute.xlu0 %5846
        %5848 = vrot.lane.b32.xlu0 %v4773, 48
        %v5849 = vpop.permute.xlu0 %5848
        %5850 = vrot.lane.b32.xlu0 %v4774, 48
        %v5851 = vpop.permute.xlu0 %5850
        %5852 = vrot.lane.b32.xlu0 %v4775, 48
        %v5853 = vpop.permute.xlu0 %5852
        %5854 = vrot.lane.b32.xlu0 %v4776, 48
        %v5855 = vpop.permute.xlu0 %5854
        %5856 = vrot.lane.b32.xlu0 %v4777, 48
        %v5857 = vpop.permute.xlu0 %5856
        %5858 = vrot.lane.b32.xlu0 %v4778, 48
        %v5859 = vpop.permute.xlu0 %5858
        %5860 = vrot.lane.b32.xlu0 %v4779, 48
        %v5861 = vpop.permute.xlu0 %5860
        %5862 = vrot.lane.b32.xlu0 %v4780, 48
        %v5863 = vpop.permute.xlu0 %5862
        %5864 = vrot.lane.b32.xlu0 %v4781, 48
        %v5865 = vpop.permute.xlu0 %5864
        %5866 = vrot.lane.b32.xlu0 %v4782, 48
        %v5867 = vpop.permute.xlu0 %5866
        %5868 = vrot.lane.b32.xlu0 %v4783, 48
        %v5869 = vpop.permute.xlu0 %5868
        %5870 = vrot.lane.b32.xlu0 %v4784, 48
        %v5871 = vpop.permute.xlu0 %5870
        %5872 = vrot.lane.b32.xlu0 %v4785, 48
        %v5873 = vpop.permute.xlu0 %5872
        %5874 = vrot.lane.b32.xlu0 %v4786, 48
        %v5875 = vpop.permute.xlu0 %5874
        %5876 = vrot.lane.b32.xlu0 %v4787, 48
        %v5877 = vpop.permute.xlu0 %5876
        %5878 = vrot.lane.b32.xlu0 %v4788, 48
        %v5879 = vpop.permute.xlu0 %5878
        %5880 = vrot.lane.b32.xlu0 %v4789, 48
        %v5881 = vpop.permute.xlu0 %5880
        %5882 = vrot.lane.b32.xlu0 %v4844, 48
        %v5883 = vpop.permute.xlu0 %5882
        %5884 = vrot.lane.b32.xlu0 %v4845, 48
        %v5885 = vpop.permute.xlu0 %5884
        %5886 = vrot.lane.b32.xlu0 %v4846, 48
        %v5887 = vpop.permute.xlu0 %5886
        %5939 = vrot.lane.b32.xlu0 %v4793, 56
        %v5940 = vpop.permute.xlu0 %5939
        %5941 = vrot.lane.b32.xlu0 %v4794, 56
        %v5942 = vpop.permute.xlu0 %5941
        %5943 = vrot.lane.b32.xlu0 %v4795, 56
        %v5944 = vpop.permute.xlu0 %5943
        %5945 = vrot.lane.b32.xlu0 %v4796, 56
        %v5946 = vpop.permute.xlu0 %5945
        %5947 = vrot.lane.b32.xlu0 %v4797, 56
        %v5948 = vpop.permute.xlu0 %5947
        %5949 = vrot.lane.b32.xlu0 %v4798, 56
        %v5950 = vpop.permute.xlu0 %5949
        %5951 = vrot.lane.b32.xlu0 %v4799, 56
        %v5952 = vpop.permute.xlu0 %5951
        %5953 = vrot.lane.b32.xlu0 %v4800, 56
        %v5954 = vpop.permute.xlu0 %5953
        %5955 = vrot.lane.b32.xlu0 %v4801, 56
        %v5956 = vpop.permute.xlu0 %5955
        %5957 = vrot.lane.b32.xlu0 %v4802, 56
        %v5958 = vpop.permute.xlu0 %5957
        %5959 = vrot.lane.b32.xlu0 %v4803, 56
        %v5960 = vpop.permute.xlu0 %5959
        %5961 = vrot.lane.b32.xlu0 %v4804, 56
        %v5962 = vpop.permute.xlu0 %5961
        %5963 = vrot.lane.b32.xlu0 %v4805, 56
        %v5964 = vpop.permute.xlu0 %5963
        %5965 = vrot.lane.b32.xlu0 %v4806, 56
        %v5966 = vpop.permute.xlu0 %5965
        %5967 = vrot.lane.b32.xlu0 %v4807, 56
        %v5968 = vpop.permute.xlu0 %5967
        %5969 = vrot.lane.b32.xlu0 %v4808, 56
        %v5970 = vpop.permute.xlu0 %5969
        %5971 = vrot.lane.b32.xlu0 %v4809, 56
        %v5972 = vpop.permute.xlu0 %5971
        %5973 = vrot.lane.b32.xlu0 %v4810, 56
        %v5974 = vpop.permute.xlu0 %5973
        %5975 = vrot.lane.b32.xlu0 %v4811, 56
        %v5976 = vpop.permute.xlu0 %5975
        %5977 = vrot.lane.b32.xlu0 %v4812, 56
        %v5978 = vpop.permute.xlu0 %5977
        %5979 = vrot.lane.b32.xlu0 %v4813, 56
        %v5980 = vpop.permute.xlu0 %5979
        %5981 = vrot.lane.b32.xlu0 %v4814, 56
        %v5982 = vpop.permute.xlu0 %5981
        %5983 = vrot.lane.b32.xlu0 %v4815, 56
        %v5984 = vpop.permute.xlu0 %5983
        %5985 = vrot.lane.b32.xlu0 %v4816, 56
        %v5986 = vpop.permute.xlu0 %5985
        %5987 = vrot.lane.b32.xlu0 %v4817, 56
        %v5988 = vpop.permute.xlu0 %5987
        %5989 = vrot.lane.b32.xlu0 %v4818, 56
        %v5990 = vpop.permute.xlu0 %5989
        %5991 = vrot.lane.b32.xlu0 %v4819, 56
        %v5992 = vpop.permute.xlu0 %5991
        %5993 = vrot.lane.b32.xlu0 %v4820, 56
        %v5994 = vpop.permute.xlu0 %5993
        %5995 = vrot.lane.b32.xlu0 %v4821, 56
        %v5996 = vpop.permute.xlu0 %5995
        %5997 = vrot.lane.b32.xlu0 %v4822, 56
        %v5998 = vpop.permute.xlu0 %5997
        %5999 = vrot.lane.b32.xlu0 %v4823, 56
        %v6000 = vpop.permute.xlu0 %5999
        %6001 = vrot.lane.b32.xlu0 %v4824, 56
        %v6002 = vpop.permute.xlu0 %6001
        %6003 = vrot.lane.b32.xlu0 %v4825, 56
        %v6004 = vpop.permute.xlu0 %6003
        %6005 = vrot.lane.b32.xlu0 %v4826, 56
        %v6006 = vpop.permute.xlu0 %6005
        %6007 = vrot.lane.b32.xlu0 %v4827, 56
        %v6008 = vpop.permute.xlu0 %6007
        %6009 = vrot.lane.b32.xlu0 %v4828, 56
        %v6010 = vpop.permute.xlu0 %6009
        %6011 = vrot.lane.b32.xlu0 %v4829, 56
        %v6012 = vpop.permute.xlu0 %6011
        %6013 = vrot.lane.b32.xlu0 %v4830, 56
        %v6014 = vpop.permute.xlu0 %6013
        %6015 = vrot.lane.b32.xlu0 %v4831, 56
        %v6016 = vpop.permute.xlu0 %6015
        %6017 = vrot.lane.b32.xlu0 %v4832, 56
        %v6018 = vpop.permute.xlu0 %6017
        %6019 = vrot.lane.b32.xlu0 %v4833, 56
        %v6020 = vpop.permute.xlu0 %6019
        %6021 = vrot.lane.b32.xlu0 %v4834, 56
        %v6022 = vpop.permute.xlu0 %6021
        %6023 = vrot.lane.b32.xlu0 %v4835, 56
        %v6024 = vpop.permute.xlu0 %6023
        %6025 = vrot.lane.b32.xlu0 %v4836, 56
        %v6026 = vpop.permute.xlu0 %6025
        %6027 = vrot.lane.b32.xlu0 %v4837, 56
        %v6028 = vpop.permute.xlu0 %6027
        %6029 = vrot.lane.b32.xlu0 %v4847, 56
        %v6030 = vpop.permute.xlu0 %6029
        %6031 = vrot.lane.b32.xlu0 %v4848, 56
        %v6032 = vpop.permute.xlu0 %6031
        %6033 = vrot.lane.b32.xlu0 %v4849, 56
        %v6034 = vpop.permute.xlu0 %6033
        %6086 = vrot.lane.b32.xlu0 %v4652, 64
        %v6087 = vpop.permute.xlu0 %6086
        %6088 = vrot.lane.b32.xlu0 %v4653, 64
        %v6089 = vpop.permute.xlu0 %6088
        %6090 = vrot.lane.b32.xlu0 %v4654, 64
        %v6091 = vpop.permute.xlu0 %6090
        %6092 = vrot.lane.b32.xlu0 %v4655, 64
        %v6093 = vpop.permute.xlu0 %6092
        %6094 = vrot.lane.b32.xlu0 %v4656, 64
        %v6095 = vpop.permute.xlu0 %6094
        %6096 = vrot.lane.b32.xlu0 %v4657, 64
        %v6097 = vpop.permute.xlu0 %6096
        %6098 = vrot.lane.b32.xlu0 %v4658, 64
        %v6099 = vpop.permute.xlu0 %6098
        %6100 = vrot.lane.b32.xlu0 %v4659, 64
        %v6101 = vpop.permute.xlu0 %6100
        %6102 = vrot.lane.b32.xlu0 %v4660, 64
        %v6103 = vpop.permute.xlu0 %6102
        %6104 = vrot.lane.b32.xlu0 %v4661, 64
        %v6105 = vpop.permute.xlu0 %6104
        %6106 = vrot.lane.b32.xlu0 %v4662, 64
        %v6107 = vpop.permute.xlu0 %6106
        %6108 = vrot.lane.b32.xlu0 %v4663, 64
        %v6109 = vpop.permute.xlu0 %6108
        %6110 = vrot.lane.b32.xlu0 %v4664, 64
        %v6111 = vpop.permute.xlu0 %6110
        %6112 = vrot.lane.b32.xlu0 %v4665, 64
        %v6113 = vpop.permute.xlu0 %6112
        %6114 = vrot.lane.b32.xlu0 %v4666, 64
        %v6115 = vpop.permute.xlu0 %6114
        %6116 = vrot.lane.b32.xlu0 %v4667, 64
        %v6117 = vpop.permute.xlu0 %6116
        %6118 = vrot.lane.b32.xlu0 %v4668, 64
        %v6119 = vpop.permute.xlu0 %6118
        %6120 = vrot.lane.b32.xlu0 %v4669, 64
        %v6121 = vpop.permute.xlu0 %6120
        %6122 = vrot.lane.b32.xlu0 %v4670, 64
        %v6123 = vpop.permute.xlu0 %6122
        %6124 = vrot.lane.b32.xlu0 %v4671, 64
        %v6125 = vpop.permute.xlu0 %6124
        %6126 = vrot.lane.b32.xlu0 %v4672, 64
        %v6127 = vpop.permute.xlu0 %6126
        %6128 = vrot.lane.b32.xlu0 %v4673, 64
        %v6129 = vpop.permute.xlu0 %6128
        %6130 = vrot.lane.b32.xlu0 %v4674, 64
        %v6131 = vpop.permute.xlu0 %6130
        %6132 = vrot.lane.b32.xlu0 %v4675, 64
        %v6133 = vpop.permute.xlu0 %6132
        %6134 = vrot.lane.b32.xlu0 %v4676, 64
        %v6135 = vpop.permute.xlu0 %6134
        %6136 = vrot.lane.b32.xlu0 %v4677, 64
        %v6137 = vpop.permute.xlu0 %6136
        %6138 = vrot.lane.b32.xlu0 %v4678, 64
        %v6139 = vpop.permute.xlu0 %6138
        %6140 = vrot.lane.b32.xlu0 %v4679, 64
        %v6141 = vpop.permute.xlu0 %6140
        %6142 = vrot.lane.b32.xlu0 %v4680, 64
        %v6143 = vpop.permute.xlu0 %6142
        %6144 = vrot.lane.b32.xlu0 %v4681, 64
        %v6145 = vpop.permute.xlu0 %6144
        %6146 = vrot.lane.b32.xlu0 %v4682, 64
        %v6147 = vpop.permute.xlu0 %6146
        %6148 = vrot.lane.b32.xlu0 %v4683, 64
        %v6149 = vpop.permute.xlu0 %6148
        %6150 = vrot.lane.b32.xlu0 %v4684, 64
        %v6151 = vpop.permute.xlu0 %6150
        %6152 = vrot.lane.b32.xlu0 %v4685, 64
        %v6153 = vpop.permute.xlu0 %6152
        %6154 = vrot.lane.b32.xlu0 %v4686, 64
        %v6155 = vpop.permute.xlu0 %6154
        %6156 = vrot.lane.b32.xlu0 %v4687, 64
        %v6157 = vpop.permute.xlu0 %6156
        %6158 = vrot.lane.b32.xlu0 %v4688, 64
        %v6159 = vpop.permute.xlu0 %6158
        %6160 = vrot.lane.b32.xlu0 %v4689, 64
        %v6161 = vpop.permute.xlu0 %6160
        %6162 = vrot.lane.b32.xlu0 %v4690, 64
        %v6163 = vpop.permute.xlu0 %6162
        %6164 = vrot.lane.b32.xlu0 %v4691, 64
        %v6165 = vpop.permute.xlu0 %6164
        %6166 = vrot.lane.b32.xlu0 %v4692, 64
        %v6167 = vpop.permute.xlu0 %6166
        %6168 = vrot.lane.b32.xlu0 %v4693, 64
        %v6169 = vpop.permute.xlu0 %6168
        %6170 = vrot.lane.b32.xlu0 %v4838, 64
        %v6171 = vpop.permute.xlu0 %6170
        %6172 = vrot.lane.b32.xlu0 %v4839, 64
        %v6173 = vpop.permute.xlu0 %6172
        %6174 = vrot.lane.b32.xlu0 %v4840, 64
        %v6175 = vpop.permute.xlu0 %6174
        %6176 = vrot.lane.b32.xlu0 %v4850, 64
        %v6177 = vpop.permute.xlu0 %6176
        %6178 = vrot.lane.b32.xlu0 %v4851, 64
        %v6179 = vpop.permute.xlu0 %6178
        %6180 = vrot.lane.b32.xlu0 %v4852, 64
        %v6181 = vpop.permute.xlu0 %6180
        %6233 = vrot.lane.b32.xlu0 %v4700, 72
        %v6234 = vpop.permute.xlu0 %6233
        %6235 = vrot.lane.b32.xlu0 %v4701, 72
        %v6236 = vpop.permute.xlu0 %6235
        %6237 = vrot.lane.b32.xlu0 %v4702, 72
        %v6238 = vpop.permute.xlu0 %6237
        %6239 = vrot.lane.b32.xlu0 %v4703, 72
        %v6240 = vpop.permute.xlu0 %6239
        %6241 = vrot.lane.b32.xlu0 %v4704, 72
        %v6242 = vpop.permute.xlu0 %6241
        %6243 = vrot.lane.b32.xlu0 %v4705, 72
        %v6244 = vpop.permute.xlu0 %6243
        %6245 = vrot.lane.b32.xlu0 %v4706, 72
        %v6246 = vpop.permute.xlu0 %6245
        %6247 = vrot.lane.b32.xlu0 %v4707, 72
        %v6248 = vpop.permute.xlu0 %6247
        %6249 = vrot.lane.b32.xlu0 %v4708, 72
        %v6250 = vpop.permute.xlu0 %6249
        %6251 = vrot.lane.b32.xlu0 %v4709, 72
        %v6252 = vpop.permute.xlu0 %6251
        %6253 = vrot.lane.b32.xlu0 %v4710, 72
        %v6254 = vpop.permute.xlu0 %6253
        %6255 = vrot.lane.b32.xlu0 %v4711, 72
        %v6256 = vpop.permute.xlu0 %6255
        %6257 = vrot.lane.b32.xlu0 %v4712, 72
        %v6258 = vpop.permute.xlu0 %6257
        %6259 = vrot.lane.b32.xlu0 %v4713, 72
        %v6260 = vpop.permute.xlu0 %6259
        %6261 = vrot.lane.b32.xlu0 %v4714, 72
        %v6262 = vpop.permute.xlu0 %6261
        %6263 = vrot.lane.b32.xlu0 %v4715, 72
        %v6264 = vpop.permute.xlu0 %6263
        %6265 = vrot.lane.b32.xlu0 %v4716, 72
        %v6266 = vpop.permute.xlu0 %6265
        %6267 = vrot.lane.b32.xlu0 %v4717, 72
        %v6268 = vpop.permute.xlu0 %6267
        %6269 = vrot.lane.b32.xlu0 %v4718, 72
        %v6270 = vpop.permute.xlu0 %6269
        %6271 = vrot.lane.b32.xlu0 %v4719, 72
        %v6272 = vpop.permute.xlu0 %6271
        %6273 = vrot.lane.b32.xlu0 %v4720, 72
        %v6274 = vpop.permute.xlu0 %6273
        %6275 = vrot.lane.b32.xlu0 %v4721, 72
        %v6276 = vpop.permute.xlu0 %6275
        %6277 = vrot.lane.b32.xlu0 %v4722, 72
        %v6278 = vpop.permute.xlu0 %6277
        %6279 = vrot.lane.b32.xlu0 %v4723, 72
        %v6280 = vpop.permute.xlu0 %6279
        %6281 = vrot.lane.b32.xlu0 %v4724, 72
        %v6282 = vpop.permute.xlu0 %6281
        %6283 = vrot.lane.b32.xlu0 %v4725, 72
        %v6284 = vpop.permute.xlu0 %6283
        %6285 = vrot.lane.b32.xlu0 %v4726, 72
        %v6286 = vpop.permute.xlu0 %6285
        %6287 = vrot.lane.b32.xlu0 %v4727, 72
        %v6288 = vpop.permute.xlu0 %6287
        %6289 = vrot.lane.b32.xlu0 %v4728, 72
        %v6290 = vpop.permute.xlu0 %6289
        %6291 = vrot.lane.b32.xlu0 %v4729, 72
        %v6292 = vpop.permute.xlu0 %6291
        %6293 = vrot.lane.b32.xlu0 %v4730, 72
        %v6294 = vpop.permute.xlu0 %6293
        %6295 = vrot.lane.b32.xlu0 %v4731, 72
        %v6296 = vpop.permute.xlu0 %6295
        %6297 = vrot.lane.b32.xlu0 %v4732, 72
        %v6298 = vpop.permute.xlu0 %6297
        %6299 = vrot.lane.b32.xlu0 %v4733, 72
        %v6300 = vpop.permute.xlu0 %6299
        %6301 = vrot.lane.b32.xlu0 %v4734, 72
        %v6302 = vpop.permute.xlu0 %6301
        %6303 = vrot.lane.b32.xlu0 %v4735, 72
        %v6304 = vpop.permute.xlu0 %6303
        %6305 = vrot.lane.b32.xlu0 %v4736, 72
        %v6306 = vpop.permute.xlu0 %6305
        %6307 = vrot.lane.b32.xlu0 %v4737, 72
        %v6308 = vpop.permute.xlu0 %6307
        %6309 = vrot.lane.b32.xlu0 %v4738, 72
        %v6310 = vpop.permute.xlu0 %6309
        %6311 = vrot.lane.b32.xlu0 %v4739, 72
        %v6312 = vpop.permute.xlu0 %6311
        %6313 = vrot.lane.b32.xlu0 %v4740, 72
        %v6314 = vpop.permute.xlu0 %6313
        %6315 = vrot.lane.b32.xlu0 %v4741, 72
        %v6316 = vpop.permute.xlu0 %6315
        %6317 = vrot.lane.b32.xlu0 %v4841, 72
        %v6318 = vpop.permute.xlu0 %6317
        %6319 = vrot.lane.b32.xlu0 %v4842, 72
        %v6320 = vpop.permute.xlu0 %6319
        %6321 = vrot.lane.b32.xlu0 %v4843, 72
        %v6322 = vpop.permute.xlu0 %6321
        %6323 = vrot.lane.b32.xlu0 %v4853, 72
        %v6324 = vpop.permute.xlu0 %6323
        %6325 = vrot.lane.b32.xlu0 %v4854, 72
        %v6326 = vpop.permute.xlu0 %6325
        %6327 = vrot.lane.b32.xlu0 %v4855, 72
        %v6328 = vpop.permute.xlu0 %6327
        %6380 = vrot.lane.b32.xlu0 %v4748, 80
        %v6381 = vpop.permute.xlu0 %6380
        %6382 = vrot.lane.b32.xlu0 %v4749, 80
        %v6383 = vpop.permute.xlu0 %6382
        %6384 = vrot.lane.b32.xlu0 %v4750, 80
        %v6385 = vpop.permute.xlu0 %6384
        %6386 = vrot.lane.b32.xlu0 %v4751, 80
        %v6387 = vpop.permute.xlu0 %6386
        %6388 = vrot.lane.b32.xlu0 %v4752, 80
        %v6389 = vpop.permute.xlu0 %6388
        %6390 = vrot.lane.b32.xlu0 %v4753, 80
        %v6391 = vpop.permute.xlu0 %6390
        %6392 = vrot.lane.b32.xlu0 %v4754, 80
        %v6393 = vpop.permute.xlu0 %6392
        %6394 = vrot.lane.b32.xlu0 %v4755, 80
        %v6395 = vpop.permute.xlu0 %6394
        %6396 = vrot.lane.b32.xlu0 %v4756, 80
        %v6397 = vpop.permute.xlu0 %6396
        %6398 = vrot.lane.b32.xlu0 %v4757, 80
        %v6399 = vpop.permute.xlu0 %6398
        %6400 = vrot.lane.b32.xlu0 %v4758, 80
        %v6401 = vpop.permute.xlu0 %6400
        %6402 = vrot.lane.b32.xlu0 %v4759, 80
        %v6403 = vpop.permute.xlu0 %6402
        %6404 = vrot.lane.b32.xlu0 %v4760, 80
        %v6405 = vpop.permute.xlu0 %6404
        %6406 = vrot.lane.b32.xlu0 %v4761, 80
        %v6407 = vpop.permute.xlu0 %6406
        %6408 = vrot.lane.b32.xlu0 %v4762, 80
        %v6409 = vpop.permute.xlu0 %6408
        %6410 = vrot.lane.b32.xlu0 %v4763, 80
        %v6411 = vpop.permute.xlu0 %6410
        %6412 = vrot.lane.b32.xlu0 %v4764, 80
        %v6413 = vpop.permute.xlu0 %6412
        %6414 = vrot.lane.b32.xlu0 %v4765, 80
        %v6415 = vpop.permute.xlu0 %6414
        %6416 = vrot.lane.b32.xlu0 %v4766, 80
        %v6417 = vpop.permute.xlu0 %6416
        %6418 = vrot.lane.b32.xlu0 %v4767, 80
        %v6419 = vpop.permute.xlu0 %6418
        %6420 = vrot.lane.b32.xlu0 %v4768, 80
        %v6421 = vpop.permute.xlu0 %6420
        %6422 = vrot.lane.b32.xlu0 %v4769, 80
        %v6423 = vpop.permute.xlu0 %6422
        %6424 = vrot.lane.b32.xlu0 %v4770, 80
        %v6425 = vpop.permute.xlu0 %6424
        %6426 = vrot.lane.b32.xlu0 %v4771, 80
        %v6427 = vpop.permute.xlu0 %6426
        %6428 = vrot.lane.b32.xlu0 %v4772, 80
        %v6429 = vpop.permute.xlu0 %6428
        %6430 = vrot.lane.b32.xlu0 %v4773, 80
        %v6431 = vpop.permute.xlu0 %6430
        %6432 = vrot.lane.b32.xlu0 %v4774, 80
        %v6433 = vpop.permute.xlu0 %6432
        %6434 = vrot.lane.b32.xlu0 %v4775, 80
        %v6435 = vpop.permute.xlu0 %6434
        %6436 = vrot.lane.b32.xlu0 %v4776, 80
        %v6437 = vpop.permute.xlu0 %6436
        %6438 = vrot.lane.b32.xlu0 %v4777, 80
        %v6439 = vpop.permute.xlu0 %6438
        %6440 = vrot.lane.b32.xlu0 %v4778, 80
        %v6441 = vpop.permute.xlu0 %6440
        %6442 = vrot.lane.b32.xlu0 %v4779, 80
        %v6443 = vpop.permute.xlu0 %6442
        %6444 = vrot.lane.b32.xlu0 %v4780, 80
        %v6445 = vpop.permute.xlu0 %6444
        %6446 = vrot.lane.b32.xlu0 %v4781, 80
        %v6447 = vpop.permute.xlu0 %6446
        %6448 = vrot.lane.b32.xlu0 %v4782, 80
        %v6449 = vpop.permute.xlu0 %6448
        %6450 = vrot.lane.b32.xlu0 %v4783, 80
        %v6451 = vpop.permute.xlu0 %6450
        %6452 = vrot.lane.b32.xlu0 %v4784, 80
        %v6453 = vpop.permute.xlu0 %6452
        %6454 = vrot.lane.b32.xlu0 %v4785, 80
        %v6455 = vpop.permute.xlu0 %6454
        %6456 = vrot.lane.b32.xlu0 %v4786, 80
        %v6457 = vpop.permute.xlu0 %6456
        %6458 = vrot.lane.b32.xlu0 %v4787, 80
        %v6459 = vpop.permute.xlu0 %6458
        %6460 = vrot.lane.b32.xlu0 %v4788, 80
        %v6461 = vpop.permute.xlu0 %6460
        %6462 = vrot.lane.b32.xlu0 %v4789, 80
        %v6463 = vpop.permute.xlu0 %6462
        %6464 = vrot.lane.b32.xlu0 %v4844, 80
        %v6465 = vpop.permute.xlu0 %6464
        %6466 = vrot.lane.b32.xlu0 %v4845, 80
        %v6467 = vpop.permute.xlu0 %6466
        %6468 = vrot.lane.b32.xlu0 %v4846, 80
        %v6469 = vpop.permute.xlu0 %6468
        %6470 = vrot.lane.b32.xlu0 %v4856, 80
        %v6471 = vpop.permute.xlu0 %6470
        %6472 = vrot.lane.b32.xlu0 %v4857, 80
        %v6473 = vpop.permute.xlu0 %6472
        %6474 = vrot.lane.b32.xlu0 %v4858, 80
        %v6475 = vpop.permute.xlu0 %6474
        %6527 = vrot.lane.b32.xlu0 %v4796, 88
        %v6528 = vpop.permute.xlu0 %6527
        %6529 = vrot.lane.b32.xlu0 %v4797, 88
        %v6530 = vpop.permute.xlu0 %6529
        %6531 = vrot.lane.b32.xlu0 %v4798, 88
        %v6532 = vpop.permute.xlu0 %6531
        %6533 = vrot.lane.b32.xlu0 %v4799, 88
        %v6534 = vpop.permute.xlu0 %6533
        %6535 = vrot.lane.b32.xlu0 %v4800, 88
        %v6536 = vpop.permute.xlu0 %6535
        %6537 = vrot.lane.b32.xlu0 %v4801, 88
        %v6538 = vpop.permute.xlu0 %6537
        %6539 = vrot.lane.b32.xlu0 %v4802, 88
        %v6540 = vpop.permute.xlu0 %6539
        %6541 = vrot.lane.b32.xlu0 %v4803, 88
        %v6542 = vpop.permute.xlu0 %6541
        %6543 = vrot.lane.b32.xlu0 %v4804, 88
        %v6544 = vpop.permute.xlu0 %6543
        %6545 = vrot.lane.b32.xlu0 %v4805, 88
        %v6546 = vpop.permute.xlu0 %6545
        %6547 = vrot.lane.b32.xlu0 %v4806, 88
        %v6548 = vpop.permute.xlu0 %6547
        %6549 = vrot.lane.b32.xlu0 %v4807, 88
        %v6550 = vpop.permute.xlu0 %6549
        %6551 = vrot.lane.b32.xlu0 %v4808, 88
        %v6552 = vpop.permute.xlu0 %6551
        %6553 = vrot.lane.b32.xlu0 %v4809, 88
        %v6554 = vpop.permute.xlu0 %6553
        %6555 = vrot.lane.b32.xlu0 %v4810, 88
        %v6556 = vpop.permute.xlu0 %6555
        %6557 = vrot.lane.b32.xlu0 %v4811, 88
        %v6558 = vpop.permute.xlu0 %6557
        %6559 = vrot.lane.b32.xlu0 %v4812, 88
        %v6560 = vpop.permute.xlu0 %6559
        %6561 = vrot.lane.b32.xlu0 %v4813, 88
        %v6562 = vpop.permute.xlu0 %6561
        %6563 = vrot.lane.b32.xlu0 %v4814, 88
        %v6564 = vpop.permute.xlu0 %6563
        %6565 = vrot.lane.b32.xlu0 %v4815, 88
        %v6566 = vpop.permute.xlu0 %6565
        %6567 = vrot.lane.b32.xlu0 %v4816, 88
        %v6568 = vpop.permute.xlu0 %6567
        %6569 = vrot.lane.b32.xlu0 %v4817, 88
        %v6570 = vpop.permute.xlu0 %6569
        %6571 = vrot.lane.b32.xlu0 %v4818, 88
        %v6572 = vpop.permute.xlu0 %6571
        %6573 = vrot.lane.b32.xlu0 %v4819, 88
        %v6574 = vpop.permute.xlu0 %6573
        %6575 = vrot.lane.b32.xlu0 %v4820, 88
        %v6576 = vpop.permute.xlu0 %6575
        %6577 = vrot.lane.b32.xlu0 %v4821, 88
        %v6578 = vpop.permute.xlu0 %6577
        %6579 = vrot.lane.b32.xlu0 %v4822, 88
        %v6580 = vpop.permute.xlu0 %6579
        %6581 = vrot.lane.b32.xlu0 %v4823, 88
        %v6582 = vpop.permute.xlu0 %6581
        %6583 = vrot.lane.b32.xlu0 %v4824, 88
        %v6584 = vpop.permute.xlu0 %6583
        %6585 = vrot.lane.b32.xlu0 %v4825, 88
        %v6586 = vpop.permute.xlu0 %6585
        %6587 = vrot.lane.b32.xlu0 %v4826, 88
        %v6588 = vpop.permute.xlu0 %6587
        %6589 = vrot.lane.b32.xlu0 %v4827, 88
        %v6590 = vpop.permute.xlu0 %6589
        %6591 = vrot.lane.b32.xlu0 %v4828, 88
        %v6592 = vpop.permute.xlu0 %6591
        %6593 = vrot.lane.b32.xlu0 %v4829, 88
        %v6594 = vpop.permute.xlu0 %6593
        %6595 = vrot.lane.b32.xlu0 %v4830, 88
        %v6596 = vpop.permute.xlu0 %6595
        %6597 = vrot.lane.b32.xlu0 %v4831, 88
        %v6598 = vpop.permute.xlu0 %6597
        %6599 = vrot.lane.b32.xlu0 %v4832, 88
        %v6600 = vpop.permute.xlu0 %6599
        %6601 = vrot.lane.b32.xlu0 %v4833, 88
        %v6602 = vpop.permute.xlu0 %6601
        %6603 = vrot.lane.b32.xlu0 %v4834, 88
        %v6604 = vpop.permute.xlu0 %6603
        %6605 = vrot.lane.b32.xlu0 %v4835, 88
        %v6606 = vpop.permute.xlu0 %6605
        %6607 = vrot.lane.b32.xlu0 %v4836, 88
        %v6608 = vpop.permute.xlu0 %6607
        %6609 = vrot.lane.b32.xlu0 %v4837, 88
        %v6610 = vpop.permute.xlu0 %6609
        %6611 = vrot.lane.b32.xlu0 %v4847, 88
        %v6612 = vpop.permute.xlu0 %6611
        %6613 = vrot.lane.b32.xlu0 %v4848, 88
        %v6614 = vpop.permute.xlu0 %6613
        %6615 = vrot.lane.b32.xlu0 %v4849, 88
        %v6616 = vpop.permute.xlu0 %6615
        %6617 = vrot.lane.b32.xlu0 %v4859, 88
        %v6618 = vpop.permute.xlu0 %6617
        %6619 = vrot.lane.b32.xlu0 %v4860, 88
        %v6620 = vpop.permute.xlu0 %6619
        %6621 = vrot.lane.b32.xlu0 %v4861, 88
        %v6622 = vpop.permute.xlu0 %6621
        %6674 = vrot.lane.b32.xlu0 %v4655, 96
        %v6675 = vpop.permute.xlu0 %6674
        %6676 = vrot.lane.b32.xlu0 %v4656, 96
        %v6677 = vpop.permute.xlu0 %6676
        %6678 = vrot.lane.b32.xlu0 %v4657, 96
        %v6679 = vpop.permute.xlu0 %6678
        %6680 = vrot.lane.b32.xlu0 %v4658, 96
        %v6681 = vpop.permute.xlu0 %6680
        %6682 = vrot.lane.b32.xlu0 %v4659, 96
        %v6683 = vpop.permute.xlu0 %6682
        %6684 = vrot.lane.b32.xlu0 %v4660, 96
        %v6685 = vpop.permute.xlu0 %6684
        %6686 = vrot.lane.b32.xlu0 %v4661, 96
        %v6687 = vpop.permute.xlu0 %6686
        %6688 = vrot.lane.b32.xlu0 %v4662, 96
        %v6689 = vpop.permute.xlu0 %6688
        %6690 = vrot.lane.b32.xlu0 %v4663, 96
        %v6691 = vpop.permute.xlu0 %6690
        %6692 = vrot.lane.b32.xlu0 %v4664, 96
        %v6693 = vpop.permute.xlu0 %6692
        %6694 = vrot.lane.b32.xlu0 %v4665, 96
        %v6695 = vpop.permute.xlu0 %6694
        %6696 = vrot.lane.b32.xlu0 %v4666, 96
        %v6697 = vpop.permute.xlu0 %6696
        %6698 = vrot.lane.b32.xlu0 %v4667, 96
        %v6699 = vpop.permute.xlu0 %6698
        %6700 = vrot.lane.b32.xlu0 %v4668, 96
        %v6701 = vpop.permute.xlu0 %6700
        %6702 = vrot.lane.b32.xlu0 %v4669, 96
        %v6703 = vpop.permute.xlu0 %6702
        %6704 = vrot.lane.b32.xlu0 %v4670, 96
        %v6705 = vpop.permute.xlu0 %6704
        %6706 = vrot.lane.b32.xlu0 %v4671, 96
        %v6707 = vpop.permute.xlu0 %6706
        %6708 = vrot.lane.b32.xlu0 %v4672, 96
        %v6709 = vpop.permute.xlu0 %6708
        %6710 = vrot.lane.b32.xlu0 %v4673, 96
        %v6711 = vpop.permute.xlu0 %6710
        %6712 = vrot.lane.b32.xlu0 %v4674, 96
        %v6713 = vpop.permute.xlu0 %6712
        %6714 = vrot.lane.b32.xlu0 %v4675, 96
        %v6715 = vpop.permute.xlu0 %6714
        %6716 = vrot.lane.b32.xlu0 %v4676, 96
        %v6717 = vpop.permute.xlu0 %6716
        %6718 = vrot.lane.b32.xlu0 %v4677, 96
        %v6719 = vpop.permute.xlu0 %6718
        %6720 = vrot.lane.b32.xlu0 %v4678, 96
        %v6721 = vpop.permute.xlu0 %6720
        %6722 = vrot.lane.b32.xlu0 %v4679, 96
        %v6723 = vpop.permute.xlu0 %6722
        %6724 = vrot.lane.b32.xlu0 %v4680, 96
        %v6725 = vpop.permute.xlu0 %6724
        %6726 = vrot.lane.b32.xlu0 %v4681, 96
        %v6727 = vpop.permute.xlu0 %6726
        %6728 = vrot.lane.b32.xlu0 %v4682, 96
        %v6729 = vpop.permute.xlu0 %6728
        %6730 = vrot.lane.b32.xlu0 %v4683, 96
        %v6731 = vpop.permute.xlu0 %6730
        %6732 = vrot.lane.b32.xlu0 %v4684, 96
        %v6733 = vpop.permute.xlu0 %6732
        %6734 = vrot.lane.b32.xlu0 %v4685, 96
        %v6735 = vpop.permute.xlu0 %6734
        %6736 = vrot.lane.b32.xlu0 %v4686, 96
        %v6737 = vpop.permute.xlu0 %6736
        %6738 = vrot.lane.b32.xlu0 %v4687, 96
        %v6739 = vpop.permute.xlu0 %6738
        %6740 = vrot.lane.b32.xlu0 %v4688, 96
        %v6741 = vpop.permute.xlu0 %6740
        %6742 = vrot.lane.b32.xlu0 %v4689, 96
        %v6743 = vpop.permute.xlu0 %6742
        %6744 = vrot.lane.b32.xlu0 %v4690, 96
        %v6745 = vpop.permute.xlu0 %6744
        %6746 = vrot.lane.b32.xlu0 %v4691, 96
        %v6747 = vpop.permute.xlu0 %6746
        %6748 = vrot.lane.b32.xlu0 %v4692, 96
        %v6749 = vpop.permute.xlu0 %6748
        %6750 = vrot.lane.b32.xlu0 %v4693, 96
        %v6751 = vpop.permute.xlu0 %6750
        %6752 = vrot.lane.b32.xlu0 %v4838, 96
        %v6753 = vpop.permute.xlu0 %6752
        %6754 = vrot.lane.b32.xlu0 %v4839, 96
        %v6755 = vpop.permute.xlu0 %6754
        %6756 = vrot.lane.b32.xlu0 %v4840, 96
        %v6757 = vpop.permute.xlu0 %6756
        %6758 = vrot.lane.b32.xlu0 %v4850, 96
        %v6759 = vpop.permute.xlu0 %6758
        %6760 = vrot.lane.b32.xlu0 %v4851, 96
        %v6761 = vpop.permute.xlu0 %6760
        %6762 = vrot.lane.b32.xlu0 %v4852, 96
        %v6763 = vpop.permute.xlu0 %6762
        %6764 = vrot.lane.b32.xlu0 %v4862, 96
        %v6765 = vpop.permute.xlu0 %6764
        %6766 = vrot.lane.b32.xlu0 %v4863, 96
        %v6767 = vpop.permute.xlu0 %6766
        %6768 = vrot.lane.b32.xlu0 %v4864, 96
        %v6769 = vpop.permute.xlu0 %6768
        %6821 = vrot.lane.b32.xlu0 %v4703, 104
        %v6822 = vpop.permute.xlu0 %6821
        %6823 = vrot.lane.b32.xlu0 %v4704, 104
        %v6824 = vpop.permute.xlu0 %6823
        %6825 = vrot.lane.b32.xlu0 %v4705, 104
        %v6826 = vpop.permute.xlu0 %6825
        %6827 = vrot.lane.b32.xlu0 %v4706, 104
        %v6828 = vpop.permute.xlu0 %6827
        %6829 = vrot.lane.b32.xlu0 %v4707, 104
        %v6830 = vpop.permute.xlu0 %6829
        %6831 = vrot.lane.b32.xlu0 %v4708, 104
        %v6832 = vpop.permute.xlu0 %6831
        %6833 = vrot.lane.b32.xlu0 %v4709, 104
        %v6834 = vpop.permute.xlu0 %6833
        %6835 = vrot.lane.b32.xlu0 %v4710, 104
        %v6836 = vpop.permute.xlu0 %6835
        %6837 = vrot.lane.b32.xlu0 %v4711, 104
        %v6838 = vpop.permute.xlu0 %6837
        %6839 = vrot.lane.b32.xlu0 %v4712, 104
        %v6840 = vpop.permute.xlu0 %6839
        %6841 = vrot.lane.b32.xlu0 %v4713, 104
        %v6842 = vpop.permute.xlu0 %6841
        %6843 = vrot.lane.b32.xlu0 %v4714, 104
        %v6844 = vpop.permute.xlu0 %6843
        %6845 = vrot.lane.b32.xlu0 %v4715, 104
        %v6846 = vpop.permute.xlu0 %6845
        %6847 = vrot.lane.b32.xlu0 %v4716, 104
        %v6848 = vpop.permute.xlu0 %6847
        %6849 = vrot.lane.b32.xlu0 %v4717, 104
        %v6850 = vpop.permute.xlu0 %6849
        %6851 = vrot.lane.b32.xlu0 %v4718, 104
        %v6852 = vpop.permute.xlu0 %6851
        %6853 = vrot.lane.b32.xlu0 %v4719, 104
        %v6854 = vpop.permute.xlu0 %6853
        %6855 = vrot.lane.b32.xlu0 %v4720, 104
        %v6856 = vpop.permute.xlu0 %6855
        %6857 = vrot.lane.b32.xlu0 %v4721, 104
        %v6858 = vpop.permute.xlu0 %6857
        %6859 = vrot.lane.b32.xlu0 %v4722, 104
        %v6860 = vpop.permute.xlu0 %6859
        %6861 = vrot.lane.b32.xlu0 %v4723, 104
        %v6862 = vpop.permute.xlu0 %6861
        %6863 = vrot.lane.b32.xlu0 %v4724, 104
        %v6864 = vpop.permute.xlu0 %6863
        %6865 = vrot.lane.b32.xlu0 %v4725, 104
        %v6866 = vpop.permute.xlu0 %6865
        %6867 = vrot.lane.b32.xlu0 %v4726, 104
        %v6868 = vpop.permute.xlu0 %6867
        %6869 = vrot.lane.b32.xlu0 %v4727, 104
        %v6870 = vpop.permute.xlu0 %6869
        %6871 = vrot.lane.b32.xlu0 %v4728, 104
        %v6872 = vpop.permute.xlu0 %6871
        %6873 = vrot.lane.b32.xlu0 %v4729, 104
        %v6874 = vpop.permute.xlu0 %6873
        %6875 = vrot.lane.b32.xlu0 %v4730, 104
        %v6876 = vpop.permute.xlu0 %6875
        %6877 = vrot.lane.b32.xlu0 %v4731, 104
        %v6878 = vpop.permute.xlu0 %6877
        %6879 = vrot.lane.b32.xlu0 %v4732, 104
        %v6880 = vpop.permute.xlu0 %6879
        %6881 = vrot.lane.b32.xlu0 %v4733, 104
        %v6882 = vpop.permute.xlu0 %6881
        %6883 = vrot.lane.b32.xlu0 %v4734, 104
        %v6884 = vpop.permute.xlu0 %6883
        %6885 = vrot.lane.b32.xlu0 %v4735, 104
        %v6886 = vpop.permute.xlu0 %6885
        %6887 = vrot.lane.b32.xlu0 %v4736, 104
        %v6888 = vpop.permute.xlu0 %6887
        %6889 = vrot.lane.b32.xlu0 %v4737, 104
        %v6890 = vpop.permute.xlu0 %6889
        %6891 = vrot.lane.b32.xlu0 %v4738, 104
        %v6892 = vpop.permute.xlu0 %6891
        %6893 = vrot.lane.b32.xlu0 %v4739, 104
        %v6894 = vpop.permute.xlu0 %6893
        %6895 = vrot.lane.b32.xlu0 %v4740, 104
        %v6896 = vpop.permute.xlu0 %6895
        %6897 = vrot.lane.b32.xlu0 %v4741, 104
        %v6898 = vpop.permute.xlu0 %6897
        %6899 = vrot.lane.b32.xlu0 %v4841, 104
        %v6900 = vpop.permute.xlu0 %6899
        %6901 = vrot.lane.b32.xlu0 %v4842, 104
        %v6902 = vpop.permute.xlu0 %6901
        %6903 = vrot.lane.b32.xlu0 %v4843, 104
        %v6904 = vpop.permute.xlu0 %6903
        %6905 = vrot.lane.b32.xlu0 %v4853, 104
        %v6906 = vpop.permute.xlu0 %6905
        %6907 = vrot.lane.b32.xlu0 %v4854, 104
        %v6908 = vpop.permute.xlu0 %6907
        %6909 = vrot.lane.b32.xlu0 %v4855, 104
        %v6910 = vpop.permute.xlu0 %6909
        %6911 = vrot.lane.b32.xlu0 %v4865, 104
        %v6912 = vpop.permute.xlu0 %6911
        %6913 = vrot.lane.b32.xlu0 %v4866, 104
        %v6914 = vpop.permute.xlu0 %6913
        %6915 = vrot.lane.b32.xlu0 %v4867, 104
        %v6916 = vpop.permute.xlu0 %6915
        %6968 = vrot.lane.b32.xlu0 %v4751, 112
        %v6969 = vpop.permute.xlu0 %6968
        %6970 = vrot.lane.b32.xlu0 %v4752, 112
        %v6971 = vpop.permute.xlu0 %6970
        %6972 = vrot.lane.b32.xlu0 %v4753, 112
        %v6973 = vpop.permute.xlu0 %6972
        %6974 = vrot.lane.b32.xlu0 %v4754, 112
        %v6975 = vpop.permute.xlu0 %6974
        %6976 = vrot.lane.b32.xlu0 %v4755, 112
        %v6977 = vpop.permute.xlu0 %6976
        %6978 = vrot.lane.b32.xlu0 %v4756, 112
        %v6979 = vpop.permute.xlu0 %6978
        %6980 = vrot.lane.b32.xlu0 %v4757, 112
        %v6981 = vpop.permute.xlu0 %6980
        %6982 = vrot.lane.b32.xlu0 %v4758, 112
        %v6983 = vpop.permute.xlu0 %6982
        %6984 = vrot.lane.b32.xlu0 %v4759, 112
        %v6985 = vpop.permute.xlu0 %6984
        %6986 = vrot.lane.b32.xlu0 %v4760, 112
        %v6987 = vpop.permute.xlu0 %6986
        %6988 = vrot.lane.b32.xlu0 %v4761, 112
        %v6989 = vpop.permute.xlu0 %6988
        %6990 = vrot.lane.b32.xlu0 %v4762, 112
        %v6991 = vpop.permute.xlu0 %6990
        %6992 = vrot.lane.b32.xlu0 %v4763, 112
        %v6993 = vpop.permute.xlu0 %6992
        %6994 = vrot.lane.b32.xlu0 %v4764, 112
        %v6995 = vpop.permute.xlu0 %6994
        %6996 = vrot.lane.b32.xlu0 %v4765, 112
        %v6997 = vpop.permute.xlu0 %6996
        %6998 = vrot.lane.b32.xlu0 %v4766, 112
        %v6999 = vpop.permute.xlu0 %6998
        %7000 = vrot.lane.b32.xlu0 %v4767, 112
        %v7001 = vpop.permute.xlu0 %7000
        %7002 = vrot.lane.b32.xlu0 %v4768, 112
        %v7003 = vpop.permute.xlu0 %7002
        %7004 = vrot.lane.b32.xlu0 %v4769, 112
        %v7005 = vpop.permute.xlu0 %7004
        %7006 = vrot.lane.b32.xlu0 %v4770, 112
        %v7007 = vpop.permute.xlu0 %7006
        %7008 = vrot.lane.b32.xlu0 %v4771, 112
        %v7009 = vpop.permute.xlu0 %7008
        %7010 = vrot.lane.b32.xlu0 %v4772, 112
        %v7011 = vpop.permute.xlu0 %7010
        %7012 = vrot.lane.b32.xlu0 %v4773, 112
        %v7013 = vpop.permute.xlu0 %7012
        %7014 = vrot.lane.b32.xlu0 %v4774, 112
        %v7015 = vpop.permute.xlu0 %7014
        %7016 = vrot.lane.b32.xlu0 %v4775, 112
        %v7017 = vpop.permute.xlu0 %7016
        %7018 = vrot.lane.b32.xlu0 %v4776, 112
        %v7019 = vpop.permute.xlu0 %7018
        %7020 = vrot.lane.b32.xlu0 %v4777, 112
        %v7021 = vpop.permute.xlu0 %7020
        %7022 = vrot.lane.b32.xlu0 %v4778, 112
        %v7023 = vpop.permute.xlu0 %7022
        %7024 = vrot.lane.b32.xlu0 %v4779, 112
        %v7025 = vpop.permute.xlu0 %7024
        %7026 = vrot.lane.b32.xlu0 %v4780, 112
        %v7027 = vpop.permute.xlu0 %7026
        %7028 = vrot.lane.b32.xlu0 %v4781, 112
        %v7029 = vpop.permute.xlu0 %7028
        %7030 = vrot.lane.b32.xlu0 %v4782, 112
        %v7031 = vpop.permute.xlu0 %7030
        %7032 = vrot.lane.b32.xlu0 %v4783, 112
        %v7033 = vpop.permute.xlu0 %7032
        %7034 = vrot.lane.b32.xlu0 %v4784, 112
        %v7035 = vpop.permute.xlu0 %7034
        %7036 = vrot.lane.b32.xlu0 %v4785, 112
        %v7037 = vpop.permute.xlu0 %7036
        %7038 = vrot.lane.b32.xlu0 %v4786, 112
        %v7039 = vpop.permute.xlu0 %7038
        %7040 = vrot.lane.b32.xlu0 %v4787, 112
        %v7041 = vpop.permute.xlu0 %7040
        %7042 = vrot.lane.b32.xlu0 %v4788, 112
        %v7043 = vpop.permute.xlu0 %7042
        %7044 = vrot.lane.b32.xlu0 %v4789, 112
        %v7045 = vpop.permute.xlu0 %7044
        %7046 = vrot.lane.b32.xlu0 %v4844, 112
        %v7047 = vpop.permute.xlu0 %7046
        %7048 = vrot.lane.b32.xlu0 %v4845, 112
        %v7049 = vpop.permute.xlu0 %7048
        %7050 = vrot.lane.b32.xlu0 %v4846, 112
        %v7051 = vpop.permute.xlu0 %7050
        %7052 = vrot.lane.b32.xlu0 %v4856, 112
        %v7053 = vpop.permute.xlu0 %7052
        %7054 = vrot.lane.b32.xlu0 %v4857, 112
        %v7055 = vpop.permute.xlu0 %7054
        %7056 = vrot.lane.b32.xlu0 %v4858, 112
        %v7057 = vpop.permute.xlu0 %7056
        %7058 = vrot.lane.b32.xlu0 %v4868, 112
        %v7059 = vpop.permute.xlu0 %7058
        %7060 = vrot.lane.b32.xlu0 %v4869, 112
        %v7061 = vpop.permute.xlu0 %7060
        %7062 = vrot.lane.b32.xlu0 %v4870, 112
        %v7063 = vpop.permute.xlu0 %7062
        %7115 = vrot.lane.b32.xlu0 %v4799, 120
        %v7116 = vpop.permute.xlu0 %7115
        %7117 = vrot.lane.b32.xlu0 %v4800, 120
        %v7118 = vpop.permute.xlu0 %7117
        %7119 = vrot.lane.b32.xlu0 %v4801, 120
        %v7120 = vpop.permute.xlu0 %7119
        %7121 = vrot.lane.b32.xlu0 %v4802, 120
        %v7122 = vpop.permute.xlu0 %7121
        %7123 = vrot.lane.b32.xlu0 %v4803, 120
        %v7124 = vpop.permute.xlu0 %7123
        %7125 = vrot.lane.b32.xlu0 %v4804, 120
        %v7126 = vpop.permute.xlu0 %7125
        %7127 = vrot.lane.b32.xlu0 %v4805, 120
        %v7128 = vpop.permute.xlu0 %7127
        %7129 = vrot.lane.b32.xlu0 %v4806, 120
        %v7130 = vpop.permute.xlu0 %7129
        %7131 = vrot.lane.b32.xlu0 %v4807, 120
        %v7132 = vpop.permute.xlu0 %7131
        %7133 = vrot.lane.b32.xlu0 %v4808, 120
        %v7134 = vpop.permute.xlu0 %7133
        %7135 = vrot.lane.b32.xlu0 %v4809, 120
        %v7136 = vpop.permute.xlu0 %7135
        %7137 = vrot.lane.b32.xlu0 %v4810, 120
        %v7138 = vpop.permute.xlu0 %7137
        %7139 = vrot.lane.b32.xlu0 %v4811, 120
        %v7140 = vpop.permute.xlu0 %7139
        %7141 = vrot.lane.b32.xlu0 %v4812, 120
        %v7142 = vpop.permute.xlu0 %7141
        %7143 = vrot.lane.b32.xlu0 %v4813, 120
        %v7144 = vpop.permute.xlu0 %7143
        %7145 = vrot.lane.b32.xlu0 %v4814, 120
        %v7146 = vpop.permute.xlu0 %7145
        %7147 = vrot.lane.b32.xlu0 %v4815, 120
        %v7148 = vpop.permute.xlu0 %7147
        %7149 = vrot.lane.b32.xlu0 %v4816, 120
        %v7150 = vpop.permute.xlu0 %7149
        %7151 = vrot.lane.b32.xlu0 %v4817, 120
        %v7152 = vpop.permute.xlu0 %7151
        %7153 = vrot.lane.b32.xlu0 %v4818, 120
        %v7154 = vpop.permute.xlu0 %7153
        %7155 = vrot.lane.b32.xlu0 %v4819, 120
        %v7156 = vpop.permute.xlu0 %7155
        %7157 = vrot.lane.b32.xlu0 %v4820, 120
        %v7158 = vpop.permute.xlu0 %7157
        %7159 = vrot.lane.b32.xlu0 %v4821, 120
        %v7160 = vpop.permute.xlu0 %7159
        %7161 = vrot.lane.b32.xlu0 %v4822, 120
        %v7162 = vpop.permute.xlu0 %7161
        %7163 = vrot.lane.b32.xlu0 %v4823, 120
        %v7164 = vpop.permute.xlu0 %7163
        %7165 = vrot.lane.b32.xlu0 %v4824, 120
        %v7166 = vpop.permute.xlu0 %7165
        %7167 = vrot.lane.b32.xlu0 %v4825, 120
        %v7168 = vpop.permute.xlu0 %7167
        %7169 = vrot.lane.b32.xlu0 %v4826, 120
        %v7170 = vpop.permute.xlu0 %7169
        %7171 = vrot.lane.b32.xlu0 %v4827, 120
        %v7172 = vpop.permute.xlu0 %7171
        %7173 = vrot.lane.b32.xlu0 %v4828, 120
        %v7174 = vpop.permute.xlu0 %7173
        %7175 = vrot.lane.b32.xlu0 %v4829, 120
        %v7176 = vpop.permute.xlu0 %7175
        %7177 = vrot.lane.b32.xlu0 %v4830, 120
        %v7178 = vpop.permute.xlu0 %7177
        %7179 = vrot.lane.b32.xlu0 %v4831, 120
        %v7180 = vpop.permute.xlu0 %7179
        %7181 = vrot.lane.b32.xlu0 %v4832, 120
        %v7182 = vpop.permute.xlu0 %7181
        %7183 = vrot.lane.b32.xlu0 %v4833, 120
        %v7184 = vpop.permute.xlu0 %7183
        %7185 = vrot.lane.b32.xlu0 %v4834, 120
        %v7186 = vpop.permute.xlu0 %7185
        %7187 = vrot.lane.b32.xlu0 %v4835, 120
        %v7188 = vpop.permute.xlu0 %7187
        %7189 = vrot.lane.b32.xlu0 %v4836, 120
        %v7190 = vpop.permute.xlu0 %7189
        %7191 = vrot.lane.b32.xlu0 %v4837, 120
        %v7192 = vpop.permute.xlu0 %7191
        %7193 = vrot.lane.b32.xlu0 %v4847, 120
        %v7194 = vpop.permute.xlu0 %7193
        %7195 = vrot.lane.b32.xlu0 %v4848, 120
        %v7196 = vpop.permute.xlu0 %7195
        %7197 = vrot.lane.b32.xlu0 %v4849, 120
        %v7198 = vpop.permute.xlu0 %7197
        %7199 = vrot.lane.b32.xlu0 %v4859, 120
        %v7200 = vpop.permute.xlu0 %7199
        %7201 = vrot.lane.b32.xlu0 %v4860, 120
        %v7202 = vpop.permute.xlu0 %7201
        %7203 = vrot.lane.b32.xlu0 %v4861, 120
        %v7204 = vpop.permute.xlu0 %7203
        %7205 = vrot.lane.b32.xlu0 %v4871, 120
        %v7206 = vpop.permute.xlu0 %7205
        %7207 = vrot.lane.b32.xlu0 %v4872, 120
        %v7208 = vpop.permute.xlu0 %7207
        %7209 = vrot.lane.b32.xlu0 %v4873, 120
        %v7210 = vpop.permute.xlu0 %7209
        %v7259 = vsel %vm224, %v4646, %v4923
        %v7260 = vsel %vm224, %v4647, %v4925
        %v7261 = vsel %vm224, %v4648, %v4927
        %v7262 = vsel %vm224, %v4649, %v4929
        %v7263 = vsel %vm224, %v4650, %v4931
        %v7264 = vsel %vm224, %v4651, %v4933
        %v7265 = vsel %vm224, %v4652, %v4935
        %v7266 = vsel %vm224, %v4653, %v4937
        %v7267 = vsel %vm224, %v4654, %v4939
        %v7268 = vsel %vm224, %v4655, %v4941
        %v7269 = vsel %vm224, %v4656, %v4943
        %v7270 = vsel %vm224, %v4657, %v4945
        %v7271 = vsel %vm224, %v4658, %v4947
        %v7272 = vsel %vm224, %v4659, %v4949
        %v7273 = vsel %vm224, %v4660, %v4951
        %v7274 = vsel %vm224, %v4661, %v4953
        %v7275 = vsel %vm224, %v4662, %v4955
        %v7276 = vsel %vm224, %v4663, %v4957
        %v7277 = vsel %vm224, %v4664, %v4959
        %v7278 = vsel %vm224, %v4665, %v4961
        %v7279 = vsel %vm224, %v4666, %v4963
        %v7280 = vsel %vm224, %v4667, %v4965
        %v7281 = vsel %vm224, %v4668, %v4967
        %v7282 = vsel %vm224, %v4669, %v4969
        %v7283 = vsel %vm224, %v4670, %v4971
        %v7284 = vsel %vm224, %v4671, %v4973
        %v7285 = vsel %vm224, %v4672, %v4975
        %v7286 = vsel %vm224, %v4673, %v4977
        %v7287 = vsel %vm224, %v4674, %v4979
        %v7288 = vsel %vm224, %v4675, %v4981
        %v7289 = vsel %vm224, %v4676, %v4983
        %v7290 = vsel %vm224, %v4677, %v4985
        %v7291 = vsel %vm224, %v4678, %v4987
        %v7292 = vsel %vm224, %v4679, %v4989
        %v7293 = vsel %vm224, %v4680, %v4991
        %v7294 = vsel %vm224, %v4681, %v4993
        %v7295 = vsel %vm224, %v4682, %v4995
        %v7296 = vsel %vm224, %v4683, %v4997
        %v7297 = vsel %vm224, %v4684, %v4999
        %v7298 = vsel %vm224, %v4685, %v5001
        %v7299 = vsel %vm224, %v4686, %v5003
        %v7300 = vsel %vm224, %v4687, %v5005
        %v7301 = vsel %vm224, %v4688, %v5007
        %v7302 = vsel %vm224, %v4689, %v5009
        %v7303 = vsel %vm224, %v4690, %v5011
        %v7304 = vsel %vm224, %v4691, %v5013
        %v7305 = vsel %vm224, %v4692, %v5015
        %v7306 = vsel %vm224, %v4693, %v5017
        %v7307 = vsel %vm3486, %v7259, %v5115
        %v7308 = vsel %vm3486, %v7260, %v5117
        %v7309 = vsel %vm3486, %v7261, %v5119
        %v7310 = vsel %vm3486, %v7262, %v5121
        %v7311 = vsel %vm3486, %v7263, %v5123
        %v7312 = vsel %vm3486, %v7264, %v5125
        %v7313 = vsel %vm3486, %v7265, %v5127
        %v7314 = vsel %vm3486, %v7266, %v5129
        %v7315 = vsel %vm3486, %v7267, %v5131
        %v7316 = vsel %vm3486, %v7268, %v5133
        %v7317 = vsel %vm3486, %v7269, %v5135
        %v7318 = vsel %vm3486, %v7270, %v5137
        %v7319 = vsel %vm3486, %v7271, %v5139
        %v7320 = vsel %vm3486, %v7272, %v5141
        %v7321 = vsel %vm3486, %v7273, %v5143
        %v7322 = vsel %vm3486, %v7274, %v5145
        %v7323 = vsel %vm3486, %v7275, %v5147
        %v7324 = vsel %vm3486, %v7276, %v5149
        %v7325 = vsel %vm3486, %v7277, %v5151
        %v7326 = vsel %vm3486, %v7278, %v5153
        %v7327 = vsel %vm3486, %v7279, %v5155
        %v7328 = vsel %vm3486, %v7280, %v5157
        %v7329 = vsel %vm3486, %v7281, %v5159
        %v7330 = vsel %vm3486, %v7282, %v5161
        %v7331 = vsel %vm3486, %v7283, %v5163
        %v7332 = vsel %vm3486, %v7284, %v5165
        %v7333 = vsel %vm3486, %v7285, %v5167
        %v7334 = vsel %vm3486, %v7286, %v5169
        %v7335 = vsel %vm3486, %v7287, %v5171
        %v7336 = vsel %vm3486, %v7288, %v5173
        %v7337 = vsel %vm3486, %v7289, %v5175
        %v7338 = vsel %vm3486, %v7290, %v5177
        %v7339 = vsel %vm3486, %v7291, %v5179
        %v7340 = vsel %vm3486, %v7292, %v5181
        %v7341 = vsel %vm3486, %v7293, %v5183
        %v7342 = vsel %vm3486, %v7294, %v5185
        %v7343 = vsel %vm3486, %v7295, %v5187
        %v7344 = vsel %vm3486, %v7296, %v5189
        %v7345 = vsel %vm3486, %v7297, %v5191
        %v7346 = vsel %vm3486, %v7298, %v5193
        %v7347 = vsel %vm3486, %v7299, %v5195
        %v7348 = vsel %vm3486, %v7300, %v5197
        %v7349 = vsel %vm3486, %v7301, %v5199
        %v7350 = vsel %vm3486, %v7302, %v5201
        %v7351 = vsel %vm3486, %v7303, %v5203
        %v7352 = vsel %vm3486, %v7304, %v5205
        %v7353 = vsel %vm3486, %v7305, %v5207
        %v7354 = vsel %vm3486, %v7306, %v5209
        %v7355 = vsel %vm3590, %v7307, %v5307
        %v7356 = vsel %vm3590, %v7308, %v5309
        %v7357 = vsel %vm3590, %v7309, %v5311
        %v7358 = vsel %vm3590, %v7310, %v5313
        %v7359 = vsel %vm3590, %v7311, %v5315
        %v7360 = vsel %vm3590, %v7312, %v5317
        %v7361 = vsel %vm3590, %v7313, %v5319
        %v7362 = vsel %vm3590, %v7314, %v5321
        %v7363 = vsel %vm3590, %v7315, %v5323
        %v7364 = vsel %vm3590, %v7316, %v5325
        %v7365 = vsel %vm3590, %v7317, %v5327
        %v7366 = vsel %vm3590, %v7318, %v5329
        %v7367 = vsel %vm3590, %v7319, %v5331
        %v7368 = vsel %vm3590, %v7320, %v5333
        %v7369 = vsel %vm3590, %v7321, %v5335
        %v7370 = vsel %vm3590, %v7322, %v5337
        %v7371 = vsel %vm3590, %v7323, %v5339
        %v7372 = vsel %vm3590, %v7324, %v5341
        %v7373 = vsel %vm3590, %v7325, %v5343
        %v7374 = vsel %vm3590, %v7326, %v5345
        %v7375 = vsel %vm3590, %v7327, %v5347
        %v7376 = vsel %vm3590, %v7328, %v5349
        %v7377 = vsel %vm3590, %v7329, %v5351
        %v7378 = vsel %vm3590, %v7330, %v5353
        %v7379 = vsel %vm3590, %v7331, %v5355
        %v7380 = vsel %vm3590, %v7332, %v5357
        %v7381 = vsel %vm3590, %v7333, %v5359
        %v7382 = vsel %vm3590, %v7334, %v5361
        %v7383 = vsel %vm3590, %v7335, %v5363
        %v7384 = vsel %vm3590, %v7336, %v5365
        %v7385 = vsel %vm3590, %v7337, %v5367
        %v7386 = vsel %vm3590, %v7338, %v5369
        %v7387 = vsel %vm3590, %v7339, %v5371
        %v7388 = vsel %vm3590, %v7340, %v5373
        %v7389 = vsel %vm3590, %v7341, %v5375
        %v7390 = vsel %vm3590, %v7342, %v5377
        %v7391 = vsel %vm3590, %v7343, %v5379
        %v7392 = vsel %vm3590, %v7344, %v5381
        %v7393 = vsel %vm3590, %v7345, %v5383
        %v7394 = vsel %vm3590, %v7346, %v5385
        %v7395 = vsel %vm3590, %v7347, %v5387
        %v7396 = vsel %vm3590, %v7348, %v5389
        %v7397 = vsel %vm3590, %v7349, %v5391
        %v7398 = vsel %vm3590, %v7350, %v5393
        %v7399 = vsel %vm3590, %v7351, %v5395
        %v7400 = vsel %vm3590, %v7352, %v5397
        %v7401 = vsel %vm3590, %v7353, %v5399
        %v7402 = vsel %vm3590, %v7354, %v5401
        %v7403 = vsel %vm3694, %v7355, %v5499
        %v7404 = vsel %vm3694, %v7356, %v5501
        %v7405 = vsel %vm3694, %v7357, %v5503
        %v7406 = vsel %vm3694, %v7358, %v5505
        %v7407 = vsel %vm3694, %v7359, %v5507
        %v7408 = vsel %vm3694, %v7360, %v5509
        %v7409 = vsel %vm3694, %v7361, %v5511
        %v7410 = vsel %vm3694, %v7362, %v5513
        %v7411 = vsel %vm3694, %v7363, %v5515
        %v7412 = vsel %vm3694, %v7364, %v5517
        %v7413 = vsel %vm3694, %v7365, %v5519
        %v7414 = vsel %vm3694, %v7366, %v5521
        %v7415 = vsel %vm3694, %v7367, %v5523
        %v7416 = vsel %vm3694, %v7368, %v5525
        %v7417 = vsel %vm3694, %v7369, %v5527
        %v7418 = vsel %vm3694, %v7370, %v5529
        %v7419 = vsel %vm3694, %v7371, %v5531
        %v7420 = vsel %vm3694, %v7372, %v5533
        %v7421 = vsel %vm3694, %v7373, %v5535
        %v7422 = vsel %vm3694, %v7374, %v5537
        %v7423 = vsel %vm3694, %v7375, %v5539
        %v7424 = vsel %vm3694, %v7376, %v5541
        %v7425 = vsel %vm3694, %v7377, %v5543
        %v7426 = vsel %vm3694, %v7378, %v5545
        %v7427 = vsel %vm3694, %v7379, %v5547
        %v7428 = vsel %vm3694, %v7380, %v5549
        %v7429 = vsel %vm3694, %v7381, %v5551
        %v7430 = vsel %vm3694, %v7382, %v5553
        %v7431 = vsel %vm3694, %v7383, %v5555
        %v7432 = vsel %vm3694, %v7384, %v5557
        %v7433 = vsel %vm3694, %v7385, %v5559
        %v7434 = vsel %vm3694, %v7386, %v5561
        %v7435 = vsel %vm3694, %v7387, %v5563
        %v7436 = vsel %vm3694, %v7388, %v5565
        %v7437 = vsel %vm3694, %v7389, %v5567
        %v7438 = vsel %vm3694, %v7390, %v5569
        %v7439 = vsel %vm3694, %v7391, %v5571
        %v7440 = vsel %vm3694, %v7392, %v5573
        %v7441 = vsel %vm3694, %v7393, %v5575
        %v7442 = vsel %vm3694, %v7394, %v5577
        %v7443 = vsel %vm3694, %v7395, %v5579
        %v7444 = vsel %vm3694, %v7396, %v5581
        %v7445 = vsel %vm3694, %v7397, %v5583
        %v7446 = vsel %vm3694, %v7398, %v5585
        %v7447 = vsel %vm3694, %v7399, %v5587
        %v7448 = vsel %vm3694, %v7400, %v5589
        %v7449 = vsel %vm3694, %v7401, %v5591
        %v7450 = vsel %vm3694, %v7402, %v5593
        %v7451 = vsel %vm3798, %v7403, %v5646
        %v7452 = vsel %vm3798, %v7404, %v5648
        %v7453 = vsel %vm3798, %v7405, %v5650
        %v7454 = vsel %vm3798, %v7406, %v5652
        %v7455 = vsel %vm3798, %v7407, %v5654
        %v7456 = vsel %vm3798, %v7408, %v5656
        %v7457 = vsel %vm3798, %v7409, %v5658
        %v7458 = vsel %vm3798, %v7410, %v5660
        %v7459 = vsel %vm3798, %v7411, %v5662
        %v7460 = vsel %vm3798, %v7412, %v5664
        %v7461 = vsel %vm3798, %v7413, %v5666
        %v7462 = vsel %vm3798, %v7414, %v5668
        %v7463 = vsel %vm3798, %v7415, %v5670
        %v7464 = vsel %vm3798, %v7416, %v5672
        %v7465 = vsel %vm3798, %v7417, %v5674
        %v7466 = vsel %vm3798, %v7418, %v5676
        %v7467 = vsel %vm3798, %v7419, %v5678
        %v7468 = vsel %vm3798, %v7420, %v5680
        %v7469 = vsel %vm3798, %v7421, %v5682
        %v7470 = vsel %vm3798, %v7422, %v5684
        %v7471 = vsel %vm3798, %v7423, %v5686
        %v7472 = vsel %vm3798, %v7424, %v5688
        %v7473 = vsel %vm3798, %v7425, %v5690
        %v7474 = vsel %vm3798, %v7426, %v5692
        %v7475 = vsel %vm3798, %v7427, %v5694
        %v7476 = vsel %vm3798, %v7428, %v5696
        %v7477 = vsel %vm3798, %v7429, %v5698
        %v7478 = vsel %vm3798, %v7430, %v5700
        %v7479 = vsel %vm3798, %v7431, %v5702
        %v7480 = vsel %vm3798, %v7432, %v5704
        %v7481 = vsel %vm3798, %v7433, %v5706
        %v7482 = vsel %vm3798, %v7434, %v5708
        %v7483 = vsel %vm3798, %v7435, %v5710
        %v7484 = vsel %vm3798, %v7436, %v5712
        %v7485 = vsel %vm3798, %v7437, %v5714
        %v7486 = vsel %vm3798, %v7438, %v5716
        %v7487 = vsel %vm3798, %v7439, %v5718
        %v7488 = vsel %vm3798, %v7440, %v5720
        %v7489 = vsel %vm3798, %v7441, %v5722
        %v7490 = vsel %vm3798, %v7442, %v5724
        %v7491 = vsel %vm3798, %v7443, %v5726
        %v7492 = vsel %vm3798, %v7444, %v5728
        %v7493 = vsel %vm3798, %v7445, %v5730
        %v7494 = vsel %vm3798, %v7446, %v5732
        %v7495 = vsel %vm3798, %v7447, %v5734
        %v7496 = vsel %vm3798, %v7448, %v5736
        %v7497 = vsel %vm3798, %v7449, %v5738
        %v7498 = vsel %vm3798, %v7450, %v5740
        %v7499 = vsel %vm3902, %v7451, %v5793
        %v7500 = vsel %vm3902, %v7452, %v5795
        %v7501 = vsel %vm3902, %v7453, %v5797
        %v7502 = vsel %vm3902, %v7454, %v5799
        %v7503 = vsel %vm3902, %v7455, %v5801
        %v7504 = vsel %vm3902, %v7456, %v5803
        %v7505 = vsel %vm3902, %v7457, %v5805
        %v7506 = vsel %vm3902, %v7458, %v5807
        %v7507 = vsel %vm3902, %v7459, %v5809
        %v7508 = vsel %vm3902, %v7460, %v5811
        %v7509 = vsel %vm3902, %v7461, %v5813
        %v7510 = vsel %vm3902, %v7462, %v5815
        %v7511 = vsel %vm3902, %v7463, %v5817
        %v7512 = vsel %vm3902, %v7464, %v5819
        %v7513 = vsel %vm3902, %v7465, %v5821
        %v7514 = vsel %vm3902, %v7466, %v5823
        %v7515 = vsel %vm3902, %v7467, %v5825
        %v7516 = vsel %vm3902, %v7468, %v5827
        %v7517 = vsel %vm3902, %v7469, %v5829
        %v7518 = vsel %vm3902, %v7470, %v5831
        %v7519 = vsel %vm3902, %v7471, %v5833
        %v7520 = vsel %vm3902, %v7472, %v5835
        %v7521 = vsel %vm3902, %v7473, %v5837
        %v7522 = vsel %vm3902, %v7474, %v5839
        %v7523 = vsel %vm3902, %v7475, %v5841
        %v7524 = vsel %vm3902, %v7476, %v5843
        %v7525 = vsel %vm3902, %v7477, %v5845
        %v7526 = vsel %vm3902, %v7478, %v5847
        %v7527 = vsel %vm3902, %v7479, %v5849
        %v7528 = vsel %vm3902, %v7480, %v5851
        %v7529 = vsel %vm3902, %v7481, %v5853
        %v7530 = vsel %vm3902, %v7482, %v5855
        %v7531 = vsel %vm3902, %v7483, %v5857
        %v7532 = vsel %vm3902, %v7484, %v5859
        %v7533 = vsel %vm3902, %v7485, %v5861
        %v7534 = vsel %vm3902, %v7486, %v5863
        %v7535 = vsel %vm3902, %v7487, %v5865
        %v7536 = vsel %vm3902, %v7488, %v5867
        %v7537 = vsel %vm3902, %v7489, %v5869
        %v7538 = vsel %vm3902, %v7490, %v5871
        %v7539 = vsel %vm3902, %v7491, %v5873
        %v7540 = vsel %vm3902, %v7492, %v5875
        %v7541 = vsel %vm3902, %v7493, %v5877
        %v7542 = vsel %vm3902, %v7494, %v5879
        %v7543 = vsel %vm3902, %v7495, %v5881
        %v7544 = vsel %vm3902, %v7496, %v5883
        %v7545 = vsel %vm3902, %v7497, %v5885
        %v7546 = vsel %vm3902, %v7498, %v5887
        %v7547 = vsel %vm4006, %v7499, %v5940
        %v7548 = vsel %vm4006, %v7500, %v5942
        %v7549 = vsel %vm4006, %v7501, %v5944
        %v7550 = vsel %vm4006, %v7502, %v5946
        %v7551 = vsel %vm4006, %v7503, %v5948
        %v7552 = vsel %vm4006, %v7504, %v5950
        %v7553 = vsel %vm4006, %v7505, %v5952
        %v7554 = vsel %vm4006, %v7506, %v5954
        %v7555 = vsel %vm4006, %v7507, %v5956
        %v7556 = vsel %vm4006, %v7508, %v5958
        %v7557 = vsel %vm4006, %v7509, %v5960
        %v7558 = vsel %vm4006, %v7510, %v5962
        %v7559 = vsel %vm4006, %v7511, %v5964
        %v7560 = vsel %vm4006, %v7512, %v5966
        %v7561 = vsel %vm4006, %v7513, %v5968
        %v7562 = vsel %vm4006, %v7514, %v5970
        %v7563 = vsel %vm4006, %v7515, %v5972
        %v7564 = vsel %vm4006, %v7516, %v5974
        %v7565 = vsel %vm4006, %v7517, %v5976
        %v7566 = vsel %vm4006, %v7518, %v5978
        %v7567 = vsel %vm4006, %v7519, %v5980
        %v7568 = vsel %vm4006, %v7520, %v5982
        %v7569 = vsel %vm4006, %v7521, %v5984
        %v7570 = vsel %vm4006, %v7522, %v5986
        %v7571 = vsel %vm4006, %v7523, %v5988
        %v7572 = vsel %vm4006, %v7524, %v5990
        %v7573 = vsel %vm4006, %v7525, %v5992
        %v7574 = vsel %vm4006, %v7526, %v5994
        %v7575 = vsel %vm4006, %v7527, %v5996
        %v7576 = vsel %vm4006, %v7528, %v5998
        %v7577 = vsel %vm4006, %v7529, %v6000
        %v7578 = vsel %vm4006, %v7530, %v6002
        %v7579 = vsel %vm4006, %v7531, %v6004
        %v7580 = vsel %vm4006, %v7532, %v6006
        %v7581 = vsel %vm4006, %v7533, %v6008
        %v7582 = vsel %vm4006, %v7534, %v6010
        %v7583 = vsel %vm4006, %v7535, %v6012
        %v7584 = vsel %vm4006, %v7536, %v6014
        %v7585 = vsel %vm4006, %v7537, %v6016
        %v7586 = vsel %vm4006, %v7538, %v6018
        %v7587 = vsel %vm4006, %v7539, %v6020
        %v7588 = vsel %vm4006, %v7540, %v6022
        %v7589 = vsel %vm4006, %v7541, %v6024
        %v7590 = vsel %vm4006, %v7542, %v6026
        %v7591 = vsel %vm4006, %v7543, %v6028
        %v7592 = vsel %vm4006, %v7544, %v6030
        %v7593 = vsel %vm4006, %v7545, %v6032
        %v7594 = vsel %vm4006, %v7546, %v6034
        %v7595 = vsel %vm4168, %v7547, %v6087
        %v7596 = vsel %vm4168, %v7548, %v6089
        %v7597 = vsel %vm4168, %v7549, %v6091
        %v7598 = vsel %vm4168, %v7550, %v6093
        %v7599 = vsel %vm4168, %v7551, %v6095
        %v7600 = vsel %vm4168, %v7552, %v6097
        %v7601 = vsel %vm4168, %v7553, %v6099
        %v7602 = vsel %vm4168, %v7554, %v6101
        %v7603 = vsel %vm4168, %v7555, %v6103
        %v7604 = vsel %vm4168, %v7556, %v6105
        %v7605 = vsel %vm4168, %v7557, %v6107
        %v7606 = vsel %vm4168, %v7558, %v6109
        %v7607 = vsel %vm4168, %v7559, %v6111
        %v7608 = vsel %vm4168, %v7560, %v6113
        %v7609 = vsel %vm4168, %v7561, %v6115
        %v7610 = vsel %vm4168, %v7562, %v6117
        %v7611 = vsel %vm4168, %v7563, %v6119
        %v7612 = vsel %vm4168, %v7564, %v6121
        %v7613 = vsel %vm4168, %v7565, %v6123
        %v7614 = vsel %vm4168, %v7566, %v6125
        %v7615 = vsel %vm4168, %v7567, %v6127
        %v7616 = vsel %vm4168, %v7568, %v6129
        %v7617 = vsel %vm4168, %v7569, %v6131
        %v7618 = vsel %vm4168, %v7570, %v6133
        %v7619 = vsel %vm4168, %v7571, %v6135
        %v7620 = vsel %vm4168, %v7572, %v6137
        %v7621 = vsel %vm4168, %v7573, %v6139
        %v7622 = vsel %vm4168, %v7574, %v6141
        %v7623 = vsel %vm4168, %v7575, %v6143
        %v7624 = vsel %vm4168, %v7576, %v6145
        %v7625 = vsel %vm4168, %v7577, %v6147
        %v7626 = vsel %vm4168, %v7578, %v6149
        %v7627 = vsel %vm4168, %v7579, %v6151
        %v7628 = vsel %vm4168, %v7580, %v6153
        %v7629 = vsel %vm4168, %v7581, %v6155
        %v7630 = vsel %vm4168, %v7582, %v6157
        %v7631 = vsel %vm4168, %v7583, %v6159
        %v7632 = vsel %vm4168, %v7584, %v6161
        %v7633 = vsel %vm4168, %v7585, %v6163
        %v7634 = vsel %vm4168, %v7586, %v6165
        %v7635 = vsel %vm4168, %v7587, %v6167
        %v7636 = vsel %vm4168, %v7588, %v6169
        %v7637 = vsel %vm4168, %v7589, %v6171
        %v7638 = vsel %vm4168, %v7590, %v6173
        %v7639 = vsel %vm4168, %v7591, %v6175
        %v7640 = vsel %vm4168, %v7592, %v6177
        %v7641 = vsel %vm4168, %v7593, %v6179
        %v7642 = vsel %vm4168, %v7594, %v6181
        %vm7643 = vcmask 588800
        %v7644 = vsel %vm7643, %v7595, %v6234
        %v7645 = vsel %vm7643, %v7596, %v6236
        %v7646 = vsel %vm7643, %v7597, %v6238
        %v7647 = vsel %vm7643, %v7598, %v6240
        %v7648 = vsel %vm7643, %v7599, %v6242
        %v7649 = vsel %vm7643, %v7600, %v6244
        %v7650 = vsel %vm7643, %v7601, %v6246
        %v7651 = vsel %vm7643, %v7602, %v6248
        %v7652 = vsel %vm7643, %v7603, %v6250
        %v7653 = vsel %vm7643, %v7604, %v6252
        %v7654 = vsel %vm7643, %v7605, %v6254
        %v7655 = vsel %vm7643, %v7606, %v6256
        %v7656 = vsel %vm7643, %v7607, %v6258
        %v7657 = vsel %vm7643, %v7608, %v6260
        %v7658 = vsel %vm7643, %v7609, %v6262
        %v7659 = vsel %vm7643, %v7610, %v6264
        %v7660 = vsel %vm7643, %v7611, %v6266
        %v7661 = vsel %vm7643, %v7612, %v6268
        %v7662 = vsel %vm7643, %v7613, %v6270
        %v7663 = vsel %vm7643, %v7614, %v6272
        %v7664 = vsel %vm7643, %v7615, %v6274
        %v7665 = vsel %vm7643, %v7616, %v6276
        %v7666 = vsel %vm7643, %v7617, %v6278
        %v7667 = vsel %vm7643, %v7618, %v6280
        %v7668 = vsel %vm7643, %v7619, %v6282
        %v7669 = vsel %vm7643, %v7620, %v6284
        %v7670 = vsel %vm7643, %v7621, %v6286
        %v7671 = vsel %vm7643, %v7622, %v6288
        %v7672 = vsel %vm7643, %v7623, %v6290
        %v7673 = vsel %vm7643, %v7624, %v6292
        %v7674 = vsel %vm7643, %v7625, %v6294
        %v7675 = vsel %vm7643, %v7626, %v6296
        %v7676 = vsel %vm7643, %v7627, %v6298
        %v7677 = vsel %vm7643, %v7628, %v6300
        %v7678 = vsel %vm7643, %v7629, %v6302
        %v7679 = vsel %vm7643, %v7630, %v6304
        %v7680 = vsel %vm7643, %v7631, %v6306
        %v7681 = vsel %vm7643, %v7632, %v6308
        %v7682 = vsel %vm7643, %v7633, %v6310
        %v7683 = vsel %vm7643, %v7634, %v6312
        %v7684 = vsel %vm7643, %v7635, %v6314
        %v7685 = vsel %vm7643, %v7636, %v6316
        %v7686 = vsel %vm7643, %v7637, %v6318
        %v7687 = vsel %vm7643, %v7638, %v6320
        %v7688 = vsel %vm7643, %v7639, %v6322
        %v7689 = vsel %vm7643, %v7640, %v6324
        %v7690 = vsel %vm7643, %v7641, %v6326
        %v7691 = vsel %vm7643, %v7642, %v6328
        %vm7692 = vcmask 654336
        %v7693 = vsel %vm7692, %v7644, %v6381
        %v7694 = vsel %vm7692, %v7645, %v6383
        %v7695 = vsel %vm7692, %v7646, %v6385
        %v7696 = vsel %vm7692, %v7647, %v6387
        %v7697 = vsel %vm7692, %v7648, %v6389
        %v7698 = vsel %vm7692, %v7649, %v6391
        %v7699 = vsel %vm7692, %v7650, %v6393
        %v7700 = vsel %vm7692, %v7651, %v6395
        %v7701 = vsel %vm7692, %v7652, %v6397
        %v7702 = vsel %vm7692, %v7653, %v6399
        %v7703 = vsel %vm7692, %v7654, %v6401
        %v7704 = vsel %vm7692, %v7655, %v6403
        %v7705 = vsel %vm7692, %v7656, %v6405
        %v7706 = vsel %vm7692, %v7657, %v6407
        %v7707 = vsel %vm7692, %v7658, %v6409
        %v7708 = vsel %vm7692, %v7659, %v6411
        %v7709 = vsel %vm7692, %v7660, %v6413
        %v7710 = vsel %vm7692, %v7661, %v6415
        %v7711 = vsel %vm7692, %v7662, %v6417
        %v7712 = vsel %vm7692, %v7663, %v6419
        %v7713 = vsel %vm7692, %v7664, %v6421
        %v7714 = vsel %vm7692, %v7665, %v6423
        %v7715 = vsel %vm7692, %v7666, %v6425
        %v7716 = vsel %vm7692, %v7667, %v6427
        %v7717 = vsel %vm7692, %v7668, %v6429
        %v7718 = vsel %vm7692, %v7669, %v6431
        %v7719 = vsel %vm7692, %v7670, %v6433
        %v7720 = vsel %vm7692, %v7671, %v6435
        %v7721 = vsel %vm7692, %v7672, %v6437
        %v7722 = vsel %vm7692, %v7673, %v6439
        %v7723 = vsel %vm7692, %v7674, %v6441
        %v7724 = vsel %vm7692, %v7675, %v6443
        %v7725 = vsel %vm7692, %v7676, %v6445
        %v7726 = vsel %vm7692, %v7677, %v6447
        %v7727 = vsel %vm7692, %v7678, %v6449
        %v7728 = vsel %vm7692, %v7679, %v6451
        %v7729 = vsel %vm7692, %v7680, %v6453
        %v7730 = vsel %vm7692, %v7681, %v6455
        %v7731 = vsel %vm7692, %v7682, %v6457
        %v7732 = vsel %vm7692, %v7683, %v6459
        %v7733 = vsel %vm7692, %v7684, %v6461
        %v7734 = vsel %vm7692, %v7685, %v6463
        %v7735 = vsel %vm7692, %v7686, %v6465
        %v7736 = vsel %vm7692, %v7687, %v6467
        %v7737 = vsel %vm7692, %v7688, %v6469
        %v7738 = vsel %vm7692, %v7689, %v6471
        %v7739 = vsel %vm7692, %v7690, %v6473
        %v7740 = vsel %vm7692, %v7691, %v6475
        %vm7741 = vcmask 719872
        %v7742 = vsel %vm7741, %v7693, %v6528
        %v7743 = vsel %vm7741, %v7694, %v6530
        %v7744 = vsel %vm7741, %v7695, %v6532
        %v7745 = vsel %vm7741, %v7696, %v6534
        %v7746 = vsel %vm7741, %v7697, %v6536
        %v7747 = vsel %vm7741, %v7698, %v6538
        %v7748 = vsel %vm7741, %v7699, %v6540
        %v7749 = vsel %vm7741, %v7700, %v6542
        %v7750 = vsel %vm7741, %v7701, %v6544
        %v7751 = vsel %vm7741, %v7702, %v6546
        %v7752 = vsel %vm7741, %v7703, %v6548
        %v7753 = vsel %vm7741, %v7704, %v6550
        %v7754 = vsel %vm7741, %v7705, %v6552
        %v7755 = vsel %vm7741, %v7706, %v6554
        %v7756 = vsel %vm7741, %v7707, %v6556
        %v7757 = vsel %vm7741, %v7708, %v6558
        %v7758 = vsel %vm7741, %v7709, %v6560
        %v7759 = vsel %vm7741, %v7710, %v6562
        %v7760 = vsel %vm7741, %v7711, %v6564
        %v7761 = vsel %vm7741, %v7712, %v6566
        %v7762 = vsel %vm7741, %v7713, %v6568
        %v7763 = vsel %vm7741, %v7714, %v6570
        %v7764 = vsel %vm7741, %v7715, %v6572
        %v7765 = vsel %vm7741, %v7716, %v6574
        %v7766 = vsel %vm7741, %v7717, %v6576
        %v7767 = vsel %vm7741, %v7718, %v6578
        %v7768 = vsel %vm7741, %v7719, %v6580
        %v7769 = vsel %vm7741, %v7720, %v6582
        %v7770 = vsel %vm7741, %v7721, %v6584
        %v7771 = vsel %vm7741, %v7722, %v6586
        %v7772 = vsel %vm7741, %v7723, %v6588
        %v7773 = vsel %vm7741, %v7724, %v6590
        %v7774 = vsel %vm7741, %v7725, %v6592
        %v7775 = vsel %vm7741, %v7726, %v6594
        %v7776 = vsel %vm7741, %v7727, %v6596
        %v7777 = vsel %vm7741, %v7728, %v6598
        %v7778 = vsel %vm7741, %v7729, %v6600
        %v7779 = vsel %vm7741, %v7730, %v6602
        %v7780 = vsel %vm7741, %v7731, %v6604
        %v7781 = vsel %vm7741, %v7732, %v6606
        %v7782 = vsel %vm7741, %v7733, %v6608
        %v7783 = vsel %vm7741, %v7734, %v6610
        %v7784 = vsel %vm7741, %v7735, %v6612
        %v7785 = vsel %vm7741, %v7736, %v6614
        %v7786 = vsel %vm7741, %v7737, %v6616
        %v7787 = vsel %vm7741, %v7738, %v6618
        %v7788 = vsel %vm7741, %v7739, %v6620
        %v7789 = vsel %vm7741, %v7740, %v6622
        %vm7790 = vcmask 785408
        %v7791 = vsel %vm7790, %v7742, %v6675
        %v7792 = vsel %vm7790, %v7743, %v6677
        %v7793 = vsel %vm7790, %v7744, %v6679
        %v7794 = vsel %vm7790, %v7745, %v6681
        %v7795 = vsel %vm7790, %v7746, %v6683
        %v7796 = vsel %vm7790, %v7747, %v6685
        %v7797 = vsel %vm7790, %v7748, %v6687
        %v7798 = vsel %vm7790, %v7749, %v6689
        %v7799 = vsel %vm7790, %v7750, %v6691
        %v7800 = vsel %vm7790, %v7751, %v6693
        %v7801 = vsel %vm7790, %v7752, %v6695
        %v7802 = vsel %vm7790, %v7753, %v6697
        %v7803 = vsel %vm7790, %v7754, %v6699
        %v7804 = vsel %vm7790, %v7755, %v6701
        %v7805 = vsel %vm7790, %v7756, %v6703
        %v7806 = vsel %vm7790, %v7757, %v6705
        %v7807 = vsel %vm7790, %v7758, %v6707
        %v7808 = vsel %vm7790, %v7759, %v6709
        %v7809 = vsel %vm7790, %v7760, %v6711
        %v7810 = vsel %vm7790, %v7761, %v6713
        %v7811 = vsel %vm7790, %v7762, %v6715
        %v7812 = vsel %vm7790, %v7763, %v6717
        %v7813 = vsel %vm7790, %v7764, %v6719
        %v7814 = vsel %vm7790, %v7765, %v6721
        %v7815 = vsel %vm7790, %v7766, %v6723
        %v7816 = vsel %vm7790, %v7767, %v6725
        %v7817 = vsel %vm7790, %v7768, %v6727
        %v7818 = vsel %vm7790, %v7769, %v6729
        %v7819 = vsel %vm7790, %v7770, %v6731
        %v7820 = vsel %vm7790, %v7771, %v6733
        %v7821 = vsel %vm7790, %v7772, %v6735
        %v7822 = vsel %vm7790, %v7773, %v6737
        %v7823 = vsel %vm7790, %v7774, %v6739
        %v7824 = vsel %vm7790, %v7775, %v6741
        %v7825 = vsel %vm7790, %v7776, %v6743
        %v7826 = vsel %vm7790, %v7777, %v6745
        %v7827 = vsel %vm7790, %v7778, %v6747
        %v7828 = vsel %vm7790, %v7779, %v6749
        %v7829 = vsel %vm7790, %v7780, %v6751
        %v7830 = vsel %vm7790, %v7781, %v6753
        %v7831 = vsel %vm7790, %v7782, %v6755
        %v7832 = vsel %vm7790, %v7783, %v6757
        %v7833 = vsel %vm7790, %v7784, %v6759
        %v7834 = vsel %vm7790, %v7785, %v6761
        %v7835 = vsel %vm7790, %v7786, %v6763
        %v7836 = vsel %vm7790, %v7787, %v6765
        %v7837 = vsel %vm7790, %v7788, %v6767
        %v7838 = vsel %vm7790, %v7789, %v6769
        %vm7839 = vcmask 850944
        %v7840 = vsel %vm7839, %v7791, %v6822
        %v7841 = vsel %vm7839, %v7792, %v6824
        %v7842 = vsel %vm7839, %v7793, %v6826
        %v7843 = vsel %vm7839, %v7794, %v6828
        %v7844 = vsel %vm7839, %v7795, %v6830
        %v7845 = vsel %vm7839, %v7796, %v6832
        %v7846 = vsel %vm7839, %v7797, %v6834
        %v7847 = vsel %vm7839, %v7798, %v6836
        %v7848 = vsel %vm7839, %v7799, %v6838
        %v7849 = vsel %vm7839, %v7800, %v6840
        %v7850 = vsel %vm7839, %v7801, %v6842
        %v7851 = vsel %vm7839, %v7802, %v6844
        %v7852 = vsel %vm7839, %v7803, %v6846
        %v7853 = vsel %vm7839, %v7804, %v6848
        %v7854 = vsel %vm7839, %v7805, %v6850
        %v7855 = vsel %vm7839, %v7806, %v6852
        %v7856 = vsel %vm7839, %v7807, %v6854
        %v7857 = vsel %vm7839, %v7808, %v6856
        %v7858 = vsel %vm7839, %v7809, %v6858
        %v7859 = vsel %vm7839, %v7810, %v6860
        %v7860 = vsel %vm7839, %v7811, %v6862
        %v7861 = vsel %vm7839, %v7812, %v6864
        %v7862 = vsel %vm7839, %v7813, %v6866
        %v7863 = vsel %vm7839, %v7814, %v6868
        %v7864 = vsel %vm7839, %v7815, %v6870
        %v7865 = vsel %vm7839, %v7816, %v6872
        %v7866 = vsel %vm7839, %v7817, %v6874
        %v7867 = vsel %vm7839, %v7818, %v6876
        %v7868 = vsel %vm7839, %v7819, %v6878
        %v7869 = vsel %vm7839, %v7820, %v6880
        %v7870 = vsel %vm7839, %v7821, %v6882
        %v7871 = vsel %vm7839, %v7822, %v6884
        %v7872 = vsel %vm7839, %v7823, %v6886
        %v7873 = vsel %vm7839, %v7824, %v6888
        %v7874 = vsel %vm7839, %v7825, %v6890
        %v7875 = vsel %vm7839, %v7826, %v6892
        %v7876 = vsel %vm7839, %v7827, %v6894
        %v7877 = vsel %vm7839, %v7828, %v6896
        %v7878 = vsel %vm7839, %v7829, %v6898
        %v7879 = vsel %vm7839, %v7830, %v6900
        %v7880 = vsel %vm7839, %v7831, %v6902
        %v7881 = vsel %vm7839, %v7832, %v6904
        %v7882 = vsel %vm7839, %v7833, %v6906
        %v7883 = vsel %vm7839, %v7834, %v6908
        %v7884 = vsel %vm7839, %v7835, %v6910
        %v7885 = vsel %vm7839, %v7836, %v6912
        %v7886 = vsel %vm7839, %v7837, %v6914
        %v7887 = vsel %vm7839, %v7838, %v6916
        %vm7888 = vcmask 916480
        %v7889 = vsel %vm7888, %v7840, %v6969
        %v7890 = vsel %vm7888, %v7841, %v6971
        %v7891 = vsel %vm7888, %v7842, %v6973
        %v7892 = vsel %vm7888, %v7843, %v6975
        %v7893 = vsel %vm7888, %v7844, %v6977
        %v7894 = vsel %vm7888, %v7845, %v6979
        %v7895 = vsel %vm7888, %v7846, %v6981
        %v7896 = vsel %vm7888, %v7847, %v6983
        %v7897 = vsel %vm7888, %v7848, %v6985
        %v7898 = vsel %vm7888, %v7849, %v6987
        %v7899 = vsel %vm7888, %v7850, %v6989
        %v7900 = vsel %vm7888, %v7851, %v6991
        %v7901 = vsel %vm7888, %v7852, %v6993
        %v7902 = vsel %vm7888, %v7853, %v6995
        %v7903 = vsel %vm7888, %v7854, %v6997
        %v7904 = vsel %vm7888, %v7855, %v6999
        %v7905 = vsel %vm7888, %v7856, %v7001
        %v7906 = vsel %vm7888, %v7857, %v7003
        %v7907 = vsel %vm7888, %v7858, %v7005
        %v7908 = vsel %vm7888, %v7859, %v7007
        %v7909 = vsel %vm7888, %v7860, %v7009
        %v7910 = vsel %vm7888, %v7861, %v7011
        %v7911 = vsel %vm7888, %v7862, %v7013
        %v7912 = vsel %vm7888, %v7863, %v7015
        %v7913 = vsel %vm7888, %v7864, %v7017
        %v7914 = vsel %vm7888, %v7865, %v7019
        %v7915 = vsel %vm7888, %v7866, %v7021
        %v7916 = vsel %vm7888, %v7867, %v7023
        %v7917 = vsel %vm7888, %v7868, %v7025
        %v7918 = vsel %vm7888, %v7869, %v7027
        %v7919 = vsel %vm7888, %v7870, %v7029
        %v7920 = vsel %vm7888, %v7871, %v7031
        %v7921 = vsel %vm7888, %v7872, %v7033
        %v7922 = vsel %vm7888, %v7873, %v7035
        %v7923 = vsel %vm7888, %v7874, %v7037
        %v7924 = vsel %vm7888, %v7875, %v7039
        %v7925 = vsel %vm7888, %v7876, %v7041
        %v7926 = vsel %vm7888, %v7877, %v7043
        %v7927 = vsel %vm7888, %v7878, %v7045
        %v7928 = vsel %vm7888, %v7879, %v7047
        %v7929 = vsel %vm7888, %v7880, %v7049
        %v7930 = vsel %vm7888, %v7881, %v7051
        %v7931 = vsel %vm7888, %v7882, %v7053
        %v7932 = vsel %vm7888, %v7883, %v7055
        %v7933 = vsel %vm7888, %v7884, %v7057
        %v7934 = vsel %vm7888, %v7885, %v7059
        %v7935 = vsel %vm7888, %v7886, %v7061
        %v7936 = vsel %vm7888, %v7887, %v7063
        %vm7937 = vcmask 982016
        %v7938 = vsel %vm7937, %v7889, %v7116
        %v7939 = vsel %vm7937, %v7890, %v7118
        %v7940 = vsel %vm7937, %v7891, %v7120
        %v7941 = vsel %vm7937, %v7892, %v7122
        %v7942 = vsel %vm7937, %v7893, %v7124
        %v7943 = vsel %vm7937, %v7894, %v7126
        %v7944 = vsel %vm7937, %v7895, %v7128
        %v7945 = vsel %vm7937, %v7896, %v7130
        %v7946 = vsel %vm7937, %v7897, %v7132
        %v7947 = vsel %vm7937, %v7898, %v7134
        %v7948 = vsel %vm7937, %v7899, %v7136
        %v7949 = vsel %vm7937, %v7900, %v7138
        %v7950 = vsel %vm7937, %v7901, %v7140
        %v7951 = vsel %vm7937, %v7902, %v7142
        %v7952 = vsel %vm7937, %v7903, %v7144
        %v7953 = vsel %vm7937, %v7904, %v7146
        %v7954 = vsel %vm7937, %v7905, %v7148
        %v7955 = vsel %vm7937, %v7906, %v7150
        %v7956 = vsel %vm7937, %v7907, %v7152
        %v7957 = vsel %vm7937, %v7908, %v7154
        %v7958 = vsel %vm7937, %v7909, %v7156
        %v7959 = vsel %vm7937, %v7910, %v7158
        %v7960 = vsel %vm7937, %v7911, %v7160
        %v7961 = vsel %vm7937, %v7912, %v7162
        %v7962 = vsel %vm7937, %v7913, %v7164
        %v7963 = vsel %vm7937, %v7914, %v7166
        %v7964 = vsel %vm7937, %v7915, %v7168
        %v7965 = vsel %vm7937, %v7916, %v7170
        %v7966 = vsel %vm7937, %v7917, %v7172
        %v7967 = vsel %vm7937, %v7918, %v7174
        %v7968 = vsel %vm7937, %v7919, %v7176
        %v7969 = vsel %vm7937, %v7920, %v7178
        %v7970 = vsel %vm7937, %v7921, %v7180
        %v7971 = vsel %vm7937, %v7922, %v7182
        %v7972 = vsel %vm7937, %v7923, %v7184
        %v7973 = vsel %vm7937, %v7924, %v7186
        %v7974 = vsel %vm7937, %v7925, %v7188
        %v7975 = vsel %vm7937, %v7926, %v7190
        %v7976 = vsel %vm7937, %v7927, %v7192
        %v7977 = vsel %vm7937, %v7928, %v7194
        %v7978 = vsel %vm7937, %v7929, %v7196
        %v7979 = vsel %vm7937, %v7930, %v7198
        %v7980 = vsel %vm7937, %v7931, %v7200
        %v7981 = vsel %vm7937, %v7932, %v7202
        %v7982 = vsel %vm7937, %v7933, %v7204
        %v7983 = vsel %vm7937, %v7934, %v7206
        %v7984 = vsel %vm7937, %v7935, %v7208
        %v7985 = vsel %vm7937, %v7936, %v7210
        %v7986 = vpack.c.bf16 %v7939, %v7938
        %v7987 = vpack.c.bf16 %v7941, %v7940
        %v7988 = vpack.c.bf16 %v7943, %v7942
        %v7989 = vpack.c.bf16 %v7945, %v7944
        %v7990 = vpack.c.bf16 %v7947, %v7946
        %v7991 = vpack.c.bf16 %v7949, %v7948
        %v7992 = vpack.c.bf16 %v7951, %v7950
        %v7993 = vpack.c.bf16 %v7953, %v7952
        %v7994 = vpack.c.bf16 %v7955, %v7954
        %v7995 = vpack.c.bf16 %v7957, %v7956
        %v7996 = vpack.c.bf16 %v7959, %v7958
        %v7997 = vpack.c.bf16 %v7961, %v7960
        %v7998 = vpack.c.bf16 %v7963, %v7962
        %v7999 = vpack.c.bf16 %v7965, %v7964
        %v8000 = vpack.c.bf16 %v7967, %v7966
        %v8001 = vpack.c.bf16 %v7969, %v7968
        %v8002 = vpack.c.bf16 %v7971, %v7970
        %v8003 = vpack.c.bf16 %v7973, %v7972
        %v8004 = vpack.c.bf16 %v7975, %v7974
        %v8005 = vpack.c.bf16 %v7977, %v7976
        %v8006 = vpack.c.bf16 %v7979, %v7978
        %v8007 = vpack.c.bf16 %v7981, %v7980
        %v8008 = vpack.c.bf16 %v7983, %v7982
        %v8009 = vpack.c.bf16 %v7985, %v7984
        %v8010 = vld [vmem:[%s2] sm:$0xf]
        %v8011 = vld [vmem:[%s2 + $0x4] sm:$0xf]
        %v8012 = vld [vmem:[%s2 + $0x8] sm:$0xf]
        %v8013 = vld [vmem:[%s2 + $0xc] sm:$0xf]
        %v8014 = vld [vmem:[%s2 + $0x10] sm:$0xf]
        %v8015 = vld [vmem:[%s2 + $0x14] sm:$0xf]
        %v8016 = vld [vmem:[%s2 + $0x18] sm:$0xf]
        %v8017 = vld [vmem:[%s2 + $0x1c] sm:$0xf]
        %v8018 = vld [vmem:[%s2 + $0x20] sm:$0xf]
        %v8019 = vld [vmem:[%s2 + $0x24] sm:$0xf]
        %v8020 = vld [vmem:[%s2 + $0x28] sm:$0xf]
        %v8021 = vld [vmem:[%s2 + $0x2c] sm:$0xf]
        %v8022 = vld [vmem:[%s2 + $0x30] sm:$0xf]
        %v8023 = vld [vmem:[%s2 + $0x34] sm:$0xf]
        %v8024 = vld [vmem:[%s2 + $0x38] sm:$0xf]
        %v8025 = vld [vmem:[%s2 + $0x3c] sm:$0xf]
        %v8042 = vunpack.c.l.b16 %v8010
        %v8043 = vunpack.c.l.b16 %v8011
        %v8044 = vunpack.c.l.b16 %v8012
        %v8045 = vunpack.c.l.b16 %v8013
        %v8046 = vunpack.c.l.b16 %v8014
        %v8047 = vunpack.c.l.b16 %v8015
        %v8048 = vunpack.c.l.b16 %v8016
        %v8049 = vunpack.c.l.b16 %v8017
        %v8050 = vunpack.c.l.b16 %v8018
        %v8051 = vunpack.c.l.b16 %v8019
        %v8052 = vunpack.c.l.b16 %v8020
        %v8053 = vunpack.c.l.b16 %v8021
        %v8054 = vunpack.c.l.b16 %v8022
        %v8055 = vunpack.c.l.b16 %v8023
        %v8056 = vunpack.c.l.b16 %v8024
        %v8057 = vunpack.c.l.b16 %v8025
        %v8058 = vpack.c.b16 %v8043, %v8042
        %v8059 = vpack.c.b16 %v8045, %v8044
        %v8060 = vpack.c.b16 %v8047, %v8046
        %v8061 = vpack.c.b16 %v8049, %v8048
        %v8062 = vpack.c.b16 %v8051, %v8050
        %v8063 = vpack.c.b16 %v8053, %v8052
        %v8064 = vpack.c.b16 %v8055, %v8054
        %v8065 = vpack.c.b16 %v8057, %v8056
        %8074 = vmatprep.subr.bf16.mxu0 0
        %8075 = vmatpush1.bf16.msra.mxu0 %v8058
        %8076 = vmatprep.subr.bf16.mxu0 0
        %8077 = vmatpush1.bf16.msra.mxu0 %v8059
        %8078 = vmatprep.subr.bf16.mxu0 0
        %8079 = vmatpush1.bf16.msra.mxu0 %v8060
        %8080 = vmatprep.subr.bf16.mxu0 0
        %8081 = vmatpush1.bf16.msra.mxu0 %v8061
        %8082 = vmatprep.subr.bf16.mxu0 0
        %8083 = vmatpush1.bf16.msra.mxu0 %v8062
        %8084 = vmatprep.subr.bf16.mxu0 0
        %8085 = vmatpush1.bf16.msra.mxu0 %v8063
        %8086 = vmatprep.subr.bf16.mxu0 0
        %8087 = vmatpush1.bf16.msra.mxu0 %v8064
        %8088 = vmatprep.subr.bf16.mxu0 0
        %8089 = vmatpush1.bf16.msra.mxu0 %v8065
        %8090 = vmatprep.subr.bf16.mxu0 0
        %8091 = vmatpush1.bf16.msra.mxu0 0
        %8092 = vmatprep.subr.bf16.mxu0 0
        %8093 = vmatpush1.bf16.msra.mxu0 0
        %8094 = vmatprep.subr.bf16.mxu0 0
        %8095 = vmatpush1.bf16.msra.mxu0 0
        %8096 = vmatprep.subr.bf16.mxu0 0
        %8097 = vmatpush1.bf16.msra.mxu0 0
        %8098 = vmatprep.subr.bf16.mxu0 0
        %8099 = vmatpush1.bf16.msra.mxu0 0
        %8100 = vmatprep.subr.bf16.mxu0 0
        %8101 = vmatpush1.bf16.msra.mxu0 0
        %8102 = vmatprep.subr.bf16.mxu0 0
        %8103 = vmatpush1.bf16.msra.mxu0 0
        %8104 = vmatprep.subr.bf16.mxu0 0
        %8105 = vmatpush1.bf16.msra.mxu0 0
        %8106 = vmatprep.mubr.bf16.mxu0 0
        %8107 = vmatmul.mubr.bf16.gmra.mrb[0].mxu0 %v7986
        %v8108 = vpop.f32.mrb[0].mxu0
        %v8109 = vadd.f32 0.0, %v8108
        %v8110 = vpop.f32.mrb[0].mxu0
        %v8111 = vpop.f32.mrb[0].mxu0
        %v8112 = vadd.f32 0.0, %v8111
        %v8113 = vpop.f32.mrb[0].mxu0
        %8114 = vmatprep.mubr.bf16.mxu0 0
        %8115 = vmatmul.mubr.bf16.gmra.mrb[0].mxu0 %v7987
        %v8116 = vpop.f32.mrb[0].mxu0
        %v8117 = vpop.f32.mrb[0].mxu0
        %v8118 = vpop.f32.mrb[0].mxu0
        %v8119 = vadd.f32 0.0, %v8118
        %v8120 = vpop.f32.mrb[0].mxu0
        %8121 = vmatprep.mubr.bf16.mxu0 0
        %8122 = vmatmul.mubr.bf16.gmra.mrb[0].mxu0 %v7988
        %v8123 = vpop.f32.mrb[0].mxu0
        %v8124 = vadd.f32 0.0, %v8123
        %v8125 = vpop.f32.mrb[0].mxu0
        %v8126 = vpop.f32.mrb[0].mxu0
        %v8127 = vpop.f32.mrb[0].mxu0
        %8128 = vmatprep.mubr.bf16.mxu0 0
        %8129 = vmatmul.mubr.bf16.gmra.mrb[0].mxu0 %v7989
        %v8130 = vpop.f32.mrb[0].mxu0
        %v8131 = vadd.f32 0.0, %v8130
        %v8132 = vpop.f32.mrb[0].mxu0
        %v8133 = vpop.f32.mrb[0].mxu0
        %v8134 = vadd.f32 0.0, %v8133
        %v8135 = vpop.f32.mrb[0].mxu0
        %8136 = vmatprep.mubr.bf16.mxu0 0
        %8137 = vmatmul.mubr.bf16.gmra.mrb[0].mxu0 %v7990
        %v8138 = vpop.f32.mrb[0].mxu0
        %v8139 = vpop.f32.mrb[0].mxu0
        %v8140 = vpop.f32.mrb[0].mxu0
        %v8141 = vadd.f32 0.0, %v8140
        %v8142 = vpop.f32.mrb[0].mxu0
        %8143 = vmatprep.mubr.bf16.mxu0 0
        %8144 = vmatmul.mubr.bf16.gmra.mrb[0].mxu0 %v7991
        %v8145 = vpop.f32.mrb[0].mxu0
        %v8146 = vadd.f32 0.0, %v8145
        %v8147 = vpop.f32.mrb[0].mxu0
        %v8148 = vpop.f32.mrb[0].mxu0
        %v8149 = vpop.f32.mrb[0].mxu0
        %8150 = vmatprep.mubr.bf16.mxu0 0
        %8151 = vmatmul.mubr.bf16.gmra.mrb[0].mxu0 %v7992
        %v8152 = vpop.f32.mrb[0].mxu0
        %v8153 = vadd.f32 0.0, %v8152
        %v8154 = vpop.f32.mrb[0].mxu0
        %v8155 = vpop.f32.mrb[0].mxu0
        %v8156 = vadd.f32 0.0, %v8155
        %v8157 = vpop.f32.mrb[0].mxu0
        %8158 = vmatprep.mubr.bf16.mxu0 0
        %8159 = vmatmul.mubr.bf16.gmra.mrb[0].mxu0 %v7993
        %v8160 = vpop.f32.mrb[0].mxu0
        %v8161 = vpop.f32.mrb[0].mxu0
        %v8162 = vpop.f32.mrb[0].mxu0
        %v8163 = vadd.f32 0.0, %v8162
        %v8164 = vpop.f32.mrb[0].mxu0
        %8165 = vmatprep.mubr.bf16.mxu0 0
        %8166 = vmatmul.mubr.bf16.gmra.mrb[0].mxu0 %v7994
        %v8167 = vpop.f32.mrb[0].mxu0
        %v8168 = vadd.f32 0.0, %v8167
        %v8169 = vpop.f32.mrb[0].mxu0
        %v8170 = vpop.f32.mrb[0].mxu0
        %v8171 = vpop.f32.mrb[0].mxu0
        %8172 = vmatprep.mubr.bf16.mxu0 0
        %8173 = vmatmul.mubr.bf16.gmra.mrb[0].mxu0 %v7995
        %v8174 = vpop.f32.mrb[0].mxu0
        %v8175 = vadd.f32 0.0, %v8174
        %v8176 = vpop.f32.mrb[0].mxu0
        %v8177 = vpop.f32.mrb[0].mxu0
        %v8178 = vadd.f32 0.0, %v8177
        %v8179 = vpop.f32.mrb[0].mxu0
        %8180 = vmatprep.mubr.bf16.mxu0 0
        %8181 = vmatmul.mubr.bf16.gmra.mrb[0].mxu0 %v7996
        %v8182 = vpop.f32.mrb[0].mxu0
        %v8183 = vpop.f32.mrb[0].mxu0
        %v8184 = vpop.f32.mrb[0].mxu0
        %v8185 = vadd.f32 0.0, %v8184
        %v8186 = vpop.f32.mrb[0].mxu0
        %8187 = vmatprep.mubr.bf16.mxu0 0
        %8188 = vmatmul.mubr.bf16.gmra.mrb[0].mxu0 %v7997
        %v8189 = vpop.f32.mrb[0].mxu0
        %v8190 = vadd.f32 0.0, %v8189
        %v8191 = vpop.f32.mrb[0].mxu0
        %v8192 = vpop.f32.mrb[0].mxu0
        %v8193 = vpop.f32.mrb[0].mxu0
        %8194 = vmatprep.mubr.bf16.mxu0 0
        %8195 = vmatmul.mubr.bf16.gmra.mrb[0].mxu0 %v7998
        %v8196 = vpop.f32.mrb[0].mxu0
        %v8197 = vadd.f32 0.0, %v8196
        %v8198 = vpop.f32.mrb[0].mxu0
        %v8199 = vpop.f32.mrb[0].mxu0
        %v8200 = vadd.f32 0.0, %v8199
        %v8201 = vpop.f32.mrb[0].mxu0
        %8202 = vmatprep.mubr.bf16.mxu0 0
        %8203 = vmatmul.mubr.bf16.gmra.mrb[0].mxu0 %v7999
        %v8204 = vpop.f32.mrb[0].mxu0
        %v8205 = vpop.f32.mrb[0].mxu0
        %v8206 = vpop.f32.mrb[0].mxu0
        %v8207 = vadd.f32 0.0, %v8206
        %v8208 = vpop.f32.mrb[0].mxu0
        %8209 = vmatprep.mubr.bf16.mxu0 0
        %8210 = vmatmul.mubr.bf16.gmra.mrb[0].mxu0 %v8000
        %v8211 = vpop.f32.mrb[0].mxu0
        %v8212 = vadd.f32 0.0, %v8211
        %v8213 = vpop.f32.mrb[0].mxu0
        %v8214 = vpop.f32.mrb[0].mxu0
        %v8215 = vpop.f32.mrb[0].mxu0
        %8216 = vmatprep.mubr.bf16.mxu0 0
        %8217 = vmatmul.mubr.bf16.gmra.mrb[0].mxu0 %v8001
        %v8218 = vpop.f32.mrb[0].mxu0
        %v8219 = vadd.f32 0.0, %v8218
        %v8220 = vpop.f32.mrb[0].mxu0
        %v8221 = vpop.f32.mrb[0].mxu0
        %v8222 = vadd.f32 0.0, %v8221
        %v8223 = vpop.f32.mrb[0].mxu0
        %8224 = vmatprep.mubr.bf16.mxu0 0
        %8225 = vmatmul.mubr.bf16.gmra.mrb[0].mxu0 %v8002
        %v8226 = vpop.f32.mrb[0].mxu0
        %v8227 = vpop.f32.mrb[0].mxu0
        %v8228 = vpop.f32.mrb[0].mxu0
        %v8229 = vadd.f32 0.0, %v8228
        %v8230 = vpop.f32.mrb[0].mxu0
        %8231 = vmatprep.mubr.bf16.mxu0 0
        %8232 = vmatmul.mubr.bf16.gmra.mrb[0].mxu0 %v8003
        %v8233 = vpop.f32.mrb[0].mxu0
        %v8234 = vadd.f32 0.0, %v8233
        %v8235 = vpop.f32.mrb[0].mxu0
        %v8236 = vpop.f32.mrb[0].mxu0
        %v8237 = vpop.f32.mrb[0].mxu0
        %8238 = vmatprep.mubr.bf16.mxu0 0
        %8239 = vmatmul.mubr.bf16.gmra.mrb[0].mxu0 %v8004
        %v8240 = vpop.f32.mrb[0].mxu0
        %v8241 = vadd.f32 0.0, %v8240
        %v8242 = vpop.f32.mrb[0].mxu0
        %v8243 = vpop.f32.mrb[0].mxu0
        %v8244 = vadd.f32 0.0, %v8243
        %v8245 = vpop.f32.mrb[0].mxu0
        %8246 = vmatprep.mubr.bf16.mxu0 0
        %8247 = vmatmul.mubr.bf16.gmra.mrb[0].mxu0 %v8005
        %v8248 = vpop.f32.mrb[0].mxu0
        %v8249 = vpop.f32.mrb[0].mxu0
        %v8250 = vpop.f32.mrb[0].mxu0
        %v8251 = vadd.f32 0.0, %v8250
        %v8252 = vpop.f32.mrb[0].mxu0
        %8253 = vmatprep.mubr.bf16.mxu0 0
        %8254 = vmatmul.mubr.bf16.gmra.mrb[0].mxu0 %v8006
        %v8255 = vpop.f32.mrb[0].mxu0
        %v8256 = vadd.f32 0.0, %v8255
        %v8257 = vpop.f32.mrb[0].mxu0
        %v8258 = vpop.f32.mrb[0].mxu0
        %v8259 = vpop.f32.mrb[0].mxu0
        %8260 = vmatprep.mubr.bf16.mxu0 0
        %8261 = vmatmul.mubr.bf16.gmra.mrb[0].mxu0 %v8007
        %v8262 = vpop.f32.mrb[0].mxu0
        %v8263 = vadd.f32 0.0, %v8262
        %v8264 = vpop.f32.mrb[0].mxu0
        %v8265 = vpop.f32.mrb[0].mxu0
        %v8266 = vadd.f32 0.0, %v8265
        %v8267 = vpop.f32.mrb[0].mxu0
        %8268 = vmatprep.mubr.bf16.mxu0 0
        %8269 = vmatmul.mubr.bf16.gmra.mrb[0].mxu0 %v8008
        %v8270 = vpop.f32.mrb[0].mxu0
        %v8271 = vpop.f32.mrb[0].mxu0
        %v8272 = vpop.f32.mrb[0].mxu0
        %v8273 = vadd.f32 0.0, %v8272
        %v8274 = vpop.f32.mrb[0].mxu0
        %8275 = vmatprep.mubr.bf16.mxu0 0
        %8276 = vmatmul.mubr.bf16.gmra.mrb[0].mxu0 %v8009
        %v8277 = vpop.f32.mrb[0].mxu0
        %v8278 = vadd.f32 0.0, %v8277
        %v8279 = vpop.f32.mrb[0].mxu0
        %v8280 = vpop.f32.mrb[0].mxu0
        %v8281 = vpop.f32.mrb[0].mxu0
        %8282 = vdwg.mxu0
        %s8283 = scalar_lea.vmem %s222, 48
        %v8284 = vld [vmem:[%s8283 + $0x2] sm:$0xff]
        %v8285 = vld [vmem:[%s8283 + $0xa] sm:$0xff]
        %v8286 = vld [vmem:[%s8283 + $0x1a] sm:$0xff]
        %v8287 = vld [vmem:[%s8283 + $0x22] sm:$0xff]
        %v8288 = vld [vmem:[%s8283 + $0x32] sm:$0xff]
        %v8289 = vld [vmem:[%s8283 + $0x3a] sm:$0xff]
        %v8290 = vld [vmem:[%s8283 + $0x4a] sm:$0xff]
        %v8291 = vld [vmem:[%s8283 + $0x52] sm:$0xff]
        %v8292 = vld [vmem:[%s8283 + $0x62] sm:$0xff]
        %v8293 = vld [vmem:[%s8283 + $0x6a] sm:$0xff]
        %v8294 = vld [vmem:[%s8283 + $0x7a] sm:$0xff]
        %v8295 = vld [vmem:[%s8283 + $0x82] sm:$0xff]
        %v8296 = vld [vmem:[%s8283 + $0x92] sm:$0xff]
        %v8297 = vld [vmem:[%s8283 + $0x9a] sm:$0xff]
        %v8298 = vld [vmem:[%s8283 + $0xaa] sm:$0xff]
        %v8299 = vld [vmem:[%s8283 + $0xb2] sm:$0xff]
        %v8300 = vld [vmem:[%s8283 + $0xc2] sm:$0xff]
        %v8301 = vld [vmem:[%s8283 + $0xca] sm:$0xff]
        %v8302 = vld [vmem:[%s8283 + $0xda] sm:$0xff]
        %v8303 = vld [vmem:[%s8283 + $0xe2] sm:$0xff]
        %v8304 = vld [vmem:[%s8283 + $0xf2] sm:$0xff]
        %v8305 = vld [vmem:[%s8283 + $0xfa] sm:$0xff]
        %v8306 = vld [vmem:[%s8283 + $0x10a] sm:$0xff]
        %v8307 = vld [vmem:[%s8283 + $0x112] sm:$0xff]
        %v8308 = vld [vmem:[%s8283 + $0x122] sm:$0xff]
        %v8309 = vld [vmem:[%s8283 + $0x12a] sm:$0xff]
        %v8310 = vld [vmem:[%s8283 + $0x13a] sm:$0xff]
        %v8311 = vld [vmem:[%s8283 + $0x142] sm:$0xff]
        %v8312 = vld [vmem:[%s8283 + $0x152] sm:$0xff]
        %v8313 = vld [vmem:[%s8283 + $0x15a] sm:$0xff]
        %v8314 = vld [vmem:[%s8283 + $0x16a] sm:$0xff]
        %v8315 = vld [vmem:[%s8283 + $0x172] sm:$0xff]
        %8348 = vrot.lane.b32.xlu0 %v8109, 4
        %v8349 = vpop.permute.xlu0 %8348
        %8350 = vrot.lane.b32.xlu0 %v8112, 4
        %v8351 = vpop.permute.xlu0 %8350
        %8352 = vrot.lane.b32.xlu0 %v8119, 4
        %v8353 = vpop.permute.xlu0 %8352
        %8354 = vrot.lane.b32.xlu0 %v8124, 4
        %v8355 = vpop.permute.xlu0 %8354
        %8356 = vrot.lane.b32.xlu0 %v8131, 4
        %v8357 = vpop.permute.xlu0 %8356
        %8358 = vrot.lane.b32.xlu0 %v8134, 4
        %v8359 = vpop.permute.xlu0 %8358
        %8360 = vrot.lane.b32.xlu0 %v8141, 4
        %v8361 = vpop.permute.xlu0 %8360
        %8362 = vrot.lane.b32.xlu0 %v8146, 4
        %v8363 = vpop.permute.xlu0 %8362
        %8364 = vrot.lane.b32.xlu0 %v8153, 4
        %v8365 = vpop.permute.xlu0 %8364
        %8366 = vrot.lane.b32.xlu0 %v8156, 4
        %v8367 = vpop.permute.xlu0 %8366
        %8368 = vrot.lane.b32.xlu0 %v8163, 4
        %v8369 = vpop.permute.xlu0 %8368
        %8370 = vrot.lane.b32.xlu0 %v8168, 4
        %v8371 = vpop.permute.xlu0 %8370
        %8372 = vrot.lane.b32.xlu0 %v8175, 4
        %v8373 = vpop.permute.xlu0 %8372
        %8374 = vrot.lane.b32.xlu0 %v8178, 4
        %v8375 = vpop.permute.xlu0 %8374
        %8376 = vrot.lane.b32.xlu0 %v8185, 4
        %v8377 = vpop.permute.xlu0 %8376
        %8378 = vrot.lane.b32.xlu0 %v8190, 4
        %v8379 = vpop.permute.xlu0 %8378
        %8380 = vrot.lane.b32.xlu0 %v8197, 4
        %v8381 = vpop.permute.xlu0 %8380
        %8382 = vrot.lane.b32.xlu0 %v8200, 4
        %v8383 = vpop.permute.xlu0 %8382
        %8384 = vrot.lane.b32.xlu0 %v8207, 4
        %v8385 = vpop.permute.xlu0 %8384
        %8386 = vrot.lane.b32.xlu0 %v8212, 4
        %v8387 = vpop.permute.xlu0 %8386
        %8388 = vrot.lane.b32.xlu0 %v8219, 4
        %v8389 = vpop.permute.xlu0 %8388
        %8390 = vrot.lane.b32.xlu0 %v8222, 4
        %v8391 = vpop.permute.xlu0 %8390
        %8392 = vrot.lane.b32.xlu0 %v8229, 4
        %v8393 = vpop.permute.xlu0 %8392
        %8394 = vrot.lane.b32.xlu0 %v8234, 4
        %v8395 = vpop.permute.xlu0 %8394
        %8396 = vrot.lane.b32.xlu0 %v8241, 4
        %v8397 = vpop.permute.xlu0 %8396
        %8398 = vrot.lane.b32.xlu0 %v8244, 4
        %v8399 = vpop.permute.xlu0 %8398
        %8400 = vrot.lane.b32.xlu0 %v8251, 4
        %v8401 = vpop.permute.xlu0 %8400
        %8402 = vrot.lane.b32.xlu0 %v8256, 4
        %v8403 = vpop.permute.xlu0 %8402
        %8404 = vrot.lane.b32.xlu0 %v8263, 4
        %v8405 = vpop.permute.xlu0 %8404
        %8406 = vrot.lane.b32.xlu0 %v8266, 4
        %v8407 = vpop.permute.xlu0 %8406
        %8408 = vrot.lane.b32.xlu0 %v8273, 4
        %v8409 = vpop.permute.xlu0 %8408
        %8410 = vrot.lane.b32.xlu0 %v8278, 4
        %v8411 = vpop.permute.xlu0 %8410
        %v8444 = vsel %vm496, %v8284, %v8349
        %v8445 = vsel %vm496, %v8285, %v8351
        %v8446 = vsel %vm496, %v8286, %v8353
        %v8447 = vsel %vm496, %v8287, %v8355
        %v8448 = vsel %vm496, %v8288, %v8357
        %v8449 = vsel %vm496, %v8289, %v8359
        %v8450 = vsel %vm496, %v8290, %v8361
        %v8451 = vsel %vm496, %v8291, %v8363
        %v8452 = vsel %vm496, %v8292, %v8365
        %v8453 = vsel %vm496, %v8293, %v8367
        %v8454 = vsel %vm496, %v8294, %v8369
        %v8455 = vsel %vm496, %v8295, %v8371
        %v8456 = vsel %vm496, %v8296, %v8373
        %v8457 = vsel %vm496, %v8297, %v8375
        %v8458 = vsel %vm496, %v8298, %v8377
        %v8459 = vsel %vm496, %v8299, %v8379
        %v8460 = vsel %vm496, %v8300, %v8381
        %v8461 = vsel %vm496, %v8301, %v8383
        %v8462 = vsel %vm496, %v8302, %v8385
        %v8463 = vsel %vm496, %v8303, %v8387
        %v8464 = vsel %vm496, %v8304, %v8389
        %v8465 = vsel %vm496, %v8305, %v8391
        %v8466 = vsel %vm496, %v8306, %v8393
        %v8467 = vsel %vm496, %v8307, %v8395
        %v8468 = vsel %vm496, %v8308, %v8397
        %v8469 = vsel %vm496, %v8309, %v8399
        %v8470 = vsel %vm496, %v8310, %v8401
        %v8471 = vsel %vm496, %v8311, %v8403
        %v8472 = vsel %vm496, %v8312, %v8405
        %v8473 = vsel %vm496, %v8313, %v8407
        %v8474 = vsel %vm496, %v8314, %v8409
        %v8475 = vsel %vm496, %v8315, %v8411
        %v8476 = vld [vmem:[%s3] sm:$0xff]
        %v8477 = vld [vmem:[%s4] sm:$0xff]
        %8479 = vset.pattern.permute.xlu0 0
        %8480 = vperm.xlu0 %8479, %v8477
        %v8481 = vpop.permute.xlu0 %8480
        %v8484 = vsel %vm224, %v8476, 0
        %v8487 = vsel %vm224, %v8444, 0
        %v8490 = vsel %vm224, %v8445, 0
        %v8493 = vsel %vm224, %v8446, 0
        %v8496 = vsel %vm224, %v8447, 0
        %v8499 = vsel %vm224, %v8448, 0
        %v8502 = vsel %vm224, %v8449, 0
        %v8505 = vsel %vm224, %v8450, 0
        %v8508 = vsel %vm224, %v8451, 0
        %v8511 = vsel %vm224, %v8452, 0
        %v8514 = vsel %vm224, %v8453, 0
        %v8517 = vsel %vm224, %v8454, 0
        %v8520 = vsel %vm224, %v8455, 0
        %v8523 = vsel %vm224, %v8456, 0
        %v8526 = vsel %vm224, %v8457, 0
        %v8529 = vsel %vm224, %v8458, 0
        %v8532 = vsel %vm224, %v8459, 0
        %v8535 = vsel %vm224, %v8460, 0
        %v8538 = vsel %vm224, %v8461, 0
        %v8541 = vsel %vm224, %v8462, 0
        %v8544 = vsel %vm224, %v8463, 0
        %v8547 = vsel %vm224, %v8464, 0
        %v8550 = vsel %vm224, %v8465, 0
        %v8553 = vsel %vm224, %v8466, 0
        %v8556 = vsel %vm224, %v8467, 0
        %v8559 = vsel %vm224, %v8468, 0
        %v8562 = vsel %vm224, %v8469, 0
        %v8565 = vsel %vm224, %v8470, 0
        %v8568 = vsel %vm224, %v8471, 0
        %v8571 = vsel %vm224, %v8472, 0
        %v8574 = vsel %vm224, %v8473, 0
        %v8577 = vsel %vm224, %v8474, 0
        %v8580 = vsel %vm224, %v8475, 0
        %8582 = vmatprep.subr.mxu0 0.0
        %8583 = vmatpush1.xpose.msra.mxu0 %v8487
        %8584 = vmatprep.subr.mxu0 0.0
        %8585 = vmatpush1.xpose.msra.mxu0 %v8490
        %8586 = vmatprep.subr.mxu0 0.0
        %8587 = vmatpush1.xpose.msra.mxu0 %v8493
        %8588 = vmatprep.subr.mxu0 0.0
        %8589 = vmatpush1.xpose.msra.mxu0 %v8496
        %8590 = vmatprep.subr.mxu0 0.0
        %8591 = vmatpush1.xpose.msra.mxu0 %v8499
        %8592 = vmatprep.subr.mxu0 0.0
        %8593 = vmatpush1.xpose.msra.mxu0 %v8502
        %8594 = vmatprep.subr.mxu0 0.0
        %8595 = vmatpush1.xpose.msra.mxu0 %v8505
        %8596 = vmatprep.subr.mxu0 0.0
        %8597 = vmatpush1.xpose.msra.mxu0 %v8508
        %8598 = vmatprep.subr.mxu0 0.0
        %8599 = vmatpush1.xpose.msra.mxu0 %v8511
        %8600 = vmatprep.subr.mxu0 0.0
        %8601 = vmatpush1.xpose.msra.mxu0 %v8514
        %8602 = vmatprep.subr.mxu0 0.0
        %8603 = vmatpush1.xpose.msra.mxu0 %v8517
        %8604 = vmatprep.subr.mxu0 0.0
        %8605 = vmatpush1.xpose.msra.mxu0 %v8520
        %8606 = vmatprep.subr.mxu0 0.0
        %8607 = vmatpush1.xpose.msra.mxu0 %v8523
        %8608 = vmatprep.subr.mxu0 0.0
        %8609 = vmatpush1.xpose.msra.mxu0 %v8526
        %8610 = vmatprep.subr.mxu0 0.0
        %8611 = vmatpush1.xpose.msra.mxu0 %v8529
        %8612 = vmatprep.subr.mxu0 0.0
        %8613 = vmatpush1.xpose.msra.mxu0 %v8532
        %8614 = vmatprep.subr.mxu0 0.0
        %8615 = vmatpush1.xpose.msra.mxu0 %v8535
        %8616 = vmatprep.subr.mxu0 0.0
        %8617 = vmatpush1.xpose.msra.mxu0 %v8538
        %8618 = vmatprep.subr.mxu0 0.0
        %8619 = vmatpush1.xpose.msra.mxu0 %v8541
        %8620 = vmatprep.subr.mxu0 0.0
        %8621 = vmatpush1.xpose.msra.mxu0 %v8544
        %8622 = vmatprep.subr.mxu0 0.0
        %8623 = vmatpush1.xpose.msra.mxu0 %v8547
        %8624 = vmatprep.subr.mxu0 0.0
        %8625 = vmatpush1.xpose.msra.mxu0 %v8550
        %8626 = vmatprep.subr.mxu0 0.0
        %8627 = vmatpush1.xpose.msra.mxu0 %v8553
        %8628 = vmatprep.subr.mxu0 0.0
        %8629 = vmatpush1.xpose.msra.mxu0 %v8556
        %8630 = vmatprep.subr.mxu0 0.0
        %8631 = vmatpush1.xpose.msra.mxu0 %v8559
        %8632 = vmatprep.subr.mxu0 0.0
        %8633 = vmatpush1.xpose.msra.mxu0 %v8562
        %8634 = vmatprep.subr.mxu0 0.0
        %8635 = vmatpush1.xpose.msra.mxu0 %v8565
        %8636 = vmatprep.subr.mxu0 0.0
        %8637 = vmatpush1.xpose.msra.mxu0 %v8568
        %8638 = vmatprep.subr.mxu0 0.0
        %8639 = vmatpush1.xpose.msra.mxu0 %v8571
        %8640 = vmatprep.subr.mxu0 0.0
        %8641 = vmatpush1.xpose.msra.mxu0 %v8574
        %8642 = vmatprep.subr.mxu0 0.0
        %8643 = vmatpush1.xpose.msra.mxu0 %v8577
        %8644 = vmatprep.subr.mxu0 0.0
        %8645 = vmatpush1.xpose.msra.mxu0 %v8580
        %8646 = vmatprep.mubr.f32.mxu0 0.0
        %8647 = vmatmul.mubr.f32.gmra.mrb[0].mxu0 %v8484
        %v8648 = vpop.f32.mrb[0].mxu0
        %v8649 = vadd.f32 %v8481, %v8648
        %v8650 = vpop.f32.mrb[0].mxu0
        %v8651 = vadd.f32 %v8481, %v8650
        %8652 = vdwg.mxu0
        %8653 = vst [vmem:[%s217] sm:$0xff] %v8649
        %8654 = vst [vmem:[%s217 + $0x8] sm:$0xff] %v8651
        %s8655 = sand.u32 %s137, 1
        %s8656 = scalar_lea.sflag [#allocation5], %s8655
        %s8657 = sand.u32 %s137, 1
        %s8658 = smul.addr %s8657, 16
        %s8659 = scalar_lea.vmem [#allocation4], %s8658
        // Predicated region
        $region41: #{tpu_custom_call.1} parent=39 // pred_check
          %p8660 = pneg %p147
        $region42: #{tpu_custom_call.1} parent=39 // pred_check_branch
          %8662 = sbr.rel (%p8660) target = $region44
        $region43: #{tpu_custom_call.1} parent=39 // pred_region
          %s8664 = ssub.s32 256, 256
          %8665 = vsyncadd %s8656, %s8664
          %s8666 = smul.addr %s19, 2
          %s8667 = smul.addr %s8666, 128
          %s8668 = scalar_lea.hbm %s5, %s8667
          %s8670 = sshll.u32 %s8659, 4
          %s8671 = int_to_ptr.vmem [resolvable:$true] %s8670
          %8673 = dma.vmem_to_hbm [thread:$0]  %s8671, 256, %s8668, %s8656
        $region44: #{tpu_custom_call.1} parent=39 // pred_fallthru
          _
      $region40: #{tpu_custom_call.1} parent=5 // pred_fallthru
        _
      %p8674 = scmp.le.s32.totalorder 2, %s14
      // Predicated region
      $region45: #{tpu_custom_call.1} parent=5 // pred_check
        %p8675 = pneg %p8674
      $region46: #{tpu_custom_call.1} parent=5 // pred_check_branch
        %8677 = sbr.rel (%p8675) target = $region48
      $region47: #{tpu_custom_call.1} parent=5 // pred_region
        %s8678 = ssub.s32 %s14, 2
        // Predicated region
        $region49: #{tpu_custom_call.1} parent=47 // pred_check
          %p8679 = pneg %p153
        $region50: #{tpu_custom_call.1} parent=47 // pred_check_branch
          %8681 = sbr.rel (%p8679) target = $region52
        $region51: #{tpu_custom_call.1} parent=47 // pred_region
          %s8682 = sand.u32 %s138, 1
          %s8683 = scalar_lea.sflag [#allocation5], %s8682
          %s8684 = sand.u32 %s138, 1
          %s8685 = smul.addr %s8684, 16
          %s8686 = scalar_lea.vmem [#allocation4], %s8685
          %8687 = dma.done %s8683, 256
        $region52: #{tpu_custom_call.1} parent=47 // pred_fallthru
          _
      $region48: #{tpu_custom_call.1} parent=5 // pred_fallthru
        _
    $region6: #{tpu_custom_call.1} parent=1 // loop_footer
      %s18 = sadd.s32 1, %s14
    $region7: #{tpu_custom_call.1} parent=1 // loop_footer_branch
      %13 = sbr.rel target = $region3
    $region8: #{tpu_custom_call.1} parent=1 // loop_exit
      _
    %8688 = vsyncpa [#allocation5], 1
    %s8689 = scalar_lea.sflag [#allocation5], 1
    %8690 = vsyncpa %s8689, 1

</llo_original>
